<compile_context>
chip_gen: v7x
topology: tpu7x:2x2x1
jax: 0.10.0
libtpu: 0.0.40
codegen_flags: <defaults>
</compile_context>

<pallas_src>
import functools
import numpy as np
import jax
import jax.numpy as jnp
from jax.experimental import pallas as pl
from jax.experimental.pallas import tpu as pltpu


NC_PAD = 128  # lane-dense fc output width; sliced to num_classes in glue


# ----------------------------------------------------------------------------
# Fused kernel:
#   grid = (K // tk,)   (reduction over the patch-embed contraction dim)
#   every step:  acc (M, C) += patches_tile (M, tk) @ w_tile (tk, C)   [bf16 MXU]
#   last step (epilogue, all f32 on the resident accumulator):
#     feats   = relu(acc + b)
#     avg/max = channel mean / max                               (M, 1) each
#     sa      = sigmoid(A_avg_bd @ avg + A_max_bd @ max)         exact 7x7 conv
#     pooled  = (1/S) * P_sel·sa @ feats                          (B, C)
#     logits  = pooled @ Wfc_pad + bfc_pad                        (B, 128)
#   A_*_bd are block-diagonal (per-batch) spatial mixing matrices passed
#   TRANSPOSED so the conv matvec is a lane-broadcast multiply + sublane
#   reduction (no in-kernel transpose).
# ----------------------------------------------------------------------------
def _make_fused_kernel(inv_s):
    def kernel(x_ref, w_ref, b_ref, aavg_t_ref, amax_t_ref, psel_ref,
               wfc_ref, bfc_ref, o_ref, acc_ref):
        k = pl.program_id(0)

        @pl.when(k == 0)
        def _():
            acc_ref[...] = jnp.zeros_like(acc_ref)

        # bf16 x bf16 -> f32 accumulate on the MXU.
        acc_ref[...] += jnp.dot(x_ref[...], w_ref[...],
                                preferred_element_type=jnp.float32)

        @pl.when(k == pl.num_programs(0) - 1)
        def _():
            # Backbone epilogue: bias + ReLU (resnet50 layer4 output is post-ReLU).
            feats = jnp.maximum(acc_ref[...] + b_ref[...], 0.0)          # (M, C) f32

            # SpatialAttention: channel mean / max.
            avg_col = jnp.mean(feats, axis=1, keepdims=True)             # (M, 1)
            max_col = jnp.max(feats, axis=1, keepdims=True)              # (M, 1)

            # Exact 7x7 conv (pad=3, no bias) as block-diag spatial mixing,
            # transposed form: sa_pre[i] = sum_j A_bd[i, j] * v[j].
            mixed = aavg_t_ref[...] * avg_col + amax_t_ref[...] * max_col  # (M, M)
            sa_pre = jnp.sum(mixed, axis=0, keepdims=True)               # (1, M)

            # sigmoid = 1 / (1 + exp(-x)): exp on EUP, divide via approx recip.
            sa_row = pl.reciprocal(1.0 + jnp.exp(-sa_pre), approx=True)  # (1, M)

            # Attended features -> per-batch global average pool:
            #   pooled[b] = (1/S) * sum_{rows of batch b} sa[row] * feats[row]
            pool_w = psel_ref[...] * sa_row                              # (B, M)
            pooled = jnp.dot(pool_w, feats,
                             preferred_element_type=jnp.float32) * inv_s  # (B, C)

            # fc, lane-dense padded output (B, NC_PAD).
            logits = jnp.dot(pooled, wfc_ref[...],
                             preferred_element_type=jnp.float32) + bfc_ref[...]
            o_ref[...] = logits.astype(o_ref.dtype)

    return kernel


def hybrid_vit_pallas(patches_bf16, w_patch_bf16, b_patch, a_avg_bd_t, a_max_bd_t,
                      p_sel, w_fc_pad, b_fc_pad, *, S, tk=1024):
    M, K = patches_bf16.shape
    C = w_patch_bf16.shape[1]
    B = p_sel.shape[0]
    assert K % tk == 0, (K, tk)

    kernel = _make_fused_kernel(1.0 / float(S))
    return pl.pallas_call(
        kernel,
        out_shape=jax.ShapeDtypeStruct((B, NC_PAD), jnp.float32),
        grid=(K // tk,),
        in_specs=[
            pl.BlockSpec((M, tk), lambda k: (0, k)),       # patches tile (bf16)
            pl.BlockSpec((tk, C), lambda k: (k, 0)),       # weight tile  (bf16)
            pl.BlockSpec((1, C), lambda k: (0, 0)),        # bias (f32)
            # The specs below equal the full array shapes; they are NOT (8,128)-
            # divisible, so do not tile them in a future refactor.
            pl.BlockSpec((M, M), lambda k: (0, 0)),        # A_avg_bd^T
            pl.BlockSpec((M, M), lambda k: (0, 0)),        # A_max_bd^T
            pl.BlockSpec((B, M), lambda k: (0, 0)),        # batch selection
            pl.BlockSpec((C, NC_PAD), lambda k: (0, 0)),   # fc weight (padded)
            pl.BlockSpec((1, NC_PAD), lambda k: (0, 0)),   # fc bias   (padded)
        ],
        out_specs=pl.BlockSpec((B, NC_PAD), lambda k: (0, 0)),
        scratch_shapes=[pltpu.VMEM((M, C), jnp.float32)],  # resident feature acc
        compiler_params=pltpu.CompilerParams(
            dimension_semantics=("arbitrary",)),
    )(patches_bf16, w_patch_bf16, b_patch, a_avg_bd_t, a_max_bd_t,
      p_sel, w_fc_pad, b_fc_pad)


# ----------------------------------------------------------------------------
# Glue: patch extraction (NCHW -> channels-last patches), exact im2col of the
# 7x7 SpatialAttention conv, deterministic parameter construction.
# ----------------------------------------------------------------------------
def extract_patches(x, patch):
    # x: (B, C, H, W)  (NCHW, PyTorch convention)
    B, C, H, W = x.shape
    Hp, Wp = H // patch, W // patch
    x = x.reshape(B, C, Hp, patch, Wp, patch)
    x = x.transpose(0, 2, 4, 3, 5, 1)                 # (B, Hp, Wp, ph, pw, C)
    return x.reshape(B * Hp * Wp, patch * patch * C), Hp, Wp


def build_conv_matrices(wconv, Hf, Wf):
    # wconv: (1, 2, 7, 7) torch layout (out, in, kh, kw); padding = 3, no bias.
    # Returns A_avg, A_max with A[out_pos, in_pos] = conv weight contribution.
    S = Hf * Wf
    k = wconv.shape[-1]
    pad = k // 2
    a_avg = np.zeros((S, S), np.float32)
    a_max = np.zeros((S, S), np.float32)
    for i in range(Hf):
        for j in range(Wf):
            oi = i * Wf + j
            for u in range(k):
                for v in range(k):
                    p, q = i + u - pad, j + v - pad
                    if 0 <= p < Hf and 0 <= q < Wf:
                        ii = p * Wf + q
                        a_avg[oi, ii] += wconv[0, 0, u, v]
                        a_max[oi, ii] += wconv[0, 1, u, v]
    return a_avg, a_max


def init_params(key, *, B, patch=32, in_ch=3, feat_ch=2048, num_classes=3,
                Hf=2, Wf=2):
    k1, k2, k3, k4 = jax.random.split(key, 4)
    K = patch * patch * in_ch
    S = Hf * Wf

    # Backbone stand-in: patch-embed projection (bf16 for MXU / HBM traffic).
    w_patch = jax.random.normal(k1, (K, feat_ch), jnp.float32) * (1.0 / np.sqrt(K))
    b_patch = jnp.zeros((1, feat_ch), jnp.float32)

    # SpatialAttention 7x7 conv weights -> block-diagonal (M, M) mixing matrices.
    wconv = np.asarray(
        jax.random.normal(k2, (1, 2, 7, 7), jnp.float32) * (1.0 / np.sqrt(2 * 49)))
    a_avg, a_max = build_conv_matrices(wconv, Hf, Wf)
    eye_b = np.eye(B, dtype=np.float32)
    a_avg_bd_t = jnp.asarray(np.kron(eye_b, a_avg.T))   # (M, M) = block-diag(A)^T
    a_max_bd_t = jnp.asarray(np.kron(eye_b, a_max.T))

    # Batch-selection matrix: p_sel[b, m] = 1 iff row m belongs to batch b.
    p_sel = jnp.asarray(np.kron(eye_b, np.ones((1, S), np.float32)))   # (B, M)

    # torch Linear(2048, nc): y = x @ W.T + b.  Pad to lane-dense NC_PAD.
    w_fc = jax.random.normal(k3, (num_classes, feat_ch), jnp.float32) * (
        1.0 / np.sqrt(feat_ch))
    b_fc = jax.random.normal(k4, (num_classes,), jnp.float32) * 0.01
    w_fc_pad = jnp.zeros((feat_ch, NC_PAD), jnp.float32).at[:, :num_classes].set(
        jnp.transpose(w_fc))
    b_fc_pad = jnp.zeros((1, NC_PAD), jnp.float32).at[0, :num_classes].set(b_fc)

    return {
        "w_patch_bf16": w_patch.astype(jnp.bfloat16),
        "b_patch": b_patch,
        "a_avg_bd_t": a_avg_bd_t,
        "a_max_bd_t": a_max_bd_t,
        "p_sel": p_sel,
        "w_fc_pad": w_fc_pad,
        "b_fc_pad": b_fc_pad,
    }


@functools.partial(jax.jit, static_argnames=("patch", "num_classes", "tk"))
def hybrid_vit_forward(x, params, *, patch=32, num_classes=3, tk=1024):
    patches, Hp, Wp = extract_patches(x, patch)
    S = Hp * Wp
    logits_pad = hybrid_vit_pallas(
        patches.astype(jnp.bfloat16),
        params["w_patch_bf16"], params["b_patch"],
        params["a_avg_bd_t"], params["a_max_bd_t"],
        params["p_sel"], params["w_fc_pad"], params["b_fc_pad"],
        S=S, tk=tk)
    return logits_pad[:, :num_classes]                  # (B, num_classes)


if __name__ == "__main__":
    key = jax.random.PRNGKey(0)
    kx, kp = jax.random.split(key)

    B, Cin, H, W = 2, 3, 64, 64          # features: (B, 2048, 2, 2) like resnet50 /32
    num_classes = 3
    patch = 32
    Hf, Wf = H // patch, W // patch

    x = jax.random.normal(kx, (B, Cin, H, W), jnp.float32)   # NCHW input
    params = init_params(
        kp, B=B, patch=patch, in_ch=Cin, feat_ch=2048,
        num_classes=num_classes, Hf=Hf, Wf=Wf)

    logits = hybrid_vit_forward(x, params, patch=patch, num_classes=num_classes)
    jax.block_until_ready(logits)
    assert logits.shape == (B, num_classes), logits.shape
    print("KERNEL_OK")
</pallas_src>

<mosaic_0001>
module attributes {stable_mosaic.version = 11 : i64} {
  func.func @kernel(%arg0: i32, %arg1: memref<8x1024xbf16, #tpu.memory_space<vmem>>, %arg2: memref<1024x2048xbf16, #tpu.memory_space<vmem>>, %arg3: memref<1x2048xf32, #tpu.memory_space<vmem>>, %arg4: memref<8x8xf32, #tpu.memory_space<vmem>>, %arg5: memref<8x8xf32, #tpu.memory_space<vmem>>, %arg6: memref<2x8xf32, #tpu.memory_space<vmem>>, %arg7: memref<2048x128xf32, #tpu.memory_space<vmem>>, %arg8: memref<1x128xf32, #tpu.memory_space<vmem>>, %arg9: memref<2x128xf32, #tpu.memory_space<vmem>>, %arg10: memref<8x2048xf32, #tpu.memory_space<vmem>>) attributes {dimension_semantics = [#tpu.dimension_semantics<arbitrary>], iteration_bounds = array<i64: 3>, scalar_prefetch = 0 : i64, scratch_operands = 1 : i64, tpu.core_type = #tpu.core_type<tc>, window_params = [{transform_indices = @transform_0, window_bounds = array<i64: 8, 1024>}, {transform_indices = @transform_1, window_bounds = array<i64: 1024, 2048>}, {pipeline_mode = #tpu.pipeline_mode<synchronous>, transform_indices = @transform_2, window_bounds = array<i64: 1, 2048>}, {pipeline_mode = #tpu.pipeline_mode<synchronous>, transform_indices = @transform_3, window_bounds = array<i64: 8, 8>}, {pipeline_mode = #tpu.pipeline_mode<synchronous>, transform_indices = @transform_4, window_bounds = array<i64: 8, 8>}, {pipeline_mode = #tpu.pipeline_mode<synchronous>, transform_indices = @transform_5, window_bounds = array<i64: 2, 8>}, {pipeline_mode = #tpu.pipeline_mode<synchronous>, transform_indices = @transform_6, window_bounds = array<i64: 2048, 128>}, {pipeline_mode = #tpu.pipeline_mode<synchronous>, transform_indices = @transform_7, window_bounds = array<i64: 1, 128>}, {pipeline_mode = #tpu.pipeline_mode<synchronous>, transform_indices = @transform_8, window_bounds = array<i64: 2, 128>}]} {
    %c0_i32 = arith.constant 0 : i32
    %0 = arith.cmpi eq, %arg0, %c0_i32 : i32
    %1 = arith.extui %0 : i1 to i32
    %c0_i32_0 = arith.constant 0 : i32
    %2 = arith.cmpi ne, %1, %c0_i32_0 : i32
    scf.if %2 {
      %cst_9 = arith.constant 0.000000e+00 : f32
      %12 = vector.broadcast %cst_9 : f32 to vector<8x2048xf32>
      %c0_10 = arith.constant 0 : index
      %c0_11 = arith.constant 0 : index
      %13 = vector.load %arg10[%c0_10, %c0_11] : memref<8x2048xf32, #tpu.memory_space<vmem>>, vector<8x2048xf32>
      tpu.vector_store %arg10[%c0_10, %c0_11], %12 {strides = array<i32>} : memref<8x2048xf32, #tpu.memory_space<vmem>>, vector<8x2048xf32>,
    } else {
    }
    %c0 = arith.constant 0 : index
    %c0_1 = arith.constant 0 : index
    %3 = vector.load %arg10[%c0, %c0_1] : memref<8x2048xf32, #tpu.memory_space<vmem>>, vector<8x2048xf32>
    %c0_2 = arith.constant 0 : index
    %c0_3 = arith.constant 0 : index
    %4 = vector.load %arg1[%c0_2, %c0_3] : memref<8x1024xbf16, #tpu.memory_space<vmem>>, vector<8x1024xbf16>
    %c0_4 = arith.constant 0 : index
    %c0_5 = arith.constant 0 : index
    %5 = vector.load %arg2[%c0_4, %c0_5] : memref<1024x2048xbf16, #tpu.memory_space<vmem>>, vector<1024x2048xbf16>
    %cst = arith.constant dense<0.000000e+00> : vector<8x2048xf32>
    %6 = tpu.matmul %4, %5, %cst {dimension_numbers = #tpu.dot_dimension_numbers<[1], [0], [0], [1], [0, 0, 1, 1], [], []>} : vector<8x1024xbf16>, vector<1024x2048xbf16>, vector<8x2048xf32> -> vector<8x2048xf32>
    %7 = arith.addf %3, %6 : vector<8x2048xf32>
    %c0_6 = arith.constant 0 : index
    %c0_7 = arith.constant 0 : index
    %8 = vector.load %arg10[%c0_6, %c0_7] : memref<8x2048xf32, #tpu.memory_space<vmem>>, vector<8x2048xf32>
    tpu.vector_store %arg10[%c0_6, %c0_7], %7 {strides = array<i32>} : memref<8x2048xf32, #tpu.memory_space<vmem>>, vector<8x2048xf32>,
    %c2_i32 = arith.constant 2 : i32
    %9 = arith.cmpi eq, %arg0, %c2_i32 : i32
    %10 = arith.extui %9 : i1 to i32
    %c0_i32_8 = arith.constant 0 : i32
    %11 = arith.cmpi ne, %10, %c0_i32_8 : i32
    scf.if %11 {
      %c0_9 = arith.constant 0 : index
      %c0_10 = arith.constant 0 : index
      %12 = vector.load %arg10[%c0_9, %c0_10] : memref<8x2048xf32, #tpu.memory_space<vmem>>, vector<8x2048xf32>
      %c0_11 = arith.constant 0 : index
      %c0_12 = arith.constant 0 : index
      %13 = vector.load %arg3[%c0_11, %c0_12] : memref<1x2048xf32, #tpu.memory_space<vmem>>, vector<1x2048xf32>
      %14 = vector.broadcast %13 : vector<1x2048xf32> to vector<8x2048xf32>
      %15 = arith.addf %12, %14 : vector<8x2048xf32>
      %cst_13 = arith.constant 0.000000e+00 : f32
      %16 = vector.broadcast %cst_13 : f32 to vector<8x2048xf32>
      %17 = arith.maximumf %15, %16 : vector<8x2048xf32>
      %cst_14 = arith.constant dense<0.000000e+00> : vector<8xf32>
      %18 = vector.multi_reduction <add>, %17, %cst_14 [1] : vector<8x2048xf32> to vector<8xf32>
      %19 = vector.shape_cast %18 : vector<8xf32> to vector<8x1xf32>
      %cst_15 = arith.constant 2.048000e+03 : f32
      %20 = vector.broadcast %cst_15 : f32 to vector<8x1xf32>
      %21 = arith.divf %19, %20 : vector<8x1xf32>
      %cst_16 = arith.constant dense<0xFF800000> : vector<8xf32>
      %22 = vector.multi_reduction <maximumf>, %17, %cst_16 [1] : vector<8x2048xf32> to vector<8xf32>
      %23 = vector.shape_cast %22 : vector<8xf32> to vector<8x1xf32>
      %c0_17 = arith.constant 0 : index
      %c0_18 = arith.constant 0 : index
      %24 = vector.load %arg4[%c0_17, %c0_18] : memref<8x8xf32, #tpu.memory_space<vmem>>, vector<8x8xf32>
      %25 = vector.broadcast %21 : vector<8x1xf32> to vector<8x8xf32>
      %26 = arith.mulf %24, %25 : vector<8x8xf32>
      %c0_19 = arith.constant 0 : index
      %c0_20 = arith.constant 0 : index
      %27 = vector.load %arg5[%c0_19, %c0_20] : memref<8x8xf32, #tpu.memory_space<vmem>>, vector<8x8xf32>
      %28 = vector.broadcast %23 : vector<8x1xf32> to vector<8x8xf32>
      %29 = arith.mulf %27, %28 : vector<8x8xf32>
      %30 = arith.addf %26, %29 : vector<8x8xf32>
      %cst_21 = arith.constant dense<0.000000e+00> : vector<8xf32>
      %31 = vector.multi_reduction <add>, %30, %cst_21 [0] : vector<8x8xf32> to vector<8xf32>
      %32 = vector.shape_cast %31 : vector<8xf32> to vector<1x8xf32>
      %cst_22 = arith.constant 0.000000e+00 : f32
      %33 = vector.broadcast %cst_22 : f32 to vector<1x8xf32>
      %34 = arith.subf %33, %32 : vector<1x8xf32>
      %35 = math.exp %34 : vector<1x8xf32>
      %cst_23 = arith.constant 1.000000e+00 : f32
      %36 = vector.broadcast %cst_23 : f32 to vector<1x8xf32>
      %37 = arith.addf %36, %35 : vector<1x8xf32>
      %38 = tpu.reciprocal %37 {approx = true} : vector<1x8xf32> -> vector<1x8xf32>
      %c0_24 = arith.constant 0 : index
      %c0_25 = arith.constant 0 : index
      %39 = vector.load %arg6[%c0_24, %c0_25] : memref<2x8xf32, #tpu.memory_space<vmem>>, vector<2x8xf32>
      %40 = vector.broadcast %38 : vector<1x8xf32> to vector<2x8xf32>
      %41 = arith.mulf %39, %40 : vector<2x8xf32>
      %cst_26 = arith.constant dense<0.000000e+00> : vector<2x2048xf32>
      %42 = tpu.matmul %41, %17, %cst_26 {dimension_numbers = #tpu.dot_dimension_numbers<[1], [0], [0], [1], [0, 0, 1, 1], [], []>} : vector<2x8xf32>, vector<8x2048xf32>, vector<2x2048xf32> -> vector<2x2048xf32>
      %cst_27 = arith.constant 2.500000e-01 : f32
      %43 = vector.broadcast %cst_27 : f32 to vector<2x2048xf32>
      %44 = arith.mulf %42, %43 : vector<2x2048xf32>
      %c0_28 = arith.constant 0 : index
      %c0_29 = arith.constant 0 : index
      %45 = vector.load %arg7[%c0_28, %c0_29] : memref<2048x128xf32, #tpu.memory_space<vmem>>, vector<2048x128xf32>
      %cst_30 = arith.constant dense<0.000000e+00> : vector<2x128xf32>
      %46 = tpu.matmul %44, %45, %cst_30 {dimension_numbers = #tpu.dot_dimension_numbers<[1], [0], [0], [1], [0, 0, 1, 1], [], []>} : vector<2x2048xf32>, vector<2048x128xf32>, vector<2x128xf32> -> vector<2x128xf32>
      %c0_31 = arith.constant 0 : index
      %c0_32 = arith.constant 0 : index
      %47 = vector.load %arg8[%c0_31, %c0_32] : memref<1x128xf32, #tpu.memory_space<vmem>>, vector<1x128xf32>
      %48 = vector.broadcast %47 : vector<1x128xf32> to vector<2x128xf32>
      %49 = arith.addf %46, %48 : vector<2x128xf32>
      %c0_33 = arith.constant 0 : index
      %c0_34 = arith.constant 0 : index
      %50 = vector.load %arg9[%c0_33, %c0_34] : memref<2x128xf32, #tpu.memory_space<vmem>>, vector<2x128xf32>
      tpu.vector_store %arg9[%c0_33, %c0_34], %49 {strides = array<i32>} : memref<2x128xf32, #tpu.memory_space<vmem>>, vector<2x128xf32>,
    } else {
    }
    return
  }
  func.func @transform_0(%arg0: i32) -> (i32, i32) {
    %c0_i32 = arith.constant 0 : i32
    %c0_i32_0 = arith.constant 0 : i32
    return %c0_i32, %arg0 : i32, i32
  }
  func.func @transform_1(%arg0: i32) -> (i32, i32) {
    %c0_i32 = arith.constant 0 : i32
    %c0_i32_0 = arith.constant 0 : i32
    return %arg0, %c0_i32 : i32, i32
  }
  func.func @transform_2(%arg0: i32) -> (i32, i32) {
    %c0_i32 = arith.constant 0 : i32
    %c0_i32_0 = arith.constant 0 : i32
    %c0_i32_1 = arith.constant 0 : i32
    return %c0_i32, %c0_i32_0 : i32, i32
  }
  func.func @transform_3(%arg0: i32) -> (i32, i32) {
    %c0_i32 = arith.constant 0 : i32
    %c0_i32_0 = arith.constant 0 : i32
    %c0_i32_1 = arith.constant 0 : i32
    return %c0_i32, %c0_i32_0 : i32, i32
  }
  func.func @transform_4(%arg0: i32) -> (i32, i32) {
    %c0_i32 = arith.constant 0 : i32
    %c0_i32_0 = arith.constant 0 : i32
    %c0_i32_1 = arith.constant 0 : i32
    return %c0_i32, %c0_i32_0 : i32, i32
  }
  func.func @transform_5(%arg0: i32) -> (i32, i32) {
    %c0_i32 = arith.constant 0 : i32
    %c0_i32_0 = arith.constant 0 : i32
    %c0_i32_1 = arith.constant 0 : i32
    return %c0_i32, %c0_i32_0 : i32, i32
  }
  func.func @transform_6(%arg0: i32) -> (i32, i32) {
    %c0_i32 = arith.constant 0 : i32
    %c0_i32_0 = arith.constant 0 : i32
    %c0_i32_1 = arith.constant 0 : i32
    return %c0_i32, %c0_i32_0 : i32, i32
  }
  func.func @transform_7(%arg0: i32) -> (i32, i32) {
    %c0_i32 = arith.constant 0 : i32
    %c0_i32_0 = arith.constant 0 : i32
    %c0_i32_1 = arith.constant 0 : i32
    return %c0_i32, %c0_i32_0 : i32, i32
  }
  func.func @transform_8(%arg0: i32) -> (i32, i32) {
    %c0_i32 = arith.constant 0 : i32
    %c0_i32_0 = arith.constant 0 : i32
    %c0_i32_1 = arith.constant 0 : i32
    return %c0_i32, %c0_i32_0 : i32, i32
  }
}

</mosaic_0001>

<llo_original>
// kernel: hybrid_vit_forward.1
$region0: #{hybrid_vit_forward.1}
  #allocation0 [shape = 'u32[]', space=smem, size = 0x4, offset = 0x4, fixed_abs, tag = 'smem constant byte address 0x4 - core index']
  #allocation1 [shape = 'u32[144,128]{1,0:T(1,128)}', space=vmem, size = 0x12000, scoped, tag = 'internal scratch']
  #allocation2 [shape = 'f32[8,2048]{1,0:T(8,128)}', space=vmem, size = 0x10000, scoped, tag = 'scratch operand']
  %s0 = inlined_call_operand.vmem [shape: bf16[8,3072], index: 0, kind: input, shape index: {}]
  %s1 = inlined_call_operand.hbm [shape: bf16[3072,2048], index: 1, kind: input, shape index: {}]
  %s2 = inlined_call_operand.hbm [shape: f32[1,2048], index: 2, kind: input, shape index: {}]
  %s3 = inlined_call_operand.hbm [shape: f32[8,8], index: 3, kind: input, shape index: {}]
  %s4 = inlined_call_operand.hbm [shape: f32[8,8], index: 4, kind: input, shape index: {}]
  %s5 = inlined_call_operand.hbm [shape: f32[2,8], index: 5, kind: input, shape index: {}]
  %s6 = inlined_call_operand.hbm [shape: f32[2048,128], index: 6, kind: input, shape index: {}]
  %s7 = inlined_call_operand.hbm [shape: f32[1,128], index: 7, kind: input, shape index: {}]
  %s8 = inlined_call_operand.hbm [shape: f32[2,128], index: 8, kind: output, shape index: {}]
  %s9 = sld [smem:[#allocation0]]
  $region101: #{hybrid_vit_forward.1} parent=0
    _
  %s11 = ssub.s32 1, %s9
  %s12 = scalar_select 0, %s11, %s9
  $region1: #{hybrid_vit_forward.1} parent=0
    #allocation3 [shape = 'u8[8388608]{0}', space=vmem, size = 0x800000, scoped, tag = 'input window, operand 1']
    #allocation4 [shape = 's32[2]{0}', space=sflag, size = 0x8, scoped, tag = 'scoped memory for hybrid_vit_forward.1']
    #allocation5 [shape = 's32[2]{0}', space=sflag, size = 0x8, scoped, tag = 'scoped memory for hybrid_vit_forward.1']
    #allocation6 [shape = 'u8[8192]{0}', space=vmem, size = 0x2000, scoped, tag = 'input window, operand 2, single buffered']
    #allocation7 [shape = 's32[1]{0}', space=sflag, size = 0x4, scoped, tag = 'scoped memory for hybrid_vit_forward.1']
    #allocation8 [shape = 'u8[4096]{0}', space=vmem, size = 0x1000, scoped, tag = 'input window, operand 3, single buffered']
    #allocation9 [shape = 'u8[4096]{0}', space=vmem, size = 0x1000, scoped, tag = 'input window, operand 4, single buffered']
    #allocation10 [shape = 's32[1]{0}', space=sflag, size = 0x4, scoped, tag = 'scoped memory for hybrid_vit_forward.1']
    #allocation11 [shape = 'u8[1024]{0}', space=vmem, size = 0x400, scoped, tag = 'input window, operand 5, single buffered']
    #allocation12 [shape = 'u8[1048576]{0}', space=vmem, size = 0x100000, scoped, tag = 'input window, operand 6, single buffered']
    #allocation13 [shape = 's32[1]{0}', space=sflag, size = 0x4, scoped, tag = 'scoped memory for hybrid_vit_forward.1']
    #allocation14 [shape = 'u8[512]{0}', space=vmem, size = 0x400, scoped, tag = 'input window, operand 7, single buffered']
    #allocation15 [shape = 'u8[1024]{0}', space=vmem, size = 0x400, scoped, tag = 'output window, operand 0, single buffered']
    %13 = vsyncpa [#allocation4], 0
    %s14 = scalar_lea.sflag [#allocation4], 1
    %15 = vsyncpa %s14, 0
    %16 = vsyncpa [#allocation7], 0
    %17 = vsyncpa [#allocation10], 0
    %18 = vsyncpa [#allocation13], 0
    %19 = vsyncpa [#allocation5], 0
    loop: start=0, step=1, limit=5
    $region2: #{hybrid_vit_forward.1} parent=1 // loop_pre_header
      _
    $region3: #{hybrid_vit_forward.1} parent=1 // loop_header
      %s21 = sphi 0, %s25
      %p22 = scmp.ge.s32.totalorder %s21, 5
      %s31 = sphi 0, %s33
      %s34 = sphi 0, %s31
      %s35 = sphi 0, %s34
      %s51 = sphi 0, %s35
      %s57 = sphi 0, %s59
      %s60 = sphi 0, %s57
      %s61 = sphi 0, %s60
      %s77 = sphi 0, %s61
      %s81 = sphi 0, %s81
      %s83 = sphi 0, %s81
      %s84 = sphi 0, %s83
      %s98 = sphi 0, %s84
      %s102 = sphi 0, %s102
      %s104 = sphi 0, %s102
      %s105 = sphi 0, %s104
      %s119 = sphi 0, %s105
      %s123 = sphi 0, %s123
      %s125 = sphi 0, %s123
      %s126 = sphi 0, %s125
      %s140 = sphi 0, %s126
      %s144 = sphi 0, %s144
      %s146 = sphi 0, %s144
      %s147 = sphi 0, %s146
      %s161 = sphi 0, %s147
      %s165 = sphi 0, %s165
      %s167 = sphi 0, %s165
      %s168 = sphi 0, %s167
      %s182 = sphi 0, %s168
      %s186 = sphi 0, %s186
      %s188 = sphi 0, %s186
      %s189 = sphi 0, %s188
      %s203 = sphi 0, %s189
      %s207 = sphi 0, %s207
      %s209 = sphi 0, %s207
      %s210 = sphi 0, %s209
      %s224 = sphi 0, %s210
    $region4: #{hybrid_vit_forward.1} parent=1 // loop_header_branch
      %24 = sbr.rel (%p22) target = $region8
    $region5: #{hybrid_vit_forward.1} parent=1 // loop_body
      %s26 = ssub.s32 %s21, 1
      %s27 = ssub.s32 %s21, 2
      %s28 = sadd.s32 %s21, 1
      %s29 = ssub.s32 %s21, %s28
      %p30 = scmp.eq.s32.totalorder %s29, 0
      %s32 = sadd.s32 %s31, 1
      %s33 = scalar_select %p30, %s31, %s32
      %p36 = pneg %p30
      %p37 = scmp.eq.s32.totalorder %s21, 2
      %p38 = por %p36, %p37
      %p39 = scmp.ne.s32.totalorder %s31, %s34
      %p40 = scmp.eq.s32.totalorder %s21, 0
      %p41 = por %p39, %p40
      %p42 = scmp.ne.s32.totalorder %s31, %s34
      %p43 = scmp.eq.s32.totalorder %s26, 2
      %p44 = por %p42, %p43
      %p45 = scmp.ne.s32.totalorder %s34, %s35
      %p46 = scmp.eq.s32.totalorder %s26, 0
      %p47 = por %p45, %p46
      %p48 = scmp.ne.s32.totalorder %s34, %s35
      %p49 = scmp.eq.s32.totalorder %s27, 2
      %p50 = por %p48, %p49
      %p52 = scmp.ne.s32.totalorder %s35, %s51
      %p53 = scmp.eq.s32.totalorder %s27, 0
      %p54 = por %p52, %p53
      %s55 = ssub.s32 %s21, %s28
      %p56 = scmp.eq.s32.totalorder %s55, 0
      %s58 = sadd.s32 %s57, 1
      %s59 = scalar_select %p56, %s57, %s58
      %p62 = pneg %p56
      %p63 = scmp.eq.s32.totalorder %s21, 2
      %p64 = por %p62, %p63
      %p65 = scmp.ne.s32.totalorder %s57, %s60
      %p66 = scmp.eq.s32.totalorder %s21, 0
      %p67 = por %p65, %p66
      %p68 = scmp.ne.s32.totalorder %s57, %s60
      %p69 = scmp.eq.s32.totalorder %s26, 2
      %p70 = por %p68, %p69
      %p71 = scmp.ne.s32.totalorder %s60, %s61
      %p72 = scmp.eq.s32.totalorder %s26, 0
      %p73 = por %p71, %p72
      %p74 = scmp.ne.s32.totalorder %s60, %s61
      %p75 = scmp.eq.s32.totalorder %s27, 2
      %p76 = por %p74, %p75
      %p78 = scmp.ne.s32.totalorder %s61, %s77
      %p79 = scmp.eq.s32.totalorder %s27, 0
      %p80 = por %p78, %p79
      %s82 = sadd.s32 %s81, 1
      %p85 = scmp.eq.s32.totalorder %s21, 2
      %p86 = scmp.ne.s32.totalorder %s81, %s83
      %p87 = scmp.eq.s32.totalorder %s21, 0
      %p88 = por %p86, %p87
      %p89 = scmp.ne.s32.totalorder %s81, %s83
      %p90 = scmp.eq.s32.totalorder %s26, 2
      %p91 = por %p89, %p90
      %p92 = scmp.ne.s32.totalorder %s83, %s84
      %p93 = scmp.eq.s32.totalorder %s26, 0
      %p94 = por %p92, %p93
      %p95 = scmp.ne.s32.totalorder %s83, %s84
      %p96 = scmp.eq.s32.totalorder %s27, 2
      %p97 = por %p95, %p96
      %p99 = scmp.ne.s32.totalorder %s84, %s98
      %p100 = scmp.eq.s32.totalorder %s27, 0
      %p101 = por %p99, %p100
      %s103 = sadd.s32 %s102, 1
      %p106 = scmp.eq.s32.totalorder %s21, 2
      %p107 = scmp.ne.s32.totalorder %s102, %s104
      %p108 = scmp.eq.s32.totalorder %s21, 0
      %p109 = por %p107, %p108
      %p110 = scmp.ne.s32.totalorder %s102, %s104
      %p111 = scmp.eq.s32.totalorder %s26, 2
      %p112 = por %p110, %p111
      %p113 = scmp.ne.s32.totalorder %s104, %s105
      %p114 = scmp.eq.s32.totalorder %s26, 0
      %p115 = por %p113, %p114
      %p116 = scmp.ne.s32.totalorder %s104, %s105
      %p117 = scmp.eq.s32.totalorder %s27, 2
      %p118 = por %p116, %p117
      %p120 = scmp.ne.s32.totalorder %s105, %s119
      %p121 = scmp.eq.s32.totalorder %s27, 0
      %p122 = por %p120, %p121
      %s124 = sadd.s32 %s123, 1
      %p127 = scmp.eq.s32.totalorder %s21, 2
      %p128 = scmp.ne.s32.totalorder %s123, %s125
      %p129 = scmp.eq.s32.totalorder %s21, 0
      %p130 = por %p128, %p129
      %p131 = scmp.ne.s32.totalorder %s123, %s125
      %p132 = scmp.eq.s32.totalorder %s26, 2
      %p133 = por %p131, %p132
      %p134 = scmp.ne.s32.totalorder %s125, %s126
      %p135 = scmp.eq.s32.totalorder %s26, 0
      %p136 = por %p134, %p135
      %p137 = scmp.ne.s32.totalorder %s125, %s126
      %p138 = scmp.eq.s32.totalorder %s27, 2
      %p139 = por %p137, %p138
      %p141 = scmp.ne.s32.totalorder %s126, %s140
      %p142 = scmp.eq.s32.totalorder %s27, 0
      %p143 = por %p141, %p142
      %s145 = sadd.s32 %s144, 1
      %p148 = scmp.eq.s32.totalorder %s21, 2
      %p149 = scmp.ne.s32.totalorder %s144, %s146
      %p150 = scmp.eq.s32.totalorder %s21, 0
      %p151 = por %p149, %p150
      %p152 = scmp.ne.s32.totalorder %s144, %s146
      %p153 = scmp.eq.s32.totalorder %s26, 2
      %p154 = por %p152, %p153
      %p155 = scmp.ne.s32.totalorder %s146, %s147
      %p156 = scmp.eq.s32.totalorder %s26, 0
      %p157 = por %p155, %p156
      %p158 = scmp.ne.s32.totalorder %s146, %s147
      %p159 = scmp.eq.s32.totalorder %s27, 2
      %p160 = por %p158, %p159
      %p162 = scmp.ne.s32.totalorder %s147, %s161
      %p163 = scmp.eq.s32.totalorder %s27, 0
      %p164 = por %p162, %p163
      %s166 = sadd.s32 %s165, 1
      %p169 = scmp.eq.s32.totalorder %s21, 2
      %p170 = scmp.ne.s32.totalorder %s165, %s167
      %p171 = scmp.eq.s32.totalorder %s21, 0
      %p172 = por %p170, %p171
      %p173 = scmp.ne.s32.totalorder %s165, %s167
      %p174 = scmp.eq.s32.totalorder %s26, 2
      %p175 = por %p173, %p174
      %p176 = scmp.ne.s32.totalorder %s167, %s168
      %p177 = scmp.eq.s32.totalorder %s26, 0
      %p178 = por %p176, %p177
      %p179 = scmp.ne.s32.totalorder %s167, %s168
      %p180 = scmp.eq.s32.totalorder %s27, 2
      %p181 = por %p179, %p180
      %p183 = scmp.ne.s32.totalorder %s168, %s182
      %p184 = scmp.eq.s32.totalorder %s27, 0
      %p185 = por %p183, %p184
      %s187 = sadd.s32 %s186, 1
      %p190 = scmp.eq.s32.totalorder %s21, 2
      %p191 = scmp.ne.s32.totalorder %s186, %s188
      %p192 = scmp.eq.s32.totalorder %s21, 0
      %p193 = por %p191, %p192
      %p194 = scmp.ne.s32.totalorder %s186, %s188
      %p195 = scmp.eq.s32.totalorder %s26, 2
      %p196 = por %p194, %p195
      %p197 = scmp.ne.s32.totalorder %s188, %s189
      %p198 = scmp.eq.s32.totalorder %s26, 0
      %p199 = por %p197, %p198
      %p200 = scmp.ne.s32.totalorder %s188, %s189
      %p201 = scmp.eq.s32.totalorder %s27, 2
      %p202 = por %p200, %p201
      %p204 = scmp.ne.s32.totalorder %s189, %s203
      %p205 = scmp.eq.s32.totalorder %s27, 0
      %p206 = por %p204, %p205
      %s208 = sadd.s32 %s207, 1
      %p211 = scmp.eq.s32.totalorder %s21, 2
      %p212 = scmp.ne.s32.totalorder %s207, %s209
      %p213 = scmp.eq.s32.totalorder %s21, 0
      %p214 = por %p212, %p213
      %p215 = scmp.ne.s32.totalorder %s207, %s209
      %p216 = scmp.eq.s32.totalorder %s26, 2
      %p217 = por %p215, %p216
      %p218 = scmp.ne.s32.totalorder %s209, %s210
      %p219 = scmp.eq.s32.totalorder %s26, 0
      %p220 = por %p218, %p219
      %p221 = scmp.ne.s32.totalorder %s209, %s210
      %p222 = scmp.eq.s32.totalorder %s27, 2
      %p223 = por %p221, %p222
      %p225 = scmp.ne.s32.totalorder %s210, %s224
      %p226 = scmp.eq.s32.totalorder %s27, 0
      %p227 = por %p225, %p226
      %p228 = scmp.le.s32.totalorder 1, %s21
      %p229 = scmp.lt.s32.totalorder %s21, 4
      %p230 = pnand %p228, %p229
      %p231 = pneg %p230
      // Predicated region
      $region9: #{hybrid_vit_forward.1} parent=5 // pred_check
        _
      $region10: #{hybrid_vit_forward.1} parent=5 // pred_check_branch
        %233 = sbr.rel (%p230) target = $region12
      $region11: #{hybrid_vit_forward.1} parent=5 // pred_region
        %s234 = ssub.s32 %s21, 1
        // Predicated region
        $region13: #{hybrid_vit_forward.1} parent=11 // pred_check
          %p235 = pneg %p94
        $region14: #{hybrid_vit_forward.1} parent=11 // pred_check_branch
          %237 = sbr.rel (%p235) target = $region16
        $region15: #{hybrid_vit_forward.1} parent=11 // pred_region
          %s239 = ssub.s32 256, 256
          %240 = vsyncadd [#allocation7], %s239
          %s242 = sshll.u32 [#allocation6], 4
          %s243 = int_to_ptr.vmem [resolvable:$true] %s242
          %245 = dma.hbm_to_vmem [thread:$0]  %s2, 256, %s243, [#allocation7]
        $region16: #{hybrid_vit_forward.1} parent=11 // pred_fallthru
          _
        // Predicated region
        $region17: #{hybrid_vit_forward.1} parent=11 // pred_check
          %p246 = pneg %p115
        $region18: #{hybrid_vit_forward.1} parent=11 // pred_check_branch
          %248 = sbr.rel (%p246) target = $region20
        $region19: #{hybrid_vit_forward.1} parent=11 // pred_region
          %s250 = ssub.s32 128, 128
          %251 = vsyncadd [#allocation7], %s250
          %s253 = sshll.u32 [#allocation8], 4
          %s254 = int_to_ptr.vmem [resolvable:$true] %s253
          %256 = dma.hbm_to_vmem [thread:$0]  %s3, 128, %s254, [#allocation7]
        $region20: #{hybrid_vit_forward.1} parent=11 // pred_fallthru
          _
        // Predicated region
        $region21: #{hybrid_vit_forward.1} parent=11 // pred_check
          %p257 = pneg %p136
        $region22: #{hybrid_vit_forward.1} parent=11 // pred_check_branch
          %259 = sbr.rel (%p257) target = $region24
        $region23: #{hybrid_vit_forward.1} parent=11 // pred_region
          %s261 = ssub.s32 128, 128
          %262 = vsyncadd [#allocation10], %s261
          %s264 = sshll.u32 [#allocation9], 4
          %s265 = int_to_ptr.vmem [resolvable:$true] %s264
          %267 = dma.hbm_to_vmem [thread:$0]  %s4, 128, %s265, [#allocation10]
        $region24: #{hybrid_vit_forward.1} parent=11 // pred_fallthru
          _
        // Predicated region
        $region25: #{hybrid_vit_forward.1} parent=11 // pred_check
          %p268 = pneg %p157
        $region26: #{hybrid_vit_forward.1} parent=11 // pred_check_branch
          %270 = sbr.rel (%p268) target = $region28
        $region27: #{hybrid_vit_forward.1} parent=11 // pred_region
          %s272 = ssub.s32 32, 32
          %273 = vsyncadd [#allocation10], %s272
          %s275 = sshll.u32 [#allocation11], 4
          %s276 = int_to_ptr.vmem [resolvable:$true] %s275
          %278 = dma.hbm_to_vmem [thread:$0]  %s5, 32, %s276, [#allocation10]
        $region28: #{hybrid_vit_forward.1} parent=11 // pred_fallthru
          _
        // Predicated region
        $region29: #{hybrid_vit_forward.1} parent=11 // pred_check
          %p279 = pneg %p178
        $region30: #{hybrid_vit_forward.1} parent=11 // pred_check_branch
          %281 = sbr.rel (%p279) target = $region32
        $region31: #{hybrid_vit_forward.1} parent=11 // pred_region
          %s283 = ssub.s32 32768, 32768
          %284 = vsyncadd [#allocation13], %s283
          %s285 = sshll.u32 [#allocation12], 4
          %s286 = int_to_ptr.vmem [resolvable:$true] %s285
          %291 = dma.hbm_to_vmem [thread:$0]  %s6, 32768, %s286, [#allocation13], 128, 128, 8
        $region32: #{hybrid_vit_forward.1} parent=11 // pred_fallthru
          _
        // Predicated region
        $region33: #{hybrid_vit_forward.1} parent=11 // pred_check
          %p292 = pneg %p199
        $region34: #{hybrid_vit_forward.1} parent=11 // pred_check_branch
          %294 = sbr.rel (%p292) target = $region36
        $region35: #{hybrid_vit_forward.1} parent=11 // pred_region
          %s296 = ssub.s32 16, 16
          %297 = vsyncadd [#allocation13], %s296
          %s299 = sshll.u32 [#allocation14], 4
          %s300 = int_to_ptr.vmem [resolvable:$true] %s299
          %302 = dma.hbm_to_vmem [thread:$0]  %s7, 16, %s300, [#allocation13]
        $region36: #{hybrid_vit_forward.1} parent=11 // pred_fallthru
          _
      $region12: #{hybrid_vit_forward.1} parent=5 // pred_fallthru
        _
      %p303 = scmp.lt.s32.totalorder %s21, 3
      // Predicated region
      $region37: #{hybrid_vit_forward.1} parent=5 // pred_check
        %p304 = pneg %p303
      $region38: #{hybrid_vit_forward.1} parent=5 // pred_check_branch
        %306 = sbr.rel (%p304) target = $region40
      $region39: #{hybrid_vit_forward.1} parent=5 // pred_region
        // Predicated region
        $region41: #{hybrid_vit_forward.1} parent=39 // pred_check
          %p307 = pneg %p41
        $region42: #{hybrid_vit_forward.1} parent=39 // pred_check_branch
          %309 = sbr.rel (%p307) target = $region44
        $region43: #{hybrid_vit_forward.1} parent=39 // pred_region
          %s310 = smul.u32 8, %s21
          %p311 = scmp.lt.s32.totalorder %s310, 23
          %s312 = scalar_select %p311, %s310, 23
          %s313 = smul.addr %s312, 4
          %s314 = scalar_lea.vmem %s0, %s313
          %s315 = smul.u32 8, %s21
        $region44: #{hybrid_vit_forward.1} parent=39 // pred_fallthru
          _
        // Predicated region
        $region45: #{hybrid_vit_forward.1} parent=39 // pred_check
          %p316 = pneg %p67
        $region46: #{hybrid_vit_forward.1} parent=39 // pred_check_branch
          %318 = sbr.rel (%p316) target = $region48
        $region47: #{hybrid_vit_forward.1} parent=39 // pred_region
          %s319 = sand.u32 %s57, 1
          %s320 = scalar_lea.sflag [#allocation4], %s319
          %s321 = sand.u32 %s57, 1
          %s322 = smul.addr %s321, 8192
          %s323 = scalar_lea.vmem [#allocation3], %s322
          %s324 = smul.u32 128, %s21
          %s326 = ssub.s32 131072, 131072
          %327 = vsyncadd %s320, %s326
          %s328 = smul.addr %s324, 16
          %s329 = smul.addr %s328, 64
          %s330 = scalar_lea.hbm %s1, %s329
          %s331 = sshll.u32 %s323, 4
          %s332 = int_to_ptr.vmem [resolvable:$true] %s331
          %337 = dma.hbm_to_vmem [thread:$0]  %s330, 131072, %s332, %s320, 1024, 1024, 64
        $region48: #{hybrid_vit_forward.1} parent=39 // pred_fallthru
          _
      $region40: #{hybrid_vit_forward.1} parent=5 // pred_fallthru
        _
      %p338 = scmp.le.s32.totalorder 1, %s21
      %p339 = scmp.lt.s32.totalorder %s21, 4
      %p340 = pnand %p338, %p339
      %p341 = pneg %p340
      // Predicated region
      $region49: #{hybrid_vit_forward.1} parent=5 // pred_check
        _
      $region50: #{hybrid_vit_forward.1} parent=5 // pred_check_branch
        %343 = sbr.rel (%p340) target = $region52
      $region51: #{hybrid_vit_forward.1} parent=5 // pred_region
        %s344 = ssub.s32 %s21, 1
        %s345 = sand.u32 %s60, 1
        %s346 = scalar_lea.sflag [#allocation4], %s345
        %s347 = sand.u32 %s60, 1
        %s348 = smul.addr %s347, 8192
        %s349 = scalar_lea.vmem [#allocation3], %s348
        // Predicated region
        $region53: #{hybrid_vit_forward.1} parent=51 // pred_check
          %p350 = pneg %p73
        $region54: #{hybrid_vit_forward.1} parent=51 // pred_check_branch
          %352 = sbr.rel (%p350) target = $region56
        $region55: #{hybrid_vit_forward.1} parent=51 // pred_region
          %353 = dma.done %s346, 131072
        $region56: #{hybrid_vit_forward.1} parent=51 // pred_fallthru
          _
        // Predicated region
        $region57: #{hybrid_vit_forward.1} parent=51 // pred_check
          %p354 = pneg %p94
        $region58: #{hybrid_vit_forward.1} parent=51 // pred_check_branch
          %356 = sbr.rel (%p354) target = $region60
        $region59: #{hybrid_vit_forward.1} parent=51 // pred_region
          %357 = dma.done [#allocation7], 256
        $region60: #{hybrid_vit_forward.1} parent=51 // pred_fallthru
          _
        // Predicated region
        $region61: #{hybrid_vit_forward.1} parent=51 // pred_check
          %p358 = pneg %p115
        $region62: #{hybrid_vit_forward.1} parent=51 // pred_check_branch
          %360 = sbr.rel (%p358) target = $region64
        $region63: #{hybrid_vit_forward.1} parent=51 // pred_region
          %361 = dma.done [#allocation7], 128
        $region64: #{hybrid_vit_forward.1} parent=51 // pred_fallthru
          _
        // Predicated region
        $region65: #{hybrid_vit_forward.1} parent=51 // pred_check
          %p362 = pneg %p136
        $region66: #{hybrid_vit_forward.1} parent=51 // pred_check_branch
          %364 = sbr.rel (%p362) target = $region68
        $region67: #{hybrid_vit_forward.1} parent=51 // pred_region
          %365 = dma.done [#allocation10], 128
        $region68: #{hybrid_vit_forward.1} parent=51 // pred_fallthru
          _
        // Predicated region
        $region69: #{hybrid_vit_forward.1} parent=51 // pred_check
          %p366 = pneg %p157
        $region70: #{hybrid_vit_forward.1} parent=51 // pred_check_branch
          %368 = sbr.rel (%p366) target = $region72
        $region71: #{hybrid_vit_forward.1} parent=51 // pred_region
          %369 = dma.done [#allocation10], 32
        $region72: #{hybrid_vit_forward.1} parent=51 // pred_fallthru
          _
        // Predicated region
        $region73: #{hybrid_vit_forward.1} parent=51 // pred_check
          %p370 = pneg %p178
        $region74: #{hybrid_vit_forward.1} parent=51 // pred_check_branch
          %372 = sbr.rel (%p370) target = $region76
        $region75: #{hybrid_vit_forward.1} parent=51 // pred_region
          %373 = dma.done [#allocation13], 32768
        $region76: #{hybrid_vit_forward.1} parent=51 // pred_fallthru
          _
        // Predicated region
        $region77: #{hybrid_vit_forward.1} parent=51 // pred_check
          %p374 = pneg %p199
        $region78: #{hybrid_vit_forward.1} parent=51 // pred_check_branch
          %376 = sbr.rel (%p374) target = $region80
        $region79: #{hybrid_vit_forward.1} parent=51 // pred_region
          %377 = dma.done [#allocation13], 16
        $region80: #{hybrid_vit_forward.1} parent=51 // pred_fallthru
          _
        %s378 = smul.u32 8, %s26
        %p379 = scmp.lt.s32.totalorder %s378, 23
        %s380 = scalar_select %p379, %s378, 23
        %s381 = smul.addr %s380, 4
        %s382 = scalar_lea.vmem %s0, %s381
        %p383 = pneg %p47
        %p384 = pneg %p44
        %s385 = sand.u32 %s60, 1
        %s386 = scalar_lea.sflag [#allocation4], %s385
        %s387 = sand.u32 %s60, 1
        %s388 = smul.addr %s387, 8192
        %s389 = scalar_lea.vmem [#allocation3], %s388
        %p390 = pneg %p73
        %p391 = pneg %p70
        %p392 = pneg %p94
        %p393 = pneg %p91
        %p394 = pneg %p115
        %p395 = pneg %p112
        %p396 = pneg %p136
        %p397 = pneg %p133
        %p398 = pneg %p157
        %p399 = pneg %p154
        %p400 = pneg %p178
        %p401 = pneg %p175
        %p402 = pneg %p199
        %p403 = pneg %p196
        %p404 = pneg %p220
        %p405 = pneg %p217
        %s406 = smul.u32 8, %s26
        %p407 = scmp.lt.s32.totalorder %s406, 23
        %s408 = scalar_select %p407, %s406, 23
        %s409 = smul.addr %s408, 4
        %s410 = scalar_lea.vmem %s0, %s409
        %s411 = smul.u32 8, %s26
        %s412 = smul.u32 128, %s26
        %p413 = scmp.eq.s32.totalorder %s26, 0
        // Predicated region
        $region81: #{hybrid_vit_forward.1} parent=51 // pred_check
          %p414 = pneg %p413
        $region82: #{hybrid_vit_forward.1} parent=51 // pred_check_branch
          %416 = sbr.rel (%p414) target = $region84
        $region83: #{hybrid_vit_forward.1} parent=51 // pred_region
          %417 = vst [vmem:[#allocation2] sm:$0xff] 0.0
          %418 = vst [vmem:[#allocation2 + $0x8] sm:$0xff] 0.0
          %419 = vst [vmem:[#allocation2 + $0x10] sm:$0xff] 0.0
          %420 = vst [vmem:[#allocation2 + $0x18] sm:$0xff] 0.0
          %421 = vst [vmem:[#allocation2 + $0x20] sm:$0xff] 0.0
          %422 = vst [vmem:[#allocation2 + $0x28] sm:$0xff] 0.0
          %423 = vst [vmem:[#allocation2 + $0x30] sm:$0xff] 0.0
          %424 = vst [vmem:[#allocation2 + $0x38] sm:$0xff] 0.0
          %425 = vst [vmem:[#allocation2 + $0x40] sm:$0xff] 0.0
          %426 = vst [vmem:[#allocation2 + $0x48] sm:$0xff] 0.0
          %427 = vst [vmem:[#allocation2 + $0x50] sm:$0xff] 0.0
          %428 = vst [vmem:[#allocation2 + $0x58] sm:$0xff] 0.0
          %429 = vst [vmem:[#allocation2 + $0x60] sm:$0xff] 0.0
          %430 = vst [vmem:[#allocation2 + $0x68] sm:$0xff] 0.0
          %431 = vst [vmem:[#allocation2 + $0x70] sm:$0xff] 0.0
          %432 = vst [vmem:[#allocation2 + $0x78] sm:$0xff] 0.0
        $region84: #{hybrid_vit_forward.1} parent=51 // pred_fallthru
          _
        %v433 = vld [vmem:[#allocation2] sm:$0xff]
        %v434 = vld [vmem:[#allocation2 + $0x8] sm:$0xff]
        %v435 = vld [vmem:[#allocation2 + $0x10] sm:$0xff]
        %v436 = vld [vmem:[#allocation2 + $0x18] sm:$0xff]
        %v437 = vld [vmem:[#allocation2 + $0x20] sm:$0xff]
        %v438 = vld [vmem:[#allocation2 + $0x28] sm:$0xff]
        %v439 = vld [vmem:[#allocation2 + $0x30] sm:$0xff]
        %v440 = vld [vmem:[#allocation2 + $0x38] sm:$0xff]
        %v441 = vld [vmem:[#allocation2 + $0x40] sm:$0xff]
        %v442 = vld [vmem:[#allocation2 + $0x48] sm:$0xff]
        %v443 = vld [vmem:[#allocation2 + $0x50] sm:$0xff]
        %v444 = vld [vmem:[#allocation2 + $0x58] sm:$0xff]
        %v445 = vld [vmem:[#allocation2 + $0x60] sm:$0xff]
        %v446 = vld [vmem:[#allocation2 + $0x68] sm:$0xff]
        %v447 = vld [vmem:[#allocation2 + $0x70] sm:$0xff]
        %v448 = vld [vmem:[#allocation2 + $0x78] sm:$0xff]
        %v449 = vld [vmem:[%s410] sm:$0xff]
        %v450 = vld [vmem:[%s410 + $0x8] sm:$0xff]
        %v451 = vld [vmem:[%s410 + $0x10] sm:$0xff]
        %v452 = vld [vmem:[%s410 + $0x18] sm:$0xff]
        %v453 = vld [vmem:[%s349] sm:$0xff]
        %v454 = vld [vmem:[%s349 + $0x8] sm:$0xff]
        %v455 = vld [vmem:[%s349 + $0x10] sm:$0xff]
        %v456 = vld [vmem:[%s349 + $0x18] sm:$0xff]
        %v457 = vld [vmem:[%s349 + $0x20] sm:$0xff]
        %v458 = vld [vmem:[%s349 + $0x28] sm:$0xff]
        %v459 = vld [vmem:[%s349 + $0x30] sm:$0xff]
        %v460 = vld [vmem:[%s349 + $0x38] sm:$0xff]
        %v461 = vld [vmem:[%s349 + $0x40] sm:$0xff]
        %v462 = vld [vmem:[%s349 + $0x48] sm:$0xff]
        %v463 = vld [vmem:[%s349 + $0x50] sm:$0xff]
        %v464 = vld [vmem:[%s349 + $0x58] sm:$0xff]
        %v465 = vld [vmem:[%s349 + $0x60] sm:$0xff]
        %v466 = vld [vmem:[%s349 + $0x68] sm:$0xff]
        %v467 = vld [vmem:[%s349 + $0x70] sm:$0xff]
        %v468 = vld [vmem:[%s349 + $0x78] sm:$0xff]
        %v469 = vld [vmem:[%s349 + $0x80] sm:$0xff]
        %v470 = vld [vmem:[%s349 + $0x88] sm:$0xff]
        %v471 = vld [vmem:[%s349 + $0x90] sm:$0xff]
        %v472 = vld [vmem:[%s349 + $0x98] sm:$0xff]
        %v473 = vld [vmem:[%s349 + $0xa0] sm:$0xff]
        %v474 = vld [vmem:[%s349 + $0xa8] sm:$0xff]
        %v475 = vld [vmem:[%s349 + $0xb0] sm:$0xff]
        %v476 = vld [vmem:[%s349 + $0xb8] sm:$0xff]
        %v477 = vld [vmem:[%s349 + $0xc0] sm:$0xff]
        %v478 = vld [vmem:[%s349 + $0xc8] sm:$0xff]
        %v479 = vld [vmem:[%s349 + $0xd0] sm:$0xff]
        %v480 = vld [vmem:[%s349 + $0xd8] sm:$0xff]
        %v481 = vld [vmem:[%s349 + $0xe0] sm:$0xff]
        %v482 = vld [vmem:[%s349 + $0xe8] sm:$0xff]
        %v483 = vld [vmem:[%s349 + $0xf0] sm:$0xff]
        %v484 = vld [vmem:[%s349 + $0xf8] sm:$0xff]
        %v485 = vld [vmem:[%s349 + $0x100] sm:$0xff]
        %v486 = vld [vmem:[%s349 + $0x108] sm:$0xff]
        %v487 = vld [vmem:[%s349 + $0x110] sm:$0xff]
        %v488 = vld [vmem:[%s349 + $0x118] sm:$0xff]
        %v489 = vld [vmem:[%s349 + $0x120] sm:$0xff]
        %v490 = vld [vmem:[%s349 + $0x128] sm:$0xff]
        %v491 = vld [vmem:[%s349 + $0x130] sm:$0xff]
        %v492 = vld [vmem:[%s349 + $0x138] sm:$0xff]
        %v493 = vld [vmem:[%s349 + $0x140] sm:$0xff]
        %v494 = vld [vmem:[%s349 + $0x148] sm:$0xff]
        %v495 = vld [vmem:[%s349 + $0x150] sm:$0xff]
        %v496 = vld [vmem:[%s349 + $0x158] sm:$0xff]
        %v497 = vld [vmem:[%s349 + $0x160] sm:$0xff]
        %v498 = vld [vmem:[%s349 + $0x168] sm:$0xff]
        %v499 = vld [vmem:[%s349 + $0x170] sm:$0xff]
        %v500 = vld [vmem:[%s349 + $0x178] sm:$0xff]
        %v501 = vld [vmem:[%s349 + $0x180] sm:$0xff]
        %v502 = vld [vmem:[%s349 + $0x188] sm:$0xff]
        %v503 = vld [vmem:[%s349 + $0x190] sm:$0xff]
        %v504 = vld [vmem:[%s349 + $0x198] sm:$0xff]
        %v505 = vld [vmem:[%s349 + $0x1a0] sm:$0xff]
        %v506 = vld [vmem:[%s349 + $0x1a8] sm:$0xff]
        %v507 = vld [vmem:[%s349 + $0x1b0] sm:$0xff]
        %v508 = vld [vmem:[%s349 + $0x1b8] sm:$0xff]
        %v509 = vld [vmem:[%s349 + $0x1c0] sm:$0xff]
        %v510 = vld [vmem:[%s349 + $0x1c8] sm:$0xff]
        %v511 = vld [vmem:[%s349 + $0x1d0] sm:$0xff]
        %v512 = vld [vmem:[%s349 + $0x1d8] sm:$0xff]
        %v513 = vld [vmem:[%s349 + $0x1e0] sm:$0xff]
        %v514 = vld [vmem:[%s349 + $0x1e8] sm:$0xff]
        %v515 = vld [vmem:[%s349 + $0x1f0] sm:$0xff]
        %v516 = vld [vmem:[%s349 + $0x1f8] sm:$0xff]
        %v517 = vld [vmem:[%s349 + $0x200] sm:$0xff]
        %v518 = vld [vmem:[%s349 + $0x208] sm:$0xff]
        %v519 = vld [vmem:[%s349 + $0x210] sm:$0xff]
        %v520 = vld [vmem:[%s349 + $0x218] sm:$0xff]
        %v521 = vld [vmem:[%s349 + $0x220] sm:$0xff]
        %v522 = vld [vmem:[%s349 + $0x228] sm:$0xff]
        %v523 = vld [vmem:[%s349 + $0x230] sm:$0xff]
        %v524 = vld [vmem:[%s349 + $0x238] sm:$0xff]
        %v525 = vld [vmem:[%s349 + $0x240] sm:$0xff]
        %v526 = vld [vmem:[%s349 + $0x248] sm:$0xff]
        %v527 = vld [vmem:[%s349 + $0x250] sm:$0xff]
        %v528 = vld [vmem:[%s349 + $0x258] sm:$0xff]
        %v529 = vld [vmem:[%s349 + $0x260] sm:$0xff]
        %v530 = vld [vmem:[%s349 + $0x268] sm:$0xff]
        %v531 = vld [vmem:[%s349 + $0x270] sm:$0xff]
        %v532 = vld [vmem:[%s349 + $0x278] sm:$0xff]
        %v533 = vld [vmem:[%s349 + $0x280] sm:$0xff]
        %v534 = vld [vmem:[%s349 + $0x288] sm:$0xff]
        %v535 = vld [vmem:[%s349 + $0x290] sm:$0xff]
        %v536 = vld [vmem:[%s349 + $0x298] sm:$0xff]
        %v537 = vld [vmem:[%s349 + $0x2a0] sm:$0xff]
        %v538 = vld [vmem:[%s349 + $0x2a8] sm:$0xff]
        %v539 = vld [vmem:[%s349 + $0x2b0] sm:$0xff]
        %v540 = vld [vmem:[%s349 + $0x2b8] sm:$0xff]
        %v541 = vld [vmem:[%s349 + $0x2c0] sm:$0xff]
        %v542 = vld [vmem:[%s349 + $0x2c8] sm:$0xff]
        %v543 = vld [vmem:[%s349 + $0x2d0] sm:$0xff]
        %v544 = vld [vmem:[%s349 + $0x2d8] sm:$0xff]
        %v545 = vld [vmem:[%s349 + $0x2e0] sm:$0xff]
        %v546 = vld [vmem:[%s349 + $0x2e8] sm:$0xff]
        %v547 = vld [vmem:[%s349 + $0x2f0] sm:$0xff]
        %v548 = vld [vmem:[%s349 + $0x2f8] sm:$0xff]
        %v549 = vld [vmem:[%s349 + $0x300] sm:$0xff]
        %v550 = vld [vmem:[%s349 + $0x308] sm:$0xff]
        %v551 = vld [vmem:[%s349 + $0x310] sm:$0xff]
        %v552 = vld [vmem:[%s349 + $0x318] sm:$0xff]
        %v553 = vld [vmem:[%s349 + $0x320] sm:$0xff]
        %v554 = vld [vmem:[%s349 + $0x328] sm:$0xff]
        %v555 = vld [vmem:[%s349 + $0x330] sm:$0xff]
        %v556 = vld [vmem:[%s349 + $0x338] sm:$0xff]
        %v557 = vld [vmem:[%s349 + $0x340] sm:$0xff]
        %v558 = vld [vmem:[%s349 + $0x348] sm:$0xff]
        %v559 = vld [vmem:[%s349 + $0x350] sm:$0xff]
        %v560 = vld [vmem:[%s349 + $0x358] sm:$0xff]
        %v561 = vld [vmem:[%s349 + $0x360] sm:$0xff]
        %v562 = vld [vmem:[%s349 + $0x368] sm:$0xff]
        %v563 = vld [vmem:[%s349 + $0x370] sm:$0xff]
        %v564 = vld [vmem:[%s349 + $0x378] sm:$0xff]
        %v565 = vld [vmem:[%s349 + $0x380] sm:$0xff]
        %v566 = vld [vmem:[%s349 + $0x388] sm:$0xff]
        %v567 = vld [vmem:[%s349 + $0x390] sm:$0xff]
        %v568 = vld [vmem:[%s349 + $0x398] sm:$0xff]
        %v569 = vld [vmem:[%s349 + $0x3a0] sm:$0xff]
        %v570 = vld [vmem:[%s349 + $0x3a8] sm:$0xff]
        %v571 = vld [vmem:[%s349 + $0x3b0] sm:$0xff]
        %v572 = vld [vmem:[%s349 + $0x3b8] sm:$0xff]
        %v573 = vld [vmem:[%s349 + $0x3c0] sm:$0xff]
        %v574 = vld [vmem:[%s349 + $0x3c8] sm:$0xff]
        %v575 = vld [vmem:[%s349 + $0x3d0] sm:$0xff]
        %v576 = vld [vmem:[%s349 + $0x3d8] sm:$0xff]
        %v577 = vld [vmem:[%s349 + $0x3e0] sm:$0xff]
        %v578 = vld [vmem:[%s349 + $0x3e8] sm:$0xff]
        %v579 = vld [vmem:[%s349 + $0x3f0] sm:$0xff]
        %v580 = vld [vmem:[%s349 + $0x3f8] sm:$0xff]
        %v581 = vld [vmem:[%s349 + $0x400] sm:$0xff]
        %v582 = vld [vmem:[%s349 + $0x408] sm:$0xff]
        %v583 = vld [vmem:[%s349 + $0x410] sm:$0xff]
        %v584 = vld [vmem:[%s349 + $0x418] sm:$0xff]
        %v585 = vld [vmem:[%s349 + $0x420] sm:$0xff]
        %v586 = vld [vmem:[%s349 + $0x428] sm:$0xff]
        %v587 = vld [vmem:[%s349 + $0x430] sm:$0xff]
        %v588 = vld [vmem:[%s349 + $0x438] sm:$0xff]
        %v589 = vld [vmem:[%s349 + $0x440] sm:$0xff]
        %v590 = vld [vmem:[%s349 + $0x448] sm:$0xff]
        %v591 = vld [vmem:[%s349 + $0x450] sm:$0xff]
        %v592 = vld [vmem:[%s349 + $0x458] sm:$0xff]
        %v593 = vld [vmem:[%s349 + $0x460] sm:$0xff]
        %v594 = vld [vmem:[%s349 + $0x468] sm:$0xff]
        %v595 = vld [vmem:[%s349 + $0x470] sm:$0xff]
        %v596 = vld [vmem:[%s349 + $0x478] sm:$0xff]
        %v597 = vld [vmem:[%s349 + $0x480] sm:$0xff]
        %v598 = vld [vmem:[%s349 + $0x488] sm:$0xff]
        %v599 = vld [vmem:[%s349 + $0x490] sm:$0xff]
        %v600 = vld [vmem:[%s349 + $0x498] sm:$0xff]
        %v601 = vld [vmem:[%s349 + $0x4a0] sm:$0xff]
        %v602 = vld [vmem:[%s349 + $0x4a8] sm:$0xff]
        %v603 = vld [vmem:[%s349 + $0x4b0] sm:$0xff]
        %v604 = vld [vmem:[%s349 + $0x4b8] sm:$0xff]
        %v605 = vld [vmem:[%s349 + $0x4c0] sm:$0xff]
        %v606 = vld [vmem:[%s349 + $0x4c8] sm:$0xff]
        %v607 = vld [vmem:[%s349 + $0x4d0] sm:$0xff]
        %v608 = vld [vmem:[%s349 + $0x4d8] sm:$0xff]
        %v609 = vld [vmem:[%s349 + $0x4e0] sm:$0xff]
        %v610 = vld [vmem:[%s349 + $0x4e8] sm:$0xff]
        %v611 = vld [vmem:[%s349 + $0x4f0] sm:$0xff]
        %v612 = vld [vmem:[%s349 + $0x4f8] sm:$0xff]
        %v613 = vld [vmem:[%s349 + $0x500] sm:$0xff]
        %v614 = vld [vmem:[%s349 + $0x508] sm:$0xff]
        %v615 = vld [vmem:[%s349 + $0x510] sm:$0xff]
        %v616 = vld [vmem:[%s349 + $0x518] sm:$0xff]
        %v617 = vld [vmem:[%s349 + $0x520] sm:$0xff]
        %v618 = vld [vmem:[%s349 + $0x528] sm:$0xff]
        %v619 = vld [vmem:[%s349 + $0x530] sm:$0xff]
        %v620 = vld [vmem:[%s349 + $0x538] sm:$0xff]
        %v621 = vld [vmem:[%s349 + $0x540] sm:$0xff]
        %v622 = vld [vmem:[%s349 + $0x548] sm:$0xff]
        %v623 = vld [vmem:[%s349 + $0x550] sm:$0xff]
        %v624 = vld [vmem:[%s349 + $0x558] sm:$0xff]
        %v625 = vld [vmem:[%s349 + $0x560] sm:$0xff]
        %v626 = vld [vmem:[%s349 + $0x568] sm:$0xff]
        %v627 = vld [vmem:[%s349 + $0x570] sm:$0xff]
        %v628 = vld [vmem:[%s349 + $0x578] sm:$0xff]
        %v629 = vld [vmem:[%s349 + $0x580] sm:$0xff]
        %v630 = vld [vmem:[%s349 + $0x588] sm:$0xff]
        %v631 = vld [vmem:[%s349 + $0x590] sm:$0xff]
        %v632 = vld [vmem:[%s349 + $0x598] sm:$0xff]
        %v633 = vld [vmem:[%s349 + $0x5a0] sm:$0xff]
        %v634 = vld [vmem:[%s349 + $0x5a8] sm:$0xff]
        %v635 = vld [vmem:[%s349 + $0x5b0] sm:$0xff]
        %v636 = vld [vmem:[%s349 + $0x5b8] sm:$0xff]
        %v637 = vld [vmem:[%s349 + $0x5c0] sm:$0xff]
        %v638 = vld [vmem:[%s349 + $0x5c8] sm:$0xff]
        %v639 = vld [vmem:[%s349 + $0x5d0] sm:$0xff]
        %v640 = vld [vmem:[%s349 + $0x5d8] sm:$0xff]
        %v641 = vld [vmem:[%s349 + $0x5e0] sm:$0xff]
        %v642 = vld [vmem:[%s349 + $0x5e8] sm:$0xff]
        %v643 = vld [vmem:[%s349 + $0x5f0] sm:$0xff]
        %v644 = vld [vmem:[%s349 + $0x5f8] sm:$0xff]
        %v645 = vld [vmem:[%s349 + $0x600] sm:$0xff]
        %v646 = vld [vmem:[%s349 + $0x608] sm:$0xff]
        %v647 = vld [vmem:[%s349 + $0x610] sm:$0xff]
        %v648 = vld [vmem:[%s349 + $0x618] sm:$0xff]
        %v649 = vld [vmem:[%s349 + $0x620] sm:$0xff]
        %v650 = vld [vmem:[%s349 + $0x628] sm:$0xff]
        %v651 = vld [vmem:[%s349 + $0x630] sm:$0xff]
        %v652 = vld [vmem:[%s349 + $0x638] sm:$0xff]
        %v653 = vld [vmem:[%s349 + $0x640] sm:$0xff]
        %v654 = vld [vmem:[%s349 + $0x648] sm:$0xff]
        %v655 = vld [vmem:[%s349 + $0x650] sm:$0xff]
        %v656 = vld [vmem:[%s349 + $0x658] sm:$0xff]
        %v657 = vld [vmem:[%s349 + $0x660] sm:$0xff]
        %v658 = vld [vmem:[%s349 + $0x668] sm:$0xff]
        %v659 = vld [vmem:[%s349 + $0x670] sm:$0xff]
        %v660 = vld [vmem:[%s349 + $0x678] sm:$0xff]
        %v661 = vld [vmem:[%s349 + $0x680] sm:$0xff]
        %v662 = vld [vmem:[%s349 + $0x688] sm:$0xff]
        %v663 = vld [vmem:[%s349 + $0x690] sm:$0xff]
        %v664 = vld [vmem:[%s349 + $0x698] sm:$0xff]
        %v665 = vld [vmem:[%s349 + $0x6a0] sm:$0xff]
        %v666 = vld [vmem:[%s349 + $0x6a8] sm:$0xff]
        %v667 = vld [vmem:[%s349 + $0x6b0] sm:$0xff]
        %v668 = vld [vmem:[%s349 + $0x6b8] sm:$0xff]
        %v669 = vld [vmem:[%s349 + $0x6c0] sm:$0xff]
        %v670 = vld [vmem:[%s349 + $0x6c8] sm:$0xff]
        %v671 = vld [vmem:[%s349 + $0x6d0] sm:$0xff]
        %v672 = vld [vmem:[%s349 + $0x6d8] sm:$0xff]
        %v673 = vld [vmem:[%s349 + $0x6e0] sm:$0xff]
        %v674 = vld [vmem:[%s349 + $0x6e8] sm:$0xff]
        %v675 = vld [vmem:[%s349 + $0x6f0] sm:$0xff]
        %v676 = vld [vmem:[%s349 + $0x6f8] sm:$0xff]
        %v677 = vld [vmem:[%s349 + $0x700] sm:$0xff]
        %v678 = vld [vmem:[%s349 + $0x708] sm:$0xff]
        %v679 = vld [vmem:[%s349 + $0x710] sm:$0xff]
        %v680 = vld [vmem:[%s349 + $0x718] sm:$0xff]
        %v681 = vld [vmem:[%s349 + $0x720] sm:$0xff]
        %v682 = vld [vmem:[%s349 + $0x728] sm:$0xff]
        %v683 = vld [vmem:[%s349 + $0x730] sm:$0xff]
        %v684 = vld [vmem:[%s349 + $0x738] sm:$0xff]
        %v685 = vld [vmem:[%s349 + $0x740] sm:$0xff]
        %v686 = vld [vmem:[%s349 + $0x748] sm:$0xff]
        %v687 = vld [vmem:[%s349 + $0x750] sm:$0xff]
        %v688 = vld [vmem:[%s349 + $0x758] sm:$0xff]
        %v689 = vld [vmem:[%s349 + $0x760] sm:$0xff]
        %v690 = vld [vmem:[%s349 + $0x768] sm:$0xff]
        %v691 = vld [vmem:[%s349 + $0x770] sm:$0xff]
        %v692 = vld [vmem:[%s349 + $0x778] sm:$0xff]
        %v693 = vld [vmem:[%s349 + $0x780] sm:$0xff]
        %v694 = vld [vmem:[%s349 + $0x788] sm:$0xff]
        %v695 = vld [vmem:[%s349 + $0x790] sm:$0xff]
        %v696 = vld [vmem:[%s349 + $0x798] sm:$0xff]
        %v697 = vld [vmem:[%s349 + $0x7a0] sm:$0xff]
        %v698 = vld [vmem:[%s349 + $0x7a8] sm:$0xff]
        %v699 = vld [vmem:[%s349 + $0x7b0] sm:$0xff]
        %v700 = vld [vmem:[%s349 + $0x7b8] sm:$0xff]
        %v701 = vld [vmem:[%s349 + $0x7c0] sm:$0xff]
        %v702 = vld [vmem:[%s349 + $0x7c8] sm:$0xff]
        %v703 = vld [vmem:[%s349 + $0x7d0] sm:$0xff]
        %v704 = vld [vmem:[%s349 + $0x7d8] sm:$0xff]
        %v705 = vld [vmem:[%s349 + $0x7e0] sm:$0xff]
        %v706 = vld [vmem:[%s349 + $0x7e8] sm:$0xff]
        %v707 = vld [vmem:[%s349 + $0x7f0] sm:$0xff]
        %v708 = vld [vmem:[%s349 + $0x7f8] sm:$0xff]
        %v709 = vld [vmem:[%s349 + $0x800] sm:$0xff]
        %v710 = vld [vmem:[%s349 + $0x808] sm:$0xff]
        %v711 = vld [vmem:[%s349 + $0x810] sm:$0xff]
        %v712 = vld [vmem:[%s349 + $0x818] sm:$0xff]
        %v713 = vld [vmem:[%s349 + $0x820] sm:$0xff]
        %v714 = vld [vmem:[%s349 + $0x828] sm:$0xff]
        %v715 = vld [vmem:[%s349 + $0x830] sm:$0xff]
        %v716 = vld [vmem:[%s349 + $0x838] sm:$0xff]
        %v717 = vld [vmem:[%s349 + $0x840] sm:$0xff]
        %v718 = vld [vmem:[%s349 + $0x848] sm:$0xff]
        %v719 = vld [vmem:[%s349 + $0x850] sm:$0xff]
        %v720 = vld [vmem:[%s349 + $0x858] sm:$0xff]
        %v721 = vld [vmem:[%s349 + $0x860] sm:$0xff]
        %v722 = vld [vmem:[%s349 + $0x868] sm:$0xff]
        %v723 = vld [vmem:[%s349 + $0x870] sm:$0xff]
        %v724 = vld [vmem:[%s349 + $0x878] sm:$0xff]
        %v725 = vld [vmem:[%s349 + $0x880] sm:$0xff]
        %v726 = vld [vmem:[%s349 + $0x888] sm:$0xff]
        %v727 = vld [vmem:[%s349 + $0x890] sm:$0xff]
        %v728 = vld [vmem:[%s349 + $0x898] sm:$0xff]
        %v729 = vld [vmem:[%s349 + $0x8a0] sm:$0xff]
        %v730 = vld [vmem:[%s349 + $0x8a8] sm:$0xff]
        %v731 = vld [vmem:[%s349 + $0x8b0] sm:$0xff]
        %v732 = vld [vmem:[%s349 + $0x8b8] sm:$0xff]
        %v733 = vld [vmem:[%s349 + $0x8c0] sm:$0xff]
        %v734 = vld [vmem:[%s349 + $0x8c8] sm:$0xff]
        %v735 = vld [vmem:[%s349 + $0x8d0] sm:$0xff]
        %v736 = vld [vmem:[%s349 + $0x8d8] sm:$0xff]
        %v737 = vld [vmem:[%s349 + $0x8e0] sm:$0xff]
        %v738 = vld [vmem:[%s349 + $0x8e8] sm:$0xff]
        %v739 = vld [vmem:[%s349 + $0x8f0] sm:$0xff]
        %v740 = vld [vmem:[%s349 + $0x8f8] sm:$0xff]
        %v741 = vld [vmem:[%s349 + $0x900] sm:$0xff]
        %v742 = vld [vmem:[%s349 + $0x908] sm:$0xff]
        %v743 = vld [vmem:[%s349 + $0x910] sm:$0xff]
        %v744 = vld [vmem:[%s349 + $0x918] sm:$0xff]
        %v745 = vld [vmem:[%s349 + $0x920] sm:$0xff]
        %v746 = vld [vmem:[%s349 + $0x928] sm:$0xff]
        %v747 = vld [vmem:[%s349 + $0x930] sm:$0xff]
        %v748 = vld [vmem:[%s349 + $0x938] sm:$0xff]
        %v749 = vld [vmem:[%s349 + $0x940] sm:$0xff]
        %v750 = vld [vmem:[%s349 + $0x948] sm:$0xff]
        %v751 = vld [vmem:[%s349 + $0x950] sm:$0xff]
        %v752 = vld [vmem:[%s349 + $0x958] sm:$0xff]
        %v753 = vld [vmem:[%s349 + $0x960] sm:$0xff]
        %v754 = vld [vmem:[%s349 + $0x968] sm:$0xff]
        %v755 = vld [vmem:[%s349 + $0x970] sm:$0xff]
        %v756 = vld [vmem:[%s349 + $0x978] sm:$0xff]
        %v757 = vld [vmem:[%s349 + $0x980] sm:$0xff]
        %v758 = vld [vmem:[%s349 + $0x988] sm:$0xff]
        %v759 = vld [vmem:[%s349 + $0x990] sm:$0xff]
        %v760 = vld [vmem:[%s349 + $0x998] sm:$0xff]
        %v761 = vld [vmem:[%s349 + $0x9a0] sm:$0xff]
        %v762 = vld [vmem:[%s349 + $0x9a8] sm:$0xff]
        %v763 = vld [vmem:[%s349 + $0x9b0] sm:$0xff]
        %v764 = vld [vmem:[%s349 + $0x9b8] sm:$0xff]
        %v765 = vld [vmem:[%s349 + $0x9c0] sm:$0xff]
        %v766 = vld [vmem:[%s349 + $0x9c8] sm:$0xff]
        %v767 = vld [vmem:[%s349 + $0x9d0] sm:$0xff]
        %v768 = vld [vmem:[%s349 + $0x9d8] sm:$0xff]
        %v769 = vld [vmem:[%s349 + $0x9e0] sm:$0xff]
        %v770 = vld [vmem:[%s349 + $0x9e8] sm:$0xff]
        %v771 = vld [vmem:[%s349 + $0x9f0] sm:$0xff]
        %v772 = vld [vmem:[%s349 + $0x9f8] sm:$0xff]
        %v773 = vld [vmem:[%s349 + $0xa00] sm:$0xff]
        %v774 = vld [vmem:[%s349 + $0xa08] sm:$0xff]
        %v775 = vld [vmem:[%s349 + $0xa10] sm:$0xff]
        %v776 = vld [vmem:[%s349 + $0xa18] sm:$0xff]
        %v777 = vld [vmem:[%s349 + $0xa20] sm:$0xff]
        %v778 = vld [vmem:[%s349 + $0xa28] sm:$0xff]
        %v779 = vld [vmem:[%s349 + $0xa30] sm:$0xff]
        %v780 = vld [vmem:[%s349 + $0xa38] sm:$0xff]
        %v781 = vld [vmem:[%s349 + $0xa40] sm:$0xff]
        %v782 = vld [vmem:[%s349 + $0xa48] sm:$0xff]
        %v783 = vld [vmem:[%s349 + $0xa50] sm:$0xff]
        %v784 = vld [vmem:[%s349 + $0xa58] sm:$0xff]
        %v785 = vld [vmem:[%s349 + $0xa60] sm:$0xff]
        %v786 = vld [vmem:[%s349 + $0xa68] sm:$0xff]
        %v787 = vld [vmem:[%s349 + $0xa70] sm:$0xff]
        %v788 = vld [vmem:[%s349 + $0xa78] sm:$0xff]
        %v789 = vld [vmem:[%s349 + $0xa80] sm:$0xff]
        %v790 = vld [vmem:[%s349 + $0xa88] sm:$0xff]
        %v791 = vld [vmem:[%s349 + $0xa90] sm:$0xff]
        %v792 = vld [vmem:[%s349 + $0xa98] sm:$0xff]
        %v793 = vld [vmem:[%s349 + $0xaa0] sm:$0xff]
        %v794 = vld [vmem:[%s349 + $0xaa8] sm:$0xff]
        %v795 = vld [vmem:[%s349 + $0xab0] sm:$0xff]
        %v796 = vld [vmem:[%s349 + $0xab8] sm:$0xff]
        %v797 = vld [vmem:[%s349 + $0xac0] sm:$0xff]
        %v798 = vld [vmem:[%s349 + $0xac8] sm:$0xff]
        %v799 = vld [vmem:[%s349 + $0xad0] sm:$0xff]
        %v800 = vld [vmem:[%s349 + $0xad8] sm:$0xff]
        %v801 = vld [vmem:[%s349 + $0xae0] sm:$0xff]
        %v802 = vld [vmem:[%s349 + $0xae8] sm:$0xff]
        %v803 = vld [vmem:[%s349 + $0xaf0] sm:$0xff]
        %v804 = vld [vmem:[%s349 + $0xaf8] sm:$0xff]
        %v805 = vld [vmem:[%s349 + $0xb00] sm:$0xff]
        %v806 = vld [vmem:[%s349 + $0xb08] sm:$0xff]
        %v807 = vld [vmem:[%s349 + $0xb10] sm:$0xff]
        %v808 = vld [vmem:[%s349 + $0xb18] sm:$0xff]
        %v809 = vld [vmem:[%s349 + $0xb20] sm:$0xff]
        %v810 = vld [vmem:[%s349 + $0xb28] sm:$0xff]
        %v811 = vld [vmem:[%s349 + $0xb30] sm:$0xff]
        %v812 = vld [vmem:[%s349 + $0xb38] sm:$0xff]
        %v813 = vld [vmem:[%s349 + $0xb40] sm:$0xff]
        %v814 = vld [vmem:[%s349 + $0xb48] sm:$0xff]
        %v815 = vld [vmem:[%s349 + $0xb50] sm:$0xff]
        %v816 = vld [vmem:[%s349 + $0xb58] sm:$0xff]
        %v817 = vld [vmem:[%s349 + $0xb60] sm:$0xff]
        %v818 = vld [vmem:[%s349 + $0xb68] sm:$0xff]
        %v819 = vld [vmem:[%s349 + $0xb70] sm:$0xff]
        %v820 = vld [vmem:[%s349 + $0xb78] sm:$0xff]
        %v821 = vld [vmem:[%s349 + $0xb80] sm:$0xff]
        %v822 = vld [vmem:[%s349 + $0xb88] sm:$0xff]
        %v823 = vld [vmem:[%s349 + $0xb90] sm:$0xff]
        %v824 = vld [vmem:[%s349 + $0xb98] sm:$0xff]
        %v825 = vld [vmem:[%s349 + $0xba0] sm:$0xff]
        %v826 = vld [vmem:[%s349 + $0xba8] sm:$0xff]
        %v827 = vld [vmem:[%s349 + $0xbb0] sm:$0xff]
        %v828 = vld [vmem:[%s349 + $0xbb8] sm:$0xff]
        %v829 = vld [vmem:[%s349 + $0xbc0] sm:$0xff]
        %v830 = vld [vmem:[%s349 + $0xbc8] sm:$0xff]
        %v831 = vld [vmem:[%s349 + $0xbd0] sm:$0xff]
        %v832 = vld [vmem:[%s349 + $0xbd8] sm:$0xff]
        %v833 = vld [vmem:[%s349 + $0xbe0] sm:$0xff]
        %v834 = vld [vmem:[%s349 + $0xbe8] sm:$0xff]
        %v835 = vld [vmem:[%s349 + $0xbf0] sm:$0xff]
        %v836 = vld [vmem:[%s349 + $0xbf8] sm:$0xff]
        %v837 = vld [vmem:[%s349 + $0xc00] sm:$0xff]
        %v838 = vld [vmem:[%s349 + $0xc08] sm:$0xff]
        %v839 = vld [vmem:[%s349 + $0xc10] sm:$0xff]
        %v840 = vld [vmem:[%s349 + $0xc18] sm:$0xff]
        %v841 = vld [vmem:[%s349 + $0xc20] sm:$0xff]
        %v842 = vld [vmem:[%s349 + $0xc28] sm:$0xff]
        %v843 = vld [vmem:[%s349 + $0xc30] sm:$0xff]
        %v844 = vld [vmem:[%s349 + $0xc38] sm:$0xff]
        %v845 = vld [vmem:[%s349 + $0xc40] sm:$0xff]
        %v846 = vld [vmem:[%s349 + $0xc48] sm:$0xff]
        %v847 = vld [vmem:[%s349 + $0xc50] sm:$0xff]
        %v848 = vld [vmem:[%s349 + $0xc58] sm:$0xff]
        %v849 = vld [vmem:[%s349 + $0xc60] sm:$0xff]
        %v850 = vld [vmem:[%s349 + $0xc68] sm:$0xff]
        %v851 = vld [vmem:[%s349 + $0xc70] sm:$0xff]
        %v852 = vld [vmem:[%s349 + $0xc78] sm:$0xff]
        %v853 = vld [vmem:[%s349 + $0xc80] sm:$0xff]
        %v854 = vld [vmem:[%s349 + $0xc88] sm:$0xff]
        %v855 = vld [vmem:[%s349 + $0xc90] sm:$0xff]
        %v856 = vld [vmem:[%s349 + $0xc98] sm:$0xff]
        %v857 = vld [vmem:[%s349 + $0xca0] sm:$0xff]
        %v858 = vld [vmem:[%s349 + $0xca8] sm:$0xff]
        %v859 = vld [vmem:[%s349 + $0xcb0] sm:$0xff]
        %v860 = vld [vmem:[%s349 + $0xcb8] sm:$0xff]
        %v861 = vld [vmem:[%s349 + $0xcc0] sm:$0xff]
        %v862 = vld [vmem:[%s349 + $0xcc8] sm:$0xff]
        %v863 = vld [vmem:[%s349 + $0xcd0] sm:$0xff]
        %v864 = vld [vmem:[%s349 + $0xcd8] sm:$0xff]
        %v865 = vld [vmem:[%s349 + $0xce0] sm:$0xff]
        %v866 = vld [vmem:[%s349 + $0xce8] sm:$0xff]
        %v867 = vld [vmem:[%s349 + $0xcf0] sm:$0xff]
        %v868 = vld [vmem:[%s349 + $0xcf8] sm:$0xff]
        %v869 = vld [vmem:[%s349 + $0xd00] sm:$0xff]
        %v870 = vld [vmem:[%s349 + $0xd08] sm:$0xff]
        %v871 = vld [vmem:[%s349 + $0xd10] sm:$0xff]
        %v872 = vld [vmem:[%s349 + $0xd18] sm:$0xff]
        %v873 = vld [vmem:[%s349 + $0xd20] sm:$0xff]
        %v874 = vld [vmem:[%s349 + $0xd28] sm:$0xff]
        %v875 = vld [vmem:[%s349 + $0xd30] sm:$0xff]
        %v876 = vld [vmem:[%s349 + $0xd38] sm:$0xff]
        %v877 = vld [vmem:[%s349 + $0xd40] sm:$0xff]
        %v878 = vld [vmem:[%s349 + $0xd48] sm:$0xff]
        %v879 = vld [vmem:[%s349 + $0xd50] sm:$0xff]
        %v880 = vld [vmem:[%s349 + $0xd58] sm:$0xff]
        %v881 = vld [vmem:[%s349 + $0xd60] sm:$0xff]
        %v882 = vld [vmem:[%s349 + $0xd68] sm:$0xff]
        %v883 = vld [vmem:[%s349 + $0xd70] sm:$0xff]
        %v884 = vld [vmem:[%s349 + $0xd78] sm:$0xff]
        %v885 = vld [vmem:[%s349 + $0xd80] sm:$0xff]
        %v886 = vld [vmem:[%s349 + $0xd88] sm:$0xff]
        %v887 = vld [vmem:[%s349 + $0xd90] sm:$0xff]
        %v888 = vld [vmem:[%s349 + $0xd98] sm:$0xff]
        %v889 = vld [vmem:[%s349 + $0xda0] sm:$0xff]
        %v890 = vld [vmem:[%s349 + $0xda8] sm:$0xff]
        %v891 = vld [vmem:[%s349 + $0xdb0] sm:$0xff]
        %v892 = vld [vmem:[%s349 + $0xdb8] sm:$0xff]
        %v893 = vld [vmem:[%s349 + $0xdc0] sm:$0xff]
        %v894 = vld [vmem:[%s349 + $0xdc8] sm:$0xff]
        %v895 = vld [vmem:[%s349 + $0xdd0] sm:$0xff]
        %v896 = vld [vmem:[%s349 + $0xdd8] sm:$0xff]
        %v897 = vld [vmem:[%s349 + $0xde0] sm:$0xff]
        %v898 = vld [vmem:[%s349 + $0xde8] sm:$0xff]
        %v899 = vld [vmem:[%s349 + $0xdf0] sm:$0xff]
        %v900 = vld [vmem:[%s349 + $0xdf8] sm:$0xff]
        %v901 = vld [vmem:[%s349 + $0xe00] sm:$0xff]
        %v902 = vld [vmem:[%s349 + $0xe08] sm:$0xff]
        %v903 = vld [vmem:[%s349 + $0xe10] sm:$0xff]
        %v904 = vld [vmem:[%s349 + $0xe18] sm:$0xff]
        %v905 = vld [vmem:[%s349 + $0xe20] sm:$0xff]
        %v906 = vld [vmem:[%s349 + $0xe28] sm:$0xff]
        %v907 = vld [vmem:[%s349 + $0xe30] sm:$0xff]
        %v908 = vld [vmem:[%s349 + $0xe38] sm:$0xff]
        %v909 = vld [vmem:[%s349 + $0xe40] sm:$0xff]
        %v910 = vld [vmem:[%s349 + $0xe48] sm:$0xff]
        %v911 = vld [vmem:[%s349 + $0xe50] sm:$0xff]
        %v912 = vld [vmem:[%s349 + $0xe58] sm:$0xff]
        %v913 = vld [vmem:[%s349 + $0xe60] sm:$0xff]
        %v914 = vld [vmem:[%s349 + $0xe68] sm:$0xff]
        %v915 = vld [vmem:[%s349 + $0xe70] sm:$0xff]
        %v916 = vld [vmem:[%s349 + $0xe78] sm:$0xff]
        %v917 = vld [vmem:[%s349 + $0xe80] sm:$0xff]
        %v918 = vld [vmem:[%s349 + $0xe88] sm:$0xff]
        %v919 = vld [vmem:[%s349 + $0xe90] sm:$0xff]
        %v920 = vld [vmem:[%s349 + $0xe98] sm:$0xff]
        %v921 = vld [vmem:[%s349 + $0xea0] sm:$0xff]
        %v922 = vld [vmem:[%s349 + $0xea8] sm:$0xff]
        %v923 = vld [vmem:[%s349 + $0xeb0] sm:$0xff]
        %v924 = vld [vmem:[%s349 + $0xeb8] sm:$0xff]
        %v925 = vld [vmem:[%s349 + $0xec0] sm:$0xff]
        %v926 = vld [vmem:[%s349 + $0xec8] sm:$0xff]
        %v927 = vld [vmem:[%s349 + $0xed0] sm:$0xff]
        %v928 = vld [vmem:[%s349 + $0xed8] sm:$0xff]
        %v929 = vld [vmem:[%s349 + $0xee0] sm:$0xff]
        %v930 = vld [vmem:[%s349 + $0xee8] sm:$0xff]
        %v931 = vld [vmem:[%s349 + $0xef0] sm:$0xff]
        %v932 = vld [vmem:[%s349 + $0xef8] sm:$0xff]
        %v933 = vld [vmem:[%s349 + $0xf00] sm:$0xff]
        %v934 = vld [vmem:[%s349 + $0xf08] sm:$0xff]
        %v935 = vld [vmem:[%s349 + $0xf10] sm:$0xff]
        %v936 = vld [vmem:[%s349 + $0xf18] sm:$0xff]
        %v937 = vld [vmem:[%s349 + $0xf20] sm:$0xff]
        %v938 = vld [vmem:[%s349 + $0xf28] sm:$0xff]
        %v939 = vld [vmem:[%s349 + $0xf30] sm:$0xff]
        %v940 = vld [vmem:[%s349 + $0xf38] sm:$0xff]
        %v941 = vld [vmem:[%s349 + $0xf40] sm:$0xff]
        %v942 = vld [vmem:[%s349 + $0xf48] sm:$0xff]
        %v943 = vld [vmem:[%s349 + $0xf50] sm:$0xff]
        %v944 = vld [vmem:[%s349 + $0xf58] sm:$0xff]
        %v945 = vld [vmem:[%s349 + $0xf60] sm:$0xff]
        %v946 = vld [vmem:[%s349 + $0xf68] sm:$0xff]
        %v947 = vld [vmem:[%s349 + $0xf70] sm:$0xff]
        %v948 = vld [vmem:[%s349 + $0xf78] sm:$0xff]
        %v949 = vld [vmem:[%s349 + $0xf80] sm:$0xff]
        %v950 = vld [vmem:[%s349 + $0xf88] sm:$0xff]
        %v951 = vld [vmem:[%s349 + $0xf90] sm:$0xff]
        %v952 = vld [vmem:[%s349 + $0xf98] sm:$0xff]
        %v953 = vld [vmem:[%s349 + $0xfa0] sm:$0xff]
        %v954 = vld [vmem:[%s349 + $0xfa8] sm:$0xff]
        %v955 = vld [vmem:[%s349 + $0xfb0] sm:$0xff]
        %v956 = vld [vmem:[%s349 + $0xfb8] sm:$0xff]
        %v957 = vld [vmem:[%s349 + $0xfc0] sm:$0xff]
        %v958 = vld [vmem:[%s349 + $0xfc8] sm:$0xff]
        %v959 = vld [vmem:[%s349 + $0xfd0] sm:$0xff]
        %v960 = vld [vmem:[%s349 + $0xfd8] sm:$0xff]
        %v961 = vld [vmem:[%s349 + $0xfe0] sm:$0xff]
        %v962 = vld [vmem:[%s349 + $0xfe8] sm:$0xff]
        %v963 = vld [vmem:[%s349 + $0xff0] sm:$0xff]
        %v964 = vld [vmem:[%s349 + $0xff8] sm:$0xff]
        %v965 = vld [vmem:[%s349 + $0x1000] sm:$0xff]
        %v966 = vld [vmem:[%s349 + $0x1008] sm:$0xff]
        %v967 = vld [vmem:[%s349 + $0x1010] sm:$0xff]
        %v968 = vld [vmem:[%s349 + $0x1018] sm:$0xff]
        %v969 = vld [vmem:[%s349 + $0x1020] sm:$0xff]
        %v970 = vld [vmem:[%s349 + $0x1028] sm:$0xff]
        %v971 = vld [vmem:[%s349 + $0x1030] sm:$0xff]
        %v972 = vld [vmem:[%s349 + $0x1038] sm:$0xff]
        %v973 = vld [vmem:[%s349 + $0x1040] sm:$0xff]
        %v974 = vld [vmem:[%s349 + $0x1048] sm:$0xff]
        %v975 = vld [vmem:[%s349 + $0x1050] sm:$0xff]
        %v976 = vld [vmem:[%s349 + $0x1058] sm:$0xff]
        %v977 = vld [vmem:[%s349 + $0x1060] sm:$0xff]
        %v978 = vld [vmem:[%s349 + $0x1068] sm:$0xff]
        %v979 = vld [vmem:[%s349 + $0x1070] sm:$0xff]
        %v980 = vld [vmem:[%s349 + $0x1078] sm:$0xff]
        %v981 = vld [vmem:[%s349 + $0x1080] sm:$0xff]
        %v982 = vld [vmem:[%s349 + $0x1088] sm:$0xff]
        %v983 = vld [vmem:[%s349 + $0x1090] sm:$0xff]
        %v984 = vld [vmem:[%s349 + $0x1098] sm:$0xff]
        %v985 = vld [vmem:[%s349 + $0x10a0] sm:$0xff]
        %v986 = vld [vmem:[%s349 + $0x10a8] sm:$0xff]
        %v987 = vld [vmem:[%s349 + $0x10b0] sm:$0xff]
        %v988 = vld [vmem:[%s349 + $0x10b8] sm:$0xff]
        %v989 = vld [vmem:[%s349 + $0x10c0] sm:$0xff]
        %v990 = vld [vmem:[%s349 + $0x10c8] sm:$0xff]
        %v991 = vld [vmem:[%s349 + $0x10d0] sm:$0xff]
        %v992 = vld [vmem:[%s349 + $0x10d8] sm:$0xff]
        %v993 = vld [vmem:[%s349 + $0x10e0] sm:$0xff]
        %v994 = vld [vmem:[%s349 + $0x10e8] sm:$0xff]
        %v995 = vld [vmem:[%s349 + $0x10f0] sm:$0xff]
        %v996 = vld [vmem:[%s349 + $0x10f8] sm:$0xff]
        %v997 = vld [vmem:[%s349 + $0x1100] sm:$0xff]
        %v998 = vld [vmem:[%s349 + $0x1108] sm:$0xff]
        %v999 = vld [vmem:[%s349 + $0x1110] sm:$0xff]
        %v1000 = vld [vmem:[%s349 + $0x1118] sm:$0xff]
        %v1001 = vld [vmem:[%s349 + $0x1120] sm:$0xff]
        %v1002 = vld [vmem:[%s349 + $0x1128] sm:$0xff]
        %v1003 = vld [vmem:[%s349 + $0x1130] sm:$0xff]
        %v1004 = vld [vmem:[%s349 + $0x1138] sm:$0xff]
        %v1005 = vld [vmem:[%s349 + $0x1140] sm:$0xff]
        %v1006 = vld [vmem:[%s349 + $0x1148] sm:$0xff]
        %v1007 = vld [vmem:[%s349 + $0x1150] sm:$0xff]
        %v1008 = vld [vmem:[%s349 + $0x1158] sm:$0xff]
        %v1009 = vld [vmem:[%s349 + $0x1160] sm:$0xff]
        %v1010 = vld [vmem:[%s349 + $0x1168] sm:$0xff]
        %v1011 = vld [vmem:[%s349 + $0x1170] sm:$0xff]
        %v1012 = vld [vmem:[%s349 + $0x1178] sm:$0xff]
        %v1013 = vld [vmem:[%s349 + $0x1180] sm:$0xff]
        %v1014 = vld [vmem:[%s349 + $0x1188] sm:$0xff]
        %v1015 = vld [vmem:[%s349 + $0x1190] sm:$0xff]
        %v1016 = vld [vmem:[%s349 + $0x1198] sm:$0xff]
        %v1017 = vld [vmem:[%s349 + $0x11a0] sm:$0xff]
        %v1018 = vld [vmem:[%s349 + $0x11a8] sm:$0xff]
        %v1019 = vld [vmem:[%s349 + $0x11b0] sm:$0xff]
        %v1020 = vld [vmem:[%s349 + $0x11b8] sm:$0xff]
        %v1021 = vld [vmem:[%s349 + $0x11c0] sm:$0xff]
        %v1022 = vld [vmem:[%s349 + $0x11c8] sm:$0xff]
        %v1023 = vld [vmem:[%s349 + $0x11d0] sm:$0xff]
        %v1024 = vld [vmem:[%s349 + $0x11d8] sm:$0xff]
        %v1025 = vld [vmem:[%s349 + $0x11e0] sm:$0xff]
        %v1026 = vld [vmem:[%s349 + $0x11e8] sm:$0xff]
        %v1027 = vld [vmem:[%s349 + $0x11f0] sm:$0xff]
        %v1028 = vld [vmem:[%s349 + $0x11f8] sm:$0xff]
        %v1029 = vld [vmem:[%s349 + $0x1200] sm:$0xff]
        %v1030 = vld [vmem:[%s349 + $0x1208] sm:$0xff]
        %v1031 = vld [vmem:[%s349 + $0x1210] sm:$0xff]
        %v1032 = vld [vmem:[%s349 + $0x1218] sm:$0xff]
        %v1033 = vld [vmem:[%s349 + $0x1220] sm:$0xff]
        %v1034 = vld [vmem:[%s349 + $0x1228] sm:$0xff]
        %v1035 = vld [vmem:[%s349 + $0x1230] sm:$0xff]
        %v1036 = vld [vmem:[%s349 + $0x1238] sm:$0xff]
        %v1037 = vld [vmem:[%s349 + $0x1240] sm:$0xff]
        %v1038 = vld [vmem:[%s349 + $0x1248] sm:$0xff]
        %v1039 = vld [vmem:[%s349 + $0x1250] sm:$0xff]
        %v1040 = vld [vmem:[%s349 + $0x1258] sm:$0xff]
        %v1041 = vld [vmem:[%s349 + $0x1260] sm:$0xff]
        %v1042 = vld [vmem:[%s349 + $0x1268] sm:$0xff]
        %v1043 = vld [vmem:[%s349 + $0x1270] sm:$0xff]
        %v1044 = vld [vmem:[%s349 + $0x1278] sm:$0xff]
        %v1045 = vld [vmem:[%s349 + $0x1280] sm:$0xff]
        %v1046 = vld [vmem:[%s349 + $0x1288] sm:$0xff]
        %v1047 = vld [vmem:[%s349 + $0x1290] sm:$0xff]
        %v1048 = vld [vmem:[%s349 + $0x1298] sm:$0xff]
        %v1049 = vld [vmem:[%s349 + $0x12a0] sm:$0xff]
        %v1050 = vld [vmem:[%s349 + $0x12a8] sm:$0xff]
        %v1051 = vld [vmem:[%s349 + $0x12b0] sm:$0xff]
        %v1052 = vld [vmem:[%s349 + $0x12b8] sm:$0xff]
        %v1053 = vld [vmem:[%s349 + $0x12c0] sm:$0xff]
        %v1054 = vld [vmem:[%s349 + $0x12c8] sm:$0xff]
        %v1055 = vld [vmem:[%s349 + $0x12d0] sm:$0xff]
        %v1056 = vld [vmem:[%s349 + $0x12d8] sm:$0xff]
        %v1057 = vld [vmem:[%s349 + $0x12e0] sm:$0xff]
        %v1058 = vld [vmem:[%s349 + $0x12e8] sm:$0xff]
        %v1059 = vld [vmem:[%s349 + $0x12f0] sm:$0xff]
        %v1060 = vld [vmem:[%s349 + $0x12f8] sm:$0xff]
        %v1061 = vld [vmem:[%s349 + $0x1300] sm:$0xff]
        %v1062 = vld [vmem:[%s349 + $0x1308] sm:$0xff]
        %v1063 = vld [vmem:[%s349 + $0x1310] sm:$0xff]
        %v1064 = vld [vmem:[%s349 + $0x1318] sm:$0xff]
        %v1065 = vld [vmem:[%s349 + $0x1320] sm:$0xff]
        %v1066 = vld [vmem:[%s349 + $0x1328] sm:$0xff]
        %v1067 = vld [vmem:[%s349 + $0x1330] sm:$0xff]
        %v1068 = vld [vmem:[%s349 + $0x1338] sm:$0xff]
        %v1069 = vld [vmem:[%s349 + $0x1340] sm:$0xff]
        %v1070 = vld [vmem:[%s349 + $0x1348] sm:$0xff]
        %v1071 = vld [vmem:[%s349 + $0x1350] sm:$0xff]
        %v1072 = vld [vmem:[%s349 + $0x1358] sm:$0xff]
        %v1073 = vld [vmem:[%s349 + $0x1360] sm:$0xff]
        %v1074 = vld [vmem:[%s349 + $0x1368] sm:$0xff]
        %v1075 = vld [vmem:[%s349 + $0x1370] sm:$0xff]
        %v1076 = vld [vmem:[%s349 + $0x1378] sm:$0xff]
        %v1077 = vld [vmem:[%s349 + $0x1380] sm:$0xff]
        %v1078 = vld [vmem:[%s349 + $0x1388] sm:$0xff]
        %v1079 = vld [vmem:[%s349 + $0x1390] sm:$0xff]
        %v1080 = vld [vmem:[%s349 + $0x1398] sm:$0xff]
        %v1081 = vld [vmem:[%s349 + $0x13a0] sm:$0xff]
        %v1082 = vld [vmem:[%s349 + $0x13a8] sm:$0xff]
        %v1083 = vld [vmem:[%s349 + $0x13b0] sm:$0xff]
        %v1084 = vld [vmem:[%s349 + $0x13b8] sm:$0xff]
        %v1085 = vld [vmem:[%s349 + $0x13c0] sm:$0xff]
        %v1086 = vld [vmem:[%s349 + $0x13c8] sm:$0xff]
        %v1087 = vld [vmem:[%s349 + $0x13d0] sm:$0xff]
        %v1088 = vld [vmem:[%s349 + $0x13d8] sm:$0xff]
        %v1089 = vld [vmem:[%s349 + $0x13e0] sm:$0xff]
        %v1090 = vld [vmem:[%s349 + $0x13e8] sm:$0xff]
        %v1091 = vld [vmem:[%s349 + $0x13f0] sm:$0xff]
        %v1092 = vld [vmem:[%s349 + $0x13f8] sm:$0xff]
        %v1093 = vld [vmem:[%s349 + $0x1400] sm:$0xff]
        %v1094 = vld [vmem:[%s349 + $0x1408] sm:$0xff]
        %v1095 = vld [vmem:[%s349 + $0x1410] sm:$0xff]
        %v1096 = vld [vmem:[%s349 + $0x1418] sm:$0xff]
        %v1097 = vld [vmem:[%s349 + $0x1420] sm:$0xff]
        %v1098 = vld [vmem:[%s349 + $0x1428] sm:$0xff]
        %v1099 = vld [vmem:[%s349 + $0x1430] sm:$0xff]
        %v1100 = vld [vmem:[%s349 + $0x1438] sm:$0xff]
        %v1101 = vld [vmem:[%s349 + $0x1440] sm:$0xff]
        %v1102 = vld [vmem:[%s349 + $0x1448] sm:$0xff]
        %v1103 = vld [vmem:[%s349 + $0x1450] sm:$0xff]
        %v1104 = vld [vmem:[%s349 + $0x1458] sm:$0xff]
        %v1105 = vld [vmem:[%s349 + $0x1460] sm:$0xff]
        %v1106 = vld [vmem:[%s349 + $0x1468] sm:$0xff]
        %v1107 = vld [vmem:[%s349 + $0x1470] sm:$0xff]
        %v1108 = vld [vmem:[%s349 + $0x1478] sm:$0xff]
        %v1109 = vld [vmem:[%s349 + $0x1480] sm:$0xff]
        %v1110 = vld [vmem:[%s349 + $0x1488] sm:$0xff]
        %v1111 = vld [vmem:[%s349 + $0x1490] sm:$0xff]
        %v1112 = vld [vmem:[%s349 + $0x1498] sm:$0xff]
        %v1113 = vld [vmem:[%s349 + $0x14a0] sm:$0xff]
        %v1114 = vld [vmem:[%s349 + $0x14a8] sm:$0xff]
        %v1115 = vld [vmem:[%s349 + $0x14b0] sm:$0xff]
        %v1116 = vld [vmem:[%s349 + $0x14b8] sm:$0xff]
        %v1117 = vld [vmem:[%s349 + $0x14c0] sm:$0xff]
        %v1118 = vld [vmem:[%s349 + $0x14c8] sm:$0xff]
        %v1119 = vld [vmem:[%s349 + $0x14d0] sm:$0xff]
        %v1120 = vld [vmem:[%s349 + $0x14d8] sm:$0xff]
        %v1121 = vld [vmem:[%s349 + $0x14e0] sm:$0xff]
        %v1122 = vld [vmem:[%s349 + $0x14e8] sm:$0xff]
        %v1123 = vld [vmem:[%s349 + $0x14f0] sm:$0xff]
        %v1124 = vld [vmem:[%s349 + $0x14f8] sm:$0xff]
        %v1125 = vld [vmem:[%s349 + $0x1500] sm:$0xff]
        %v1126 = vld [vmem:[%s349 + $0x1508] sm:$0xff]
        %v1127 = vld [vmem:[%s349 + $0x1510] sm:$0xff]
        %v1128 = vld [vmem:[%s349 + $0x1518] sm:$0xff]
        %v1129 = vld [vmem:[%s349 + $0x1520] sm:$0xff]
        %v1130 = vld [vmem:[%s349 + $0x1528] sm:$0xff]
        %v1131 = vld [vmem:[%s349 + $0x1530] sm:$0xff]
        %v1132 = vld [vmem:[%s349 + $0x1538] sm:$0xff]
        %v1133 = vld [vmem:[%s349 + $0x1540] sm:$0xff]
        %v1134 = vld [vmem:[%s349 + $0x1548] sm:$0xff]
        %v1135 = vld [vmem:[%s349 + $0x1550] sm:$0xff]
        %v1136 = vld [vmem:[%s349 + $0x1558] sm:$0xff]
        %v1137 = vld [vmem:[%s349 + $0x1560] sm:$0xff]
        %v1138 = vld [vmem:[%s349 + $0x1568] sm:$0xff]
        %v1139 = vld [vmem:[%s349 + $0x1570] sm:$0xff]
        %v1140 = vld [vmem:[%s349 + $0x1578] sm:$0xff]
        %v1141 = vld [vmem:[%s349 + $0x1580] sm:$0xff]
        %v1142 = vld [vmem:[%s349 + $0x1588] sm:$0xff]
        %v1143 = vld [vmem:[%s349 + $0x1590] sm:$0xff]
        %v1144 = vld [vmem:[%s349 + $0x1598] sm:$0xff]
        %v1145 = vld [vmem:[%s349 + $0x15a0] sm:$0xff]
        %v1146 = vld [vmem:[%s349 + $0x15a8] sm:$0xff]
        %v1147 = vld [vmem:[%s349 + $0x15b0] sm:$0xff]
        %v1148 = vld [vmem:[%s349 + $0x15b8] sm:$0xff]
        %v1149 = vld [vmem:[%s349 + $0x15c0] sm:$0xff]
        %v1150 = vld [vmem:[%s349 + $0x15c8] sm:$0xff]
        %v1151 = vld [vmem:[%s349 + $0x15d0] sm:$0xff]
        %v1152 = vld [vmem:[%s349 + $0x15d8] sm:$0xff]
        %v1153 = vld [vmem:[%s349 + $0x15e0] sm:$0xff]
        %v1154 = vld [vmem:[%s349 + $0x15e8] sm:$0xff]
        %v1155 = vld [vmem:[%s349 + $0x15f0] sm:$0xff]
        %v1156 = vld [vmem:[%s349 + $0x15f8] sm:$0xff]
        %v1157 = vld [vmem:[%s349 + $0x1600] sm:$0xff]
        %v1158 = vld [vmem:[%s349 + $0x1608] sm:$0xff]
        %v1159 = vld [vmem:[%s349 + $0x1610] sm:$0xff]
        %v1160 = vld [vmem:[%s349 + $0x1618] sm:$0xff]
        %v1161 = vld [vmem:[%s349 + $0x1620] sm:$0xff]
        %v1162 = vld [vmem:[%s349 + $0x1628] sm:$0xff]
        %v1163 = vld [vmem:[%s349 + $0x1630] sm:$0xff]
        %v1164 = vld [vmem:[%s349 + $0x1638] sm:$0xff]
        %v1165 = vld [vmem:[%s349 + $0x1640] sm:$0xff]
        %v1166 = vld [vmem:[%s349 + $0x1648] sm:$0xff]
        %v1167 = vld [vmem:[%s349 + $0x1650] sm:$0xff]
        %v1168 = vld [vmem:[%s349 + $0x1658] sm:$0xff]
        %v1169 = vld [vmem:[%s349 + $0x1660] sm:$0xff]
        %v1170 = vld [vmem:[%s349 + $0x1668] sm:$0xff]
        %v1171 = vld [vmem:[%s349 + $0x1670] sm:$0xff]
        %v1172 = vld [vmem:[%s349 + $0x1678] sm:$0xff]
        %v1173 = vld [vmem:[%s349 + $0x1680] sm:$0xff]
        %v1174 = vld [vmem:[%s349 + $0x1688] sm:$0xff]
        %v1175 = vld [vmem:[%s349 + $0x1690] sm:$0xff]
        %v1176 = vld [vmem:[%s349 + $0x1698] sm:$0xff]
        %v1177 = vld [vmem:[%s349 + $0x16a0] sm:$0xff]
        %v1178 = vld [vmem:[%s349 + $0x16a8] sm:$0xff]
        %v1179 = vld [vmem:[%s349 + $0x16b0] sm:$0xff]
        %v1180 = vld [vmem:[%s349 + $0x16b8] sm:$0xff]
        %v1181 = vld [vmem:[%s349 + $0x16c0] sm:$0xff]
        %v1182 = vld [vmem:[%s349 + $0x16c8] sm:$0xff]
        %v1183 = vld [vmem:[%s349 + $0x16d0] sm:$0xff]
        %v1184 = vld [vmem:[%s349 + $0x16d8] sm:$0xff]
        %v1185 = vld [vmem:[%s349 + $0x16e0] sm:$0xff]
        %v1186 = vld [vmem:[%s349 + $0x16e8] sm:$0xff]
        %v1187 = vld [vmem:[%s349 + $0x16f0] sm:$0xff]
        %v1188 = vld [vmem:[%s349 + $0x16f8] sm:$0xff]
        %v1189 = vld [vmem:[%s349 + $0x1700] sm:$0xff]
        %v1190 = vld [vmem:[%s349 + $0x1708] sm:$0xff]
        %v1191 = vld [vmem:[%s349 + $0x1710] sm:$0xff]
        %v1192 = vld [vmem:[%s349 + $0x1718] sm:$0xff]
        %v1193 = vld [vmem:[%s349 + $0x1720] sm:$0xff]
        %v1194 = vld [vmem:[%s349 + $0x1728] sm:$0xff]
        %v1195 = vld [vmem:[%s349 + $0x1730] sm:$0xff]
        %v1196 = vld [vmem:[%s349 + $0x1738] sm:$0xff]
        %v1197 = vld [vmem:[%s349 + $0x1740] sm:$0xff]
        %v1198 = vld [vmem:[%s349 + $0x1748] sm:$0xff]
        %v1199 = vld [vmem:[%s349 + $0x1750] sm:$0xff]
        %v1200 = vld [vmem:[%s349 + $0x1758] sm:$0xff]
        %v1201 = vld [vmem:[%s349 + $0x1760] sm:$0xff]
        %v1202 = vld [vmem:[%s349 + $0x1768] sm:$0xff]
        %v1203 = vld [vmem:[%s349 + $0x1770] sm:$0xff]
        %v1204 = vld [vmem:[%s349 + $0x1778] sm:$0xff]
        %v1205 = vld [vmem:[%s349 + $0x1780] sm:$0xff]
        %v1206 = vld [vmem:[%s349 + $0x1788] sm:$0xff]
        %v1207 = vld [vmem:[%s349 + $0x1790] sm:$0xff]
        %v1208 = vld [vmem:[%s349 + $0x1798] sm:$0xff]
        %v1209 = vld [vmem:[%s349 + $0x17a0] sm:$0xff]
        %v1210 = vld [vmem:[%s349 + $0x17a8] sm:$0xff]
        %v1211 = vld [vmem:[%s349 + $0x17b0] sm:$0xff]
        %v1212 = vld [vmem:[%s349 + $0x17b8] sm:$0xff]
        %v1213 = vld [vmem:[%s349 + $0x17c0] sm:$0xff]
        %v1214 = vld [vmem:[%s349 + $0x17c8] sm:$0xff]
        %v1215 = vld [vmem:[%s349 + $0x17d0] sm:$0xff]
        %v1216 = vld [vmem:[%s349 + $0x17d8] sm:$0xff]
        %v1217 = vld [vmem:[%s349 + $0x17e0] sm:$0xff]
        %v1218 = vld [vmem:[%s349 + $0x17e8] sm:$0xff]
        %v1219 = vld [vmem:[%s349 + $0x17f0] sm:$0xff]
        %v1220 = vld [vmem:[%s349 + $0x17f8] sm:$0xff]
        %v1221 = vld [vmem:[%s349 + $0x1800] sm:$0xff]
        %v1222 = vld [vmem:[%s349 + $0x1808] sm:$0xff]
        %v1223 = vld [vmem:[%s349 + $0x1810] sm:$0xff]
        %v1224 = vld [vmem:[%s349 + $0x1818] sm:$0xff]
        %v1225 = vld [vmem:[%s349 + $0x1820] sm:$0xff]
        %v1226 = vld [vmem:[%s349 + $0x1828] sm:$0xff]
        %v1227 = vld [vmem:[%s349 + $0x1830] sm:$0xff]
        %v1228 = vld [vmem:[%s349 + $0x1838] sm:$0xff]
        %v1229 = vld [vmem:[%s349 + $0x1840] sm:$0xff]
        %v1230 = vld [vmem:[%s349 + $0x1848] sm:$0xff]
        %v1231 = vld [vmem:[%s349 + $0x1850] sm:$0xff]
        %v1232 = vld [vmem:[%s349 + $0x1858] sm:$0xff]
        %v1233 = vld [vmem:[%s349 + $0x1860] sm:$0xff]
        %v1234 = vld [vmem:[%s349 + $0x1868] sm:$0xff]
        %v1235 = vld [vmem:[%s349 + $0x1870] sm:$0xff]
        %v1236 = vld [vmem:[%s349 + $0x1878] sm:$0xff]
        %v1237 = vld [vmem:[%s349 + $0x1880] sm:$0xff]
        %v1238 = vld [vmem:[%s349 + $0x1888] sm:$0xff]
        %v1239 = vld [vmem:[%s349 + $0x1890] sm:$0xff]
        %v1240 = vld [vmem:[%s349 + $0x1898] sm:$0xff]
        %v1241 = vld [vmem:[%s349 + $0x18a0] sm:$0xff]
        %v1242 = vld [vmem:[%s349 + $0x18a8] sm:$0xff]
        %v1243 = vld [vmem:[%s349 + $0x18b0] sm:$0xff]
        %v1244 = vld [vmem:[%s349 + $0x18b8] sm:$0xff]
        %v1245 = vld [vmem:[%s349 + $0x18c0] sm:$0xff]
        %v1246 = vld [vmem:[%s349 + $0x18c8] sm:$0xff]
        %v1247 = vld [vmem:[%s349 + $0x18d0] sm:$0xff]
        %v1248 = vld [vmem:[%s349 + $0x18d8] sm:$0xff]
        %v1249 = vld [vmem:[%s349 + $0x18e0] sm:$0xff]
        %v1250 = vld [vmem:[%s349 + $0x18e8] sm:$0xff]
        %v1251 = vld [vmem:[%s349 + $0x18f0] sm:$0xff]
        %v1252 = vld [vmem:[%s349 + $0x18f8] sm:$0xff]
        %v1253 = vld [vmem:[%s349 + $0x1900] sm:$0xff]
        %v1254 = vld [vmem:[%s349 + $0x1908] sm:$0xff]
        %v1255 = vld [vmem:[%s349 + $0x1910] sm:$0xff]
        %v1256 = vld [vmem:[%s349 + $0x1918] sm:$0xff]
        %v1257 = vld [vmem:[%s349 + $0x1920] sm:$0xff]
        %v1258 = vld [vmem:[%s349 + $0x1928] sm:$0xff]
        %v1259 = vld [vmem:[%s349 + $0x1930] sm:$0xff]
        %v1260 = vld [vmem:[%s349 + $0x1938] sm:$0xff]
        %v1261 = vld [vmem:[%s349 + $0x1940] sm:$0xff]
        %v1262 = vld [vmem:[%s349 + $0x1948] sm:$0xff]
        %v1263 = vld [vmem:[%s349 + $0x1950] sm:$0xff]
        %v1264 = vld [vmem:[%s349 + $0x1958] sm:$0xff]
        %v1265 = vld [vmem:[%s349 + $0x1960] sm:$0xff]
        %v1266 = vld [vmem:[%s349 + $0x1968] sm:$0xff]
        %v1267 = vld [vmem:[%s349 + $0x1970] sm:$0xff]
        %v1268 = vld [vmem:[%s349 + $0x1978] sm:$0xff]
        %v1269 = vld [vmem:[%s349 + $0x1980] sm:$0xff]
        %v1270 = vld [vmem:[%s349 + $0x1988] sm:$0xff]
        %v1271 = vld [vmem:[%s349 + $0x1990] sm:$0xff]
        %v1272 = vld [vmem:[%s349 + $0x1998] sm:$0xff]
        %v1273 = vld [vmem:[%s349 + $0x19a0] sm:$0xff]
        %v1274 = vld [vmem:[%s349 + $0x19a8] sm:$0xff]
        %v1275 = vld [vmem:[%s349 + $0x19b0] sm:$0xff]
        %v1276 = vld [vmem:[%s349 + $0x19b8] sm:$0xff]
        %v1277 = vld [vmem:[%s349 + $0x19c0] sm:$0xff]
        %v1278 = vld [vmem:[%s349 + $0x19c8] sm:$0xff]
        %v1279 = vld [vmem:[%s349 + $0x19d0] sm:$0xff]
        %v1280 = vld [vmem:[%s349 + $0x19d8] sm:$0xff]
        %v1281 = vld [vmem:[%s349 + $0x19e0] sm:$0xff]
        %v1282 = vld [vmem:[%s349 + $0x19e8] sm:$0xff]
        %v1283 = vld [vmem:[%s349 + $0x19f0] sm:$0xff]
        %v1284 = vld [vmem:[%s349 + $0x19f8] sm:$0xff]
        %v1285 = vld [vmem:[%s349 + $0x1a00] sm:$0xff]
        %v1286 = vld [vmem:[%s349 + $0x1a08] sm:$0xff]
        %v1287 = vld [vmem:[%s349 + $0x1a10] sm:$0xff]
        %v1288 = vld [vmem:[%s349 + $0x1a18] sm:$0xff]
        %v1289 = vld [vmem:[%s349 + $0x1a20] sm:$0xff]
        %v1290 = vld [vmem:[%s349 + $0x1a28] sm:$0xff]
        %v1291 = vld [vmem:[%s349 + $0x1a30] sm:$0xff]
        %v1292 = vld [vmem:[%s349 + $0x1a38] sm:$0xff]
        %v1293 = vld [vmem:[%s349 + $0x1a40] sm:$0xff]
        %v1294 = vld [vmem:[%s349 + $0x1a48] sm:$0xff]
        %v1295 = vld [vmem:[%s349 + $0x1a50] sm:$0xff]
        %v1296 = vld [vmem:[%s349 + $0x1a58] sm:$0xff]
        %v1297 = vld [vmem:[%s349 + $0x1a60] sm:$0xff]
        %v1298 = vld [vmem:[%s349 + $0x1a68] sm:$0xff]
        %v1299 = vld [vmem:[%s349 + $0x1a70] sm:$0xff]
        %v1300 = vld [vmem:[%s349 + $0x1a78] sm:$0xff]
        %v1301 = vld [vmem:[%s349 + $0x1a80] sm:$0xff]
        %v1302 = vld [vmem:[%s349 + $0x1a88] sm:$0xff]
        %v1303 = vld [vmem:[%s349 + $0x1a90] sm:$0xff]
        %v1304 = vld [vmem:[%s349 + $0x1a98] sm:$0xff]
        %v1305 = vld [vmem:[%s349 + $0x1aa0] sm:$0xff]
        %v1306 = vld [vmem:[%s349 + $0x1aa8] sm:$0xff]
        %v1307 = vld [vmem:[%s349 + $0x1ab0] sm:$0xff]
        %v1308 = vld [vmem:[%s349 + $0x1ab8] sm:$0xff]
        %v1309 = vld [vmem:[%s349 + $0x1ac0] sm:$0xff]
        %v1310 = vld [vmem:[%s349 + $0x1ac8] sm:$0xff]
        %v1311 = vld [vmem:[%s349 + $0x1ad0] sm:$0xff]
        %v1312 = vld [vmem:[%s349 + $0x1ad8] sm:$0xff]
        %v1313 = vld [vmem:[%s349 + $0x1ae0] sm:$0xff]
        %v1314 = vld [vmem:[%s349 + $0x1ae8] sm:$0xff]
        %v1315 = vld [vmem:[%s349 + $0x1af0] sm:$0xff]
        %v1316 = vld [vmem:[%s349 + $0x1af8] sm:$0xff]
        %v1317 = vld [vmem:[%s349 + $0x1b00] sm:$0xff]
        %v1318 = vld [vmem:[%s349 + $0x1b08] sm:$0xff]
        %v1319 = vld [vmem:[%s349 + $0x1b10] sm:$0xff]
        %v1320 = vld [vmem:[%s349 + $0x1b18] sm:$0xff]
        %v1321 = vld [vmem:[%s349 + $0x1b20] sm:$0xff]
        %v1322 = vld [vmem:[%s349 + $0x1b28] sm:$0xff]
        %v1323 = vld [vmem:[%s349 + $0x1b30] sm:$0xff]
        %v1324 = vld [vmem:[%s349 + $0x1b38] sm:$0xff]
        %v1325 = vld [vmem:[%s349 + $0x1b40] sm:$0xff]
        %v1326 = vld [vmem:[%s349 + $0x1b48] sm:$0xff]
        %v1327 = vld [vmem:[%s349 + $0x1b50] sm:$0xff]
        %v1328 = vld [vmem:[%s349 + $0x1b58] sm:$0xff]
        %v1329 = vld [vmem:[%s349 + $0x1b60] sm:$0xff]
        %v1330 = vld [vmem:[%s349 + $0x1b68] sm:$0xff]
        %v1331 = vld [vmem:[%s349 + $0x1b70] sm:$0xff]
        %v1332 = vld [vmem:[%s349 + $0x1b78] sm:$0xff]
        %v1333 = vld [vmem:[%s349 + $0x1b80] sm:$0xff]
        %v1334 = vld [vmem:[%s349 + $0x1b88] sm:$0xff]
        %v1335 = vld [vmem:[%s349 + $0x1b90] sm:$0xff]
        %v1336 = vld [vmem:[%s349 + $0x1b98] sm:$0xff]
        %v1337 = vld [vmem:[%s349 + $0x1ba0] sm:$0xff]
        %v1338 = vld [vmem:[%s349 + $0x1ba8] sm:$0xff]
        %v1339 = vld [vmem:[%s349 + $0x1bb0] sm:$0xff]
        %v1340 = vld [vmem:[%s349 + $0x1bb8] sm:$0xff]
        %v1341 = vld [vmem:[%s349 + $0x1bc0] sm:$0xff]
        %v1342 = vld [vmem:[%s349 + $0x1bc8] sm:$0xff]
        %v1343 = vld [vmem:[%s349 + $0x1bd0] sm:$0xff]
        %v1344 = vld [vmem:[%s349 + $0x1bd8] sm:$0xff]
        %v1345 = vld [vmem:[%s349 + $0x1be0] sm:$0xff]
        %v1346 = vld [vmem:[%s349 + $0x1be8] sm:$0xff]
        %v1347 = vld [vmem:[%s349 + $0x1bf0] sm:$0xff]
        %v1348 = vld [vmem:[%s349 + $0x1bf8] sm:$0xff]
        %v1349 = vld [vmem:[%s349 + $0x1c00] sm:$0xff]
        %v1350 = vld [vmem:[%s349 + $0x1c08] sm:$0xff]
        %v1351 = vld [vmem:[%s349 + $0x1c10] sm:$0xff]
        %v1352 = vld [vmem:[%s349 + $0x1c18] sm:$0xff]
        %v1353 = vld [vmem:[%s349 + $0x1c20] sm:$0xff]
        %v1354 = vld [vmem:[%s349 + $0x1c28] sm:$0xff]
        %v1355 = vld [vmem:[%s349 + $0x1c30] sm:$0xff]
        %v1356 = vld [vmem:[%s349 + $0x1c38] sm:$0xff]
        %v1357 = vld [vmem:[%s349 + $0x1c40] sm:$0xff]
        %v1358 = vld [vmem:[%s349 + $0x1c48] sm:$0xff]
        %v1359 = vld [vmem:[%s349 + $0x1c50] sm:$0xff]
        %v1360 = vld [vmem:[%s349 + $0x1c58] sm:$0xff]
        %v1361 = vld [vmem:[%s349 + $0x1c60] sm:$0xff]
        %v1362 = vld [vmem:[%s349 + $0x1c68] sm:$0xff]
        %v1363 = vld [vmem:[%s349 + $0x1c70] sm:$0xff]
        %v1364 = vld [vmem:[%s349 + $0x1c78] sm:$0xff]
        %v1365 = vld [vmem:[%s349 + $0x1c80] sm:$0xff]
        %v1366 = vld [vmem:[%s349 + $0x1c88] sm:$0xff]
        %v1367 = vld [vmem:[%s349 + $0x1c90] sm:$0xff]
        %v1368 = vld [vmem:[%s349 + $0x1c98] sm:$0xff]
        %v1369 = vld [vmem:[%s349 + $0x1ca0] sm:$0xff]
        %v1370 = vld [vmem:[%s349 + $0x1ca8] sm:$0xff]
        %v1371 = vld [vmem:[%s349 + $0x1cb0] sm:$0xff]
        %v1372 = vld [vmem:[%s349 + $0x1cb8] sm:$0xff]
        %v1373 = vld [vmem:[%s349 + $0x1cc0] sm:$0xff]
        %v1374 = vld [vmem:[%s349 + $0x1cc8] sm:$0xff]
        %v1375 = vld [vmem:[%s349 + $0x1cd0] sm:$0xff]
        %v1376 = vld [vmem:[%s349 + $0x1cd8] sm:$0xff]
        %v1377 = vld [vmem:[%s349 + $0x1ce0] sm:$0xff]
        %v1378 = vld [vmem:[%s349 + $0x1ce8] sm:$0xff]
        %v1379 = vld [vmem:[%s349 + $0x1cf0] sm:$0xff]
        %v1380 = vld [vmem:[%s349 + $0x1cf8] sm:$0xff]
        %v1381 = vld [vmem:[%s349 + $0x1d00] sm:$0xff]
        %v1382 = vld [vmem:[%s349 + $0x1d08] sm:$0xff]
        %v1383 = vld [vmem:[%s349 + $0x1d10] sm:$0xff]
        %v1384 = vld [vmem:[%s349 + $0x1d18] sm:$0xff]
        %v1385 = vld [vmem:[%s349 + $0x1d20] sm:$0xff]
        %v1386 = vld [vmem:[%s349 + $0x1d28] sm:$0xff]
        %v1387 = vld [vmem:[%s349 + $0x1d30] sm:$0xff]
        %v1388 = vld [vmem:[%s349 + $0x1d38] sm:$0xff]
        %v1389 = vld [vmem:[%s349 + $0x1d40] sm:$0xff]
        %v1390 = vld [vmem:[%s349 + $0x1d48] sm:$0xff]
        %v1391 = vld [vmem:[%s349 + $0x1d50] sm:$0xff]
        %v1392 = vld [vmem:[%s349 + $0x1d58] sm:$0xff]
        %v1393 = vld [vmem:[%s349 + $0x1d60] sm:$0xff]
        %v1394 = vld [vmem:[%s349 + $0x1d68] sm:$0xff]
        %v1395 = vld [vmem:[%s349 + $0x1d70] sm:$0xff]
        %v1396 = vld [vmem:[%s349 + $0x1d78] sm:$0xff]
        %v1397 = vld [vmem:[%s349 + $0x1d80] sm:$0xff]
        %v1398 = vld [vmem:[%s349 + $0x1d88] sm:$0xff]
        %v1399 = vld [vmem:[%s349 + $0x1d90] sm:$0xff]
        %v1400 = vld [vmem:[%s349 + $0x1d98] sm:$0xff]
        %v1401 = vld [vmem:[%s349 + $0x1da0] sm:$0xff]
        %v1402 = vld [vmem:[%s349 + $0x1da8] sm:$0xff]
        %v1403 = vld [vmem:[%s349 + $0x1db0] sm:$0xff]
        %v1404 = vld [vmem:[%s349 + $0x1db8] sm:$0xff]
        %v1405 = vld [vmem:[%s349 + $0x1dc0] sm:$0xff]
        %v1406 = vld [vmem:[%s349 + $0x1dc8] sm:$0xff]
        %v1407 = vld [vmem:[%s349 + $0x1dd0] sm:$0xff]
        %v1408 = vld [vmem:[%s349 + $0x1dd8] sm:$0xff]
        %v1409 = vld [vmem:[%s349 + $0x1de0] sm:$0xff]
        %v1410 = vld [vmem:[%s349 + $0x1de8] sm:$0xff]
        %v1411 = vld [vmem:[%s349 + $0x1df0] sm:$0xff]
        %v1412 = vld [vmem:[%s349 + $0x1df8] sm:$0xff]
        %v1413 = vld [vmem:[%s349 + $0x1e00] sm:$0xff]
        %v1414 = vld [vmem:[%s349 + $0x1e08] sm:$0xff]
        %v1415 = vld [vmem:[%s349 + $0x1e10] sm:$0xff]
        %v1416 = vld [vmem:[%s349 + $0x1e18] sm:$0xff]
        %v1417 = vld [vmem:[%s349 + $0x1e20] sm:$0xff]
        %v1418 = vld [vmem:[%s349 + $0x1e28] sm:$0xff]
        %v1419 = vld [vmem:[%s349 + $0x1e30] sm:$0xff]
        %v1420 = vld [vmem:[%s349 + $0x1e38] sm:$0xff]
        %v1421 = vld [vmem:[%s349 + $0x1e40] sm:$0xff]
        %v1422 = vld [vmem:[%s349 + $0x1e48] sm:$0xff]
        %v1423 = vld [vmem:[%s349 + $0x1e50] sm:$0xff]
        %v1424 = vld [vmem:[%s349 + $0x1e58] sm:$0xff]
        %v1425 = vld [vmem:[%s349 + $0x1e60] sm:$0xff]
        %v1426 = vld [vmem:[%s349 + $0x1e68] sm:$0xff]
        %v1427 = vld [vmem:[%s349 + $0x1e70] sm:$0xff]
        %v1428 = vld [vmem:[%s349 + $0x1e78] sm:$0xff]
        %v1429 = vld [vmem:[%s349 + $0x1e80] sm:$0xff]
        %v1430 = vld [vmem:[%s349 + $0x1e88] sm:$0xff]
        %v1431 = vld [vmem:[%s349 + $0x1e90] sm:$0xff]
        %v1432 = vld [vmem:[%s349 + $0x1e98] sm:$0xff]
        %v1433 = vld [vmem:[%s349 + $0x1ea0] sm:$0xff]
        %v1434 = vld [vmem:[%s349 + $0x1ea8] sm:$0xff]
        %v1435 = vld [vmem:[%s349 + $0x1eb0] sm:$0xff]
        %v1436 = vld [vmem:[%s349 + $0x1eb8] sm:$0xff]
        %v1437 = vld [vmem:[%s349 + $0x1ec0] sm:$0xff]
        %v1438 = vld [vmem:[%s349 + $0x1ec8] sm:$0xff]
        %v1439 = vld [vmem:[%s349 + $0x1ed0] sm:$0xff]
        %v1440 = vld [vmem:[%s349 + $0x1ed8] sm:$0xff]
        %v1441 = vld [vmem:[%s349 + $0x1ee0] sm:$0xff]
        %v1442 = vld [vmem:[%s349 + $0x1ee8] sm:$0xff]
        %v1443 = vld [vmem:[%s349 + $0x1ef0] sm:$0xff]
        %v1444 = vld [vmem:[%s349 + $0x1ef8] sm:$0xff]
        %v1445 = vld [vmem:[%s349 + $0x1f00] sm:$0xff]
        %v1446 = vld [vmem:[%s349 + $0x1f08] sm:$0xff]
        %v1447 = vld [vmem:[%s349 + $0x1f10] sm:$0xff]
        %v1448 = vld [vmem:[%s349 + $0x1f18] sm:$0xff]
        %v1449 = vld [vmem:[%s349 + $0x1f20] sm:$0xff]
        %v1450 = vld [vmem:[%s349 + $0x1f28] sm:$0xff]
        %v1451 = vld [vmem:[%s349 + $0x1f30] sm:$0xff]
        %v1452 = vld [vmem:[%s349 + $0x1f38] sm:$0xff]
        %v1453 = vld [vmem:[%s349 + $0x1f40] sm:$0xff]
        %v1454 = vld [vmem:[%s349 + $0x1f48] sm:$0xff]
        %v1455 = vld [vmem:[%s349 + $0x1f50] sm:$0xff]
        %v1456 = vld [vmem:[%s349 + $0x1f58] sm:$0xff]
        %v1457 = vld [vmem:[%s349 + $0x1f60] sm:$0xff]
        %v1458 = vld [vmem:[%s349 + $0x1f68] sm:$0xff]
        %v1459 = vld [vmem:[%s349 + $0x1f70] sm:$0xff]
        %v1460 = vld [vmem:[%s349 + $0x1f78] sm:$0xff]
        %v1461 = vld [vmem:[%s349 + $0x1f80] sm:$0xff]
        %v1462 = vld [vmem:[%s349 + $0x1f88] sm:$0xff]
        %v1463 = vld [vmem:[%s349 + $0x1f90] sm:$0xff]
        %v1464 = vld [vmem:[%s349 + $0x1f98] sm:$0xff]
        %v1465 = vld [vmem:[%s349 + $0x1fa0] sm:$0xff]
        %v1466 = vld [vmem:[%s349 + $0x1fa8] sm:$0xff]
        %v1467 = vld [vmem:[%s349 + $0x1fb0] sm:$0xff]
        %v1468 = vld [vmem:[%s349 + $0x1fb8] sm:$0xff]
        %v1469 = vld [vmem:[%s349 + $0x1fc0] sm:$0xff]
        %v1470 = vld [vmem:[%s349 + $0x1fc8] sm:$0xff]
        %v1471 = vld [vmem:[%s349 + $0x1fd0] sm:$0xff]
        %v1472 = vld [vmem:[%s349 + $0x1fd8] sm:$0xff]
        %v1473 = vld [vmem:[%s349 + $0x1fe0] sm:$0xff]
        %v1474 = vld [vmem:[%s349 + $0x1fe8] sm:$0xff]
        %v1475 = vld [vmem:[%s349 + $0x1ff0] sm:$0xff]
        %v1476 = vld [vmem:[%s349 + $0x1ff8] sm:$0xff]
        %v1481 = vunpack.c.l.b16 %v449
        %v1482 = vunpack.c.h.b16 %v449
        %v1483 = vunpack.c.l.b16 %v450
        %v1484 = vunpack.c.h.b16 %v450
        %v1485 = vunpack.c.l.b16 %v451
        %v1486 = vunpack.c.h.b16 %v451
        %v1487 = vunpack.c.l.b16 %v452
        %v1488 = vunpack.c.h.b16 %v452
        %v1489 = vpack.c.b16 %v1481, %v1481
        %v1490 = vpack.c.b16 %v1482, %v1482
        %v1491 = vpack.c.b16 %v1483, %v1483
        %v1492 = vpack.c.b16 %v1484, %v1484
        %v1493 = vpack.c.b16 %v1485, %v1485
        %v1494 = vpack.c.b16 %v1486, %v1486
        %v1495 = vpack.c.b16 %v1487, %v1487
        %v1496 = vpack.c.b16 %v1488, %v1488
        %v2529 = vunpack.c.l.b16 %v453
        %v2530 = vunpack.c.h.b16 %v453
        %v2531 = vunpack.c.l.b16 %v454
        %v2532 = vunpack.c.h.b16 %v454
        %v2533 = vunpack.c.l.b16 %v455
        %v2534 = vunpack.c.h.b16 %v455
        %v2535 = vunpack.c.l.b16 %v456
        %v2536 = vunpack.c.h.b16 %v456
        %v2537 = vunpack.c.l.b16 %v457
        %v2538 = vunpack.c.h.b16 %v457
        %v2539 = vunpack.c.l.b16 %v458
        %v2540 = vunpack.c.h.b16 %v458
        %v2541 = vunpack.c.l.b16 %v459
        %v2542 = vunpack.c.h.b16 %v459
        %v2543 = vunpack.c.l.b16 %v460
        %v2544 = vunpack.c.h.b16 %v460
        %v2545 = vunpack.c.l.b16 %v461
        %v2546 = vunpack.c.h.b16 %v461
        %v2547 = vunpack.c.l.b16 %v462
        %v2548 = vunpack.c.h.b16 %v462
        %v2549 = vunpack.c.l.b16 %v463
        %v2550 = vunpack.c.h.b16 %v463
        %v2551 = vunpack.c.l.b16 %v464
        %v2552 = vunpack.c.h.b16 %v464
        %v2553 = vunpack.c.l.b16 %v465
        %v2554 = vunpack.c.h.b16 %v465
        %v2555 = vunpack.c.l.b16 %v466
        %v2556 = vunpack.c.h.b16 %v466
        %v2557 = vunpack.c.l.b16 %v467
        %v2558 = vunpack.c.h.b16 %v467
        %v2559 = vunpack.c.l.b16 %v468
        %v2560 = vunpack.c.h.b16 %v468
        %v2561 = vunpack.c.l.b16 %v469
        %v2562 = vunpack.c.h.b16 %v469
        %v2563 = vunpack.c.l.b16 %v470
        %v2564 = vunpack.c.h.b16 %v470
        %v2565 = vunpack.c.l.b16 %v471
        %v2566 = vunpack.c.h.b16 %v471
        %v2567 = vunpack.c.l.b16 %v472
        %v2568 = vunpack.c.h.b16 %v472
        %v2569 = vunpack.c.l.b16 %v473
        %v2570 = vunpack.c.h.b16 %v473
        %v2571 = vunpack.c.l.b16 %v474
        %v2572 = vunpack.c.h.b16 %v474
        %v2573 = vunpack.c.l.b16 %v475
        %v2574 = vunpack.c.h.b16 %v475
        %v2575 = vunpack.c.l.b16 %v476
        %v2576 = vunpack.c.h.b16 %v476
        %v2577 = vunpack.c.l.b16 %v477
        %v2578 = vunpack.c.h.b16 %v477
        %v2579 = vunpack.c.l.b16 %v478
        %v2580 = vunpack.c.h.b16 %v478
        %v2581 = vunpack.c.l.b16 %v479
        %v2582 = vunpack.c.h.b16 %v479
        %v2583 = vunpack.c.l.b16 %v480
        %v2584 = vunpack.c.h.b16 %v480
        %v2585 = vunpack.c.l.b16 %v481
        %v2586 = vunpack.c.h.b16 %v481
        %v2587 = vunpack.c.l.b16 %v482
        %v2588 = vunpack.c.h.b16 %v482
        %v2589 = vunpack.c.l.b16 %v483
        %v2590 = vunpack.c.h.b16 %v483
        %v2591 = vunpack.c.l.b16 %v484
        %v2592 = vunpack.c.h.b16 %v484
        %v2593 = vunpack.c.l.b16 %v485
        %v2594 = vunpack.c.h.b16 %v485
        %v2595 = vunpack.c.l.b16 %v486
        %v2596 = vunpack.c.h.b16 %v486
        %v2597 = vunpack.c.l.b16 %v487
        %v2598 = vunpack.c.h.b16 %v487
        %v2599 = vunpack.c.l.b16 %v488
        %v2600 = vunpack.c.h.b16 %v488
        %v2601 = vunpack.c.l.b16 %v489
        %v2602 = vunpack.c.h.b16 %v489
        %v2603 = vunpack.c.l.b16 %v490
        %v2604 = vunpack.c.h.b16 %v490
        %v2605 = vunpack.c.l.b16 %v491
        %v2606 = vunpack.c.h.b16 %v491
        %v2607 = vunpack.c.l.b16 %v492
        %v2608 = vunpack.c.h.b16 %v492
        %v2609 = vunpack.c.l.b16 %v493
        %v2610 = vunpack.c.h.b16 %v493
        %v2611 = vunpack.c.l.b16 %v494
        %v2612 = vunpack.c.h.b16 %v494
        %v2613 = vunpack.c.l.b16 %v495
        %v2614 = vunpack.c.h.b16 %v495
        %v2615 = vunpack.c.l.b16 %v496
        %v2616 = vunpack.c.h.b16 %v496
        %v2617 = vunpack.c.l.b16 %v497
        %v2618 = vunpack.c.h.b16 %v497
        %v2619 = vunpack.c.l.b16 %v498
        %v2620 = vunpack.c.h.b16 %v498
        %v2621 = vunpack.c.l.b16 %v499
        %v2622 = vunpack.c.h.b16 %v499
        %v2623 = vunpack.c.l.b16 %v500
        %v2624 = vunpack.c.h.b16 %v500
        %v2625 = vunpack.c.l.b16 %v501
        %v2626 = vunpack.c.h.b16 %v501
        %v2627 = vunpack.c.l.b16 %v502
        %v2628 = vunpack.c.h.b16 %v502
        %v2629 = vunpack.c.l.b16 %v503
        %v2630 = vunpack.c.h.b16 %v503
        %v2631 = vunpack.c.l.b16 %v504
        %v2632 = vunpack.c.h.b16 %v504
        %v2633 = vunpack.c.l.b16 %v505
        %v2634 = vunpack.c.h.b16 %v505
        %v2635 = vunpack.c.l.b16 %v506
        %v2636 = vunpack.c.h.b16 %v506
        %v2637 = vunpack.c.l.b16 %v507
        %v2638 = vunpack.c.h.b16 %v507
        %v2639 = vunpack.c.l.b16 %v508
        %v2640 = vunpack.c.h.b16 %v508
        %v2641 = vunpack.c.l.b16 %v509
        %v2642 = vunpack.c.h.b16 %v509
        %v2643 = vunpack.c.l.b16 %v510
        %v2644 = vunpack.c.h.b16 %v510
        %v2645 = vunpack.c.l.b16 %v511
        %v2646 = vunpack.c.h.b16 %v511
        %v2647 = vunpack.c.l.b16 %v512
        %v2648 = vunpack.c.h.b16 %v512
        %v2649 = vunpack.c.l.b16 %v513
        %v2650 = vunpack.c.h.b16 %v513
        %v2651 = vunpack.c.l.b16 %v514
        %v2652 = vunpack.c.h.b16 %v514
        %v2653 = vunpack.c.l.b16 %v515
        %v2654 = vunpack.c.h.b16 %v515
        %v2655 = vunpack.c.l.b16 %v516
        %v2656 = vunpack.c.h.b16 %v516
        %v2657 = vunpack.c.l.b16 %v517
        %v2658 = vunpack.c.h.b16 %v517
        %v2659 = vunpack.c.l.b16 %v518
        %v2660 = vunpack.c.h.b16 %v518
        %v2661 = vunpack.c.l.b16 %v519
        %v2662 = vunpack.c.h.b16 %v519
        %v2663 = vunpack.c.l.b16 %v520
        %v2664 = vunpack.c.h.b16 %v520
        %v2665 = vunpack.c.l.b16 %v521
        %v2666 = vunpack.c.h.b16 %v521
        %v2667 = vunpack.c.l.b16 %v522
        %v2668 = vunpack.c.h.b16 %v522
        %v2669 = vunpack.c.l.b16 %v523
        %v2670 = vunpack.c.h.b16 %v523
        %v2671 = vunpack.c.l.b16 %v524
        %v2672 = vunpack.c.h.b16 %v524
        %v2673 = vunpack.c.l.b16 %v525
        %v2674 = vunpack.c.h.b16 %v525
        %v2675 = vunpack.c.l.b16 %v526
        %v2676 = vunpack.c.h.b16 %v526
        %v2677 = vunpack.c.l.b16 %v527
        %v2678 = vunpack.c.h.b16 %v527
        %v2679 = vunpack.c.l.b16 %v528
        %v2680 = vunpack.c.h.b16 %v528
        %v2681 = vunpack.c.l.b16 %v529
        %v2682 = vunpack.c.h.b16 %v529
        %v2683 = vunpack.c.l.b16 %v530
        %v2684 = vunpack.c.h.b16 %v530
        %v2685 = vunpack.c.l.b16 %v531
        %v2686 = vunpack.c.h.b16 %v531
        %v2687 = vunpack.c.l.b16 %v532
        %v2688 = vunpack.c.h.b16 %v532
        %v2689 = vunpack.c.l.b16 %v533
        %v2690 = vunpack.c.h.b16 %v533
        %v2691 = vunpack.c.l.b16 %v534
        %v2692 = vunpack.c.h.b16 %v534
        %v2693 = vunpack.c.l.b16 %v535
        %v2694 = vunpack.c.h.b16 %v535
        %v2695 = vunpack.c.l.b16 %v536
        %v2696 = vunpack.c.h.b16 %v536
        %v2697 = vunpack.c.l.b16 %v537
        %v2698 = vunpack.c.h.b16 %v537
        %v2699 = vunpack.c.l.b16 %v538
        %v2700 = vunpack.c.h.b16 %v538
        %v2701 = vunpack.c.l.b16 %v539
        %v2702 = vunpack.c.h.b16 %v539
        %v2703 = vunpack.c.l.b16 %v540
        %v2704 = vunpack.c.h.b16 %v540
        %v2705 = vunpack.c.l.b16 %v541
        %v2706 = vunpack.c.h.b16 %v541
        %v2707 = vunpack.c.l.b16 %v542
        %v2708 = vunpack.c.h.b16 %v542
        %v2709 = vunpack.c.l.b16 %v543
        %v2710 = vunpack.c.h.b16 %v543
        %v2711 = vunpack.c.l.b16 %v544
        %v2712 = vunpack.c.h.b16 %v544
        %v2713 = vunpack.c.l.b16 %v545
        %v2714 = vunpack.c.h.b16 %v545
        %v2715 = vunpack.c.l.b16 %v546
        %v2716 = vunpack.c.h.b16 %v546
        %v2717 = vunpack.c.l.b16 %v547
        %v2718 = vunpack.c.h.b16 %v547
        %v2719 = vunpack.c.l.b16 %v548
        %v2720 = vunpack.c.h.b16 %v548
        %v2721 = vunpack.c.l.b16 %v549
        %v2722 = vunpack.c.h.b16 %v549
        %v2723 = vunpack.c.l.b16 %v550
        %v2724 = vunpack.c.h.b16 %v550
        %v2725 = vunpack.c.l.b16 %v551
        %v2726 = vunpack.c.h.b16 %v551
        %v2727 = vunpack.c.l.b16 %v552
        %v2728 = vunpack.c.h.b16 %v552
        %v2729 = vunpack.c.l.b16 %v553
        %v2730 = vunpack.c.h.b16 %v553
        %v2731 = vunpack.c.l.b16 %v554
        %v2732 = vunpack.c.h.b16 %v554
        %v2733 = vunpack.c.l.b16 %v555
        %v2734 = vunpack.c.h.b16 %v555
        %v2735 = vunpack.c.l.b16 %v556
        %v2736 = vunpack.c.h.b16 %v556
        %v2737 = vunpack.c.l.b16 %v557
        %v2738 = vunpack.c.h.b16 %v557
        %v2739 = vunpack.c.l.b16 %v558
        %v2740 = vunpack.c.h.b16 %v558
        %v2741 = vunpack.c.l.b16 %v559
        %v2742 = vunpack.c.h.b16 %v559
        %v2743 = vunpack.c.l.b16 %v560
        %v2744 = vunpack.c.h.b16 %v560
        %v2745 = vunpack.c.l.b16 %v561
        %v2746 = vunpack.c.h.b16 %v561
        %v2747 = vunpack.c.l.b16 %v562
        %v2748 = vunpack.c.h.b16 %v562
        %v2749 = vunpack.c.l.b16 %v563
        %v2750 = vunpack.c.h.b16 %v563
        %v2751 = vunpack.c.l.b16 %v564
        %v2752 = vunpack.c.h.b16 %v564
        %v2753 = vunpack.c.l.b16 %v565
        %v2754 = vunpack.c.h.b16 %v565
        %v2755 = vunpack.c.l.b16 %v566
        %v2756 = vunpack.c.h.b16 %v566
        %v2757 = vunpack.c.l.b16 %v567
        %v2758 = vunpack.c.h.b16 %v567
        %v2759 = vunpack.c.l.b16 %v568
        %v2760 = vunpack.c.h.b16 %v568
        %v2761 = vunpack.c.l.b16 %v569
        %v2762 = vunpack.c.h.b16 %v569
        %v2763 = vunpack.c.l.b16 %v570
        %v2764 = vunpack.c.h.b16 %v570
        %v2765 = vunpack.c.l.b16 %v571
        %v2766 = vunpack.c.h.b16 %v571
        %v2767 = vunpack.c.l.b16 %v572
        %v2768 = vunpack.c.h.b16 %v572
        %v2769 = vunpack.c.l.b16 %v573
        %v2770 = vunpack.c.h.b16 %v573
        %v2771 = vunpack.c.l.b16 %v574
        %v2772 = vunpack.c.h.b16 %v574
        %v2773 = vunpack.c.l.b16 %v575
        %v2774 = vunpack.c.h.b16 %v575
        %v2775 = vunpack.c.l.b16 %v576
        %v2776 = vunpack.c.h.b16 %v576
        %v2777 = vunpack.c.l.b16 %v577
        %v2778 = vunpack.c.h.b16 %v577
        %v2779 = vunpack.c.l.b16 %v578
        %v2780 = vunpack.c.h.b16 %v578
        %v2781 = vunpack.c.l.b16 %v579
        %v2782 = vunpack.c.h.b16 %v579
        %v2783 = vunpack.c.l.b16 %v580
        %v2784 = vunpack.c.h.b16 %v580
        %v2785 = vunpack.c.l.b16 %v581
        %v2786 = vunpack.c.h.b16 %v581
        %v2787 = vunpack.c.l.b16 %v582
        %v2788 = vunpack.c.h.b16 %v582
        %v2789 = vunpack.c.l.b16 %v583
        %v2790 = vunpack.c.h.b16 %v583
        %v2791 = vunpack.c.l.b16 %v584
        %v2792 = vunpack.c.h.b16 %v584
        %v2793 = vunpack.c.l.b16 %v585
        %v2794 = vunpack.c.h.b16 %v585
        %v2795 = vunpack.c.l.b16 %v586
        %v2796 = vunpack.c.h.b16 %v586
        %v2797 = vunpack.c.l.b16 %v587
        %v2798 = vunpack.c.h.b16 %v587
        %v2799 = vunpack.c.l.b16 %v588
        %v2800 = vunpack.c.h.b16 %v588
        %v2801 = vunpack.c.l.b16 %v589
        %v2802 = vunpack.c.h.b16 %v589
        %v2803 = vunpack.c.l.b16 %v590
        %v2804 = vunpack.c.h.b16 %v590
        %v2805 = vunpack.c.l.b16 %v591
        %v2806 = vunpack.c.h.b16 %v591
        %v2807 = vunpack.c.l.b16 %v592
        %v2808 = vunpack.c.h.b16 %v592
        %v2809 = vunpack.c.l.b16 %v593
        %v2810 = vunpack.c.h.b16 %v593
        %v2811 = vunpack.c.l.b16 %v594
        %v2812 = vunpack.c.h.b16 %v594
        %v2813 = vunpack.c.l.b16 %v595
        %v2814 = vunpack.c.h.b16 %v595
        %v2815 = vunpack.c.l.b16 %v596
        %v2816 = vunpack.c.h.b16 %v596
        %v2817 = vunpack.c.l.b16 %v597
        %v2818 = vunpack.c.h.b16 %v597
        %v2819 = vunpack.c.l.b16 %v598
        %v2820 = vunpack.c.h.b16 %v598
        %v2821 = vunpack.c.l.b16 %v599
        %v2822 = vunpack.c.h.b16 %v599
        %v2823 = vunpack.c.l.b16 %v600
        %v2824 = vunpack.c.h.b16 %v600
        %v2825 = vunpack.c.l.b16 %v601
        %v2826 = vunpack.c.h.b16 %v601
        %v2827 = vunpack.c.l.b16 %v602
        %v2828 = vunpack.c.h.b16 %v602
        %v2829 = vunpack.c.l.b16 %v603
        %v2830 = vunpack.c.h.b16 %v603
        %v2831 = vunpack.c.l.b16 %v604
        %v2832 = vunpack.c.h.b16 %v604
        %v2833 = vunpack.c.l.b16 %v605
        %v2834 = vunpack.c.h.b16 %v605
        %v2835 = vunpack.c.l.b16 %v606
        %v2836 = vunpack.c.h.b16 %v606
        %v2837 = vunpack.c.l.b16 %v607
        %v2838 = vunpack.c.h.b16 %v607
        %v2839 = vunpack.c.l.b16 %v608
        %v2840 = vunpack.c.h.b16 %v608
        %v2841 = vunpack.c.l.b16 %v609
        %v2842 = vunpack.c.h.b16 %v609
        %v2843 = vunpack.c.l.b16 %v610
        %v2844 = vunpack.c.h.b16 %v610
        %v2845 = vunpack.c.l.b16 %v611
        %v2846 = vunpack.c.h.b16 %v611
        %v2847 = vunpack.c.l.b16 %v612
        %v2848 = vunpack.c.h.b16 %v612
        %v2849 = vunpack.c.l.b16 %v613
        %v2850 = vunpack.c.h.b16 %v613
        %v2851 = vunpack.c.l.b16 %v614
        %v2852 = vunpack.c.h.b16 %v614
        %v2853 = vunpack.c.l.b16 %v615
        %v2854 = vunpack.c.h.b16 %v615
        %v2855 = vunpack.c.l.b16 %v616
        %v2856 = vunpack.c.h.b16 %v616
        %v2857 = vunpack.c.l.b16 %v617
        %v2858 = vunpack.c.h.b16 %v617
        %v2859 = vunpack.c.l.b16 %v618
        %v2860 = vunpack.c.h.b16 %v618
        %v2861 = vunpack.c.l.b16 %v619
        %v2862 = vunpack.c.h.b16 %v619
        %v2863 = vunpack.c.l.b16 %v620
        %v2864 = vunpack.c.h.b16 %v620
        %v2865 = vunpack.c.l.b16 %v621
        %v2866 = vunpack.c.h.b16 %v621
        %v2867 = vunpack.c.l.b16 %v622
        %v2868 = vunpack.c.h.b16 %v622
        %v2869 = vunpack.c.l.b16 %v623
        %v2870 = vunpack.c.h.b16 %v623
        %v2871 = vunpack.c.l.b16 %v624
        %v2872 = vunpack.c.h.b16 %v624
        %v2873 = vunpack.c.l.b16 %v625
        %v2874 = vunpack.c.h.b16 %v625
        %v2875 = vunpack.c.l.b16 %v626
        %v2876 = vunpack.c.h.b16 %v626
        %v2877 = vunpack.c.l.b16 %v627
        %v2878 = vunpack.c.h.b16 %v627
        %v2879 = vunpack.c.l.b16 %v628
        %v2880 = vunpack.c.h.b16 %v628
        %v2881 = vunpack.c.l.b16 %v629
        %v2882 = vunpack.c.h.b16 %v629
        %v2883 = vunpack.c.l.b16 %v630
        %v2884 = vunpack.c.h.b16 %v630
        %v2885 = vunpack.c.l.b16 %v631
        %v2886 = vunpack.c.h.b16 %v631
        %v2887 = vunpack.c.l.b16 %v632
        %v2888 = vunpack.c.h.b16 %v632
        %v2889 = vunpack.c.l.b16 %v633
        %v2890 = vunpack.c.h.b16 %v633
        %v2891 = vunpack.c.l.b16 %v634
        %v2892 = vunpack.c.h.b16 %v634
        %v2893 = vunpack.c.l.b16 %v635
        %v2894 = vunpack.c.h.b16 %v635
        %v2895 = vunpack.c.l.b16 %v636
        %v2896 = vunpack.c.h.b16 %v636
        %v2897 = vunpack.c.l.b16 %v637
        %v2898 = vunpack.c.h.b16 %v637
        %v2899 = vunpack.c.l.b16 %v638
        %v2900 = vunpack.c.h.b16 %v638
        %v2901 = vunpack.c.l.b16 %v639
        %v2902 = vunpack.c.h.b16 %v639
        %v2903 = vunpack.c.l.b16 %v640
        %v2904 = vunpack.c.h.b16 %v640
        %v2905 = vunpack.c.l.b16 %v641
        %v2906 = vunpack.c.h.b16 %v641
        %v2907 = vunpack.c.l.b16 %v642
        %v2908 = vunpack.c.h.b16 %v642
        %v2909 = vunpack.c.l.b16 %v643
        %v2910 = vunpack.c.h.b16 %v643
        %v2911 = vunpack.c.l.b16 %v644
        %v2912 = vunpack.c.h.b16 %v644
        %v2913 = vunpack.c.l.b16 %v645
        %v2914 = vunpack.c.h.b16 %v645
        %v2915 = vunpack.c.l.b16 %v646
        %v2916 = vunpack.c.h.b16 %v646
        %v2917 = vunpack.c.l.b16 %v647
        %v2918 = vunpack.c.h.b16 %v647
        %v2919 = vunpack.c.l.b16 %v648
        %v2920 = vunpack.c.h.b16 %v648
        %v2921 = vunpack.c.l.b16 %v649
        %v2922 = vunpack.c.h.b16 %v649
        %v2923 = vunpack.c.l.b16 %v650
        %v2924 = vunpack.c.h.b16 %v650
        %v2925 = vunpack.c.l.b16 %v651
        %v2926 = vunpack.c.h.b16 %v651
        %v2927 = vunpack.c.l.b16 %v652
        %v2928 = vunpack.c.h.b16 %v652
        %v2929 = vunpack.c.l.b16 %v653
        %v2930 = vunpack.c.h.b16 %v653
        %v2931 = vunpack.c.l.b16 %v654
        %v2932 = vunpack.c.h.b16 %v654
        %v2933 = vunpack.c.l.b16 %v655
        %v2934 = vunpack.c.h.b16 %v655
        %v2935 = vunpack.c.l.b16 %v656
        %v2936 = vunpack.c.h.b16 %v656
        %v2937 = vunpack.c.l.b16 %v657
        %v2938 = vunpack.c.h.b16 %v657
        %v2939 = vunpack.c.l.b16 %v658
        %v2940 = vunpack.c.h.b16 %v658
        %v2941 = vunpack.c.l.b16 %v659
        %v2942 = vunpack.c.h.b16 %v659
        %v2943 = vunpack.c.l.b16 %v660
        %v2944 = vunpack.c.h.b16 %v660
        %v2945 = vunpack.c.l.b16 %v661
        %v2946 = vunpack.c.h.b16 %v661
        %v2947 = vunpack.c.l.b16 %v662
        %v2948 = vunpack.c.h.b16 %v662
        %v2949 = vunpack.c.l.b16 %v663
        %v2950 = vunpack.c.h.b16 %v663
        %v2951 = vunpack.c.l.b16 %v664
        %v2952 = vunpack.c.h.b16 %v664
        %v2953 = vunpack.c.l.b16 %v665
        %v2954 = vunpack.c.h.b16 %v665
        %v2955 = vunpack.c.l.b16 %v666
        %v2956 = vunpack.c.h.b16 %v666
        %v2957 = vunpack.c.l.b16 %v667
        %v2958 = vunpack.c.h.b16 %v667
        %v2959 = vunpack.c.l.b16 %v668
        %v2960 = vunpack.c.h.b16 %v668
        %v2961 = vunpack.c.l.b16 %v669
        %v2962 = vunpack.c.h.b16 %v669
        %v2963 = vunpack.c.l.b16 %v670
        %v2964 = vunpack.c.h.b16 %v670
        %v2965 = vunpack.c.l.b16 %v671
        %v2966 = vunpack.c.h.b16 %v671
        %v2967 = vunpack.c.l.b16 %v672
        %v2968 = vunpack.c.h.b16 %v672
        %v2969 = vunpack.c.l.b16 %v673
        %v2970 = vunpack.c.h.b16 %v673
        %v2971 = vunpack.c.l.b16 %v674
        %v2972 = vunpack.c.h.b16 %v674
        %v2973 = vunpack.c.l.b16 %v675
        %v2974 = vunpack.c.h.b16 %v675
        %v2975 = vunpack.c.l.b16 %v676
        %v2976 = vunpack.c.h.b16 %v676
        %v2977 = vunpack.c.l.b16 %v677
        %v2978 = vunpack.c.h.b16 %v677
        %v2979 = vunpack.c.l.b16 %v678
        %v2980 = vunpack.c.h.b16 %v678
        %v2981 = vunpack.c.l.b16 %v679
        %v2982 = vunpack.c.h.b16 %v679
        %v2983 = vunpack.c.l.b16 %v680
        %v2984 = vunpack.c.h.b16 %v680
        %v2985 = vunpack.c.l.b16 %v681
        %v2986 = vunpack.c.h.b16 %v681
        %v2987 = vunpack.c.l.b16 %v682
        %v2988 = vunpack.c.h.b16 %v682
        %v2989 = vunpack.c.l.b16 %v683
        %v2990 = vunpack.c.h.b16 %v683
        %v2991 = vunpack.c.l.b16 %v684
        %v2992 = vunpack.c.h.b16 %v684
        %v2993 = vunpack.c.l.b16 %v685
        %v2994 = vunpack.c.h.b16 %v685
        %v2995 = vunpack.c.l.b16 %v686
        %v2996 = vunpack.c.h.b16 %v686
        %v2997 = vunpack.c.l.b16 %v687
        %v2998 = vunpack.c.h.b16 %v687
        %v2999 = vunpack.c.l.b16 %v688
        %v3000 = vunpack.c.h.b16 %v688
        %v3001 = vunpack.c.l.b16 %v689
        %v3002 = vunpack.c.h.b16 %v689
        %v3003 = vunpack.c.l.b16 %v690
        %v3004 = vunpack.c.h.b16 %v690
        %v3005 = vunpack.c.l.b16 %v691
        %v3006 = vunpack.c.h.b16 %v691
        %v3007 = vunpack.c.l.b16 %v692
        %v3008 = vunpack.c.h.b16 %v692
        %v3009 = vunpack.c.l.b16 %v693
        %v3010 = vunpack.c.h.b16 %v693
        %v3011 = vunpack.c.l.b16 %v694
        %v3012 = vunpack.c.h.b16 %v694
        %v3013 = vunpack.c.l.b16 %v695
        %v3014 = vunpack.c.h.b16 %v695
        %v3015 = vunpack.c.l.b16 %v696
        %v3016 = vunpack.c.h.b16 %v696
        %v3017 = vunpack.c.l.b16 %v697
        %v3018 = vunpack.c.h.b16 %v697
        %v3019 = vunpack.c.l.b16 %v698
        %v3020 = vunpack.c.h.b16 %v698
        %v3021 = vunpack.c.l.b16 %v699
        %v3022 = vunpack.c.h.b16 %v699
        %v3023 = vunpack.c.l.b16 %v700
        %v3024 = vunpack.c.h.b16 %v700
        %v3025 = vunpack.c.l.b16 %v701
        %v3026 = vunpack.c.h.b16 %v701
        %v3027 = vunpack.c.l.b16 %v702
        %v3028 = vunpack.c.h.b16 %v702
        %v3029 = vunpack.c.l.b16 %v703
        %v3030 = vunpack.c.h.b16 %v703
        %v3031 = vunpack.c.l.b16 %v704
        %v3032 = vunpack.c.h.b16 %v704
        %v3033 = vunpack.c.l.b16 %v705
        %v3034 = vunpack.c.h.b16 %v705
        %v3035 = vunpack.c.l.b16 %v706
        %v3036 = vunpack.c.h.b16 %v706
        %v3037 = vunpack.c.l.b16 %v707
        %v3038 = vunpack.c.h.b16 %v707
        %v3039 = vunpack.c.l.b16 %v708
        %v3040 = vunpack.c.h.b16 %v708
        %v3041 = vunpack.c.l.b16 %v709
        %v3042 = vunpack.c.h.b16 %v709
        %v3043 = vunpack.c.l.b16 %v710
        %v3044 = vunpack.c.h.b16 %v710
        %v3045 = vunpack.c.l.b16 %v711
        %v3046 = vunpack.c.h.b16 %v711
        %v3047 = vunpack.c.l.b16 %v712
        %v3048 = vunpack.c.h.b16 %v712
        %v3049 = vunpack.c.l.b16 %v713
        %v3050 = vunpack.c.h.b16 %v713
        %v3051 = vunpack.c.l.b16 %v714
        %v3052 = vunpack.c.h.b16 %v714
        %v3053 = vunpack.c.l.b16 %v715
        %v3054 = vunpack.c.h.b16 %v715
        %v3055 = vunpack.c.l.b16 %v716
        %v3056 = vunpack.c.h.b16 %v716
        %v3057 = vunpack.c.l.b16 %v717
        %v3058 = vunpack.c.h.b16 %v717
        %v3059 = vunpack.c.l.b16 %v718
        %v3060 = vunpack.c.h.b16 %v718
        %v3061 = vunpack.c.l.b16 %v719
        %v3062 = vunpack.c.h.b16 %v719
        %v3063 = vunpack.c.l.b16 %v720
        %v3064 = vunpack.c.h.b16 %v720
        %v3065 = vunpack.c.l.b16 %v721
        %v3066 = vunpack.c.h.b16 %v721
        %v3067 = vunpack.c.l.b16 %v722
        %v3068 = vunpack.c.h.b16 %v722
        %v3069 = vunpack.c.l.b16 %v723
        %v3070 = vunpack.c.h.b16 %v723
        %v3071 = vunpack.c.l.b16 %v724
        %v3072 = vunpack.c.h.b16 %v724
        %v3073 = vunpack.c.l.b16 %v725
        %v3074 = vunpack.c.h.b16 %v725
        %v3075 = vunpack.c.l.b16 %v726
        %v3076 = vunpack.c.h.b16 %v726
        %v3077 = vunpack.c.l.b16 %v727
        %v3078 = vunpack.c.h.b16 %v727
        %v3079 = vunpack.c.l.b16 %v728
        %v3080 = vunpack.c.h.b16 %v728
        %v3081 = vunpack.c.l.b16 %v729
        %v3082 = vunpack.c.h.b16 %v729
        %v3083 = vunpack.c.l.b16 %v730
        %v3084 = vunpack.c.h.b16 %v730
        %v3085 = vunpack.c.l.b16 %v731
        %v3086 = vunpack.c.h.b16 %v731
        %v3087 = vunpack.c.l.b16 %v732
        %v3088 = vunpack.c.h.b16 %v732
        %v3089 = vunpack.c.l.b16 %v733
        %v3090 = vunpack.c.h.b16 %v733
        %v3091 = vunpack.c.l.b16 %v734
        %v3092 = vunpack.c.h.b16 %v734
        %v3093 = vunpack.c.l.b16 %v735
        %v3094 = vunpack.c.h.b16 %v735
        %v3095 = vunpack.c.l.b16 %v736
        %v3096 = vunpack.c.h.b16 %v736
        %v3097 = vunpack.c.l.b16 %v737
        %v3098 = vunpack.c.h.b16 %v737
        %v3099 = vunpack.c.l.b16 %v738
        %v3100 = vunpack.c.h.b16 %v738
        %v3101 = vunpack.c.l.b16 %v739
        %v3102 = vunpack.c.h.b16 %v739
        %v3103 = vunpack.c.l.b16 %v740
        %v3104 = vunpack.c.h.b16 %v740
        %v3105 = vunpack.c.l.b16 %v741
        %v3106 = vunpack.c.h.b16 %v741
        %v3107 = vunpack.c.l.b16 %v742
        %v3108 = vunpack.c.h.b16 %v742
        %v3109 = vunpack.c.l.b16 %v743
        %v3110 = vunpack.c.h.b16 %v743
        %v3111 = vunpack.c.l.b16 %v744
        %v3112 = vunpack.c.h.b16 %v744
        %v3113 = vunpack.c.l.b16 %v745
        %v3114 = vunpack.c.h.b16 %v745
        %v3115 = vunpack.c.l.b16 %v746
        %v3116 = vunpack.c.h.b16 %v746
        %v3117 = vunpack.c.l.b16 %v747
        %v3118 = vunpack.c.h.b16 %v747
        %v3119 = vunpack.c.l.b16 %v748
        %v3120 = vunpack.c.h.b16 %v748
        %v3121 = vunpack.c.l.b16 %v749
        %v3122 = vunpack.c.h.b16 %v749
        %v3123 = vunpack.c.l.b16 %v750
        %v3124 = vunpack.c.h.b16 %v750
        %v3125 = vunpack.c.l.b16 %v751
        %v3126 = vunpack.c.h.b16 %v751
        %v3127 = vunpack.c.l.b16 %v752
        %v3128 = vunpack.c.h.b16 %v752
        %v3129 = vunpack.c.l.b16 %v753
        %v3130 = vunpack.c.h.b16 %v753
        %v3131 = vunpack.c.l.b16 %v754
        %v3132 = vunpack.c.h.b16 %v754
        %v3133 = vunpack.c.l.b16 %v755
        %v3134 = vunpack.c.h.b16 %v755
        %v3135 = vunpack.c.l.b16 %v756
        %v3136 = vunpack.c.h.b16 %v756
        %v3137 = vunpack.c.l.b16 %v757
        %v3138 = vunpack.c.h.b16 %v757
        %v3139 = vunpack.c.l.b16 %v758
        %v3140 = vunpack.c.h.b16 %v758
        %v3141 = vunpack.c.l.b16 %v759
        %v3142 = vunpack.c.h.b16 %v759
        %v3143 = vunpack.c.l.b16 %v760
        %v3144 = vunpack.c.h.b16 %v760
        %v3145 = vunpack.c.l.b16 %v761
        %v3146 = vunpack.c.h.b16 %v761
        %v3147 = vunpack.c.l.b16 %v762
        %v3148 = vunpack.c.h.b16 %v762
        %v3149 = vunpack.c.l.b16 %v763
        %v3150 = vunpack.c.h.b16 %v763
        %v3151 = vunpack.c.l.b16 %v764
        %v3152 = vunpack.c.h.b16 %v764
        %v3153 = vunpack.c.l.b16 %v765
        %v3154 = vunpack.c.h.b16 %v765
        %v3155 = vunpack.c.l.b16 %v766
        %v3156 = vunpack.c.h.b16 %v766
        %v3157 = vunpack.c.l.b16 %v767
        %v3158 = vunpack.c.h.b16 %v767
        %v3159 = vunpack.c.l.b16 %v768
        %v3160 = vunpack.c.h.b16 %v768
        %v3161 = vunpack.c.l.b16 %v769
        %v3162 = vunpack.c.h.b16 %v769
        %v3163 = vunpack.c.l.b16 %v770
        %v3164 = vunpack.c.h.b16 %v770
        %v3165 = vunpack.c.l.b16 %v771
        %v3166 = vunpack.c.h.b16 %v771
        %v3167 = vunpack.c.l.b16 %v772
        %v3168 = vunpack.c.h.b16 %v772
        %v3169 = vunpack.c.l.b16 %v773
        %v3170 = vunpack.c.h.b16 %v773
        %v3171 = vunpack.c.l.b16 %v774
        %v3172 = vunpack.c.h.b16 %v774
        %v3173 = vunpack.c.l.b16 %v775
        %v3174 = vunpack.c.h.b16 %v775
        %v3175 = vunpack.c.l.b16 %v776
        %v3176 = vunpack.c.h.b16 %v776
        %v3177 = vunpack.c.l.b16 %v777
        %v3178 = vunpack.c.h.b16 %v777
        %v3179 = vunpack.c.l.b16 %v778
        %v3180 = vunpack.c.h.b16 %v778
        %v3181 = vunpack.c.l.b16 %v779
        %v3182 = vunpack.c.h.b16 %v779
        %v3183 = vunpack.c.l.b16 %v780
        %v3184 = vunpack.c.h.b16 %v780
        %v3185 = vunpack.c.l.b16 %v781
        %v3186 = vunpack.c.h.b16 %v781
        %v3187 = vunpack.c.l.b16 %v782
        %v3188 = vunpack.c.h.b16 %v782
        %v3189 = vunpack.c.l.b16 %v783
        %v3190 = vunpack.c.h.b16 %v783
        %v3191 = vunpack.c.l.b16 %v784
        %v3192 = vunpack.c.h.b16 %v784
        %v3193 = vunpack.c.l.b16 %v785
        %v3194 = vunpack.c.h.b16 %v785
        %v3195 = vunpack.c.l.b16 %v786
        %v3196 = vunpack.c.h.b16 %v786
        %v3197 = vunpack.c.l.b16 %v787
        %v3198 = vunpack.c.h.b16 %v787
        %v3199 = vunpack.c.l.b16 %v788
        %v3200 = vunpack.c.h.b16 %v788
        %v3201 = vunpack.c.l.b16 %v789
        %v3202 = vunpack.c.h.b16 %v789
        %v3203 = vunpack.c.l.b16 %v790
        %v3204 = vunpack.c.h.b16 %v790
        %v3205 = vunpack.c.l.b16 %v791
        %v3206 = vunpack.c.h.b16 %v791
        %v3207 = vunpack.c.l.b16 %v792
        %v3208 = vunpack.c.h.b16 %v792
        %v3209 = vunpack.c.l.b16 %v793
        %v3210 = vunpack.c.h.b16 %v793
        %v3211 = vunpack.c.l.b16 %v794
        %v3212 = vunpack.c.h.b16 %v794
        %v3213 = vunpack.c.l.b16 %v795
        %v3214 = vunpack.c.h.b16 %v795
        %v3215 = vunpack.c.l.b16 %v796
        %v3216 = vunpack.c.h.b16 %v796
        %v3217 = vunpack.c.l.b16 %v797
        %v3218 = vunpack.c.h.b16 %v797
        %v3219 = vunpack.c.l.b16 %v798
        %v3220 = vunpack.c.h.b16 %v798
        %v3221 = vunpack.c.l.b16 %v799
        %v3222 = vunpack.c.h.b16 %v799
        %v3223 = vunpack.c.l.b16 %v800
        %v3224 = vunpack.c.h.b16 %v800
        %v3225 = vunpack.c.l.b16 %v801
        %v3226 = vunpack.c.h.b16 %v801
        %v3227 = vunpack.c.l.b16 %v802
        %v3228 = vunpack.c.h.b16 %v802
        %v3229 = vunpack.c.l.b16 %v803
        %v3230 = vunpack.c.h.b16 %v803
        %v3231 = vunpack.c.l.b16 %v804
        %v3232 = vunpack.c.h.b16 %v804
        %v3233 = vunpack.c.l.b16 %v805
        %v3234 = vunpack.c.h.b16 %v805
        %v3235 = vunpack.c.l.b16 %v806
        %v3236 = vunpack.c.h.b16 %v806
        %v3237 = vunpack.c.l.b16 %v807
        %v3238 = vunpack.c.h.b16 %v807
        %v3239 = vunpack.c.l.b16 %v808
        %v3240 = vunpack.c.h.b16 %v808
        %v3241 = vunpack.c.l.b16 %v809
        %v3242 = vunpack.c.h.b16 %v809
        %v3243 = vunpack.c.l.b16 %v810
        %v3244 = vunpack.c.h.b16 %v810
        %v3245 = vunpack.c.l.b16 %v811
        %v3246 = vunpack.c.h.b16 %v811
        %v3247 = vunpack.c.l.b16 %v812
        %v3248 = vunpack.c.h.b16 %v812
        %v3249 = vunpack.c.l.b16 %v813
        %v3250 = vunpack.c.h.b16 %v813
        %v3251 = vunpack.c.l.b16 %v814
        %v3252 = vunpack.c.h.b16 %v814
        %v3253 = vunpack.c.l.b16 %v815
        %v3254 = vunpack.c.h.b16 %v815
        %v3255 = vunpack.c.l.b16 %v816
        %v3256 = vunpack.c.h.b16 %v816
        %v3257 = vunpack.c.l.b16 %v817
        %v3258 = vunpack.c.h.b16 %v817
        %v3259 = vunpack.c.l.b16 %v818
        %v3260 = vunpack.c.h.b16 %v818
        %v3261 = vunpack.c.l.b16 %v819
        %v3262 = vunpack.c.h.b16 %v819
        %v3263 = vunpack.c.l.b16 %v820
        %v3264 = vunpack.c.h.b16 %v820
        %v3265 = vunpack.c.l.b16 %v821
        %v3266 = vunpack.c.h.b16 %v821
        %v3267 = vunpack.c.l.b16 %v822
        %v3268 = vunpack.c.h.b16 %v822
        %v3269 = vunpack.c.l.b16 %v823
        %v3270 = vunpack.c.h.b16 %v823
        %v3271 = vunpack.c.l.b16 %v824
        %v3272 = vunpack.c.h.b16 %v824
        %v3273 = vunpack.c.l.b16 %v825
        %v3274 = vunpack.c.h.b16 %v825
        %v3275 = vunpack.c.l.b16 %v826
        %v3276 = vunpack.c.h.b16 %v826
        %v3277 = vunpack.c.l.b16 %v827
        %v3278 = vunpack.c.h.b16 %v827
        %v3279 = vunpack.c.l.b16 %v828
        %v3280 = vunpack.c.h.b16 %v828
        %v3281 = vunpack.c.l.b16 %v829
        %v3282 = vunpack.c.h.b16 %v829
        %v3283 = vunpack.c.l.b16 %v830
        %v3284 = vunpack.c.h.b16 %v830
        %v3285 = vunpack.c.l.b16 %v831
        %v3286 = vunpack.c.h.b16 %v831
        %v3287 = vunpack.c.l.b16 %v832
        %v3288 = vunpack.c.h.b16 %v832
        %v3289 = vunpack.c.l.b16 %v833
        %v3290 = vunpack.c.h.b16 %v833
        %v3291 = vunpack.c.l.b16 %v834
        %v3292 = vunpack.c.h.b16 %v834
        %v3293 = vunpack.c.l.b16 %v835
        %v3294 = vunpack.c.h.b16 %v835
        %v3295 = vunpack.c.l.b16 %v836
        %v3296 = vunpack.c.h.b16 %v836
        %v3297 = vunpack.c.l.b16 %v837
        %v3298 = vunpack.c.h.b16 %v837
        %v3299 = vunpack.c.l.b16 %v838
        %v3300 = vunpack.c.h.b16 %v838
        %v3301 = vunpack.c.l.b16 %v839
        %v3302 = vunpack.c.h.b16 %v839
        %v3303 = vunpack.c.l.b16 %v840
        %v3304 = vunpack.c.h.b16 %v840
        %v3305 = vunpack.c.l.b16 %v841
        %v3306 = vunpack.c.h.b16 %v841
        %v3307 = vunpack.c.l.b16 %v842
        %v3308 = vunpack.c.h.b16 %v842
        %v3309 = vunpack.c.l.b16 %v843
        %v3310 = vunpack.c.h.b16 %v843
        %v3311 = vunpack.c.l.b16 %v844
        %v3312 = vunpack.c.h.b16 %v844
        %v3313 = vunpack.c.l.b16 %v845
        %v3314 = vunpack.c.h.b16 %v845
        %v3315 = vunpack.c.l.b16 %v846
        %v3316 = vunpack.c.h.b16 %v846
        %v3317 = vunpack.c.l.b16 %v847
        %v3318 = vunpack.c.h.b16 %v847
        %v3319 = vunpack.c.l.b16 %v848
        %v3320 = vunpack.c.h.b16 %v848
        %v3321 = vunpack.c.l.b16 %v849
        %v3322 = vunpack.c.h.b16 %v849
        %v3323 = vunpack.c.l.b16 %v850
        %v3324 = vunpack.c.h.b16 %v850
        %v3325 = vunpack.c.l.b16 %v851
        %v3326 = vunpack.c.h.b16 %v851
        %v3327 = vunpack.c.l.b16 %v852
        %v3328 = vunpack.c.h.b16 %v852
        %v3329 = vunpack.c.l.b16 %v853
        %v3330 = vunpack.c.h.b16 %v853
        %v3331 = vunpack.c.l.b16 %v854
        %v3332 = vunpack.c.h.b16 %v854
        %v3333 = vunpack.c.l.b16 %v855
        %v3334 = vunpack.c.h.b16 %v855
        %v3335 = vunpack.c.l.b16 %v856
        %v3336 = vunpack.c.h.b16 %v856
        %v3337 = vunpack.c.l.b16 %v857
        %v3338 = vunpack.c.h.b16 %v857
        %v3339 = vunpack.c.l.b16 %v858
        %v3340 = vunpack.c.h.b16 %v858
        %v3341 = vunpack.c.l.b16 %v859
        %v3342 = vunpack.c.h.b16 %v859
        %v3343 = vunpack.c.l.b16 %v860
        %v3344 = vunpack.c.h.b16 %v860
        %v3345 = vunpack.c.l.b16 %v861
        %v3346 = vunpack.c.h.b16 %v861
        %v3347 = vunpack.c.l.b16 %v862
        %v3348 = vunpack.c.h.b16 %v862
        %v3349 = vunpack.c.l.b16 %v863
        %v3350 = vunpack.c.h.b16 %v863
        %v3351 = vunpack.c.l.b16 %v864
        %v3352 = vunpack.c.h.b16 %v864
        %v3353 = vunpack.c.l.b16 %v865
        %v3354 = vunpack.c.h.b16 %v865
        %v3355 = vunpack.c.l.b16 %v866
        %v3356 = vunpack.c.h.b16 %v866
        %v3357 = vunpack.c.l.b16 %v867
        %v3358 = vunpack.c.h.b16 %v867
        %v3359 = vunpack.c.l.b16 %v868
        %v3360 = vunpack.c.h.b16 %v868
        %v3361 = vunpack.c.l.b16 %v869
        %v3362 = vunpack.c.h.b16 %v869
        %v3363 = vunpack.c.l.b16 %v870
        %v3364 = vunpack.c.h.b16 %v870
        %v3365 = vunpack.c.l.b16 %v871
        %v3366 = vunpack.c.h.b16 %v871
        %v3367 = vunpack.c.l.b16 %v872
        %v3368 = vunpack.c.h.b16 %v872
        %v3369 = vunpack.c.l.b16 %v873
        %v3370 = vunpack.c.h.b16 %v873
        %v3371 = vunpack.c.l.b16 %v874
        %v3372 = vunpack.c.h.b16 %v874
        %v3373 = vunpack.c.l.b16 %v875
        %v3374 = vunpack.c.h.b16 %v875
        %v3375 = vunpack.c.l.b16 %v876
        %v3376 = vunpack.c.h.b16 %v876
        %v3377 = vunpack.c.l.b16 %v877
        %v3378 = vunpack.c.h.b16 %v877
        %v3379 = vunpack.c.l.b16 %v878
        %v3380 = vunpack.c.h.b16 %v878
        %v3381 = vunpack.c.l.b16 %v879
        %v3382 = vunpack.c.h.b16 %v879
        %v3383 = vunpack.c.l.b16 %v880
        %v3384 = vunpack.c.h.b16 %v880
        %v3385 = vunpack.c.l.b16 %v881
        %v3386 = vunpack.c.h.b16 %v881
        %v3387 = vunpack.c.l.b16 %v882
        %v3388 = vunpack.c.h.b16 %v882
        %v3389 = vunpack.c.l.b16 %v883
        %v3390 = vunpack.c.h.b16 %v883
        %v3391 = vunpack.c.l.b16 %v884
        %v3392 = vunpack.c.h.b16 %v884
        %v3393 = vunpack.c.l.b16 %v885
        %v3394 = vunpack.c.h.b16 %v885
        %v3395 = vunpack.c.l.b16 %v886
        %v3396 = vunpack.c.h.b16 %v886
        %v3397 = vunpack.c.l.b16 %v887
        %v3398 = vunpack.c.h.b16 %v887
        %v3399 = vunpack.c.l.b16 %v888
        %v3400 = vunpack.c.h.b16 %v888
        %v3401 = vunpack.c.l.b16 %v889
        %v3402 = vunpack.c.h.b16 %v889
        %v3403 = vunpack.c.l.b16 %v890
        %v3404 = vunpack.c.h.b16 %v890
        %v3405 = vunpack.c.l.b16 %v891
        %v3406 = vunpack.c.h.b16 %v891
        %v3407 = vunpack.c.l.b16 %v892
        %v3408 = vunpack.c.h.b16 %v892
        %v3409 = vunpack.c.l.b16 %v893
        %v3410 = vunpack.c.h.b16 %v893
        %v3411 = vunpack.c.l.b16 %v894
        %v3412 = vunpack.c.h.b16 %v894
        %v3413 = vunpack.c.l.b16 %v895
        %v3414 = vunpack.c.h.b16 %v895
        %v3415 = vunpack.c.l.b16 %v896
        %v3416 = vunpack.c.h.b16 %v896
        %v3417 = vunpack.c.l.b16 %v897
        %v3418 = vunpack.c.h.b16 %v897
        %v3419 = vunpack.c.l.b16 %v898
        %v3420 = vunpack.c.h.b16 %v898
        %v3421 = vunpack.c.l.b16 %v899
        %v3422 = vunpack.c.h.b16 %v899
        %v3423 = vunpack.c.l.b16 %v900
        %v3424 = vunpack.c.h.b16 %v900
        %v3425 = vunpack.c.l.b16 %v901
        %v3426 = vunpack.c.h.b16 %v901
        %v3427 = vunpack.c.l.b16 %v902
        %v3428 = vunpack.c.h.b16 %v902
        %v3429 = vunpack.c.l.b16 %v903
        %v3430 = vunpack.c.h.b16 %v903
        %v3431 = vunpack.c.l.b16 %v904
        %v3432 = vunpack.c.h.b16 %v904
        %v3433 = vunpack.c.l.b16 %v905
        %v3434 = vunpack.c.h.b16 %v905
        %v3435 = vunpack.c.l.b16 %v906
        %v3436 = vunpack.c.h.b16 %v906
        %v3437 = vunpack.c.l.b16 %v907
        %v3438 = vunpack.c.h.b16 %v907
        %v3439 = vunpack.c.l.b16 %v908
        %v3440 = vunpack.c.h.b16 %v908
        %v3441 = vunpack.c.l.b16 %v909
        %v3442 = vunpack.c.h.b16 %v909
        %v3443 = vunpack.c.l.b16 %v910
        %v3444 = vunpack.c.h.b16 %v910
        %v3445 = vunpack.c.l.b16 %v911
        %v3446 = vunpack.c.h.b16 %v911
        %v3447 = vunpack.c.l.b16 %v912
        %v3448 = vunpack.c.h.b16 %v912
        %v3449 = vunpack.c.l.b16 %v913
        %v3450 = vunpack.c.h.b16 %v913
        %v3451 = vunpack.c.l.b16 %v914
        %v3452 = vunpack.c.h.b16 %v914
        %v3453 = vunpack.c.l.b16 %v915
        %v3454 = vunpack.c.h.b16 %v915
        %v3455 = vunpack.c.l.b16 %v916
        %v3456 = vunpack.c.h.b16 %v916
        %v3457 = vunpack.c.l.b16 %v917
        %v3458 = vunpack.c.h.b16 %v917
        %v3459 = vunpack.c.l.b16 %v918
        %v3460 = vunpack.c.h.b16 %v918
        %v3461 = vunpack.c.l.b16 %v919
        %v3462 = vunpack.c.h.b16 %v919
        %v3463 = vunpack.c.l.b16 %v920
        %v3464 = vunpack.c.h.b16 %v920
        %v3465 = vunpack.c.l.b16 %v921
        %v3466 = vunpack.c.h.b16 %v921
        %v3467 = vunpack.c.l.b16 %v922
        %v3468 = vunpack.c.h.b16 %v922
        %v3469 = vunpack.c.l.b16 %v923
        %v3470 = vunpack.c.h.b16 %v923
        %v3471 = vunpack.c.l.b16 %v924
        %v3472 = vunpack.c.h.b16 %v924
        %v3473 = vunpack.c.l.b16 %v925
        %v3474 = vunpack.c.h.b16 %v925
        %v3475 = vunpack.c.l.b16 %v926
        %v3476 = vunpack.c.h.b16 %v926
        %v3477 = vunpack.c.l.b16 %v927
        %v3478 = vunpack.c.h.b16 %v927
        %v3479 = vunpack.c.l.b16 %v928
        %v3480 = vunpack.c.h.b16 %v928
        %v3481 = vunpack.c.l.b16 %v929
        %v3482 = vunpack.c.h.b16 %v929
        %v3483 = vunpack.c.l.b16 %v930
        %v3484 = vunpack.c.h.b16 %v930
        %v3485 = vunpack.c.l.b16 %v931
        %v3486 = vunpack.c.h.b16 %v931
        %v3487 = vunpack.c.l.b16 %v932
        %v3488 = vunpack.c.h.b16 %v932
        %v3489 = vunpack.c.l.b16 %v933
        %v3490 = vunpack.c.h.b16 %v933
        %v3491 = vunpack.c.l.b16 %v934
        %v3492 = vunpack.c.h.b16 %v934
        %v3493 = vunpack.c.l.b16 %v935
        %v3494 = vunpack.c.h.b16 %v935
        %v3495 = vunpack.c.l.b16 %v936
        %v3496 = vunpack.c.h.b16 %v936
        %v3497 = vunpack.c.l.b16 %v937
        %v3498 = vunpack.c.h.b16 %v937
        %v3499 = vunpack.c.l.b16 %v938
        %v3500 = vunpack.c.h.b16 %v938
        %v3501 = vunpack.c.l.b16 %v939
        %v3502 = vunpack.c.h.b16 %v939
        %v3503 = vunpack.c.l.b16 %v940
        %v3504 = vunpack.c.h.b16 %v940
        %v3505 = vunpack.c.l.b16 %v941
        %v3506 = vunpack.c.h.b16 %v941
        %v3507 = vunpack.c.l.b16 %v942
        %v3508 = vunpack.c.h.b16 %v942
        %v3509 = vunpack.c.l.b16 %v943
        %v3510 = vunpack.c.h.b16 %v943
        %v3511 = vunpack.c.l.b16 %v944
        %v3512 = vunpack.c.h.b16 %v944
        %v3513 = vunpack.c.l.b16 %v945
        %v3514 = vunpack.c.h.b16 %v945
        %v3515 = vunpack.c.l.b16 %v946
        %v3516 = vunpack.c.h.b16 %v946
        %v3517 = vunpack.c.l.b16 %v947
        %v3518 = vunpack.c.h.b16 %v947
        %v3519 = vunpack.c.l.b16 %v948
        %v3520 = vunpack.c.h.b16 %v948
        %v3521 = vunpack.c.l.b16 %v949
        %v3522 = vunpack.c.h.b16 %v949
        %v3523 = vunpack.c.l.b16 %v950
        %v3524 = vunpack.c.h.b16 %v950
        %v3525 = vunpack.c.l.b16 %v951
        %v3526 = vunpack.c.h.b16 %v951
        %v3527 = vunpack.c.l.b16 %v952
        %v3528 = vunpack.c.h.b16 %v952
        %v3529 = vunpack.c.l.b16 %v953
        %v3530 = vunpack.c.h.b16 %v953
        %v3531 = vunpack.c.l.b16 %v954
        %v3532 = vunpack.c.h.b16 %v954
        %v3533 = vunpack.c.l.b16 %v955
        %v3534 = vunpack.c.h.b16 %v955
        %v3535 = vunpack.c.l.b16 %v956
        %v3536 = vunpack.c.h.b16 %v956
        %v3537 = vunpack.c.l.b16 %v957
        %v3538 = vunpack.c.h.b16 %v957
        %v3539 = vunpack.c.l.b16 %v958
        %v3540 = vunpack.c.h.b16 %v958
        %v3541 = vunpack.c.l.b16 %v959
        %v3542 = vunpack.c.h.b16 %v959
        %v3543 = vunpack.c.l.b16 %v960
        %v3544 = vunpack.c.h.b16 %v960
        %v3545 = vunpack.c.l.b16 %v961
        %v3546 = vunpack.c.h.b16 %v961
        %v3547 = vunpack.c.l.b16 %v962
        %v3548 = vunpack.c.h.b16 %v962
        %v3549 = vunpack.c.l.b16 %v963
        %v3550 = vunpack.c.h.b16 %v963
        %v3551 = vunpack.c.l.b16 %v964
        %v3552 = vunpack.c.h.b16 %v964
        %v3553 = vunpack.c.l.b16 %v965
        %v3554 = vunpack.c.h.b16 %v965
        %v3555 = vunpack.c.l.b16 %v966
        %v3556 = vunpack.c.h.b16 %v966
        %v3557 = vunpack.c.l.b16 %v967
        %v3558 = vunpack.c.h.b16 %v967
        %v3559 = vunpack.c.l.b16 %v968
        %v3560 = vunpack.c.h.b16 %v968
        %v3561 = vunpack.c.l.b16 %v969
        %v3562 = vunpack.c.h.b16 %v969
        %v3563 = vunpack.c.l.b16 %v970
        %v3564 = vunpack.c.h.b16 %v970
        %v3565 = vunpack.c.l.b16 %v971
        %v3566 = vunpack.c.h.b16 %v971
        %v3567 = vunpack.c.l.b16 %v972
        %v3568 = vunpack.c.h.b16 %v972
        %v3569 = vunpack.c.l.b16 %v973
        %v3570 = vunpack.c.h.b16 %v973
        %v3571 = vunpack.c.l.b16 %v974
        %v3572 = vunpack.c.h.b16 %v974
        %v3573 = vunpack.c.l.b16 %v975
        %v3574 = vunpack.c.h.b16 %v975
        %v3575 = vunpack.c.l.b16 %v976
        %v3576 = vunpack.c.h.b16 %v976
        %v3577 = vunpack.c.l.b16 %v977
        %v3578 = vunpack.c.h.b16 %v977
        %v3579 = vunpack.c.l.b16 %v978
        %v3580 = vunpack.c.h.b16 %v978
        %v3581 = vunpack.c.l.b16 %v979
        %v3582 = vunpack.c.h.b16 %v979
        %v3583 = vunpack.c.l.b16 %v980
        %v3584 = vunpack.c.h.b16 %v980
        %v3585 = vunpack.c.l.b16 %v981
        %v3586 = vunpack.c.h.b16 %v981
        %v3587 = vunpack.c.l.b16 %v982
        %v3588 = vunpack.c.h.b16 %v982
        %v3589 = vunpack.c.l.b16 %v983
        %v3590 = vunpack.c.h.b16 %v983
        %v3591 = vunpack.c.l.b16 %v984
        %v3592 = vunpack.c.h.b16 %v984
        %v3593 = vunpack.c.l.b16 %v985
        %v3594 = vunpack.c.h.b16 %v985
        %v3595 = vunpack.c.l.b16 %v986
        %v3596 = vunpack.c.h.b16 %v986
        %v3597 = vunpack.c.l.b16 %v987
        %v3598 = vunpack.c.h.b16 %v987
        %v3599 = vunpack.c.l.b16 %v988
        %v3600 = vunpack.c.h.b16 %v988
        %v3601 = vunpack.c.l.b16 %v989
        %v3602 = vunpack.c.h.b16 %v989
        %v3603 = vunpack.c.l.b16 %v990
        %v3604 = vunpack.c.h.b16 %v990
        %v3605 = vunpack.c.l.b16 %v991
        %v3606 = vunpack.c.h.b16 %v991
        %v3607 = vunpack.c.l.b16 %v992
        %v3608 = vunpack.c.h.b16 %v992
        %v3609 = vunpack.c.l.b16 %v993
        %v3610 = vunpack.c.h.b16 %v993
        %v3611 = vunpack.c.l.b16 %v994
        %v3612 = vunpack.c.h.b16 %v994
        %v3613 = vunpack.c.l.b16 %v995
        %v3614 = vunpack.c.h.b16 %v995
        %v3615 = vunpack.c.l.b16 %v996
        %v3616 = vunpack.c.h.b16 %v996
        %v3617 = vunpack.c.l.b16 %v997
        %v3618 = vunpack.c.h.b16 %v997
        %v3619 = vunpack.c.l.b16 %v998
        %v3620 = vunpack.c.h.b16 %v998
        %v3621 = vunpack.c.l.b16 %v999
        %v3622 = vunpack.c.h.b16 %v999
        %v3623 = vunpack.c.l.b16 %v1000
        %v3624 = vunpack.c.h.b16 %v1000
        %v3625 = vunpack.c.l.b16 %v1001
        %v3626 = vunpack.c.h.b16 %v1001
        %v3627 = vunpack.c.l.b16 %v1002
        %v3628 = vunpack.c.h.b16 %v1002
        %v3629 = vunpack.c.l.b16 %v1003
        %v3630 = vunpack.c.h.b16 %v1003
        %v3631 = vunpack.c.l.b16 %v1004
        %v3632 = vunpack.c.h.b16 %v1004
        %v3633 = vunpack.c.l.b16 %v1005
        %v3634 = vunpack.c.h.b16 %v1005
        %v3635 = vunpack.c.l.b16 %v1006
        %v3636 = vunpack.c.h.b16 %v1006
        %v3637 = vunpack.c.l.b16 %v1007
        %v3638 = vunpack.c.h.b16 %v1007
        %v3639 = vunpack.c.l.b16 %v1008
        %v3640 = vunpack.c.h.b16 %v1008
        %v3641 = vunpack.c.l.b16 %v1009
        %v3642 = vunpack.c.h.b16 %v1009
        %v3643 = vunpack.c.l.b16 %v1010
        %v3644 = vunpack.c.h.b16 %v1010
        %v3645 = vunpack.c.l.b16 %v1011
        %v3646 = vunpack.c.h.b16 %v1011
        %v3647 = vunpack.c.l.b16 %v1012
        %v3648 = vunpack.c.h.b16 %v1012
        %v3649 = vunpack.c.l.b16 %v1013
        %v3650 = vunpack.c.h.b16 %v1013
        %v3651 = vunpack.c.l.b16 %v1014
        %v3652 = vunpack.c.h.b16 %v1014
        %v3653 = vunpack.c.l.b16 %v1015
        %v3654 = vunpack.c.h.b16 %v1015
        %v3655 = vunpack.c.l.b16 %v1016
        %v3656 = vunpack.c.h.b16 %v1016
        %v3657 = vunpack.c.l.b16 %v1017
        %v3658 = vunpack.c.h.b16 %v1017
        %v3659 = vunpack.c.l.b16 %v1018
        %v3660 = vunpack.c.h.b16 %v1018
        %v3661 = vunpack.c.l.b16 %v1019
        %v3662 = vunpack.c.h.b16 %v1019
        %v3663 = vunpack.c.l.b16 %v1020
        %v3664 = vunpack.c.h.b16 %v1020
        %v3665 = vunpack.c.l.b16 %v1021
        %v3666 = vunpack.c.h.b16 %v1021
        %v3667 = vunpack.c.l.b16 %v1022
        %v3668 = vunpack.c.h.b16 %v1022
        %v3669 = vunpack.c.l.b16 %v1023
        %v3670 = vunpack.c.h.b16 %v1023
        %v3671 = vunpack.c.l.b16 %v1024
        %v3672 = vunpack.c.h.b16 %v1024
        %v3673 = vunpack.c.l.b16 %v1025
        %v3674 = vunpack.c.h.b16 %v1025
        %v3675 = vunpack.c.l.b16 %v1026
        %v3676 = vunpack.c.h.b16 %v1026
        %v3677 = vunpack.c.l.b16 %v1027
        %v3678 = vunpack.c.h.b16 %v1027
        %v3679 = vunpack.c.l.b16 %v1028
        %v3680 = vunpack.c.h.b16 %v1028
        %v3681 = vunpack.c.l.b16 %v1029
        %v3682 = vunpack.c.h.b16 %v1029
        %v3683 = vunpack.c.l.b16 %v1030
        %v3684 = vunpack.c.h.b16 %v1030
        %v3685 = vunpack.c.l.b16 %v1031
        %v3686 = vunpack.c.h.b16 %v1031
        %v3687 = vunpack.c.l.b16 %v1032
        %v3688 = vunpack.c.h.b16 %v1032
        %v3689 = vunpack.c.l.b16 %v1033
        %v3690 = vunpack.c.h.b16 %v1033
        %v3691 = vunpack.c.l.b16 %v1034
        %v3692 = vunpack.c.h.b16 %v1034
        %v3693 = vunpack.c.l.b16 %v1035
        %v3694 = vunpack.c.h.b16 %v1035
        %v3695 = vunpack.c.l.b16 %v1036
        %v3696 = vunpack.c.h.b16 %v1036
        %v3697 = vunpack.c.l.b16 %v1037
        %v3698 = vunpack.c.h.b16 %v1037
        %v3699 = vunpack.c.l.b16 %v1038
        %v3700 = vunpack.c.h.b16 %v1038
        %v3701 = vunpack.c.l.b16 %v1039
        %v3702 = vunpack.c.h.b16 %v1039
        %v3703 = vunpack.c.l.b16 %v1040
        %v3704 = vunpack.c.h.b16 %v1040
        %v3705 = vunpack.c.l.b16 %v1041
        %v3706 = vunpack.c.h.b16 %v1041
        %v3707 = vunpack.c.l.b16 %v1042
        %v3708 = vunpack.c.h.b16 %v1042
        %v3709 = vunpack.c.l.b16 %v1043
        %v3710 = vunpack.c.h.b16 %v1043
        %v3711 = vunpack.c.l.b16 %v1044
        %v3712 = vunpack.c.h.b16 %v1044
        %v3713 = vunpack.c.l.b16 %v1045
        %v3714 = vunpack.c.h.b16 %v1045
        %v3715 = vunpack.c.l.b16 %v1046
        %v3716 = vunpack.c.h.b16 %v1046
        %v3717 = vunpack.c.l.b16 %v1047
        %v3718 = vunpack.c.h.b16 %v1047
        %v3719 = vunpack.c.l.b16 %v1048
        %v3720 = vunpack.c.h.b16 %v1048
        %v3721 = vunpack.c.l.b16 %v1049
        %v3722 = vunpack.c.h.b16 %v1049
        %v3723 = vunpack.c.l.b16 %v1050
        %v3724 = vunpack.c.h.b16 %v1050
        %v3725 = vunpack.c.l.b16 %v1051
        %v3726 = vunpack.c.h.b16 %v1051
        %v3727 = vunpack.c.l.b16 %v1052
        %v3728 = vunpack.c.h.b16 %v1052
        %v3729 = vunpack.c.l.b16 %v1053
        %v3730 = vunpack.c.h.b16 %v1053
        %v3731 = vunpack.c.l.b16 %v1054
        %v3732 = vunpack.c.h.b16 %v1054
        %v3733 = vunpack.c.l.b16 %v1055
        %v3734 = vunpack.c.h.b16 %v1055
        %v3735 = vunpack.c.l.b16 %v1056
        %v3736 = vunpack.c.h.b16 %v1056
        %v3737 = vunpack.c.l.b16 %v1057
        %v3738 = vunpack.c.h.b16 %v1057
        %v3739 = vunpack.c.l.b16 %v1058
        %v3740 = vunpack.c.h.b16 %v1058
        %v3741 = vunpack.c.l.b16 %v1059
        %v3742 = vunpack.c.h.b16 %v1059
        %v3743 = vunpack.c.l.b16 %v1060
        %v3744 = vunpack.c.h.b16 %v1060
        %v3745 = vunpack.c.l.b16 %v1061
        %v3746 = vunpack.c.h.b16 %v1061
        %v3747 = vunpack.c.l.b16 %v1062
        %v3748 = vunpack.c.h.b16 %v1062
        %v3749 = vunpack.c.l.b16 %v1063
        %v3750 = vunpack.c.h.b16 %v1063
        %v3751 = vunpack.c.l.b16 %v1064
        %v3752 = vunpack.c.h.b16 %v1064
        %v3753 = vunpack.c.l.b16 %v1065
        %v3754 = vunpack.c.h.b16 %v1065
        %v3755 = vunpack.c.l.b16 %v1066
        %v3756 = vunpack.c.h.b16 %v1066
        %v3757 = vunpack.c.l.b16 %v1067
        %v3758 = vunpack.c.h.b16 %v1067
        %v3759 = vunpack.c.l.b16 %v1068
        %v3760 = vunpack.c.h.b16 %v1068
        %v3761 = vunpack.c.l.b16 %v1069
        %v3762 = vunpack.c.h.b16 %v1069
        %v3763 = vunpack.c.l.b16 %v1070
        %v3764 = vunpack.c.h.b16 %v1070
        %v3765 = vunpack.c.l.b16 %v1071
        %v3766 = vunpack.c.h.b16 %v1071
        %v3767 = vunpack.c.l.b16 %v1072
        %v3768 = vunpack.c.h.b16 %v1072
        %v3769 = vunpack.c.l.b16 %v1073
        %v3770 = vunpack.c.h.b16 %v1073
        %v3771 = vunpack.c.l.b16 %v1074
        %v3772 = vunpack.c.h.b16 %v1074
        %v3773 = vunpack.c.l.b16 %v1075
        %v3774 = vunpack.c.h.b16 %v1075
        %v3775 = vunpack.c.l.b16 %v1076
        %v3776 = vunpack.c.h.b16 %v1076
        %v3777 = vunpack.c.l.b16 %v1077
        %v3778 = vunpack.c.h.b16 %v1077
        %v3779 = vunpack.c.l.b16 %v1078
        %v3780 = vunpack.c.h.b16 %v1078
        %v3781 = vunpack.c.l.b16 %v1079
        %v3782 = vunpack.c.h.b16 %v1079
        %v3783 = vunpack.c.l.b16 %v1080
        %v3784 = vunpack.c.h.b16 %v1080
        %v3785 = vunpack.c.l.b16 %v1081
        %v3786 = vunpack.c.h.b16 %v1081
        %v3787 = vunpack.c.l.b16 %v1082
        %v3788 = vunpack.c.h.b16 %v1082
        %v3789 = vunpack.c.l.b16 %v1083
        %v3790 = vunpack.c.h.b16 %v1083
        %v3791 = vunpack.c.l.b16 %v1084
        %v3792 = vunpack.c.h.b16 %v1084
        %v3793 = vunpack.c.l.b16 %v1085
        %v3794 = vunpack.c.h.b16 %v1085
        %v3795 = vunpack.c.l.b16 %v1086
        %v3796 = vunpack.c.h.b16 %v1086
        %v3797 = vunpack.c.l.b16 %v1087
        %v3798 = vunpack.c.h.b16 %v1087
        %v3799 = vunpack.c.l.b16 %v1088
        %v3800 = vunpack.c.h.b16 %v1088
        %v3801 = vunpack.c.l.b16 %v1089
        %v3802 = vunpack.c.h.b16 %v1089
        %v3803 = vunpack.c.l.b16 %v1090
        %v3804 = vunpack.c.h.b16 %v1090
        %v3805 = vunpack.c.l.b16 %v1091
        %v3806 = vunpack.c.h.b16 %v1091
        %v3807 = vunpack.c.l.b16 %v1092
        %v3808 = vunpack.c.h.b16 %v1092
        %v3809 = vunpack.c.l.b16 %v1093
        %v3810 = vunpack.c.h.b16 %v1093
        %v3811 = vunpack.c.l.b16 %v1094
        %v3812 = vunpack.c.h.b16 %v1094
        %v3813 = vunpack.c.l.b16 %v1095
        %v3814 = vunpack.c.h.b16 %v1095
        %v3815 = vunpack.c.l.b16 %v1096
        %v3816 = vunpack.c.h.b16 %v1096
        %v3817 = vunpack.c.l.b16 %v1097
        %v3818 = vunpack.c.h.b16 %v1097
        %v3819 = vunpack.c.l.b16 %v1098
        %v3820 = vunpack.c.h.b16 %v1098
        %v3821 = vunpack.c.l.b16 %v1099
        %v3822 = vunpack.c.h.b16 %v1099
        %v3823 = vunpack.c.l.b16 %v1100
        %v3824 = vunpack.c.h.b16 %v1100
        %v3825 = vunpack.c.l.b16 %v1101
        %v3826 = vunpack.c.h.b16 %v1101
        %v3827 = vunpack.c.l.b16 %v1102
        %v3828 = vunpack.c.h.b16 %v1102
        %v3829 = vunpack.c.l.b16 %v1103
        %v3830 = vunpack.c.h.b16 %v1103
        %v3831 = vunpack.c.l.b16 %v1104
        %v3832 = vunpack.c.h.b16 %v1104
        %v3833 = vunpack.c.l.b16 %v1105
        %v3834 = vunpack.c.h.b16 %v1105
        %v3835 = vunpack.c.l.b16 %v1106
        %v3836 = vunpack.c.h.b16 %v1106
        %v3837 = vunpack.c.l.b16 %v1107
        %v3838 = vunpack.c.h.b16 %v1107
        %v3839 = vunpack.c.l.b16 %v1108
        %v3840 = vunpack.c.h.b16 %v1108
        %v3841 = vunpack.c.l.b16 %v1109
        %v3842 = vunpack.c.h.b16 %v1109
        %v3843 = vunpack.c.l.b16 %v1110
        %v3844 = vunpack.c.h.b16 %v1110
        %v3845 = vunpack.c.l.b16 %v1111
        %v3846 = vunpack.c.h.b16 %v1111
        %v3847 = vunpack.c.l.b16 %v1112
        %v3848 = vunpack.c.h.b16 %v1112
        %v3849 = vunpack.c.l.b16 %v1113
        %v3850 = vunpack.c.h.b16 %v1113
        %v3851 = vunpack.c.l.b16 %v1114
        %v3852 = vunpack.c.h.b16 %v1114
        %v3853 = vunpack.c.l.b16 %v1115
        %v3854 = vunpack.c.h.b16 %v1115
        %v3855 = vunpack.c.l.b16 %v1116
        %v3856 = vunpack.c.h.b16 %v1116
        %v3857 = vunpack.c.l.b16 %v1117
        %v3858 = vunpack.c.h.b16 %v1117
        %v3859 = vunpack.c.l.b16 %v1118
        %v3860 = vunpack.c.h.b16 %v1118
        %v3861 = vunpack.c.l.b16 %v1119
        %v3862 = vunpack.c.h.b16 %v1119
        %v3863 = vunpack.c.l.b16 %v1120
        %v3864 = vunpack.c.h.b16 %v1120
        %v3865 = vunpack.c.l.b16 %v1121
        %v3866 = vunpack.c.h.b16 %v1121
        %v3867 = vunpack.c.l.b16 %v1122
        %v3868 = vunpack.c.h.b16 %v1122
        %v3869 = vunpack.c.l.b16 %v1123
        %v3870 = vunpack.c.h.b16 %v1123
        %v3871 = vunpack.c.l.b16 %v1124
        %v3872 = vunpack.c.h.b16 %v1124
        %v3873 = vunpack.c.l.b16 %v1125
        %v3874 = vunpack.c.h.b16 %v1125
        %v3875 = vunpack.c.l.b16 %v1126
        %v3876 = vunpack.c.h.b16 %v1126
        %v3877 = vunpack.c.l.b16 %v1127
        %v3878 = vunpack.c.h.b16 %v1127
        %v3879 = vunpack.c.l.b16 %v1128
        %v3880 = vunpack.c.h.b16 %v1128
        %v3881 = vunpack.c.l.b16 %v1129
        %v3882 = vunpack.c.h.b16 %v1129
        %v3883 = vunpack.c.l.b16 %v1130
        %v3884 = vunpack.c.h.b16 %v1130
        %v3885 = vunpack.c.l.b16 %v1131
        %v3886 = vunpack.c.h.b16 %v1131
        %v3887 = vunpack.c.l.b16 %v1132
        %v3888 = vunpack.c.h.b16 %v1132
        %v3889 = vunpack.c.l.b16 %v1133
        %v3890 = vunpack.c.h.b16 %v1133
        %v3891 = vunpack.c.l.b16 %v1134
        %v3892 = vunpack.c.h.b16 %v1134
        %v3893 = vunpack.c.l.b16 %v1135
        %v3894 = vunpack.c.h.b16 %v1135
        %v3895 = vunpack.c.l.b16 %v1136
        %v3896 = vunpack.c.h.b16 %v1136
        %v3897 = vunpack.c.l.b16 %v1137
        %v3898 = vunpack.c.h.b16 %v1137
        %v3899 = vunpack.c.l.b16 %v1138
        %v3900 = vunpack.c.h.b16 %v1138
        %v3901 = vunpack.c.l.b16 %v1139
        %v3902 = vunpack.c.h.b16 %v1139
        %v3903 = vunpack.c.l.b16 %v1140
        %v3904 = vunpack.c.h.b16 %v1140
        %v3905 = vunpack.c.l.b16 %v1141
        %v3906 = vunpack.c.h.b16 %v1141
        %v3907 = vunpack.c.l.b16 %v1142
        %v3908 = vunpack.c.h.b16 %v1142
        %v3909 = vunpack.c.l.b16 %v1143
        %v3910 = vunpack.c.h.b16 %v1143
        %v3911 = vunpack.c.l.b16 %v1144
        %v3912 = vunpack.c.h.b16 %v1144
        %v3913 = vunpack.c.l.b16 %v1145
        %v3914 = vunpack.c.h.b16 %v1145
        %v3915 = vunpack.c.l.b16 %v1146
        %v3916 = vunpack.c.h.b16 %v1146
        %v3917 = vunpack.c.l.b16 %v1147
        %v3918 = vunpack.c.h.b16 %v1147
        %v3919 = vunpack.c.l.b16 %v1148
        %v3920 = vunpack.c.h.b16 %v1148
        %v3921 = vunpack.c.l.b16 %v1149
        %v3922 = vunpack.c.h.b16 %v1149
        %v3923 = vunpack.c.l.b16 %v1150
        %v3924 = vunpack.c.h.b16 %v1150
        %v3925 = vunpack.c.l.b16 %v1151
        %v3926 = vunpack.c.h.b16 %v1151
        %v3927 = vunpack.c.l.b16 %v1152
        %v3928 = vunpack.c.h.b16 %v1152
        %v3929 = vunpack.c.l.b16 %v1153
        %v3930 = vunpack.c.h.b16 %v1153
        %v3931 = vunpack.c.l.b16 %v1154
        %v3932 = vunpack.c.h.b16 %v1154
        %v3933 = vunpack.c.l.b16 %v1155
        %v3934 = vunpack.c.h.b16 %v1155
        %v3935 = vunpack.c.l.b16 %v1156
        %v3936 = vunpack.c.h.b16 %v1156
        %v3937 = vunpack.c.l.b16 %v1157
        %v3938 = vunpack.c.h.b16 %v1157
        %v3939 = vunpack.c.l.b16 %v1158
        %v3940 = vunpack.c.h.b16 %v1158
        %v3941 = vunpack.c.l.b16 %v1159
        %v3942 = vunpack.c.h.b16 %v1159
        %v3943 = vunpack.c.l.b16 %v1160
        %v3944 = vunpack.c.h.b16 %v1160
        %v3945 = vunpack.c.l.b16 %v1161
        %v3946 = vunpack.c.h.b16 %v1161
        %v3947 = vunpack.c.l.b16 %v1162
        %v3948 = vunpack.c.h.b16 %v1162
        %v3949 = vunpack.c.l.b16 %v1163
        %v3950 = vunpack.c.h.b16 %v1163
        %v3951 = vunpack.c.l.b16 %v1164
        %v3952 = vunpack.c.h.b16 %v1164
        %v3953 = vunpack.c.l.b16 %v1165
        %v3954 = vunpack.c.h.b16 %v1165
        %v3955 = vunpack.c.l.b16 %v1166
        %v3956 = vunpack.c.h.b16 %v1166
        %v3957 = vunpack.c.l.b16 %v1167
        %v3958 = vunpack.c.h.b16 %v1167
        %v3959 = vunpack.c.l.b16 %v1168
        %v3960 = vunpack.c.h.b16 %v1168
        %v3961 = vunpack.c.l.b16 %v1169
        %v3962 = vunpack.c.h.b16 %v1169
        %v3963 = vunpack.c.l.b16 %v1170
        %v3964 = vunpack.c.h.b16 %v1170
        %v3965 = vunpack.c.l.b16 %v1171
        %v3966 = vunpack.c.h.b16 %v1171
        %v3967 = vunpack.c.l.b16 %v1172
        %v3968 = vunpack.c.h.b16 %v1172
        %v3969 = vunpack.c.l.b16 %v1173
        %v3970 = vunpack.c.h.b16 %v1173
        %v3971 = vunpack.c.l.b16 %v1174
        %v3972 = vunpack.c.h.b16 %v1174
        %v3973 = vunpack.c.l.b16 %v1175
        %v3974 = vunpack.c.h.b16 %v1175
        %v3975 = vunpack.c.l.b16 %v1176
        %v3976 = vunpack.c.h.b16 %v1176
        %v3977 = vunpack.c.l.b16 %v1177
        %v3978 = vunpack.c.h.b16 %v1177
        %v3979 = vunpack.c.l.b16 %v1178
        %v3980 = vunpack.c.h.b16 %v1178
        %v3981 = vunpack.c.l.b16 %v1179
        %v3982 = vunpack.c.h.b16 %v1179
        %v3983 = vunpack.c.l.b16 %v1180
        %v3984 = vunpack.c.h.b16 %v1180
        %v3985 = vunpack.c.l.b16 %v1181
        %v3986 = vunpack.c.h.b16 %v1181
        %v3987 = vunpack.c.l.b16 %v1182
        %v3988 = vunpack.c.h.b16 %v1182
        %v3989 = vunpack.c.l.b16 %v1183
        %v3990 = vunpack.c.h.b16 %v1183
        %v3991 = vunpack.c.l.b16 %v1184
        %v3992 = vunpack.c.h.b16 %v1184
        %v3993 = vunpack.c.l.b16 %v1185
        %v3994 = vunpack.c.h.b16 %v1185
        %v3995 = vunpack.c.l.b16 %v1186
        %v3996 = vunpack.c.h.b16 %v1186
        %v3997 = vunpack.c.l.b16 %v1187
        %v3998 = vunpack.c.h.b16 %v1187
        %v3999 = vunpack.c.l.b16 %v1188
        %v4000 = vunpack.c.h.b16 %v1188
        %v4001 = vunpack.c.l.b16 %v1189
        %v4002 = vunpack.c.h.b16 %v1189
        %v4003 = vunpack.c.l.b16 %v1190
        %v4004 = vunpack.c.h.b16 %v1190
        %v4005 = vunpack.c.l.b16 %v1191
        %v4006 = vunpack.c.h.b16 %v1191
        %v4007 = vunpack.c.l.b16 %v1192
        %v4008 = vunpack.c.h.b16 %v1192
        %v4009 = vunpack.c.l.b16 %v1193
        %v4010 = vunpack.c.h.b16 %v1193
        %v4011 = vunpack.c.l.b16 %v1194
        %v4012 = vunpack.c.h.b16 %v1194
        %v4013 = vunpack.c.l.b16 %v1195
        %v4014 = vunpack.c.h.b16 %v1195
        %v4015 = vunpack.c.l.b16 %v1196
        %v4016 = vunpack.c.h.b16 %v1196
        %v4017 = vunpack.c.l.b16 %v1197
        %v4018 = vunpack.c.h.b16 %v1197
        %v4019 = vunpack.c.l.b16 %v1198
        %v4020 = vunpack.c.h.b16 %v1198
        %v4021 = vunpack.c.l.b16 %v1199
        %v4022 = vunpack.c.h.b16 %v1199
        %v4023 = vunpack.c.l.b16 %v1200
        %v4024 = vunpack.c.h.b16 %v1200
        %v4025 = vunpack.c.l.b16 %v1201
        %v4026 = vunpack.c.h.b16 %v1201
        %v4027 = vunpack.c.l.b16 %v1202
        %v4028 = vunpack.c.h.b16 %v1202
        %v4029 = vunpack.c.l.b16 %v1203
        %v4030 = vunpack.c.h.b16 %v1203
        %v4031 = vunpack.c.l.b16 %v1204
        %v4032 = vunpack.c.h.b16 %v1204
        %v4033 = vunpack.c.l.b16 %v1205
        %v4034 = vunpack.c.h.b16 %v1205
        %v4035 = vunpack.c.l.b16 %v1206
        %v4036 = vunpack.c.h.b16 %v1206
        %v4037 = vunpack.c.l.b16 %v1207
        %v4038 = vunpack.c.h.b16 %v1207
        %v4039 = vunpack.c.l.b16 %v1208
        %v4040 = vunpack.c.h.b16 %v1208
        %v4041 = vunpack.c.l.b16 %v1209
        %v4042 = vunpack.c.h.b16 %v1209
        %v4043 = vunpack.c.l.b16 %v1210
        %v4044 = vunpack.c.h.b16 %v1210
        %v4045 = vunpack.c.l.b16 %v1211
        %v4046 = vunpack.c.h.b16 %v1211
        %v4047 = vunpack.c.l.b16 %v1212
        %v4048 = vunpack.c.h.b16 %v1212
        %v4049 = vunpack.c.l.b16 %v1213
        %v4050 = vunpack.c.h.b16 %v1213
        %v4051 = vunpack.c.l.b16 %v1214
        %v4052 = vunpack.c.h.b16 %v1214
        %v4053 = vunpack.c.l.b16 %v1215
        %v4054 = vunpack.c.h.b16 %v1215
        %v4055 = vunpack.c.l.b16 %v1216
        %v4056 = vunpack.c.h.b16 %v1216
        %v4057 = vunpack.c.l.b16 %v1217
        %v4058 = vunpack.c.h.b16 %v1217
        %v4059 = vunpack.c.l.b16 %v1218
        %v4060 = vunpack.c.h.b16 %v1218
        %v4061 = vunpack.c.l.b16 %v1219
        %v4062 = vunpack.c.h.b16 %v1219
        %v4063 = vunpack.c.l.b16 %v1220
        %v4064 = vunpack.c.h.b16 %v1220
        %v4065 = vunpack.c.l.b16 %v1221
        %v4066 = vunpack.c.h.b16 %v1221
        %v4067 = vunpack.c.l.b16 %v1222
        %v4068 = vunpack.c.h.b16 %v1222
        %v4069 = vunpack.c.l.b16 %v1223
        %v4070 = vunpack.c.h.b16 %v1223
        %v4071 = vunpack.c.l.b16 %v1224
        %v4072 = vunpack.c.h.b16 %v1224
        %v4073 = vunpack.c.l.b16 %v1225
        %v4074 = vunpack.c.h.b16 %v1225
        %v4075 = vunpack.c.l.b16 %v1226
        %v4076 = vunpack.c.h.b16 %v1226
        %v4077 = vunpack.c.l.b16 %v1227
        %v4078 = vunpack.c.h.b16 %v1227
        %v4079 = vunpack.c.l.b16 %v1228
        %v4080 = vunpack.c.h.b16 %v1228
        %v4081 = vunpack.c.l.b16 %v1229
        %v4082 = vunpack.c.h.b16 %v1229
        %v4083 = vunpack.c.l.b16 %v1230
        %v4084 = vunpack.c.h.b16 %v1230
        %v4085 = vunpack.c.l.b16 %v1231
        %v4086 = vunpack.c.h.b16 %v1231
        %v4087 = vunpack.c.l.b16 %v1232
        %v4088 = vunpack.c.h.b16 %v1232
        %v4089 = vunpack.c.l.b16 %v1233
        %v4090 = vunpack.c.h.b16 %v1233
        %v4091 = vunpack.c.l.b16 %v1234
        %v4092 = vunpack.c.h.b16 %v1234
        %v4093 = vunpack.c.l.b16 %v1235
        %v4094 = vunpack.c.h.b16 %v1235
        %v4095 = vunpack.c.l.b16 %v1236
        %v4096 = vunpack.c.h.b16 %v1236
        %v4097 = vunpack.c.l.b16 %v1237
        %v4098 = vunpack.c.h.b16 %v1237
        %v4099 = vunpack.c.l.b16 %v1238
        %v4100 = vunpack.c.h.b16 %v1238
        %v4101 = vunpack.c.l.b16 %v1239
        %v4102 = vunpack.c.h.b16 %v1239
        %v4103 = vunpack.c.l.b16 %v1240
        %v4104 = vunpack.c.h.b16 %v1240
        %v4105 = vunpack.c.l.b16 %v1241
        %v4106 = vunpack.c.h.b16 %v1241
        %v4107 = vunpack.c.l.b16 %v1242
        %v4108 = vunpack.c.h.b16 %v1242
        %v4109 = vunpack.c.l.b16 %v1243
        %v4110 = vunpack.c.h.b16 %v1243
        %v4111 = vunpack.c.l.b16 %v1244
        %v4112 = vunpack.c.h.b16 %v1244
        %v4113 = vunpack.c.l.b16 %v1245
        %v4114 = vunpack.c.h.b16 %v1245
        %v4115 = vunpack.c.l.b16 %v1246
        %v4116 = vunpack.c.h.b16 %v1246
        %v4117 = vunpack.c.l.b16 %v1247
        %v4118 = vunpack.c.h.b16 %v1247
        %v4119 = vunpack.c.l.b16 %v1248
        %v4120 = vunpack.c.h.b16 %v1248
        %v4121 = vunpack.c.l.b16 %v1249
        %v4122 = vunpack.c.h.b16 %v1249
        %v4123 = vunpack.c.l.b16 %v1250
        %v4124 = vunpack.c.h.b16 %v1250
        %v4125 = vunpack.c.l.b16 %v1251
        %v4126 = vunpack.c.h.b16 %v1251
        %v4127 = vunpack.c.l.b16 %v1252
        %v4128 = vunpack.c.h.b16 %v1252
        %v4129 = vunpack.c.l.b16 %v1253
        %v4130 = vunpack.c.h.b16 %v1253
        %v4131 = vunpack.c.l.b16 %v1254
        %v4132 = vunpack.c.h.b16 %v1254
        %v4133 = vunpack.c.l.b16 %v1255
        %v4134 = vunpack.c.h.b16 %v1255
        %v4135 = vunpack.c.l.b16 %v1256
        %v4136 = vunpack.c.h.b16 %v1256
        %v4137 = vunpack.c.l.b16 %v1257
        %v4138 = vunpack.c.h.b16 %v1257
        %v4139 = vunpack.c.l.b16 %v1258
        %v4140 = vunpack.c.h.b16 %v1258
        %v4141 = vunpack.c.l.b16 %v1259
        %v4142 = vunpack.c.h.b16 %v1259
        %v4143 = vunpack.c.l.b16 %v1260
        %v4144 = vunpack.c.h.b16 %v1260
        %v4145 = vunpack.c.l.b16 %v1261
        %v4146 = vunpack.c.h.b16 %v1261
        %v4147 = vunpack.c.l.b16 %v1262
        %v4148 = vunpack.c.h.b16 %v1262
        %v4149 = vunpack.c.l.b16 %v1263
        %v4150 = vunpack.c.h.b16 %v1263
        %v4151 = vunpack.c.l.b16 %v1264
        %v4152 = vunpack.c.h.b16 %v1264
        %v4153 = vunpack.c.l.b16 %v1265
        %v4154 = vunpack.c.h.b16 %v1265
        %v4155 = vunpack.c.l.b16 %v1266
        %v4156 = vunpack.c.h.b16 %v1266
        %v4157 = vunpack.c.l.b16 %v1267
        %v4158 = vunpack.c.h.b16 %v1267
        %v4159 = vunpack.c.l.b16 %v1268
        %v4160 = vunpack.c.h.b16 %v1268
        %v4161 = vunpack.c.l.b16 %v1269
        %v4162 = vunpack.c.h.b16 %v1269
        %v4163 = vunpack.c.l.b16 %v1270
        %v4164 = vunpack.c.h.b16 %v1270
        %v4165 = vunpack.c.l.b16 %v1271
        %v4166 = vunpack.c.h.b16 %v1271
        %v4167 = vunpack.c.l.b16 %v1272
        %v4168 = vunpack.c.h.b16 %v1272
        %v4169 = vunpack.c.l.b16 %v1273
        %v4170 = vunpack.c.h.b16 %v1273
        %v4171 = vunpack.c.l.b16 %v1274
        %v4172 = vunpack.c.h.b16 %v1274
        %v4173 = vunpack.c.l.b16 %v1275
        %v4174 = vunpack.c.h.b16 %v1275
        %v4175 = vunpack.c.l.b16 %v1276
        %v4176 = vunpack.c.h.b16 %v1276
        %v4177 = vunpack.c.l.b16 %v1277
        %v4178 = vunpack.c.h.b16 %v1277
        %v4179 = vunpack.c.l.b16 %v1278
        %v4180 = vunpack.c.h.b16 %v1278
        %v4181 = vunpack.c.l.b16 %v1279
        %v4182 = vunpack.c.h.b16 %v1279
        %v4183 = vunpack.c.l.b16 %v1280
        %v4184 = vunpack.c.h.b16 %v1280
        %v4185 = vunpack.c.l.b16 %v1281
        %v4186 = vunpack.c.h.b16 %v1281
        %v4187 = vunpack.c.l.b16 %v1282
        %v4188 = vunpack.c.h.b16 %v1282
        %v4189 = vunpack.c.l.b16 %v1283
        %v4190 = vunpack.c.h.b16 %v1283
        %v4191 = vunpack.c.l.b16 %v1284
        %v4192 = vunpack.c.h.b16 %v1284
        %v4193 = vunpack.c.l.b16 %v1285
        %v4194 = vunpack.c.h.b16 %v1285
        %v4195 = vunpack.c.l.b16 %v1286
        %v4196 = vunpack.c.h.b16 %v1286
        %v4197 = vunpack.c.l.b16 %v1287
        %v4198 = vunpack.c.h.b16 %v1287
        %v4199 = vunpack.c.l.b16 %v1288
        %v4200 = vunpack.c.h.b16 %v1288
        %v4201 = vunpack.c.l.b16 %v1289
        %v4202 = vunpack.c.h.b16 %v1289
        %v4203 = vunpack.c.l.b16 %v1290
        %v4204 = vunpack.c.h.b16 %v1290
        %v4205 = vunpack.c.l.b16 %v1291
        %v4206 = vunpack.c.h.b16 %v1291
        %v4207 = vunpack.c.l.b16 %v1292
        %v4208 = vunpack.c.h.b16 %v1292
        %v4209 = vunpack.c.l.b16 %v1293
        %v4210 = vunpack.c.h.b16 %v1293
        %v4211 = vunpack.c.l.b16 %v1294
        %v4212 = vunpack.c.h.b16 %v1294
        %v4213 = vunpack.c.l.b16 %v1295
        %v4214 = vunpack.c.h.b16 %v1295
        %v4215 = vunpack.c.l.b16 %v1296
        %v4216 = vunpack.c.h.b16 %v1296
        %v4217 = vunpack.c.l.b16 %v1297
        %v4218 = vunpack.c.h.b16 %v1297
        %v4219 = vunpack.c.l.b16 %v1298
        %v4220 = vunpack.c.h.b16 %v1298
        %v4221 = vunpack.c.l.b16 %v1299
        %v4222 = vunpack.c.h.b16 %v1299
        %v4223 = vunpack.c.l.b16 %v1300
        %v4224 = vunpack.c.h.b16 %v1300
        %v4225 = vunpack.c.l.b16 %v1301
        %v4226 = vunpack.c.h.b16 %v1301
        %v4227 = vunpack.c.l.b16 %v1302
        %v4228 = vunpack.c.h.b16 %v1302
        %v4229 = vunpack.c.l.b16 %v1303
        %v4230 = vunpack.c.h.b16 %v1303
        %v4231 = vunpack.c.l.b16 %v1304
        %v4232 = vunpack.c.h.b16 %v1304
        %v4233 = vunpack.c.l.b16 %v1305
        %v4234 = vunpack.c.h.b16 %v1305
        %v4235 = vunpack.c.l.b16 %v1306
        %v4236 = vunpack.c.h.b16 %v1306
        %v4237 = vunpack.c.l.b16 %v1307
        %v4238 = vunpack.c.h.b16 %v1307
        %v4239 = vunpack.c.l.b16 %v1308
        %v4240 = vunpack.c.h.b16 %v1308
        %v4241 = vunpack.c.l.b16 %v1309
        %v4242 = vunpack.c.h.b16 %v1309
        %v4243 = vunpack.c.l.b16 %v1310
        %v4244 = vunpack.c.h.b16 %v1310
        %v4245 = vunpack.c.l.b16 %v1311
        %v4246 = vunpack.c.h.b16 %v1311
        %v4247 = vunpack.c.l.b16 %v1312
        %v4248 = vunpack.c.h.b16 %v1312
        %v4249 = vunpack.c.l.b16 %v1313
        %v4250 = vunpack.c.h.b16 %v1313
        %v4251 = vunpack.c.l.b16 %v1314
        %v4252 = vunpack.c.h.b16 %v1314
        %v4253 = vunpack.c.l.b16 %v1315
        %v4254 = vunpack.c.h.b16 %v1315
        %v4255 = vunpack.c.l.b16 %v1316
        %v4256 = vunpack.c.h.b16 %v1316
        %v4257 = vunpack.c.l.b16 %v1317
        %v4258 = vunpack.c.h.b16 %v1317
        %v4259 = vunpack.c.l.b16 %v1318
        %v4260 = vunpack.c.h.b16 %v1318
        %v4261 = vunpack.c.l.b16 %v1319
        %v4262 = vunpack.c.h.b16 %v1319
        %v4263 = vunpack.c.l.b16 %v1320
        %v4264 = vunpack.c.h.b16 %v1320
        %v4265 = vunpack.c.l.b16 %v1321
        %v4266 = vunpack.c.h.b16 %v1321
        %v4267 = vunpack.c.l.b16 %v1322
        %v4268 = vunpack.c.h.b16 %v1322
        %v4269 = vunpack.c.l.b16 %v1323
        %v4270 = vunpack.c.h.b16 %v1323
        %v4271 = vunpack.c.l.b16 %v1324
        %v4272 = vunpack.c.h.b16 %v1324
        %v4273 = vunpack.c.l.b16 %v1325
        %v4274 = vunpack.c.h.b16 %v1325
        %v4275 = vunpack.c.l.b16 %v1326
        %v4276 = vunpack.c.h.b16 %v1326
        %v4277 = vunpack.c.l.b16 %v1327
        %v4278 = vunpack.c.h.b16 %v1327
        %v4279 = vunpack.c.l.b16 %v1328
        %v4280 = vunpack.c.h.b16 %v1328
        %v4281 = vunpack.c.l.b16 %v1329
        %v4282 = vunpack.c.h.b16 %v1329
        %v4283 = vunpack.c.l.b16 %v1330
        %v4284 = vunpack.c.h.b16 %v1330
        %v4285 = vunpack.c.l.b16 %v1331
        %v4286 = vunpack.c.h.b16 %v1331
        %v4287 = vunpack.c.l.b16 %v1332
        %v4288 = vunpack.c.h.b16 %v1332
        %v4289 = vunpack.c.l.b16 %v1333
        %v4290 = vunpack.c.h.b16 %v1333
        %v4291 = vunpack.c.l.b16 %v1334
        %v4292 = vunpack.c.h.b16 %v1334
        %v4293 = vunpack.c.l.b16 %v1335
        %v4294 = vunpack.c.h.b16 %v1335
        %v4295 = vunpack.c.l.b16 %v1336
        %v4296 = vunpack.c.h.b16 %v1336
        %v4297 = vunpack.c.l.b16 %v1337
        %v4298 = vunpack.c.h.b16 %v1337
        %v4299 = vunpack.c.l.b16 %v1338
        %v4300 = vunpack.c.h.b16 %v1338
        %v4301 = vunpack.c.l.b16 %v1339
        %v4302 = vunpack.c.h.b16 %v1339
        %v4303 = vunpack.c.l.b16 %v1340
        %v4304 = vunpack.c.h.b16 %v1340
        %v4305 = vunpack.c.l.b16 %v1341
        %v4306 = vunpack.c.h.b16 %v1341
        %v4307 = vunpack.c.l.b16 %v1342
        %v4308 = vunpack.c.h.b16 %v1342
        %v4309 = vunpack.c.l.b16 %v1343
        %v4310 = vunpack.c.h.b16 %v1343
        %v4311 = vunpack.c.l.b16 %v1344
        %v4312 = vunpack.c.h.b16 %v1344
        %v4313 = vunpack.c.l.b16 %v1345
        %v4314 = vunpack.c.h.b16 %v1345
        %v4315 = vunpack.c.l.b16 %v1346
        %v4316 = vunpack.c.h.b16 %v1346
        %v4317 = vunpack.c.l.b16 %v1347
        %v4318 = vunpack.c.h.b16 %v1347
        %v4319 = vunpack.c.l.b16 %v1348
        %v4320 = vunpack.c.h.b16 %v1348
        %v4321 = vunpack.c.l.b16 %v1349
        %v4322 = vunpack.c.h.b16 %v1349
        %v4323 = vunpack.c.l.b16 %v1350
        %v4324 = vunpack.c.h.b16 %v1350
        %v4325 = vunpack.c.l.b16 %v1351
        %v4326 = vunpack.c.h.b16 %v1351
        %v4327 = vunpack.c.l.b16 %v1352
        %v4328 = vunpack.c.h.b16 %v1352
        %v4329 = vunpack.c.l.b16 %v1353
        %v4330 = vunpack.c.h.b16 %v1353
        %v4331 = vunpack.c.l.b16 %v1354
        %v4332 = vunpack.c.h.b16 %v1354
        %v4333 = vunpack.c.l.b16 %v1355
        %v4334 = vunpack.c.h.b16 %v1355
        %v4335 = vunpack.c.l.b16 %v1356
        %v4336 = vunpack.c.h.b16 %v1356
        %v4337 = vunpack.c.l.b16 %v1357
        %v4338 = vunpack.c.h.b16 %v1357
        %v4339 = vunpack.c.l.b16 %v1358
        %v4340 = vunpack.c.h.b16 %v1358
        %v4341 = vunpack.c.l.b16 %v1359
        %v4342 = vunpack.c.h.b16 %v1359
        %v4343 = vunpack.c.l.b16 %v1360
        %v4344 = vunpack.c.h.b16 %v1360
        %v4345 = vunpack.c.l.b16 %v1361
        %v4346 = vunpack.c.h.b16 %v1361
        %v4347 = vunpack.c.l.b16 %v1362
        %v4348 = vunpack.c.h.b16 %v1362
        %v4349 = vunpack.c.l.b16 %v1363
        %v4350 = vunpack.c.h.b16 %v1363
        %v4351 = vunpack.c.l.b16 %v1364
        %v4352 = vunpack.c.h.b16 %v1364
        %v4353 = vunpack.c.l.b16 %v1365
        %v4354 = vunpack.c.h.b16 %v1365
        %v4355 = vunpack.c.l.b16 %v1366
        %v4356 = vunpack.c.h.b16 %v1366
        %v4357 = vunpack.c.l.b16 %v1367
        %v4358 = vunpack.c.h.b16 %v1367
        %v4359 = vunpack.c.l.b16 %v1368
        %v4360 = vunpack.c.h.b16 %v1368
        %v4361 = vunpack.c.l.b16 %v1369
        %v4362 = vunpack.c.h.b16 %v1369
        %v4363 = vunpack.c.l.b16 %v1370
        %v4364 = vunpack.c.h.b16 %v1370
        %v4365 = vunpack.c.l.b16 %v1371
        %v4366 = vunpack.c.h.b16 %v1371
        %v4367 = vunpack.c.l.b16 %v1372
        %v4368 = vunpack.c.h.b16 %v1372
        %v4369 = vunpack.c.l.b16 %v1373
        %v4370 = vunpack.c.h.b16 %v1373
        %v4371 = vunpack.c.l.b16 %v1374
        %v4372 = vunpack.c.h.b16 %v1374
        %v4373 = vunpack.c.l.b16 %v1375
        %v4374 = vunpack.c.h.b16 %v1375
        %v4375 = vunpack.c.l.b16 %v1376
        %v4376 = vunpack.c.h.b16 %v1376
        %v4377 = vunpack.c.l.b16 %v1377
        %v4378 = vunpack.c.h.b16 %v1377
        %v4379 = vunpack.c.l.b16 %v1378
        %v4380 = vunpack.c.h.b16 %v1378
        %v4381 = vunpack.c.l.b16 %v1379
        %v4382 = vunpack.c.h.b16 %v1379
        %v4383 = vunpack.c.l.b16 %v1380
        %v4384 = vunpack.c.h.b16 %v1380
        %v4385 = vunpack.c.l.b16 %v1381
        %v4386 = vunpack.c.h.b16 %v1381
        %v4387 = vunpack.c.l.b16 %v1382
        %v4388 = vunpack.c.h.b16 %v1382
        %v4389 = vunpack.c.l.b16 %v1383
        %v4390 = vunpack.c.h.b16 %v1383
        %v4391 = vunpack.c.l.b16 %v1384
        %v4392 = vunpack.c.h.b16 %v1384
        %v4393 = vunpack.c.l.b16 %v1385
        %v4394 = vunpack.c.h.b16 %v1385
        %v4395 = vunpack.c.l.b16 %v1386
        %v4396 = vunpack.c.h.b16 %v1386
        %v4397 = vunpack.c.l.b16 %v1387
        %v4398 = vunpack.c.h.b16 %v1387
        %v4399 = vunpack.c.l.b16 %v1388
        %v4400 = vunpack.c.h.b16 %v1388
        %v4401 = vunpack.c.l.b16 %v1389
        %v4402 = vunpack.c.h.b16 %v1389
        %v4403 = vunpack.c.l.b16 %v1390
        %v4404 = vunpack.c.h.b16 %v1390
        %v4405 = vunpack.c.l.b16 %v1391
        %v4406 = vunpack.c.h.b16 %v1391
        %v4407 = vunpack.c.l.b16 %v1392
        %v4408 = vunpack.c.h.b16 %v1392
        %v4409 = vunpack.c.l.b16 %v1393
        %v4410 = vunpack.c.h.b16 %v1393
        %v4411 = vunpack.c.l.b16 %v1394
        %v4412 = vunpack.c.h.b16 %v1394
        %v4413 = vunpack.c.l.b16 %v1395
        %v4414 = vunpack.c.h.b16 %v1395
        %v4415 = vunpack.c.l.b16 %v1396
        %v4416 = vunpack.c.h.b16 %v1396
        %v4417 = vunpack.c.l.b16 %v1397
        %v4418 = vunpack.c.h.b16 %v1397
        %v4419 = vunpack.c.l.b16 %v1398
        %v4420 = vunpack.c.h.b16 %v1398
        %v4421 = vunpack.c.l.b16 %v1399
        %v4422 = vunpack.c.h.b16 %v1399
        %v4423 = vunpack.c.l.b16 %v1400
        %v4424 = vunpack.c.h.b16 %v1400
        %v4425 = vunpack.c.l.b16 %v1401
        %v4426 = vunpack.c.h.b16 %v1401
        %v4427 = vunpack.c.l.b16 %v1402
        %v4428 = vunpack.c.h.b16 %v1402
        %v4429 = vunpack.c.l.b16 %v1403
        %v4430 = vunpack.c.h.b16 %v1403
        %v4431 = vunpack.c.l.b16 %v1404
        %v4432 = vunpack.c.h.b16 %v1404
        %v4433 = vunpack.c.l.b16 %v1405
        %v4434 = vunpack.c.h.b16 %v1405
        %v4435 = vunpack.c.l.b16 %v1406
        %v4436 = vunpack.c.h.b16 %v1406
        %v4437 = vunpack.c.l.b16 %v1407
        %v4438 = vunpack.c.h.b16 %v1407
        %v4439 = vunpack.c.l.b16 %v1408
        %v4440 = vunpack.c.h.b16 %v1408
        %v4441 = vunpack.c.l.b16 %v1409
        %v4442 = vunpack.c.h.b16 %v1409
        %v4443 = vunpack.c.l.b16 %v1410
        %v4444 = vunpack.c.h.b16 %v1410
        %v4445 = vunpack.c.l.b16 %v1411
        %v4446 = vunpack.c.h.b16 %v1411
        %v4447 = vunpack.c.l.b16 %v1412
        %v4448 = vunpack.c.h.b16 %v1412
        %v4449 = vunpack.c.l.b16 %v1413
        %v4450 = vunpack.c.h.b16 %v1413
        %v4451 = vunpack.c.l.b16 %v1414
        %v4452 = vunpack.c.h.b16 %v1414
        %v4453 = vunpack.c.l.b16 %v1415
        %v4454 = vunpack.c.h.b16 %v1415
        %v4455 = vunpack.c.l.b16 %v1416
        %v4456 = vunpack.c.h.b16 %v1416
        %v4457 = vunpack.c.l.b16 %v1417
        %v4458 = vunpack.c.h.b16 %v1417
        %v4459 = vunpack.c.l.b16 %v1418
        %v4460 = vunpack.c.h.b16 %v1418
        %v4461 = vunpack.c.l.b16 %v1419
        %v4462 = vunpack.c.h.b16 %v1419
        %v4463 = vunpack.c.l.b16 %v1420
        %v4464 = vunpack.c.h.b16 %v1420
        %v4465 = vunpack.c.l.b16 %v1421
        %v4466 = vunpack.c.h.b16 %v1421
        %v4467 = vunpack.c.l.b16 %v1422
        %v4468 = vunpack.c.h.b16 %v1422
        %v4469 = vunpack.c.l.b16 %v1423
        %v4470 = vunpack.c.h.b16 %v1423
        %v4471 = vunpack.c.l.b16 %v1424
        %v4472 = vunpack.c.h.b16 %v1424
        %v4473 = vunpack.c.l.b16 %v1425
        %v4474 = vunpack.c.h.b16 %v1425
        %v4475 = vunpack.c.l.b16 %v1426
        %v4476 = vunpack.c.h.b16 %v1426
        %v4477 = vunpack.c.l.b16 %v1427
        %v4478 = vunpack.c.h.b16 %v1427
        %v4479 = vunpack.c.l.b16 %v1428
        %v4480 = vunpack.c.h.b16 %v1428
        %v4481 = vunpack.c.l.b16 %v1429
        %v4482 = vunpack.c.h.b16 %v1429
        %v4483 = vunpack.c.l.b16 %v1430
        %v4484 = vunpack.c.h.b16 %v1430
        %v4485 = vunpack.c.l.b16 %v1431
        %v4486 = vunpack.c.h.b16 %v1431
        %v4487 = vunpack.c.l.b16 %v1432
        %v4488 = vunpack.c.h.b16 %v1432
        %v4489 = vunpack.c.l.b16 %v1433
        %v4490 = vunpack.c.h.b16 %v1433
        %v4491 = vunpack.c.l.b16 %v1434
        %v4492 = vunpack.c.h.b16 %v1434
        %v4493 = vunpack.c.l.b16 %v1435
        %v4494 = vunpack.c.h.b16 %v1435
        %v4495 = vunpack.c.l.b16 %v1436
        %v4496 = vunpack.c.h.b16 %v1436
        %v4497 = vunpack.c.l.b16 %v1437
        %v4498 = vunpack.c.h.b16 %v1437
        %v4499 = vunpack.c.l.b16 %v1438
        %v4500 = vunpack.c.h.b16 %v1438
        %v4501 = vunpack.c.l.b16 %v1439
        %v4502 = vunpack.c.h.b16 %v1439
        %v4503 = vunpack.c.l.b16 %v1440
        %v4504 = vunpack.c.h.b16 %v1440
        %v4505 = vunpack.c.l.b16 %v1441
        %v4506 = vunpack.c.h.b16 %v1441
        %v4507 = vunpack.c.l.b16 %v1442
        %v4508 = vunpack.c.h.b16 %v1442
        %v4509 = vunpack.c.l.b16 %v1443
        %v4510 = vunpack.c.h.b16 %v1443
        %v4511 = vunpack.c.l.b16 %v1444
        %v4512 = vunpack.c.h.b16 %v1444
        %v4513 = vunpack.c.l.b16 %v1445
        %v4514 = vunpack.c.h.b16 %v1445
        %v4515 = vunpack.c.l.b16 %v1446
        %v4516 = vunpack.c.h.b16 %v1446
        %v4517 = vunpack.c.l.b16 %v1447
        %v4518 = vunpack.c.h.b16 %v1447
        %v4519 = vunpack.c.l.b16 %v1448
        %v4520 = vunpack.c.h.b16 %v1448
        %v4521 = vunpack.c.l.b16 %v1449
        %v4522 = vunpack.c.h.b16 %v1449
        %v4523 = vunpack.c.l.b16 %v1450
        %v4524 = vunpack.c.h.b16 %v1450
        %v4525 = vunpack.c.l.b16 %v1451
        %v4526 = vunpack.c.h.b16 %v1451
        %v4527 = vunpack.c.l.b16 %v1452
        %v4528 = vunpack.c.h.b16 %v1452
        %v4529 = vunpack.c.l.b16 %v1453
        %v4530 = vunpack.c.h.b16 %v1453
        %v4531 = vunpack.c.l.b16 %v1454
        %v4532 = vunpack.c.h.b16 %v1454
        %v4533 = vunpack.c.l.b16 %v1455
        %v4534 = vunpack.c.h.b16 %v1455
        %v4535 = vunpack.c.l.b16 %v1456
        %v4536 = vunpack.c.h.b16 %v1456
        %v4537 = vunpack.c.l.b16 %v1457
        %v4538 = vunpack.c.h.b16 %v1457
        %v4539 = vunpack.c.l.b16 %v1458
        %v4540 = vunpack.c.h.b16 %v1458
        %v4541 = vunpack.c.l.b16 %v1459
        %v4542 = vunpack.c.h.b16 %v1459
        %v4543 = vunpack.c.l.b16 %v1460
        %v4544 = vunpack.c.h.b16 %v1460
        %v4545 = vunpack.c.l.b16 %v1461
        %v4546 = vunpack.c.h.b16 %v1461
        %v4547 = vunpack.c.l.b16 %v1462
        %v4548 = vunpack.c.h.b16 %v1462
        %v4549 = vunpack.c.l.b16 %v1463
        %v4550 = vunpack.c.h.b16 %v1463
        %v4551 = vunpack.c.l.b16 %v1464
        %v4552 = vunpack.c.h.b16 %v1464
        %v4553 = vunpack.c.l.b16 %v1465
        %v4554 = vunpack.c.h.b16 %v1465
        %v4555 = vunpack.c.l.b16 %v1466
        %v4556 = vunpack.c.h.b16 %v1466
        %v4557 = vunpack.c.l.b16 %v1467
        %v4558 = vunpack.c.h.b16 %v1467
        %v4559 = vunpack.c.l.b16 %v1468
        %v4560 = vunpack.c.h.b16 %v1468
        %v4561 = vunpack.c.l.b16 %v1469
        %v4562 = vunpack.c.h.b16 %v1469
        %v4563 = vunpack.c.l.b16 %v1470
        %v4564 = vunpack.c.h.b16 %v1470
        %v4565 = vunpack.c.l.b16 %v1471
        %v4566 = vunpack.c.h.b16 %v1471
        %v4567 = vunpack.c.l.b16 %v1472
        %v4568 = vunpack.c.h.b16 %v1472
        %v4569 = vunpack.c.l.b16 %v1473
        %v4570 = vunpack.c.h.b16 %v1473
        %v4571 = vunpack.c.l.b16 %v1474
        %v4572 = vunpack.c.h.b16 %v1474
        %v4573 = vunpack.c.l.b16 %v1475
        %v4574 = vunpack.c.h.b16 %v1475
        %v4575 = vunpack.c.l.b16 %v1476
        %v4576 = vunpack.c.h.b16 %v1476
        %v4577 = vpack.c.b16 %v2545, %v2529
        %v4578 = vpack.c.b16 %v2546, %v2530
        %v4579 = vpack.c.b16 %v2547, %v2531
        %v4580 = vpack.c.b16 %v2548, %v2532
        %v4581 = vpack.c.b16 %v2549, %v2533
        %v4582 = vpack.c.b16 %v2550, %v2534
        %v4583 = vpack.c.b16 %v2551, %v2535
        %v4584 = vpack.c.b16 %v2552, %v2536
        %v4585 = vpack.c.b16 %v2553, %v2537
        %v4586 = vpack.c.b16 %v2554, %v2538
        %v4587 = vpack.c.b16 %v2555, %v2539
        %v4588 = vpack.c.b16 %v2556, %v2540
        %v4589 = vpack.c.b16 %v2557, %v2541
        %v4590 = vpack.c.b16 %v2558, %v2542
        %v4591 = vpack.c.b16 %v2559, %v2543
        %v4592 = vpack.c.b16 %v2560, %v2544
        %v4593 = vpack.c.b16 %v2577, %v2561
        %v4594 = vpack.c.b16 %v2578, %v2562
        %v4595 = vpack.c.b16 %v2579, %v2563
        %v4596 = vpack.c.b16 %v2580, %v2564
        %v4597 = vpack.c.b16 %v2581, %v2565
        %v4598 = vpack.c.b16 %v2582, %v2566
        %v4599 = vpack.c.b16 %v2583, %v2567
        %v4600 = vpack.c.b16 %v2584, %v2568
        %v4601 = vpack.c.b16 %v2585, %v2569
        %v4602 = vpack.c.b16 %v2586, %v2570
        %v4603 = vpack.c.b16 %v2587, %v2571
        %v4604 = vpack.c.b16 %v2588, %v2572
        %v4605 = vpack.c.b16 %v2589, %v2573
        %v4606 = vpack.c.b16 %v2590, %v2574
        %v4607 = vpack.c.b16 %v2591, %v2575
        %v4608 = vpack.c.b16 %v2592, %v2576
        %v4609 = vpack.c.b16 %v2609, %v2593
        %v4610 = vpack.c.b16 %v2610, %v2594
        %v4611 = vpack.c.b16 %v2611, %v2595
        %v4612 = vpack.c.b16 %v2612, %v2596
        %v4613 = vpack.c.b16 %v2613, %v2597
        %v4614 = vpack.c.b16 %v2614, %v2598
        %v4615 = vpack.c.b16 %v2615, %v2599
        %v4616 = vpack.c.b16 %v2616, %v2600
        %v4617 = vpack.c.b16 %v2617, %v2601
        %v4618 = vpack.c.b16 %v2618, %v2602
        %v4619 = vpack.c.b16 %v2619, %v2603
        %v4620 = vpack.c.b16 %v2620, %v2604
        %v4621 = vpack.c.b16 %v2621, %v2605
        %v4622 = vpack.c.b16 %v2622, %v2606
        %v4623 = vpack.c.b16 %v2623, %v2607
        %v4624 = vpack.c.b16 %v2624, %v2608
        %v4625 = vpack.c.b16 %v2641, %v2625
        %v4626 = vpack.c.b16 %v2642, %v2626
        %v4627 = vpack.c.b16 %v2643, %v2627
        %v4628 = vpack.c.b16 %v2644, %v2628
        %v4629 = vpack.c.b16 %v2645, %v2629
        %v4630 = vpack.c.b16 %v2646, %v2630
        %v4631 = vpack.c.b16 %v2647, %v2631
        %v4632 = vpack.c.b16 %v2648, %v2632
        %v4633 = vpack.c.b16 %v2649, %v2633
        %v4634 = vpack.c.b16 %v2650, %v2634
        %v4635 = vpack.c.b16 %v2651, %v2635
        %v4636 = vpack.c.b16 %v2652, %v2636
        %v4637 = vpack.c.b16 %v2653, %v2637
        %v4638 = vpack.c.b16 %v2654, %v2638
        %v4639 = vpack.c.b16 %v2655, %v2639
        %v4640 = vpack.c.b16 %v2656, %v2640
        %v4641 = vpack.c.b16 %v2673, %v2657
        %v4642 = vpack.c.b16 %v2674, %v2658
        %v4643 = vpack.c.b16 %v2675, %v2659
        %v4644 = vpack.c.b16 %v2676, %v2660
        %v4645 = vpack.c.b16 %v2677, %v2661
        %v4646 = vpack.c.b16 %v2678, %v2662
        %v4647 = vpack.c.b16 %v2679, %v2663
        %v4648 = vpack.c.b16 %v2680, %v2664
        %v4649 = vpack.c.b16 %v2681, %v2665
        %v4650 = vpack.c.b16 %v2682, %v2666
        %v4651 = vpack.c.b16 %v2683, %v2667
        %v4652 = vpack.c.b16 %v2684, %v2668
        %v4653 = vpack.c.b16 %v2685, %v2669
        %v4654 = vpack.c.b16 %v2686, %v2670
        %v4655 = vpack.c.b16 %v2687, %v2671
        %v4656 = vpack.c.b16 %v2688, %v2672
        %v4657 = vpack.c.b16 %v2705, %v2689
        %v4658 = vpack.c.b16 %v2706, %v2690
        %v4659 = vpack.c.b16 %v2707, %v2691
        %v4660 = vpack.c.b16 %v2708, %v2692
        %v4661 = vpack.c.b16 %v2709, %v2693
        %v4662 = vpack.c.b16 %v2710, %v2694
        %v4663 = vpack.c.b16 %v2711, %v2695
        %v4664 = vpack.c.b16 %v2712, %v2696
        %v4665 = vpack.c.b16 %v2713, %v2697
        %v4666 = vpack.c.b16 %v2714, %v2698
        %v4667 = vpack.c.b16 %v2715, %v2699
        %v4668 = vpack.c.b16 %v2716, %v2700
        %v4669 = vpack.c.b16 %v2717, %v2701
        %v4670 = vpack.c.b16 %v2718, %v2702
        %v4671 = vpack.c.b16 %v2719, %v2703
        %v4672 = vpack.c.b16 %v2720, %v2704
        %v4673 = vpack.c.b16 %v2737, %v2721
        %v4674 = vpack.c.b16 %v2738, %v2722
        %v4675 = vpack.c.b16 %v2739, %v2723
        %v4676 = vpack.c.b16 %v2740, %v2724
        %v4677 = vpack.c.b16 %v2741, %v2725
        %v4678 = vpack.c.b16 %v2742, %v2726
        %v4679 = vpack.c.b16 %v2743, %v2727
        %v4680 = vpack.c.b16 %v2744, %v2728
        %v4681 = vpack.c.b16 %v2745, %v2729
        %v4682 = vpack.c.b16 %v2746, %v2730
        %v4683 = vpack.c.b16 %v2747, %v2731
        %v4684 = vpack.c.b16 %v2748, %v2732
        %v4685 = vpack.c.b16 %v2749, %v2733
        %v4686 = vpack.c.b16 %v2750, %v2734
        %v4687 = vpack.c.b16 %v2751, %v2735
        %v4688 = vpack.c.b16 %v2752, %v2736
        %v4689 = vpack.c.b16 %v2769, %v2753
        %v4690 = vpack.c.b16 %v2770, %v2754
        %v4691 = vpack.c.b16 %v2771, %v2755
        %v4692 = vpack.c.b16 %v2772, %v2756
        %v4693 = vpack.c.b16 %v2773, %v2757
        %v4694 = vpack.c.b16 %v2774, %v2758
        %v4695 = vpack.c.b16 %v2775, %v2759
        %v4696 = vpack.c.b16 %v2776, %v2760
        %v4697 = vpack.c.b16 %v2777, %v2761
        %v4698 = vpack.c.b16 %v2778, %v2762
        %v4699 = vpack.c.b16 %v2779, %v2763
        %v4700 = vpack.c.b16 %v2780, %v2764
        %v4701 = vpack.c.b16 %v2781, %v2765
        %v4702 = vpack.c.b16 %v2782, %v2766
        %v4703 = vpack.c.b16 %v2783, %v2767
        %v4704 = vpack.c.b16 %v2784, %v2768
        %v4705 = vpack.c.b16 %v2801, %v2785
        %v4706 = vpack.c.b16 %v2802, %v2786
        %v4707 = vpack.c.b16 %v2803, %v2787
        %v4708 = vpack.c.b16 %v2804, %v2788
        %v4709 = vpack.c.b16 %v2805, %v2789
        %v4710 = vpack.c.b16 %v2806, %v2790
        %v4711 = vpack.c.b16 %v2807, %v2791
        %v4712 = vpack.c.b16 %v2808, %v2792
        %v4713 = vpack.c.b16 %v2809, %v2793
        %v4714 = vpack.c.b16 %v2810, %v2794
        %v4715 = vpack.c.b16 %v2811, %v2795
        %v4716 = vpack.c.b16 %v2812, %v2796
        %v4717 = vpack.c.b16 %v2813, %v2797
        %v4718 = vpack.c.b16 %v2814, %v2798
        %v4719 = vpack.c.b16 %v2815, %v2799
        %v4720 = vpack.c.b16 %v2816, %v2800
        %v4721 = vpack.c.b16 %v2833, %v2817
        %v4722 = vpack.c.b16 %v2834, %v2818
        %v4723 = vpack.c.b16 %v2835, %v2819
        %v4724 = vpack.c.b16 %v2836, %v2820
        %v4725 = vpack.c.b16 %v2837, %v2821
        %v4726 = vpack.c.b16 %v2838, %v2822
        %v4727 = vpack.c.b16 %v2839, %v2823
        %v4728 = vpack.c.b16 %v2840, %v2824
        %v4729 = vpack.c.b16 %v2841, %v2825
        %v4730 = vpack.c.b16 %v2842, %v2826
        %v4731 = vpack.c.b16 %v2843, %v2827
        %v4732 = vpack.c.b16 %v2844, %v2828
        %v4733 = vpack.c.b16 %v2845, %v2829
        %v4734 = vpack.c.b16 %v2846, %v2830
        %v4735 = vpack.c.b16 %v2847, %v2831
        %v4736 = vpack.c.b16 %v2848, %v2832
        %v4737 = vpack.c.b16 %v2865, %v2849
        %v4738 = vpack.c.b16 %v2866, %v2850
        %v4739 = vpack.c.b16 %v2867, %v2851
        %v4740 = vpack.c.b16 %v2868, %v2852
        %v4741 = vpack.c.b16 %v2869, %v2853
        %v4742 = vpack.c.b16 %v2870, %v2854
        %v4743 = vpack.c.b16 %v2871, %v2855
        %v4744 = vpack.c.b16 %v2872, %v2856
        %v4745 = vpack.c.b16 %v2873, %v2857
        %v4746 = vpack.c.b16 %v2874, %v2858
        %v4747 = vpack.c.b16 %v2875, %v2859
        %v4748 = vpack.c.b16 %v2876, %v2860
        %v4749 = vpack.c.b16 %v2877, %v2861
        %v4750 = vpack.c.b16 %v2878, %v2862
        %v4751 = vpack.c.b16 %v2879, %v2863
        %v4752 = vpack.c.b16 %v2880, %v2864
        %v4753 = vpack.c.b16 %v2897, %v2881
        %v4754 = vpack.c.b16 %v2898, %v2882
        %v4755 = vpack.c.b16 %v2899, %v2883
        %v4756 = vpack.c.b16 %v2900, %v2884
        %v4757 = vpack.c.b16 %v2901, %v2885
        %v4758 = vpack.c.b16 %v2902, %v2886
        %v4759 = vpack.c.b16 %v2903, %v2887
        %v4760 = vpack.c.b16 %v2904, %v2888
        %v4761 = vpack.c.b16 %v2905, %v2889
        %v4762 = vpack.c.b16 %v2906, %v2890
        %v4763 = vpack.c.b16 %v2907, %v2891
        %v4764 = vpack.c.b16 %v2908, %v2892
        %v4765 = vpack.c.b16 %v2909, %v2893
        %v4766 = vpack.c.b16 %v2910, %v2894
        %v4767 = vpack.c.b16 %v2911, %v2895
        %v4768 = vpack.c.b16 %v2912, %v2896
        %v4769 = vpack.c.b16 %v2929, %v2913
        %v4770 = vpack.c.b16 %v2930, %v2914
        %v4771 = vpack.c.b16 %v2931, %v2915
        %v4772 = vpack.c.b16 %v2932, %v2916
        %v4773 = vpack.c.b16 %v2933, %v2917
        %v4774 = vpack.c.b16 %v2934, %v2918
        %v4775 = vpack.c.b16 %v2935, %v2919
        %v4776 = vpack.c.b16 %v2936, %v2920
        %v4777 = vpack.c.b16 %v2937, %v2921
        %v4778 = vpack.c.b16 %v2938, %v2922
        %v4779 = vpack.c.b16 %v2939, %v2923
        %v4780 = vpack.c.b16 %v2940, %v2924
        %v4781 = vpack.c.b16 %v2941, %v2925
        %v4782 = vpack.c.b16 %v2942, %v2926
        %v4783 = vpack.c.b16 %v2943, %v2927
        %v4784 = vpack.c.b16 %v2944, %v2928
        %v4785 = vpack.c.b16 %v2961, %v2945
        %v4786 = vpack.c.b16 %v2962, %v2946
        %v4787 = vpack.c.b16 %v2963, %v2947
        %v4788 = vpack.c.b16 %v2964, %v2948
        %v4789 = vpack.c.b16 %v2965, %v2949
        %v4790 = vpack.c.b16 %v2966, %v2950
        %v4791 = vpack.c.b16 %v2967, %v2951
        %v4792 = vpack.c.b16 %v2968, %v2952
        %v4793 = vpack.c.b16 %v2969, %v2953
        %v4794 = vpack.c.b16 %v2970, %v2954
        %v4795 = vpack.c.b16 %v2971, %v2955
        %v4796 = vpack.c.b16 %v2972, %v2956
        %v4797 = vpack.c.b16 %v2973, %v2957
        %v4798 = vpack.c.b16 %v2974, %v2958
        %v4799 = vpack.c.b16 %v2975, %v2959
        %v4800 = vpack.c.b16 %v2976, %v2960
        %v4801 = vpack.c.b16 %v2993, %v2977
        %v4802 = vpack.c.b16 %v2994, %v2978
        %v4803 = vpack.c.b16 %v2995, %v2979
        %v4804 = vpack.c.b16 %v2996, %v2980
        %v4805 = vpack.c.b16 %v2997, %v2981
        %v4806 = vpack.c.b16 %v2998, %v2982
        %v4807 = vpack.c.b16 %v2999, %v2983
        %v4808 = vpack.c.b16 %v3000, %v2984
        %v4809 = vpack.c.b16 %v3001, %v2985
        %v4810 = vpack.c.b16 %v3002, %v2986
        %v4811 = vpack.c.b16 %v3003, %v2987
        %v4812 = vpack.c.b16 %v3004, %v2988
        %v4813 = vpack.c.b16 %v3005, %v2989
        %v4814 = vpack.c.b16 %v3006, %v2990
        %v4815 = vpack.c.b16 %v3007, %v2991
        %v4816 = vpack.c.b16 %v3008, %v2992
        %v4817 = vpack.c.b16 %v3025, %v3009
        %v4818 = vpack.c.b16 %v3026, %v3010
        %v4819 = vpack.c.b16 %v3027, %v3011
        %v4820 = vpack.c.b16 %v3028, %v3012
        %v4821 = vpack.c.b16 %v3029, %v3013
        %v4822 = vpack.c.b16 %v3030, %v3014
        %v4823 = vpack.c.b16 %v3031, %v3015
        %v4824 = vpack.c.b16 %v3032, %v3016
        %v4825 = vpack.c.b16 %v3033, %v3017
        %v4826 = vpack.c.b16 %v3034, %v3018
        %v4827 = vpack.c.b16 %v3035, %v3019
        %v4828 = vpack.c.b16 %v3036, %v3020
        %v4829 = vpack.c.b16 %v3037, %v3021
        %v4830 = vpack.c.b16 %v3038, %v3022
        %v4831 = vpack.c.b16 %v3039, %v3023
        %v4832 = vpack.c.b16 %v3040, %v3024
        %v4833 = vpack.c.b16 %v3057, %v3041
        %v4834 = vpack.c.b16 %v3058, %v3042
        %v4835 = vpack.c.b16 %v3059, %v3043
        %v4836 = vpack.c.b16 %v3060, %v3044
        %v4837 = vpack.c.b16 %v3061, %v3045
        %v4838 = vpack.c.b16 %v3062, %v3046
        %v4839 = vpack.c.b16 %v3063, %v3047
        %v4840 = vpack.c.b16 %v3064, %v3048
        %v4841 = vpack.c.b16 %v3065, %v3049
        %v4842 = vpack.c.b16 %v3066, %v3050
        %v4843 = vpack.c.b16 %v3067, %v3051
        %v4844 = vpack.c.b16 %v3068, %v3052
        %v4845 = vpack.c.b16 %v3069, %v3053
        %v4846 = vpack.c.b16 %v3070, %v3054
        %v4847 = vpack.c.b16 %v3071, %v3055
        %v4848 = vpack.c.b16 %v3072, %v3056
        %v4849 = vpack.c.b16 %v3089, %v3073
        %v4850 = vpack.c.b16 %v3090, %v3074
        %v4851 = vpack.c.b16 %v3091, %v3075
        %v4852 = vpack.c.b16 %v3092, %v3076
        %v4853 = vpack.c.b16 %v3093, %v3077
        %v4854 = vpack.c.b16 %v3094, %v3078
        %v4855 = vpack.c.b16 %v3095, %v3079
        %v4856 = vpack.c.b16 %v3096, %v3080
        %v4857 = vpack.c.b16 %v3097, %v3081
        %v4858 = vpack.c.b16 %v3098, %v3082
        %v4859 = vpack.c.b16 %v3099, %v3083
        %v4860 = vpack.c.b16 %v3100, %v3084
        %v4861 = vpack.c.b16 %v3101, %v3085
        %v4862 = vpack.c.b16 %v3102, %v3086
        %v4863 = vpack.c.b16 %v3103, %v3087
        %v4864 = vpack.c.b16 %v3104, %v3088
        %v4865 = vpack.c.b16 %v3121, %v3105
        %v4866 = vpack.c.b16 %v3122, %v3106
        %v4867 = vpack.c.b16 %v3123, %v3107
        %v4868 = vpack.c.b16 %v3124, %v3108
        %v4869 = vpack.c.b16 %v3125, %v3109
        %v4870 = vpack.c.b16 %v3126, %v3110
        %v4871 = vpack.c.b16 %v3127, %v3111
        %v4872 = vpack.c.b16 %v3128, %v3112
        %v4873 = vpack.c.b16 %v3129, %v3113
        %v4874 = vpack.c.b16 %v3130, %v3114
        %v4875 = vpack.c.b16 %v3131, %v3115
        %v4876 = vpack.c.b16 %v3132, %v3116
        %v4877 = vpack.c.b16 %v3133, %v3117
        %v4878 = vpack.c.b16 %v3134, %v3118
        %v4879 = vpack.c.b16 %v3135, %v3119
        %v4880 = vpack.c.b16 %v3136, %v3120
        %v4881 = vpack.c.b16 %v3153, %v3137
        %v4882 = vpack.c.b16 %v3154, %v3138
        %v4883 = vpack.c.b16 %v3155, %v3139
        %v4884 = vpack.c.b16 %v3156, %v3140
        %v4885 = vpack.c.b16 %v3157, %v3141
        %v4886 = vpack.c.b16 %v3158, %v3142
        %v4887 = vpack.c.b16 %v3159, %v3143
        %v4888 = vpack.c.b16 %v3160, %v3144
        %v4889 = vpack.c.b16 %v3161, %v3145
        %v4890 = vpack.c.b16 %v3162, %v3146
        %v4891 = vpack.c.b16 %v3163, %v3147
        %v4892 = vpack.c.b16 %v3164, %v3148
        %v4893 = vpack.c.b16 %v3165, %v3149
        %v4894 = vpack.c.b16 %v3166, %v3150
        %v4895 = vpack.c.b16 %v3167, %v3151
        %v4896 = vpack.c.b16 %v3168, %v3152
        %v4897 = vpack.c.b16 %v3185, %v3169
        %v4898 = vpack.c.b16 %v3186, %v3170
        %v4899 = vpack.c.b16 %v3187, %v3171
        %v4900 = vpack.c.b16 %v3188, %v3172
        %v4901 = vpack.c.b16 %v3189, %v3173
        %v4902 = vpack.c.b16 %v3190, %v3174
        %v4903 = vpack.c.b16 %v3191, %v3175
        %v4904 = vpack.c.b16 %v3192, %v3176
        %v4905 = vpack.c.b16 %v3193, %v3177
        %v4906 = vpack.c.b16 %v3194, %v3178
        %v4907 = vpack.c.b16 %v3195, %v3179
        %v4908 = vpack.c.b16 %v3196, %v3180
        %v4909 = vpack.c.b16 %v3197, %v3181
        %v4910 = vpack.c.b16 %v3198, %v3182
        %v4911 = vpack.c.b16 %v3199, %v3183
        %v4912 = vpack.c.b16 %v3200, %v3184
        %v4913 = vpack.c.b16 %v3217, %v3201
        %v4914 = vpack.c.b16 %v3218, %v3202
        %v4915 = vpack.c.b16 %v3219, %v3203
        %v4916 = vpack.c.b16 %v3220, %v3204
        %v4917 = vpack.c.b16 %v3221, %v3205
        %v4918 = vpack.c.b16 %v3222, %v3206
        %v4919 = vpack.c.b16 %v3223, %v3207
        %v4920 = vpack.c.b16 %v3224, %v3208
        %v4921 = vpack.c.b16 %v3225, %v3209
        %v4922 = vpack.c.b16 %v3226, %v3210
        %v4923 = vpack.c.b16 %v3227, %v3211
        %v4924 = vpack.c.b16 %v3228, %v3212
        %v4925 = vpack.c.b16 %v3229, %v3213
        %v4926 = vpack.c.b16 %v3230, %v3214
        %v4927 = vpack.c.b16 %v3231, %v3215
        %v4928 = vpack.c.b16 %v3232, %v3216
        %v4929 = vpack.c.b16 %v3249, %v3233
        %v4930 = vpack.c.b16 %v3250, %v3234
        %v4931 = vpack.c.b16 %v3251, %v3235
        %v4932 = vpack.c.b16 %v3252, %v3236
        %v4933 = vpack.c.b16 %v3253, %v3237
        %v4934 = vpack.c.b16 %v3254, %v3238
        %v4935 = vpack.c.b16 %v3255, %v3239
        %v4936 = vpack.c.b16 %v3256, %v3240
        %v4937 = vpack.c.b16 %v3257, %v3241
        %v4938 = vpack.c.b16 %v3258, %v3242
        %v4939 = vpack.c.b16 %v3259, %v3243
        %v4940 = vpack.c.b16 %v3260, %v3244
        %v4941 = vpack.c.b16 %v3261, %v3245
        %v4942 = vpack.c.b16 %v3262, %v3246
        %v4943 = vpack.c.b16 %v3263, %v3247
        %v4944 = vpack.c.b16 %v3264, %v3248
        %v4945 = vpack.c.b16 %v3281, %v3265
        %v4946 = vpack.c.b16 %v3282, %v3266
        %v4947 = vpack.c.b16 %v3283, %v3267
        %v4948 = vpack.c.b16 %v3284, %v3268
        %v4949 = vpack.c.b16 %v3285, %v3269
        %v4950 = vpack.c.b16 %v3286, %v3270
        %v4951 = vpack.c.b16 %v3287, %v3271
        %v4952 = vpack.c.b16 %v3288, %v3272
        %v4953 = vpack.c.b16 %v3289, %v3273
        %v4954 = vpack.c.b16 %v3290, %v3274
        %v4955 = vpack.c.b16 %v3291, %v3275
        %v4956 = vpack.c.b16 %v3292, %v3276
        %v4957 = vpack.c.b16 %v3293, %v3277
        %v4958 = vpack.c.b16 %v3294, %v3278
        %v4959 = vpack.c.b16 %v3295, %v3279
        %v4960 = vpack.c.b16 %v3296, %v3280
        %v4961 = vpack.c.b16 %v3313, %v3297
        %v4962 = vpack.c.b16 %v3314, %v3298
        %v4963 = vpack.c.b16 %v3315, %v3299
        %v4964 = vpack.c.b16 %v3316, %v3300
        %v4965 = vpack.c.b16 %v3317, %v3301
        %v4966 = vpack.c.b16 %v3318, %v3302
        %v4967 = vpack.c.b16 %v3319, %v3303
        %v4968 = vpack.c.b16 %v3320, %v3304
        %v4969 = vpack.c.b16 %v3321, %v3305
        %v4970 = vpack.c.b16 %v3322, %v3306
        %v4971 = vpack.c.b16 %v3323, %v3307
        %v4972 = vpack.c.b16 %v3324, %v3308
        %v4973 = vpack.c.b16 %v3325, %v3309
        %v4974 = vpack.c.b16 %v3326, %v3310
        %v4975 = vpack.c.b16 %v3327, %v3311
        %v4976 = vpack.c.b16 %v3328, %v3312
        %v4977 = vpack.c.b16 %v3345, %v3329
        %v4978 = vpack.c.b16 %v3346, %v3330
        %v4979 = vpack.c.b16 %v3347, %v3331
        %v4980 = vpack.c.b16 %v3348, %v3332
        %v4981 = vpack.c.b16 %v3349, %v3333
        %v4982 = vpack.c.b16 %v3350, %v3334
        %v4983 = vpack.c.b16 %v3351, %v3335
        %v4984 = vpack.c.b16 %v3352, %v3336
        %v4985 = vpack.c.b16 %v3353, %v3337
        %v4986 = vpack.c.b16 %v3354, %v3338
        %v4987 = vpack.c.b16 %v3355, %v3339
        %v4988 = vpack.c.b16 %v3356, %v3340
        %v4989 = vpack.c.b16 %v3357, %v3341
        %v4990 = vpack.c.b16 %v3358, %v3342
        %v4991 = vpack.c.b16 %v3359, %v3343
        %v4992 = vpack.c.b16 %v3360, %v3344
        %v4993 = vpack.c.b16 %v3377, %v3361
        %v4994 = vpack.c.b16 %v3378, %v3362
        %v4995 = vpack.c.b16 %v3379, %v3363
        %v4996 = vpack.c.b16 %v3380, %v3364
        %v4997 = vpack.c.b16 %v3381, %v3365
        %v4998 = vpack.c.b16 %v3382, %v3366
        %v4999 = vpack.c.b16 %v3383, %v3367
        %v5000 = vpack.c.b16 %v3384, %v3368
        %v5001 = vpack.c.b16 %v3385, %v3369
        %v5002 = vpack.c.b16 %v3386, %v3370
        %v5003 = vpack.c.b16 %v3387, %v3371
        %v5004 = vpack.c.b16 %v3388, %v3372
        %v5005 = vpack.c.b16 %v3389, %v3373
        %v5006 = vpack.c.b16 %v3390, %v3374
        %v5007 = vpack.c.b16 %v3391, %v3375
        %v5008 = vpack.c.b16 %v3392, %v3376
        %v5009 = vpack.c.b16 %v3409, %v3393
        %v5010 = vpack.c.b16 %v3410, %v3394
        %v5011 = vpack.c.b16 %v3411, %v3395
        %v5012 = vpack.c.b16 %v3412, %v3396
        %v5013 = vpack.c.b16 %v3413, %v3397
        %v5014 = vpack.c.b16 %v3414, %v3398
        %v5015 = vpack.c.b16 %v3415, %v3399
        %v5016 = vpack.c.b16 %v3416, %v3400
        %v5017 = vpack.c.b16 %v3417, %v3401
        %v5018 = vpack.c.b16 %v3418, %v3402
        %v5019 = vpack.c.b16 %v3419, %v3403
        %v5020 = vpack.c.b16 %v3420, %v3404
        %v5021 = vpack.c.b16 %v3421, %v3405
        %v5022 = vpack.c.b16 %v3422, %v3406
        %v5023 = vpack.c.b16 %v3423, %v3407
        %v5024 = vpack.c.b16 %v3424, %v3408
        %v5025 = vpack.c.b16 %v3441, %v3425
        %v5026 = vpack.c.b16 %v3442, %v3426
        %v5027 = vpack.c.b16 %v3443, %v3427
        %v5028 = vpack.c.b16 %v3444, %v3428
        %v5029 = vpack.c.b16 %v3445, %v3429
        %v5030 = vpack.c.b16 %v3446, %v3430
        %v5031 = vpack.c.b16 %v3447, %v3431
        %v5032 = vpack.c.b16 %v3448, %v3432
        %v5033 = vpack.c.b16 %v3449, %v3433
        %v5034 = vpack.c.b16 %v3450, %v3434
        %v5035 = vpack.c.b16 %v3451, %v3435
        %v5036 = vpack.c.b16 %v3452, %v3436
        %v5037 = vpack.c.b16 %v3453, %v3437
        %v5038 = vpack.c.b16 %v3454, %v3438
        %v5039 = vpack.c.b16 %v3455, %v3439
        %v5040 = vpack.c.b16 %v3456, %v3440
        %v5041 = vpack.c.b16 %v3473, %v3457
        %v5042 = vpack.c.b16 %v3474, %v3458
        %v5043 = vpack.c.b16 %v3475, %v3459
        %v5044 = vpack.c.b16 %v3476, %v3460
        %v5045 = vpack.c.b16 %v3477, %v3461
        %v5046 = vpack.c.b16 %v3478, %v3462
        %v5047 = vpack.c.b16 %v3479, %v3463
        %v5048 = vpack.c.b16 %v3480, %v3464
        %v5049 = vpack.c.b16 %v3481, %v3465
        %v5050 = vpack.c.b16 %v3482, %v3466
        %v5051 = vpack.c.b16 %v3483, %v3467
        %v5052 = vpack.c.b16 %v3484, %v3468
        %v5053 = vpack.c.b16 %v3485, %v3469
        %v5054 = vpack.c.b16 %v3486, %v3470
        %v5055 = vpack.c.b16 %v3487, %v3471
        %v5056 = vpack.c.b16 %v3488, %v3472
        %v5057 = vpack.c.b16 %v3505, %v3489
        %v5058 = vpack.c.b16 %v3506, %v3490
        %v5059 = vpack.c.b16 %v3507, %v3491
        %v5060 = vpack.c.b16 %v3508, %v3492
        %v5061 = vpack.c.b16 %v3509, %v3493
        %v5062 = vpack.c.b16 %v3510, %v3494
        %v5063 = vpack.c.b16 %v3511, %v3495
        %v5064 = vpack.c.b16 %v3512, %v3496
        %v5065 = vpack.c.b16 %v3513, %v3497
        %v5066 = vpack.c.b16 %v3514, %v3498
        %v5067 = vpack.c.b16 %v3515, %v3499
        %v5068 = vpack.c.b16 %v3516, %v3500
        %v5069 = vpack.c.b16 %v3517, %v3501
        %v5070 = vpack.c.b16 %v3518, %v3502
        %v5071 = vpack.c.b16 %v3519, %v3503
        %v5072 = vpack.c.b16 %v3520, %v3504
        %v5073 = vpack.c.b16 %v3537, %v3521
        %v5074 = vpack.c.b16 %v3538, %v3522
        %v5075 = vpack.c.b16 %v3539, %v3523
        %v5076 = vpack.c.b16 %v3540, %v3524
        %v5077 = vpack.c.b16 %v3541, %v3525
        %v5078 = vpack.c.b16 %v3542, %v3526
        %v5079 = vpack.c.b16 %v3543, %v3527
        %v5080 = vpack.c.b16 %v3544, %v3528
        %v5081 = vpack.c.b16 %v3545, %v3529
        %v5082 = vpack.c.b16 %v3546, %v3530
        %v5083 = vpack.c.b16 %v3547, %v3531
        %v5084 = vpack.c.b16 %v3548, %v3532
        %v5085 = vpack.c.b16 %v3549, %v3533
        %v5086 = vpack.c.b16 %v3550, %v3534
        %v5087 = vpack.c.b16 %v3551, %v3535
        %v5088 = vpack.c.b16 %v3552, %v3536
        %v5089 = vpack.c.b16 %v3569, %v3553
        %v5090 = vpack.c.b16 %v3570, %v3554
        %v5091 = vpack.c.b16 %v3571, %v3555
        %v5092 = vpack.c.b16 %v3572, %v3556
        %v5093 = vpack.c.b16 %v3573, %v3557
        %v5094 = vpack.c.b16 %v3574, %v3558
        %v5095 = vpack.c.b16 %v3575, %v3559
        %v5096 = vpack.c.b16 %v3576, %v3560
        %v5097 = vpack.c.b16 %v3577, %v3561
        %v5098 = vpack.c.b16 %v3578, %v3562
        %v5099 = vpack.c.b16 %v3579, %v3563
        %v5100 = vpack.c.b16 %v3580, %v3564
        %v5101 = vpack.c.b16 %v3581, %v3565
        %v5102 = vpack.c.b16 %v3582, %v3566
        %v5103 = vpack.c.b16 %v3583, %v3567
        %v5104 = vpack.c.b16 %v3584, %v3568
        %v5105 = vpack.c.b16 %v3601, %v3585
        %v5106 = vpack.c.b16 %v3602, %v3586
        %v5107 = vpack.c.b16 %v3603, %v3587
        %v5108 = vpack.c.b16 %v3604, %v3588
        %v5109 = vpack.c.b16 %v3605, %v3589
        %v5110 = vpack.c.b16 %v3606, %v3590
        %v5111 = vpack.c.b16 %v3607, %v3591
        %v5112 = vpack.c.b16 %v3608, %v3592
        %v5113 = vpack.c.b16 %v3609, %v3593
        %v5114 = vpack.c.b16 %v3610, %v3594
        %v5115 = vpack.c.b16 %v3611, %v3595
        %v5116 = vpack.c.b16 %v3612, %v3596
        %v5117 = vpack.c.b16 %v3613, %v3597
        %v5118 = vpack.c.b16 %v3614, %v3598
        %v5119 = vpack.c.b16 %v3615, %v3599
        %v5120 = vpack.c.b16 %v3616, %v3600
        %v5121 = vpack.c.b16 %v3633, %v3617
        %v5122 = vpack.c.b16 %v3634, %v3618
        %v5123 = vpack.c.b16 %v3635, %v3619
        %v5124 = vpack.c.b16 %v3636, %v3620
        %v5125 = vpack.c.b16 %v3637, %v3621
        %v5126 = vpack.c.b16 %v3638, %v3622
        %v5127 = vpack.c.b16 %v3639, %v3623
        %v5128 = vpack.c.b16 %v3640, %v3624
        %v5129 = vpack.c.b16 %v3641, %v3625
        %v5130 = vpack.c.b16 %v3642, %v3626
        %v5131 = vpack.c.b16 %v3643, %v3627
        %v5132 = vpack.c.b16 %v3644, %v3628
        %v5133 = vpack.c.b16 %v3645, %v3629
        %v5134 = vpack.c.b16 %v3646, %v3630
        %v5135 = vpack.c.b16 %v3647, %v3631
        %v5136 = vpack.c.b16 %v3648, %v3632
        %v5137 = vpack.c.b16 %v3665, %v3649
        %v5138 = vpack.c.b16 %v3666, %v3650
        %v5139 = vpack.c.b16 %v3667, %v3651
        %v5140 = vpack.c.b16 %v3668, %v3652
        %v5141 = vpack.c.b16 %v3669, %v3653
        %v5142 = vpack.c.b16 %v3670, %v3654
        %v5143 = vpack.c.b16 %v3671, %v3655
        %v5144 = vpack.c.b16 %v3672, %v3656
        %v5145 = vpack.c.b16 %v3673, %v3657
        %v5146 = vpack.c.b16 %v3674, %v3658
        %v5147 = vpack.c.b16 %v3675, %v3659
        %v5148 = vpack.c.b16 %v3676, %v3660
        %v5149 = vpack.c.b16 %v3677, %v3661
        %v5150 = vpack.c.b16 %v3678, %v3662
        %v5151 = vpack.c.b16 %v3679, %v3663
        %v5152 = vpack.c.b16 %v3680, %v3664
        %v5153 = vpack.c.b16 %v3697, %v3681
        %v5154 = vpack.c.b16 %v3698, %v3682
        %v5155 = vpack.c.b16 %v3699, %v3683
        %v5156 = vpack.c.b16 %v3700, %v3684
        %v5157 = vpack.c.b16 %v3701, %v3685
        %v5158 = vpack.c.b16 %v3702, %v3686
        %v5159 = vpack.c.b16 %v3703, %v3687
        %v5160 = vpack.c.b16 %v3704, %v3688
        %v5161 = vpack.c.b16 %v3705, %v3689
        %v5162 = vpack.c.b16 %v3706, %v3690
        %v5163 = vpack.c.b16 %v3707, %v3691
        %v5164 = vpack.c.b16 %v3708, %v3692
        %v5165 = vpack.c.b16 %v3709, %v3693
        %v5166 = vpack.c.b16 %v3710, %v3694
        %v5167 = vpack.c.b16 %v3711, %v3695
        %v5168 = vpack.c.b16 %v3712, %v3696
        %v5169 = vpack.c.b16 %v3729, %v3713
        %v5170 = vpack.c.b16 %v3730, %v3714
        %v5171 = vpack.c.b16 %v3731, %v3715
        %v5172 = vpack.c.b16 %v3732, %v3716
        %v5173 = vpack.c.b16 %v3733, %v3717
        %v5174 = vpack.c.b16 %v3734, %v3718
        %v5175 = vpack.c.b16 %v3735, %v3719
        %v5176 = vpack.c.b16 %v3736, %v3720
        %v5177 = vpack.c.b16 %v3737, %v3721
        %v5178 = vpack.c.b16 %v3738, %v3722
        %v5179 = vpack.c.b16 %v3739, %v3723
        %v5180 = vpack.c.b16 %v3740, %v3724
        %v5181 = vpack.c.b16 %v3741, %v3725
        %v5182 = vpack.c.b16 %v3742, %v3726
        %v5183 = vpack.c.b16 %v3743, %v3727
        %v5184 = vpack.c.b16 %v3744, %v3728
        %v5185 = vpack.c.b16 %v3761, %v3745
        %v5186 = vpack.c.b16 %v3762, %v3746
        %v5187 = vpack.c.b16 %v3763, %v3747
        %v5188 = vpack.c.b16 %v3764, %v3748
        %v5189 = vpack.c.b16 %v3765, %v3749
        %v5190 = vpack.c.b16 %v3766, %v3750
        %v5191 = vpack.c.b16 %v3767, %v3751
        %v5192 = vpack.c.b16 %v3768, %v3752
        %v5193 = vpack.c.b16 %v3769, %v3753
        %v5194 = vpack.c.b16 %v3770, %v3754
        %v5195 = vpack.c.b16 %v3771, %v3755
        %v5196 = vpack.c.b16 %v3772, %v3756
        %v5197 = vpack.c.b16 %v3773, %v3757
        %v5198 = vpack.c.b16 %v3774, %v3758
        %v5199 = vpack.c.b16 %v3775, %v3759
        %v5200 = vpack.c.b16 %v3776, %v3760
        %v5201 = vpack.c.b16 %v3793, %v3777
        %v5202 = vpack.c.b16 %v3794, %v3778
        %v5203 = vpack.c.b16 %v3795, %v3779
        %v5204 = vpack.c.b16 %v3796, %v3780
        %v5205 = vpack.c.b16 %v3797, %v3781
        %v5206 = vpack.c.b16 %v3798, %v3782
        %v5207 = vpack.c.b16 %v3799, %v3783
        %v5208 = vpack.c.b16 %v3800, %v3784
        %v5209 = vpack.c.b16 %v3801, %v3785
        %v5210 = vpack.c.b16 %v3802, %v3786
        %v5211 = vpack.c.b16 %v3803, %v3787
        %v5212 = vpack.c.b16 %v3804, %v3788
        %v5213 = vpack.c.b16 %v3805, %v3789
        %v5214 = vpack.c.b16 %v3806, %v3790
        %v5215 = vpack.c.b16 %v3807, %v3791
        %v5216 = vpack.c.b16 %v3808, %v3792
        %v5217 = vpack.c.b16 %v3825, %v3809
        %v5218 = vpack.c.b16 %v3826, %v3810
        %v5219 = vpack.c.b16 %v3827, %v3811
        %v5220 = vpack.c.b16 %v3828, %v3812
        %v5221 = vpack.c.b16 %v3829, %v3813
        %v5222 = vpack.c.b16 %v3830, %v3814
        %v5223 = vpack.c.b16 %v3831, %v3815
        %v5224 = vpack.c.b16 %v3832, %v3816
        %v5225 = vpack.c.b16 %v3833, %v3817
        %v5226 = vpack.c.b16 %v3834, %v3818
        %v5227 = vpack.c.b16 %v3835, %v3819
        %v5228 = vpack.c.b16 %v3836, %v3820
        %v5229 = vpack.c.b16 %v3837, %v3821
        %v5230 = vpack.c.b16 %v3838, %v3822
        %v5231 = vpack.c.b16 %v3839, %v3823
        %v5232 = vpack.c.b16 %v3840, %v3824
        %v5233 = vpack.c.b16 %v3857, %v3841
        %v5234 = vpack.c.b16 %v3858, %v3842
        %v5235 = vpack.c.b16 %v3859, %v3843
        %v5236 = vpack.c.b16 %v3860, %v3844
        %v5237 = vpack.c.b16 %v3861, %v3845
        %v5238 = vpack.c.b16 %v3862, %v3846
        %v5239 = vpack.c.b16 %v3863, %v3847
        %v5240 = vpack.c.b16 %v3864, %v3848
        %v5241 = vpack.c.b16 %v3865, %v3849
        %v5242 = vpack.c.b16 %v3866, %v3850
        %v5243 = vpack.c.b16 %v3867, %v3851
        %v5244 = vpack.c.b16 %v3868, %v3852
        %v5245 = vpack.c.b16 %v3869, %v3853
        %v5246 = vpack.c.b16 %v3870, %v3854
        %v5247 = vpack.c.b16 %v3871, %v3855
        %v5248 = vpack.c.b16 %v3872, %v3856
        %v5249 = vpack.c.b16 %v3889, %v3873
        %v5250 = vpack.c.b16 %v3890, %v3874
        %v5251 = vpack.c.b16 %v3891, %v3875
        %v5252 = vpack.c.b16 %v3892, %v3876
        %v5253 = vpack.c.b16 %v3893, %v3877
        %v5254 = vpack.c.b16 %v3894, %v3878
        %v5255 = vpack.c.b16 %v3895, %v3879
        %v5256 = vpack.c.b16 %v3896, %v3880
        %v5257 = vpack.c.b16 %v3897, %v3881
        %v5258 = vpack.c.b16 %v3898, %v3882
        %v5259 = vpack.c.b16 %v3899, %v3883
        %v5260 = vpack.c.b16 %v3900, %v3884
        %v5261 = vpack.c.b16 %v3901, %v3885
        %v5262 = vpack.c.b16 %v3902, %v3886
        %v5263 = vpack.c.b16 %v3903, %v3887
        %v5264 = vpack.c.b16 %v3904, %v3888
        %v5265 = vpack.c.b16 %v3921, %v3905
        %v5266 = vpack.c.b16 %v3922, %v3906
        %v5267 = vpack.c.b16 %v3923, %v3907
        %v5268 = vpack.c.b16 %v3924, %v3908
        %v5269 = vpack.c.b16 %v3925, %v3909
        %v5270 = vpack.c.b16 %v3926, %v3910
        %v5271 = vpack.c.b16 %v3927, %v3911
        %v5272 = vpack.c.b16 %v3928, %v3912
        %v5273 = vpack.c.b16 %v3929, %v3913
        %v5274 = vpack.c.b16 %v3930, %v3914
        %v5275 = vpack.c.b16 %v3931, %v3915
        %v5276 = vpack.c.b16 %v3932, %v3916
        %v5277 = vpack.c.b16 %v3933, %v3917
        %v5278 = vpack.c.b16 %v3934, %v3918
        %v5279 = vpack.c.b16 %v3935, %v3919
        %v5280 = vpack.c.b16 %v3936, %v3920
        %v5281 = vpack.c.b16 %v3953, %v3937
        %v5282 = vpack.c.b16 %v3954, %v3938
        %v5283 = vpack.c.b16 %v3955, %v3939
        %v5284 = vpack.c.b16 %v3956, %v3940
        %v5285 = vpack.c.b16 %v3957, %v3941
        %v5286 = vpack.c.b16 %v3958, %v3942
        %v5287 = vpack.c.b16 %v3959, %v3943
        %v5288 = vpack.c.b16 %v3960, %v3944
        %v5289 = vpack.c.b16 %v3961, %v3945
        %v5290 = vpack.c.b16 %v3962, %v3946
        %v5291 = vpack.c.b16 %v3963, %v3947
        %v5292 = vpack.c.b16 %v3964, %v3948
        %v5293 = vpack.c.b16 %v3965, %v3949
        %v5294 = vpack.c.b16 %v3966, %v3950
        %v5295 = vpack.c.b16 %v3967, %v3951
        %v5296 = vpack.c.b16 %v3968, %v3952
        %v5297 = vpack.c.b16 %v3985, %v3969
        %v5298 = vpack.c.b16 %v3986, %v3970
        %v5299 = vpack.c.b16 %v3987, %v3971
        %v5300 = vpack.c.b16 %v3988, %v3972
        %v5301 = vpack.c.b16 %v3989, %v3973
        %v5302 = vpack.c.b16 %v3990, %v3974
        %v5303 = vpack.c.b16 %v3991, %v3975
        %v5304 = vpack.c.b16 %v3992, %v3976
        %v5305 = vpack.c.b16 %v3993, %v3977
        %v5306 = vpack.c.b16 %v3994, %v3978
        %v5307 = vpack.c.b16 %v3995, %v3979
        %v5308 = vpack.c.b16 %v3996, %v3980
        %v5309 = vpack.c.b16 %v3997, %v3981
        %v5310 = vpack.c.b16 %v3998, %v3982
        %v5311 = vpack.c.b16 %v3999, %v3983
        %v5312 = vpack.c.b16 %v4000, %v3984
        %v5313 = vpack.c.b16 %v4017, %v4001
        %v5314 = vpack.c.b16 %v4018, %v4002
        %v5315 = vpack.c.b16 %v4019, %v4003
        %v5316 = vpack.c.b16 %v4020, %v4004
        %v5317 = vpack.c.b16 %v4021, %v4005
        %v5318 = vpack.c.b16 %v4022, %v4006
        %v5319 = vpack.c.b16 %v4023, %v4007
        %v5320 = vpack.c.b16 %v4024, %v4008
        %v5321 = vpack.c.b16 %v4025, %v4009
        %v5322 = vpack.c.b16 %v4026, %v4010
        %v5323 = vpack.c.b16 %v4027, %v4011
        %v5324 = vpack.c.b16 %v4028, %v4012
        %v5325 = vpack.c.b16 %v4029, %v4013
        %v5326 = vpack.c.b16 %v4030, %v4014
        %v5327 = vpack.c.b16 %v4031, %v4015
        %v5328 = vpack.c.b16 %v4032, %v4016
        %v5329 = vpack.c.b16 %v4049, %v4033
        %v5330 = vpack.c.b16 %v4050, %v4034
        %v5331 = vpack.c.b16 %v4051, %v4035
        %v5332 = vpack.c.b16 %v4052, %v4036
        %v5333 = vpack.c.b16 %v4053, %v4037
        %v5334 = vpack.c.b16 %v4054, %v4038
        %v5335 = vpack.c.b16 %v4055, %v4039
        %v5336 = vpack.c.b16 %v4056, %v4040
        %v5337 = vpack.c.b16 %v4057, %v4041
        %v5338 = vpack.c.b16 %v4058, %v4042
        %v5339 = vpack.c.b16 %v4059, %v4043
        %v5340 = vpack.c.b16 %v4060, %v4044
        %v5341 = vpack.c.b16 %v4061, %v4045
        %v5342 = vpack.c.b16 %v4062, %v4046
        %v5343 = vpack.c.b16 %v4063, %v4047
        %v5344 = vpack.c.b16 %v4064, %v4048
        %v5345 = vpack.c.b16 %v4081, %v4065
        %v5346 = vpack.c.b16 %v4082, %v4066
        %v5347 = vpack.c.b16 %v4083, %v4067
        %v5348 = vpack.c.b16 %v4084, %v4068
        %v5349 = vpack.c.b16 %v4085, %v4069
        %v5350 = vpack.c.b16 %v4086, %v4070
        %v5351 = vpack.c.b16 %v4087, %v4071
        %v5352 = vpack.c.b16 %v4088, %v4072
        %v5353 = vpack.c.b16 %v4089, %v4073
        %v5354 = vpack.c.b16 %v4090, %v4074
        %v5355 = vpack.c.b16 %v4091, %v4075
        %v5356 = vpack.c.b16 %v4092, %v4076
        %v5357 = vpack.c.b16 %v4093, %v4077
        %v5358 = vpack.c.b16 %v4094, %v4078
        %v5359 = vpack.c.b16 %v4095, %v4079
        %v5360 = vpack.c.b16 %v4096, %v4080
        %v5361 = vpack.c.b16 %v4113, %v4097
        %v5362 = vpack.c.b16 %v4114, %v4098
        %v5363 = vpack.c.b16 %v4115, %v4099
        %v5364 = vpack.c.b16 %v4116, %v4100
        %v5365 = vpack.c.b16 %v4117, %v4101
        %v5366 = vpack.c.b16 %v4118, %v4102
        %v5367 = vpack.c.b16 %v4119, %v4103
        %v5368 = vpack.c.b16 %v4120, %v4104
        %v5369 = vpack.c.b16 %v4121, %v4105
        %v5370 = vpack.c.b16 %v4122, %v4106
        %v5371 = vpack.c.b16 %v4123, %v4107
        %v5372 = vpack.c.b16 %v4124, %v4108
        %v5373 = vpack.c.b16 %v4125, %v4109
        %v5374 = vpack.c.b16 %v4126, %v4110
        %v5375 = vpack.c.b16 %v4127, %v4111
        %v5376 = vpack.c.b16 %v4128, %v4112
        %v5377 = vpack.c.b16 %v4145, %v4129
        %v5378 = vpack.c.b16 %v4146, %v4130
        %v5379 = vpack.c.b16 %v4147, %v4131
        %v5380 = vpack.c.b16 %v4148, %v4132
        %v5381 = vpack.c.b16 %v4149, %v4133
        %v5382 = vpack.c.b16 %v4150, %v4134
        %v5383 = vpack.c.b16 %v4151, %v4135
        %v5384 = vpack.c.b16 %v4152, %v4136
        %v5385 = vpack.c.b16 %v4153, %v4137
        %v5386 = vpack.c.b16 %v4154, %v4138
        %v5387 = vpack.c.b16 %v4155, %v4139
        %v5388 = vpack.c.b16 %v4156, %v4140
        %v5389 = vpack.c.b16 %v4157, %v4141
        %v5390 = vpack.c.b16 %v4158, %v4142
        %v5391 = vpack.c.b16 %v4159, %v4143
        %v5392 = vpack.c.b16 %v4160, %v4144
        %v5393 = vpack.c.b16 %v4177, %v4161
        %v5394 = vpack.c.b16 %v4178, %v4162
        %v5395 = vpack.c.b16 %v4179, %v4163
        %v5396 = vpack.c.b16 %v4180, %v4164
        %v5397 = vpack.c.b16 %v4181, %v4165
        %v5398 = vpack.c.b16 %v4182, %v4166
        %v5399 = vpack.c.b16 %v4183, %v4167
        %v5400 = vpack.c.b16 %v4184, %v4168
        %v5401 = vpack.c.b16 %v4185, %v4169
        %v5402 = vpack.c.b16 %v4186, %v4170
        %v5403 = vpack.c.b16 %v4187, %v4171
        %v5404 = vpack.c.b16 %v4188, %v4172
        %v5405 = vpack.c.b16 %v4189, %v4173
        %v5406 = vpack.c.b16 %v4190, %v4174
        %v5407 = vpack.c.b16 %v4191, %v4175
        %v5408 = vpack.c.b16 %v4192, %v4176
        %v5409 = vpack.c.b16 %v4209, %v4193
        %v5410 = vpack.c.b16 %v4210, %v4194
        %v5411 = vpack.c.b16 %v4211, %v4195
        %v5412 = vpack.c.b16 %v4212, %v4196
        %v5413 = vpack.c.b16 %v4213, %v4197
        %v5414 = vpack.c.b16 %v4214, %v4198
        %v5415 = vpack.c.b16 %v4215, %v4199
        %v5416 = vpack.c.b16 %v4216, %v4200
        %v5417 = vpack.c.b16 %v4217, %v4201
        %v5418 = vpack.c.b16 %v4218, %v4202
        %v5419 = vpack.c.b16 %v4219, %v4203
        %v5420 = vpack.c.b16 %v4220, %v4204
        %v5421 = vpack.c.b16 %v4221, %v4205
        %v5422 = vpack.c.b16 %v4222, %v4206
        %v5423 = vpack.c.b16 %v4223, %v4207
        %v5424 = vpack.c.b16 %v4224, %v4208
        %v5425 = vpack.c.b16 %v4241, %v4225
        %v5426 = vpack.c.b16 %v4242, %v4226
        %v5427 = vpack.c.b16 %v4243, %v4227
        %v5428 = vpack.c.b16 %v4244, %v4228
        %v5429 = vpack.c.b16 %v4245, %v4229
        %v5430 = vpack.c.b16 %v4246, %v4230
        %v5431 = vpack.c.b16 %v4247, %v4231
        %v5432 = vpack.c.b16 %v4248, %v4232
        %v5433 = vpack.c.b16 %v4249, %v4233
        %v5434 = vpack.c.b16 %v4250, %v4234
        %v5435 = vpack.c.b16 %v4251, %v4235
        %v5436 = vpack.c.b16 %v4252, %v4236
        %v5437 = vpack.c.b16 %v4253, %v4237
        %v5438 = vpack.c.b16 %v4254, %v4238
        %v5439 = vpack.c.b16 %v4255, %v4239
        %v5440 = vpack.c.b16 %v4256, %v4240
        %v5441 = vpack.c.b16 %v4273, %v4257
        %v5442 = vpack.c.b16 %v4274, %v4258
        %v5443 = vpack.c.b16 %v4275, %v4259
        %v5444 = vpack.c.b16 %v4276, %v4260
        %v5445 = vpack.c.b16 %v4277, %v4261
        %v5446 = vpack.c.b16 %v4278, %v4262
        %v5447 = vpack.c.b16 %v4279, %v4263
        %v5448 = vpack.c.b16 %v4280, %v4264
        %v5449 = vpack.c.b16 %v4281, %v4265
        %v5450 = vpack.c.b16 %v4282, %v4266
        %v5451 = vpack.c.b16 %v4283, %v4267
        %v5452 = vpack.c.b16 %v4284, %v4268
        %v5453 = vpack.c.b16 %v4285, %v4269
        %v5454 = vpack.c.b16 %v4286, %v4270
        %v5455 = vpack.c.b16 %v4287, %v4271
        %v5456 = vpack.c.b16 %v4288, %v4272
        %v5457 = vpack.c.b16 %v4305, %v4289
        %v5458 = vpack.c.b16 %v4306, %v4290
        %v5459 = vpack.c.b16 %v4307, %v4291
        %v5460 = vpack.c.b16 %v4308, %v4292
        %v5461 = vpack.c.b16 %v4309, %v4293
        %v5462 = vpack.c.b16 %v4310, %v4294
        %v5463 = vpack.c.b16 %v4311, %v4295
        %v5464 = vpack.c.b16 %v4312, %v4296
        %v5465 = vpack.c.b16 %v4313, %v4297
        %v5466 = vpack.c.b16 %v4314, %v4298
        %v5467 = vpack.c.b16 %v4315, %v4299
        %v5468 = vpack.c.b16 %v4316, %v4300
        %v5469 = vpack.c.b16 %v4317, %v4301
        %v5470 = vpack.c.b16 %v4318, %v4302
        %v5471 = vpack.c.b16 %v4319, %v4303
        %v5472 = vpack.c.b16 %v4320, %v4304
        %v5473 = vpack.c.b16 %v4337, %v4321
        %v5474 = vpack.c.b16 %v4338, %v4322
        %v5475 = vpack.c.b16 %v4339, %v4323
        %v5476 = vpack.c.b16 %v4340, %v4324
        %v5477 = vpack.c.b16 %v4341, %v4325
        %v5478 = vpack.c.b16 %v4342, %v4326
        %v5479 = vpack.c.b16 %v4343, %v4327
        %v5480 = vpack.c.b16 %v4344, %v4328
        %v5481 = vpack.c.b16 %v4345, %v4329
        %v5482 = vpack.c.b16 %v4346, %v4330
        %v5483 = vpack.c.b16 %v4347, %v4331
        %v5484 = vpack.c.b16 %v4348, %v4332
        %v5485 = vpack.c.b16 %v4349, %v4333
        %v5486 = vpack.c.b16 %v4350, %v4334
        %v5487 = vpack.c.b16 %v4351, %v4335
        %v5488 = vpack.c.b16 %v4352, %v4336
        %v5489 = vpack.c.b16 %v4369, %v4353
        %v5490 = vpack.c.b16 %v4370, %v4354
        %v5491 = vpack.c.b16 %v4371, %v4355
        %v5492 = vpack.c.b16 %v4372, %v4356
        %v5493 = vpack.c.b16 %v4373, %v4357
        %v5494 = vpack.c.b16 %v4374, %v4358
        %v5495 = vpack.c.b16 %v4375, %v4359
        %v5496 = vpack.c.b16 %v4376, %v4360
        %v5497 = vpack.c.b16 %v4377, %v4361
        %v5498 = vpack.c.b16 %v4378, %v4362
        %v5499 = vpack.c.b16 %v4379, %v4363
        %v5500 = vpack.c.b16 %v4380, %v4364
        %v5501 = vpack.c.b16 %v4381, %v4365
        %v5502 = vpack.c.b16 %v4382, %v4366
        %v5503 = vpack.c.b16 %v4383, %v4367
        %v5504 = vpack.c.b16 %v4384, %v4368
        %v5505 = vpack.c.b16 %v4401, %v4385
        %v5506 = vpack.c.b16 %v4402, %v4386
        %v5507 = vpack.c.b16 %v4403, %v4387
        %v5508 = vpack.c.b16 %v4404, %v4388
        %v5509 = vpack.c.b16 %v4405, %v4389
        %v5510 = vpack.c.b16 %v4406, %v4390
        %v5511 = vpack.c.b16 %v4407, %v4391
        %v5512 = vpack.c.b16 %v4408, %v4392
        %v5513 = vpack.c.b16 %v4409, %v4393
        %v5514 = vpack.c.b16 %v4410, %v4394
        %v5515 = vpack.c.b16 %v4411, %v4395
        %v5516 = vpack.c.b16 %v4412, %v4396
        %v5517 = vpack.c.b16 %v4413, %v4397
        %v5518 = vpack.c.b16 %v4414, %v4398
        %v5519 = vpack.c.b16 %v4415, %v4399
        %v5520 = vpack.c.b16 %v4416, %v4400
        %v5521 = vpack.c.b16 %v4433, %v4417
        %v5522 = vpack.c.b16 %v4434, %v4418
        %v5523 = vpack.c.b16 %v4435, %v4419
        %v5524 = vpack.c.b16 %v4436, %v4420
        %v5525 = vpack.c.b16 %v4437, %v4421
        %v5526 = vpack.c.b16 %v4438, %v4422
        %v5527 = vpack.c.b16 %v4439, %v4423
        %v5528 = vpack.c.b16 %v4440, %v4424
        %v5529 = vpack.c.b16 %v4441, %v4425
        %v5530 = vpack.c.b16 %v4442, %v4426
        %v5531 = vpack.c.b16 %v4443, %v4427
        %v5532 = vpack.c.b16 %v4444, %v4428
        %v5533 = vpack.c.b16 %v4445, %v4429
        %v5534 = vpack.c.b16 %v4446, %v4430
        %v5535 = vpack.c.b16 %v4447, %v4431
        %v5536 = vpack.c.b16 %v4448, %v4432
        %v5537 = vpack.c.b16 %v4465, %v4449
        %v5538 = vpack.c.b16 %v4466, %v4450
        %v5539 = vpack.c.b16 %v4467, %v4451
        %v5540 = vpack.c.b16 %v4468, %v4452
        %v5541 = vpack.c.b16 %v4469, %v4453
        %v5542 = vpack.c.b16 %v4470, %v4454
        %v5543 = vpack.c.b16 %v4471, %v4455
        %v5544 = vpack.c.b16 %v4472, %v4456
        %v5545 = vpack.c.b16 %v4473, %v4457
        %v5546 = vpack.c.b16 %v4474, %v4458
        %v5547 = vpack.c.b16 %v4475, %v4459
        %v5548 = vpack.c.b16 %v4476, %v4460
        %v5549 = vpack.c.b16 %v4477, %v4461
        %v5550 = vpack.c.b16 %v4478, %v4462
        %v5551 = vpack.c.b16 %v4479, %v4463
        %v5552 = vpack.c.b16 %v4480, %v4464
        %v5553 = vpack.c.b16 %v4497, %v4481
        %v5554 = vpack.c.b16 %v4498, %v4482
        %v5555 = vpack.c.b16 %v4499, %v4483
        %v5556 = vpack.c.b16 %v4500, %v4484
        %v5557 = vpack.c.b16 %v4501, %v4485
        %v5558 = vpack.c.b16 %v4502, %v4486
        %v5559 = vpack.c.b16 %v4503, %v4487
        %v5560 = vpack.c.b16 %v4504, %v4488
        %v5561 = vpack.c.b16 %v4505, %v4489
        %v5562 = vpack.c.b16 %v4506, %v4490
        %v5563 = vpack.c.b16 %v4507, %v4491
        %v5564 = vpack.c.b16 %v4508, %v4492
        %v5565 = vpack.c.b16 %v4509, %v4493
        %v5566 = vpack.c.b16 %v4510, %v4494
        %v5567 = vpack.c.b16 %v4511, %v4495
        %v5568 = vpack.c.b16 %v4512, %v4496
        %v5569 = vpack.c.b16 %v4529, %v4513
        %v5570 = vpack.c.b16 %v4530, %v4514
        %v5571 = vpack.c.b16 %v4531, %v4515
        %v5572 = vpack.c.b16 %v4532, %v4516
        %v5573 = vpack.c.b16 %v4533, %v4517
        %v5574 = vpack.c.b16 %v4534, %v4518
        %v5575 = vpack.c.b16 %v4535, %v4519
        %v5576 = vpack.c.b16 %v4536, %v4520
        %v5577 = vpack.c.b16 %v4537, %v4521
        %v5578 = vpack.c.b16 %v4538, %v4522
        %v5579 = vpack.c.b16 %v4539, %v4523
        %v5580 = vpack.c.b16 %v4540, %v4524
        %v5581 = vpack.c.b16 %v4541, %v4525
        %v5582 = vpack.c.b16 %v4542, %v4526
        %v5583 = vpack.c.b16 %v4543, %v4527
        %v5584 = vpack.c.b16 %v4544, %v4528
        %v5585 = vpack.c.b16 %v4561, %v4545
        %v5586 = vpack.c.b16 %v4562, %v4546
        %v5587 = vpack.c.b16 %v4563, %v4547
        %v5588 = vpack.c.b16 %v4564, %v4548
        %v5589 = vpack.c.b16 %v4565, %v4549
        %v5590 = vpack.c.b16 %v4566, %v4550
        %v5591 = vpack.c.b16 %v4567, %v4551
        %v5592 = vpack.c.b16 %v4568, %v4552
        %v5593 = vpack.c.b16 %v4569, %v4553
        %v5594 = vpack.c.b16 %v4570, %v4554
        %v5595 = vpack.c.b16 %v4571, %v4555
        %v5596 = vpack.c.b16 %v4572, %v4556
        %v5597 = vpack.c.b16 %v4573, %v4557
        %v5598 = vpack.c.b16 %v4574, %v4558
        %v5599 = vpack.c.b16 %v4575, %v4559
        %v5600 = vpack.c.b16 %v4576, %v4560
        %6625 = vmatprep.subr.bf16.mxu0 %v4578
        %6626 = vmatpush1.bf16.msra.mxu0 %v4577
        %6627 = vmatprep.subr.bf16.mxu0 %v4594
        %6628 = vmatpush1.bf16.msra.mxu0 %v4593
        %6629 = vmatprep.subr.bf16.mxu0 %v4610
        %6630 = vmatpush1.bf16.msra.mxu0 %v4609
        %6631 = vmatprep.subr.bf16.mxu0 %v4626
        %6632 = vmatpush1.bf16.msra.mxu0 %v4625
        %6633 = vmatprep.subr.bf16.mxu0 %v4642
        %6634 = vmatpush1.bf16.msra.mxu0 %v4641
        %6635 = vmatprep.subr.bf16.mxu0 %v4658
        %6636 = vmatpush1.bf16.msra.mxu0 %v4657
        %6637 = vmatprep.subr.bf16.mxu0 %v4674
        %6638 = vmatpush1.bf16.msra.mxu0 %v4673
        %6639 = vmatprep.subr.bf16.mxu0 %v4690
        %6640 = vmatpush1.bf16.msra.mxu0 %v4689
        %6641 = vmatprep.subr.bf16.mxu0 %v4706
        %6642 = vmatpush1.bf16.msra.mxu0 %v4705
        %6643 = vmatprep.subr.bf16.mxu0 %v4722
        %6644 = vmatpush1.bf16.msra.mxu0 %v4721
        %6645 = vmatprep.subr.bf16.mxu0 %v4738
        %6646 = vmatpush1.bf16.msra.mxu0 %v4737
        %6647 = vmatprep.subr.bf16.mxu0 %v4754
        %6648 = vmatpush1.bf16.msra.mxu0 %v4753
        %6649 = vmatprep.subr.bf16.mxu0 %v4770
        %6650 = vmatpush1.bf16.msra.mxu0 %v4769
        %6651 = vmatprep.subr.bf16.mxu0 %v4786
        %6652 = vmatpush1.bf16.msra.mxu0 %v4785
        %6653 = vmatprep.subr.bf16.mxu0 %v4802
        %6654 = vmatpush1.bf16.msra.mxu0 %v4801
        %6655 = vmatprep.subr.bf16.mxu0 %v4818
        %6656 = vmatpush1.bf16.msra.mxu0 %v4817
        %6657 = vmatprep.mubr.bf16.mxu0 %v1490
        %6658 = vmatmul.mubr.bf16.gmra.mrb[0].mxu0 %v1489
        %v6659 = vpop.f32.mrb[0].mxu0
        %v6660 = vadd.f32 0.0, %v6659
        %v6661 = vpop.f32.mrb[0].mxu0
        %v6662 = vadd.f32 0.0, %v6661
        %v6663 = vpop.f32.mrb[0].mxu0
        %v6664 = vpop.f32.mrb[0].mxu0
        %6665 = vdwg.mxu0
        %6666 = vmatprep.subr.bf16.mxu0 %v4834
        %6667 = vmatpush1.bf16.msra.mxu0 %v4833
        %6668 = vmatprep.subr.bf16.mxu0 %v4850
        %6669 = vmatpush1.bf16.msra.mxu0 %v4849
        %6670 = vmatprep.subr.bf16.mxu0 %v4866
        %6671 = vmatpush1.bf16.msra.mxu0 %v4865
        %6672 = vmatprep.subr.bf16.mxu0 %v4882
        %6673 = vmatpush1.bf16.msra.mxu0 %v4881
        %6674 = vmatprep.subr.bf16.mxu0 %v4898
        %6675 = vmatpush1.bf16.msra.mxu0 %v4897
        %6676 = vmatprep.subr.bf16.mxu0 %v4914
        %6677 = vmatpush1.bf16.msra.mxu0 %v4913
        %6678 = vmatprep.subr.bf16.mxu0 %v4930
        %6679 = vmatpush1.bf16.msra.mxu0 %v4929
        %6680 = vmatprep.subr.bf16.mxu0 %v4946
        %6681 = vmatpush1.bf16.msra.mxu0 %v4945
        %6682 = vmatprep.subr.bf16.mxu0 %v4962
        %6683 = vmatpush1.bf16.msra.mxu0 %v4961
        %6684 = vmatprep.subr.bf16.mxu0 %v4978
        %6685 = vmatpush1.bf16.msra.mxu0 %v4977
        %6686 = vmatprep.subr.bf16.mxu0 %v4994
        %6687 = vmatpush1.bf16.msra.mxu0 %v4993
        %6688 = vmatprep.subr.bf16.mxu0 %v5010
        %6689 = vmatpush1.bf16.msra.mxu0 %v5009
        %6690 = vmatprep.subr.bf16.mxu0 %v5026
        %6691 = vmatpush1.bf16.msra.mxu0 %v5025
        %6692 = vmatprep.subr.bf16.mxu0 %v5042
        %6693 = vmatpush1.bf16.msra.mxu0 %v5041
        %6694 = vmatprep.subr.bf16.mxu0 %v5058
        %6695 = vmatpush1.bf16.msra.mxu0 %v5057
        %6696 = vmatprep.subr.bf16.mxu0 %v5074
        %6697 = vmatpush1.bf16.msra.mxu0 %v5073
        %6698 = vmatprep.mubr.bf16.mxu0 %v1492
        %6699 = vmatmul.mubr.bf16.gmra.mrb[0].mxu0 %v1491
        %v6700 = vpop.f32.mrb[0].mxu0
        %v6701 = vadd.f32 %v6660, %v6700
        %v6702 = vpop.f32.mrb[0].mxu0
        %v6703 = vadd.f32 %v6662, %v6702
        %v6704 = vpop.f32.mrb[0].mxu0
        %v6705 = vpop.f32.mrb[0].mxu0
        %6706 = vdwg.mxu0
        %6707 = vmatprep.subr.bf16.mxu0 %v5090
        %6708 = vmatpush1.bf16.msra.mxu0 %v5089
        %6709 = vmatprep.subr.bf16.mxu0 %v5106
        %6710 = vmatpush1.bf16.msra.mxu0 %v5105
        %6711 = vmatprep.subr.bf16.mxu0 %v5122
        %6712 = vmatpush1.bf16.msra.mxu0 %v5121
        %6713 = vmatprep.subr.bf16.mxu0 %v5138
        %6714 = vmatpush1.bf16.msra.mxu0 %v5137
        %6715 = vmatprep.subr.bf16.mxu0 %v5154
        %6716 = vmatpush1.bf16.msra.mxu0 %v5153
        %6717 = vmatprep.subr.bf16.mxu0 %v5170
        %6718 = vmatpush1.bf16.msra.mxu0 %v5169
        %6719 = vmatprep.subr.bf16.mxu0 %v5186
        %6720 = vmatpush1.bf16.msra.mxu0 %v5185
        %6721 = vmatprep.subr.bf16.mxu0 %v5202
        %6722 = vmatpush1.bf16.msra.mxu0 %v5201
        %6723 = vmatprep.subr.bf16.mxu0 %v5218
        %6724 = vmatpush1.bf16.msra.mxu0 %v5217
        %6725 = vmatprep.subr.bf16.mxu0 %v5234
        %6726 = vmatpush1.bf16.msra.mxu0 %v5233
        %6727 = vmatprep.subr.bf16.mxu0 %v5250
        %6728 = vmatpush1.bf16.msra.mxu0 %v5249
        %6729 = vmatprep.subr.bf16.mxu0 %v5266
        %6730 = vmatpush1.bf16.msra.mxu0 %v5265
        %6731 = vmatprep.subr.bf16.mxu0 %v5282
        %6732 = vmatpush1.bf16.msra.mxu0 %v5281
        %6733 = vmatprep.subr.bf16.mxu0 %v5298
        %6734 = vmatpush1.bf16.msra.mxu0 %v5297
        %6735 = vmatprep.subr.bf16.mxu0 %v5314
        %6736 = vmatpush1.bf16.msra.mxu0 %v5313
        %6737 = vmatprep.subr.bf16.mxu0 %v5330
        %6738 = vmatpush1.bf16.msra.mxu0 %v5329
        %6739 = vmatprep.mubr.bf16.mxu0 %v1494
        %6740 = vmatmul.mubr.bf16.gmra.mrb[0].mxu0 %v1493
        %v6741 = vpop.f32.mrb[0].mxu0
        %v6742 = vadd.f32 %v6701, %v6741
        %v6743 = vpop.f32.mrb[0].mxu0
        %v6744 = vadd.f32 %v6703, %v6743
        %v6745 = vpop.f32.mrb[0].mxu0
        %v6746 = vpop.f32.mrb[0].mxu0
        %6747 = vdwg.mxu0
        %6748 = vmatprep.subr.bf16.mxu0 %v5346
        %6749 = vmatpush1.bf16.msra.mxu0 %v5345
        %6750 = vmatprep.subr.bf16.mxu0 %v5362
        %6751 = vmatpush1.bf16.msra.mxu0 %v5361
        %6752 = vmatprep.subr.bf16.mxu0 %v5378
        %6753 = vmatpush1.bf16.msra.mxu0 %v5377
        %6754 = vmatprep.subr.bf16.mxu0 %v5394
        %6755 = vmatpush1.bf16.msra.mxu0 %v5393
        %6756 = vmatprep.subr.bf16.mxu0 %v5410
        %6757 = vmatpush1.bf16.msra.mxu0 %v5409
        %6758 = vmatprep.subr.bf16.mxu0 %v5426
        %6759 = vmatpush1.bf16.msra.mxu0 %v5425
        %6760 = vmatprep.subr.bf16.mxu0 %v5442
        %6761 = vmatpush1.bf16.msra.mxu0 %v5441
        %6762 = vmatprep.subr.bf16.mxu0 %v5458
        %6763 = vmatpush1.bf16.msra.mxu0 %v5457
        %6764 = vmatprep.subr.bf16.mxu0 %v5474
        %6765 = vmatpush1.bf16.msra.mxu0 %v5473
        %6766 = vmatprep.subr.bf16.mxu0 %v5490
        %6767 = vmatpush1.bf16.msra.mxu0 %v5489
        %6768 = vmatprep.subr.bf16.mxu0 %v5506
        %6769 = vmatpush1.bf16.msra.mxu0 %v5505
        %6770 = vmatprep.subr.bf16.mxu0 %v5522
        %6771 = vmatpush1.bf16.msra.mxu0 %v5521
        %6772 = vmatprep.subr.bf16.mxu0 %v5538
        %6773 = vmatpush1.bf16.msra.mxu0 %v5537
        %6774 = vmatprep.subr.bf16.mxu0 %v5554
        %6775 = vmatpush1.bf16.msra.mxu0 %v5553
        %6776 = vmatprep.subr.bf16.mxu0 %v5570
        %6777 = vmatpush1.bf16.msra.mxu0 %v5569
        %6778 = vmatprep.subr.bf16.mxu0 %v5586
        %6779 = vmatpush1.bf16.msra.mxu0 %v5585
        %6780 = vmatprep.mubr.bf16.mxu0 %v1496
        %6781 = vmatmul.mubr.bf16.gmra.mrb[0].mxu0 %v1495
        %v6782 = vpop.f32.mrb[0].mxu0
        %v6783 = vadd.f32 %v6742, %v6782
        %v6784 = vpop.f32.mrb[0].mxu0
        %v6785 = vadd.f32 %v6744, %v6784
        %v6786 = vpop.f32.mrb[0].mxu0
        %v6787 = vpop.f32.mrb[0].mxu0
        %6788 = vdwg.mxu0
        %6789 = vmatprep.subr.bf16.mxu0 %v4580
        %6790 = vmatpush1.bf16.msra.mxu0 %v4579
        %6791 = vmatprep.subr.bf16.mxu0 %v4596
        %6792 = vmatpush1.bf16.msra.mxu0 %v4595
        %6793 = vmatprep.subr.bf16.mxu0 %v4612
        %6794 = vmatpush1.bf16.msra.mxu0 %v4611
        %6795 = vmatprep.subr.bf16.mxu0 %v4628
        %6796 = vmatpush1.bf16.msra.mxu0 %v4627
        %6797 = vmatprep.subr.bf16.mxu0 %v4644
        %6798 = vmatpush1.bf16.msra.mxu0 %v4643
        %6799 = vmatprep.subr.bf16.mxu0 %v4660
        %6800 = vmatpush1.bf16.msra.mxu0 %v4659
        %6801 = vmatprep.subr.bf16.mxu0 %v4676
        %6802 = vmatpush1.bf16.msra.mxu0 %v4675
        %6803 = vmatprep.subr.bf16.mxu0 %v4692
        %6804 = vmatpush1.bf16.msra.mxu0 %v4691
        %6805 = vmatprep.subr.bf16.mxu0 %v4708
        %6806 = vmatpush1.bf16.msra.mxu0 %v4707
        %6807 = vmatprep.subr.bf16.mxu0 %v4724
        %6808 = vmatpush1.bf16.msra.mxu0 %v4723
        %6809 = vmatprep.subr.bf16.mxu0 %v4740
        %6810 = vmatpush1.bf16.msra.mxu0 %v4739
        %6811 = vmatprep.subr.bf16.mxu0 %v4756
        %6812 = vmatpush1.bf16.msra.mxu0 %v4755
        %6813 = vmatprep.subr.bf16.mxu0 %v4772
        %6814 = vmatpush1.bf16.msra.mxu0 %v4771
        %6815 = vmatprep.subr.bf16.mxu0 %v4788
        %6816 = vmatpush1.bf16.msra.mxu0 %v4787
        %6817 = vmatprep.subr.bf16.mxu0 %v4804
        %6818 = vmatpush1.bf16.msra.mxu0 %v4803
        %6819 = vmatprep.subr.bf16.mxu0 %v4820
        %6820 = vmatpush1.bf16.msra.mxu0 %v4819
        %6821 = vmatprep.mubr.bf16.mxu0 %v1490
        %6822 = vmatmul.mubr.bf16.gmra.mrb[0].mxu0 %v1489
        %v6823 = vpop.f32.mrb[0].mxu0
        %v6824 = vadd.f32 0.0, %v6823
        %v6825 = vpop.f32.mrb[0].mxu0
        %v6826 = vadd.f32 0.0, %v6825
        %v6827 = vpop.f32.mrb[0].mxu0
        %v6828 = vpop.f32.mrb[0].mxu0
        %6829 = vdwg.mxu0
        %6830 = vmatprep.subr.bf16.mxu0 %v4836
        %6831 = vmatpush1.bf16.msra.mxu0 %v4835
        %6832 = vmatprep.subr.bf16.mxu0 %v4852
        %6833 = vmatpush1.bf16.msra.mxu0 %v4851
        %6834 = vmatprep.subr.bf16.mxu0 %v4868
        %6835 = vmatpush1.bf16.msra.mxu0 %v4867
        %6836 = vmatprep.subr.bf16.mxu0 %v4884
        %6837 = vmatpush1.bf16.msra.mxu0 %v4883
        %6838 = vmatprep.subr.bf16.mxu0 %v4900
        %6839 = vmatpush1.bf16.msra.mxu0 %v4899
        %6840 = vmatprep.subr.bf16.mxu0 %v4916
        %6841 = vmatpush1.bf16.msra.mxu0 %v4915
        %6842 = vmatprep.subr.bf16.mxu0 %v4932
        %6843 = vmatpush1.bf16.msra.mxu0 %v4931
        %6844 = vmatprep.subr.bf16.mxu0 %v4948
        %6845 = vmatpush1.bf16.msra.mxu0 %v4947
        %6846 = vmatprep.subr.bf16.mxu0 %v4964
        %6847 = vmatpush1.bf16.msra.mxu0 %v4963
        %6848 = vmatprep.subr.bf16.mxu0 %v4980
        %6849 = vmatpush1.bf16.msra.mxu0 %v4979
        %6850 = vmatprep.subr.bf16.mxu0 %v4996
        %6851 = vmatpush1.bf16.msra.mxu0 %v4995
        %6852 = vmatprep.subr.bf16.mxu0 %v5012
        %6853 = vmatpush1.bf16.msra.mxu0 %v5011
        %6854 = vmatprep.subr.bf16.mxu0 %v5028
        %6855 = vmatpush1.bf16.msra.mxu0 %v5027
        %6856 = vmatprep.subr.bf16.mxu0 %v5044
        %6857 = vmatpush1.bf16.msra.mxu0 %v5043
        %6858 = vmatprep.subr.bf16.mxu0 %v5060
        %6859 = vmatpush1.bf16.msra.mxu0 %v5059
        %6860 = vmatprep.subr.bf16.mxu0 %v5076
        %6861 = vmatpush1.bf16.msra.mxu0 %v5075
        %6862 = vmatprep.mubr.bf16.mxu0 %v1492
        %6863 = vmatmul.mubr.bf16.gmra.mrb[0].mxu0 %v1491
        %v6864 = vpop.f32.mrb[0].mxu0
        %v6865 = vadd.f32 %v6824, %v6864
        %v6866 = vpop.f32.mrb[0].mxu0
        %v6867 = vadd.f32 %v6826, %v6866
        %v6868 = vpop.f32.mrb[0].mxu0
        %v6869 = vpop.f32.mrb[0].mxu0
        %6870 = vdwg.mxu0
        %6871 = vmatprep.subr.bf16.mxu0 %v5092
        %6872 = vmatpush1.bf16.msra.mxu0 %v5091
        %6873 = vmatprep.subr.bf16.mxu0 %v5108
        %6874 = vmatpush1.bf16.msra.mxu0 %v5107
        %6875 = vmatprep.subr.bf16.mxu0 %v5124
        %6876 = vmatpush1.bf16.msra.mxu0 %v5123
        %6877 = vmatprep.subr.bf16.mxu0 %v5140
        %6878 = vmatpush1.bf16.msra.mxu0 %v5139
        %6879 = vmatprep.subr.bf16.mxu0 %v5156
        %6880 = vmatpush1.bf16.msra.mxu0 %v5155
        %6881 = vmatprep.subr.bf16.mxu0 %v5172
        %6882 = vmatpush1.bf16.msra.mxu0 %v5171
        %6883 = vmatprep.subr.bf16.mxu0 %v5188
        %6884 = vmatpush1.bf16.msra.mxu0 %v5187
        %6885 = vmatprep.subr.bf16.mxu0 %v5204
        %6886 = vmatpush1.bf16.msra.mxu0 %v5203
        %6887 = vmatprep.subr.bf16.mxu0 %v5220
        %6888 = vmatpush1.bf16.msra.mxu0 %v5219
        %6889 = vmatprep.subr.bf16.mxu0 %v5236
        %6890 = vmatpush1.bf16.msra.mxu0 %v5235
        %6891 = vmatprep.subr.bf16.mxu0 %v5252
        %6892 = vmatpush1.bf16.msra.mxu0 %v5251
        %6893 = vmatprep.subr.bf16.mxu0 %v5268
        %6894 = vmatpush1.bf16.msra.mxu0 %v5267
        %6895 = vmatprep.subr.bf16.mxu0 %v5284
        %6896 = vmatpush1.bf16.msra.mxu0 %v5283
        %6897 = vmatprep.subr.bf16.mxu0 %v5300
        %6898 = vmatpush1.bf16.msra.mxu0 %v5299
        %6899 = vmatprep.subr.bf16.mxu0 %v5316
        %6900 = vmatpush1.bf16.msra.mxu0 %v5315
        %6901 = vmatprep.subr.bf16.mxu0 %v5332
        %6902 = vmatpush1.bf16.msra.mxu0 %v5331
        %6903 = vmatprep.mubr.bf16.mxu0 %v1494
        %6904 = vmatmul.mubr.bf16.gmra.mrb[0].mxu0 %v1493
        %v6905 = vpop.f32.mrb[0].mxu0
        %v6906 = vadd.f32 %v6865, %v6905
        %v6907 = vpop.f32.mrb[0].mxu0
        %v6908 = vadd.f32 %v6867, %v6907
        %v6909 = vpop.f32.mrb[0].mxu0
        %v6910 = vpop.f32.mrb[0].mxu0
        %6911 = vdwg.mxu0
        %6912 = vmatprep.subr.bf16.mxu0 %v5348
        %6913 = vmatpush1.bf16.msra.mxu0 %v5347
        %6914 = vmatprep.subr.bf16.mxu0 %v5364
        %6915 = vmatpush1.bf16.msra.mxu0 %v5363
        %6916 = vmatprep.subr.bf16.mxu0 %v5380
        %6917 = vmatpush1.bf16.msra.mxu0 %v5379
        %6918 = vmatprep.subr.bf16.mxu0 %v5396
        %6919 = vmatpush1.bf16.msra.mxu0 %v5395
        %6920 = vmatprep.subr.bf16.mxu0 %v5412
        %6921 = vmatpush1.bf16.msra.mxu0 %v5411
        %6922 = vmatprep.subr.bf16.mxu0 %v5428
        %6923 = vmatpush1.bf16.msra.mxu0 %v5427
        %6924 = vmatprep.subr.bf16.mxu0 %v5444
        %6925 = vmatpush1.bf16.msra.mxu0 %v5443
        %6926 = vmatprep.subr.bf16.mxu0 %v5460
        %6927 = vmatpush1.bf16.msra.mxu0 %v5459
        %6928 = vmatprep.subr.bf16.mxu0 %v5476
        %6929 = vmatpush1.bf16.msra.mxu0 %v5475
        %6930 = vmatprep.subr.bf16.mxu0 %v5492
        %6931 = vmatpush1.bf16.msra.mxu0 %v5491
        %6932 = vmatprep.subr.bf16.mxu0 %v5508
        %6933 = vmatpush1.bf16.msra.mxu0 %v5507
        %6934 = vmatprep.subr.bf16.mxu0 %v5524
        %6935 = vmatpush1.bf16.msra.mxu0 %v5523
        %6936 = vmatprep.subr.bf16.mxu0 %v5540
        %6937 = vmatpush1.bf16.msra.mxu0 %v5539
        %6938 = vmatprep.subr.bf16.mxu0 %v5556
        %6939 = vmatpush1.bf16.msra.mxu0 %v5555
        %6940 = vmatprep.subr.bf16.mxu0 %v5572
        %6941 = vmatpush1.bf16.msra.mxu0 %v5571
        %6942 = vmatprep.subr.bf16.mxu0 %v5588
        %6943 = vmatpush1.bf16.msra.mxu0 %v5587
        %6944 = vmatprep.mubr.bf16.mxu0 %v1496
        %6945 = vmatmul.mubr.bf16.gmra.mrb[0].mxu0 %v1495
        %v6946 = vpop.f32.mrb[0].mxu0
        %v6947 = vadd.f32 %v6906, %v6946
        %v6948 = vpop.f32.mrb[0].mxu0
        %v6949 = vadd.f32 %v6908, %v6948
        %v6950 = vpop.f32.mrb[0].mxu0
        %v6951 = vpop.f32.mrb[0].mxu0
        %6952 = vdwg.mxu0
        %6953 = vmatprep.subr.bf16.mxu0 %v4582
        %6954 = vmatpush1.bf16.msra.mxu0 %v4581
        %6955 = vmatprep.subr.bf16.mxu0 %v4598
        %6956 = vmatpush1.bf16.msra.mxu0 %v4597
        %6957 = vmatprep.subr.bf16.mxu0 %v4614
        %6958 = vmatpush1.bf16.msra.mxu0 %v4613
        %6959 = vmatprep.subr.bf16.mxu0 %v4630
        %6960 = vmatpush1.bf16.msra.mxu0 %v4629
        %6961 = vmatprep.subr.bf16.mxu0 %v4646
        %6962 = vmatpush1.bf16.msra.mxu0 %v4645
        %6963 = vmatprep.subr.bf16.mxu0 %v4662
        %6964 = vmatpush1.bf16.msra.mxu0 %v4661
        %6965 = vmatprep.subr.bf16.mxu0 %v4678
        %6966 = vmatpush1.bf16.msra.mxu0 %v4677
        %6967 = vmatprep.subr.bf16.mxu0 %v4694
        %6968 = vmatpush1.bf16.msra.mxu0 %v4693
        %6969 = vmatprep.subr.bf16.mxu0 %v4710
        %6970 = vmatpush1.bf16.msra.mxu0 %v4709
        %6971 = vmatprep.subr.bf16.mxu0 %v4726
        %6972 = vmatpush1.bf16.msra.mxu0 %v4725
        %6973 = vmatprep.subr.bf16.mxu0 %v4742
        %6974 = vmatpush1.bf16.msra.mxu0 %v4741
        %6975 = vmatprep.subr.bf16.mxu0 %v4758
        %6976 = vmatpush1.bf16.msra.mxu0 %v4757
        %6977 = vmatprep.subr.bf16.mxu0 %v4774
        %6978 = vmatpush1.bf16.msra.mxu0 %v4773
        %6979 = vmatprep.subr.bf16.mxu0 %v4790
        %6980 = vmatpush1.bf16.msra.mxu0 %v4789
        %6981 = vmatprep.subr.bf16.mxu0 %v4806
        %6982 = vmatpush1.bf16.msra.mxu0 %v4805
        %6983 = vmatprep.subr.bf16.mxu0 %v4822
        %6984 = vmatpush1.bf16.msra.mxu0 %v4821
        %6985 = vmatprep.mubr.bf16.mxu0 %v1490
        %6986 = vmatmul.mubr.bf16.gmra.mrb[0].mxu0 %v1489
        %v6987 = vpop.f32.mrb[0].mxu0
        %v6988 = vadd.f32 0.0, %v6987
        %v6989 = vpop.f32.mrb[0].mxu0
        %v6990 = vadd.f32 0.0, %v6989
        %v6991 = vpop.f32.mrb[0].mxu0
        %v6992 = vpop.f32.mrb[0].mxu0
        %6993 = vdwg.mxu0
        %6994 = vmatprep.subr.bf16.mxu0 %v4838
        %6995 = vmatpush1.bf16.msra.mxu0 %v4837
        %6996 = vmatprep.subr.bf16.mxu0 %v4854
        %6997 = vmatpush1.bf16.msra.mxu0 %v4853
        %6998 = vmatprep.subr.bf16.mxu0 %v4870
        %6999 = vmatpush1.bf16.msra.mxu0 %v4869
        %7000 = vmatprep.subr.bf16.mxu0 %v4886
        %7001 = vmatpush1.bf16.msra.mxu0 %v4885
        %7002 = vmatprep.subr.bf16.mxu0 %v4902
        %7003 = vmatpush1.bf16.msra.mxu0 %v4901
        %7004 = vmatprep.subr.bf16.mxu0 %v4918
        %7005 = vmatpush1.bf16.msra.mxu0 %v4917
        %7006 = vmatprep.subr.bf16.mxu0 %v4934
        %7007 = vmatpush1.bf16.msra.mxu0 %v4933
        %7008 = vmatprep.subr.bf16.mxu0 %v4950
        %7009 = vmatpush1.bf16.msra.mxu0 %v4949
        %7010 = vmatprep.subr.bf16.mxu0 %v4966
        %7011 = vmatpush1.bf16.msra.mxu0 %v4965
        %7012 = vmatprep.subr.bf16.mxu0 %v4982
        %7013 = vmatpush1.bf16.msra.mxu0 %v4981
        %7014 = vmatprep.subr.bf16.mxu0 %v4998
        %7015 = vmatpush1.bf16.msra.mxu0 %v4997
        %7016 = vmatprep.subr.bf16.mxu0 %v5014
        %7017 = vmatpush1.bf16.msra.mxu0 %v5013
        %7018 = vmatprep.subr.bf16.mxu0 %v5030
        %7019 = vmatpush1.bf16.msra.mxu0 %v5029
        %7020 = vmatprep.subr.bf16.mxu0 %v5046
        %7021 = vmatpush1.bf16.msra.mxu0 %v5045
        %7022 = vmatprep.subr.bf16.mxu0 %v5062
        %7023 = vmatpush1.bf16.msra.mxu0 %v5061
        %7024 = vmatprep.subr.bf16.mxu0 %v5078
        %7025 = vmatpush1.bf16.msra.mxu0 %v5077
        %7026 = vmatprep.mubr.bf16.mxu0 %v1492
        %7027 = vmatmul.mubr.bf16.gmra.mrb[0].mxu0 %v1491
        %v7028 = vpop.f32.mrb[0].mxu0
        %v7029 = vadd.f32 %v6988, %v7028
        %v7030 = vpop.f32.mrb[0].mxu0
        %v7031 = vadd.f32 %v6990, %v7030
        %v7032 = vpop.f32.mrb[0].mxu0
        %v7033 = vpop.f32.mrb[0].mxu0
        %7034 = vdwg.mxu0
        %7035 = vmatprep.subr.bf16.mxu0 %v5094
        %7036 = vmatpush1.bf16.msra.mxu0 %v5093
        %7037 = vmatprep.subr.bf16.mxu0 %v5110
        %7038 = vmatpush1.bf16.msra.mxu0 %v5109
        %7039 = vmatprep.subr.bf16.mxu0 %v5126
        %7040 = vmatpush1.bf16.msra.mxu0 %v5125
        %7041 = vmatprep.subr.bf16.mxu0 %v5142
        %7042 = vmatpush1.bf16.msra.mxu0 %v5141
        %7043 = vmatprep.subr.bf16.mxu0 %v5158
        %7044 = vmatpush1.bf16.msra.mxu0 %v5157
        %7045 = vmatprep.subr.bf16.mxu0 %v5174
        %7046 = vmatpush1.bf16.msra.mxu0 %v5173
        %7047 = vmatprep.subr.bf16.mxu0 %v5190
        %7048 = vmatpush1.bf16.msra.mxu0 %v5189
        %7049 = vmatprep.subr.bf16.mxu0 %v5206
        %7050 = vmatpush1.bf16.msra.mxu0 %v5205
        %7051 = vmatprep.subr.bf16.mxu0 %v5222
        %7052 = vmatpush1.bf16.msra.mxu0 %v5221
        %7053 = vmatprep.subr.bf16.mxu0 %v5238
        %7054 = vmatpush1.bf16.msra.mxu0 %v5237
        %7055 = vmatprep.subr.bf16.mxu0 %v5254
        %7056 = vmatpush1.bf16.msra.mxu0 %v5253
        %7057 = vmatprep.subr.bf16.mxu0 %v5270
        %7058 = vmatpush1.bf16.msra.mxu0 %v5269
        %7059 = vmatprep.subr.bf16.mxu0 %v5286
        %7060 = vmatpush1.bf16.msra.mxu0 %v5285
        %7061 = vmatprep.subr.bf16.mxu0 %v5302
        %7062 = vmatpush1.bf16.msra.mxu0 %v5301
        %7063 = vmatprep.subr.bf16.mxu0 %v5318
        %7064 = vmatpush1.bf16.msra.mxu0 %v5317
        %7065 = vmatprep.subr.bf16.mxu0 %v5334
        %7066 = vmatpush1.bf16.msra.mxu0 %v5333
        %7067 = vmatprep.mubr.bf16.mxu0 %v1494
        %7068 = vmatmul.mubr.bf16.gmra.mrb[0].mxu0 %v1493
        %v7069 = vpop.f32.mrb[0].mxu0
        %v7070 = vadd.f32 %v7029, %v7069
        %v7071 = vpop.f32.mrb[0].mxu0
        %v7072 = vadd.f32 %v7031, %v7071
        %v7073 = vpop.f32.mrb[0].mxu0
        %v7074 = vpop.f32.mrb[0].mxu0
        %7075 = vdwg.mxu0
        %7076 = vmatprep.subr.bf16.mxu0 %v5350
        %7077 = vmatpush1.bf16.msra.mxu0 %v5349
        %7078 = vmatprep.subr.bf16.mxu0 %v5366
        %7079 = vmatpush1.bf16.msra.mxu0 %v5365
        %7080 = vmatprep.subr.bf16.mxu0 %v5382
        %7081 = vmatpush1.bf16.msra.mxu0 %v5381
        %7082 = vmatprep.subr.bf16.mxu0 %v5398
        %7083 = vmatpush1.bf16.msra.mxu0 %v5397
        %7084 = vmatprep.subr.bf16.mxu0 %v5414
        %7085 = vmatpush1.bf16.msra.mxu0 %v5413
        %7086 = vmatprep.subr.bf16.mxu0 %v5430
        %7087 = vmatpush1.bf16.msra.mxu0 %v5429
        %7088 = vmatprep.subr.bf16.mxu0 %v5446
        %7089 = vmatpush1.bf16.msra.mxu0 %v5445
        %7090 = vmatprep.subr.bf16.mxu0 %v5462
        %7091 = vmatpush1.bf16.msra.mxu0 %v5461
        %7092 = vmatprep.subr.bf16.mxu0 %v5478
        %7093 = vmatpush1.bf16.msra.mxu0 %v5477
        %7094 = vmatprep.subr.bf16.mxu0 %v5494
        %7095 = vmatpush1.bf16.msra.mxu0 %v5493
        %7096 = vmatprep.subr.bf16.mxu0 %v5510
        %7097 = vmatpush1.bf16.msra.mxu0 %v5509
        %7098 = vmatprep.subr.bf16.mxu0 %v5526
        %7099 = vmatpush1.bf16.msra.mxu0 %v5525
        %7100 = vmatprep.subr.bf16.mxu0 %v5542
        %7101 = vmatpush1.bf16.msra.mxu0 %v5541
        %7102 = vmatprep.subr.bf16.mxu0 %v5558
        %7103 = vmatpush1.bf16.msra.mxu0 %v5557
        %7104 = vmatprep.subr.bf16.mxu0 %v5574
        %7105 = vmatpush1.bf16.msra.mxu0 %v5573
        %7106 = vmatprep.subr.bf16.mxu0 %v5590
        %7107 = vmatpush1.bf16.msra.mxu0 %v5589
        %7108 = vmatprep.mubr.bf16.mxu0 %v1496
        %7109 = vmatmul.mubr.bf16.gmra.mrb[0].mxu0 %v1495
        %v7110 = vpop.f32.mrb[0].mxu0
        %v7111 = vadd.f32 %v7070, %v7110
        %v7112 = vpop.f32.mrb[0].mxu0
        %v7113 = vadd.f32 %v7072, %v7112
        %v7114 = vpop.f32.mrb[0].mxu0
        %v7115 = vpop.f32.mrb[0].mxu0
        %7116 = vdwg.mxu0
        %7117 = vmatprep.subr.bf16.mxu0 %v4584
        %7118 = vmatpush1.bf16.msra.mxu0 %v4583
        %7119 = vmatprep.subr.bf16.mxu0 %v4600
        %7120 = vmatpush1.bf16.msra.mxu0 %v4599
        %7121 = vmatprep.subr.bf16.mxu0 %v4616
        %7122 = vmatpush1.bf16.msra.mxu0 %v4615
        %7123 = vmatprep.subr.bf16.mxu0 %v4632
        %7124 = vmatpush1.bf16.msra.mxu0 %v4631
        %7125 = vmatprep.subr.bf16.mxu0 %v4648
        %7126 = vmatpush1.bf16.msra.mxu0 %v4647
        %7127 = vmatprep.subr.bf16.mxu0 %v4664
        %7128 = vmatpush1.bf16.msra.mxu0 %v4663
        %7129 = vmatprep.subr.bf16.mxu0 %v4680
        %7130 = vmatpush1.bf16.msra.mxu0 %v4679
        %7131 = vmatprep.subr.bf16.mxu0 %v4696
        %7132 = vmatpush1.bf16.msra.mxu0 %v4695
        %7133 = vmatprep.subr.bf16.mxu0 %v4712
        %7134 = vmatpush1.bf16.msra.mxu0 %v4711
        %7135 = vmatprep.subr.bf16.mxu0 %v4728
        %7136 = vmatpush1.bf16.msra.mxu0 %v4727
        %7137 = vmatprep.subr.bf16.mxu0 %v4744
        %7138 = vmatpush1.bf16.msra.mxu0 %v4743
        %7139 = vmatprep.subr.bf16.mxu0 %v4760
        %7140 = vmatpush1.bf16.msra.mxu0 %v4759
        %7141 = vmatprep.subr.bf16.mxu0 %v4776
        %7142 = vmatpush1.bf16.msra.mxu0 %v4775
        %7143 = vmatprep.subr.bf16.mxu0 %v4792
        %7144 = vmatpush1.bf16.msra.mxu0 %v4791
        %7145 = vmatprep.subr.bf16.mxu0 %v4808
        %7146 = vmatpush1.bf16.msra.mxu0 %v4807
        %7147 = vmatprep.subr.bf16.mxu0 %v4824
        %7148 = vmatpush1.bf16.msra.mxu0 %v4823
        %7149 = vmatprep.mubr.bf16.mxu0 %v1490
        %7150 = vmatmul.mubr.bf16.gmra.mrb[0].mxu0 %v1489
        %v7151 = vpop.f32.mrb[0].mxu0
        %v7152 = vadd.f32 0.0, %v7151
        %v7153 = vpop.f32.mrb[0].mxu0
        %v7154 = vadd.f32 0.0, %v7153
        %v7155 = vpop.f32.mrb[0].mxu0
        %v7156 = vpop.f32.mrb[0].mxu0
        %7157 = vdwg.mxu0
        %7158 = vmatprep.subr.bf16.mxu0 %v4840
        %7159 = vmatpush1.bf16.msra.mxu0 %v4839
        %7160 = vmatprep.subr.bf16.mxu0 %v4856
        %7161 = vmatpush1.bf16.msra.mxu0 %v4855
        %7162 = vmatprep.subr.bf16.mxu0 %v4872
        %7163 = vmatpush1.bf16.msra.mxu0 %v4871
        %7164 = vmatprep.subr.bf16.mxu0 %v4888
        %7165 = vmatpush1.bf16.msra.mxu0 %v4887
        %7166 = vmatprep.subr.bf16.mxu0 %v4904
        %7167 = vmatpush1.bf16.msra.mxu0 %v4903
        %7168 = vmatprep.subr.bf16.mxu0 %v4920
        %7169 = vmatpush1.bf16.msra.mxu0 %v4919
        %7170 = vmatprep.subr.bf16.mxu0 %v4936
        %7171 = vmatpush1.bf16.msra.mxu0 %v4935
        %7172 = vmatprep.subr.bf16.mxu0 %v4952
        %7173 = vmatpush1.bf16.msra.mxu0 %v4951
        %7174 = vmatprep.subr.bf16.mxu0 %v4968
        %7175 = vmatpush1.bf16.msra.mxu0 %v4967
        %7176 = vmatprep.subr.bf16.mxu0 %v4984
        %7177 = vmatpush1.bf16.msra.mxu0 %v4983
        %7178 = vmatprep.subr.bf16.mxu0 %v5000
        %7179 = vmatpush1.bf16.msra.mxu0 %v4999
        %7180 = vmatprep.subr.bf16.mxu0 %v5016
        %7181 = vmatpush1.bf16.msra.mxu0 %v5015
        %7182 = vmatprep.subr.bf16.mxu0 %v5032
        %7183 = vmatpush1.bf16.msra.mxu0 %v5031
        %7184 = vmatprep.subr.bf16.mxu0 %v5048
        %7185 = vmatpush1.bf16.msra.mxu0 %v5047
        %7186 = vmatprep.subr.bf16.mxu0 %v5064
        %7187 = vmatpush1.bf16.msra.mxu0 %v5063
        %7188 = vmatprep.subr.bf16.mxu0 %v5080
        %7189 = vmatpush1.bf16.msra.mxu0 %v5079
        %7190 = vmatprep.mubr.bf16.mxu0 %v1492
        %7191 = vmatmul.mubr.bf16.gmra.mrb[0].mxu0 %v1491
        %v7192 = vpop.f32.mrb[0].mxu0
        %v7193 = vadd.f32 %v7152, %v7192
        %v7194 = vpop.f32.mrb[0].mxu0
        %v7195 = vadd.f32 %v7154, %v7194
        %v7196 = vpop.f32.mrb[0].mxu0
        %v7197 = vpop.f32.mrb[0].mxu0
        %7198 = vdwg.mxu0
        %7199 = vmatprep.subr.bf16.mxu0 %v5096
        %7200 = vmatpush1.bf16.msra.mxu0 %v5095
        %7201 = vmatprep.subr.bf16.mxu0 %v5112
        %7202 = vmatpush1.bf16.msra.mxu0 %v5111
        %7203 = vmatprep.subr.bf16.mxu0 %v5128
        %7204 = vmatpush1.bf16.msra.mxu0 %v5127
        %7205 = vmatprep.subr.bf16.mxu0 %v5144
        %7206 = vmatpush1.bf16.msra.mxu0 %v5143
        %7207 = vmatprep.subr.bf16.mxu0 %v5160
        %7208 = vmatpush1.bf16.msra.mxu0 %v5159
        %7209 = vmatprep.subr.bf16.mxu0 %v5176
        %7210 = vmatpush1.bf16.msra.mxu0 %v5175
        %7211 = vmatprep.subr.bf16.mxu0 %v5192
        %7212 = vmatpush1.bf16.msra.mxu0 %v5191
        %7213 = vmatprep.subr.bf16.mxu0 %v5208
        %7214 = vmatpush1.bf16.msra.mxu0 %v5207
        %7215 = vmatprep.subr.bf16.mxu0 %v5224
        %7216 = vmatpush1.bf16.msra.mxu0 %v5223
        %7217 = vmatprep.subr.bf16.mxu0 %v5240
        %7218 = vmatpush1.bf16.msra.mxu0 %v5239
        %7219 = vmatprep.subr.bf16.mxu0 %v5256
        %7220 = vmatpush1.bf16.msra.mxu0 %v5255
        %7221 = vmatprep.subr.bf16.mxu0 %v5272
        %7222 = vmatpush1.bf16.msra.mxu0 %v5271
        %7223 = vmatprep.subr.bf16.mxu0 %v5288
        %7224 = vmatpush1.bf16.msra.mxu0 %v5287
        %7225 = vmatprep.subr.bf16.mxu0 %v5304
        %7226 = vmatpush1.bf16.msra.mxu0 %v5303
        %7227 = vmatprep.subr.bf16.mxu0 %v5320
        %7228 = vmatpush1.bf16.msra.mxu0 %v5319
        %7229 = vmatprep.subr.bf16.mxu0 %v5336
        %7230 = vmatpush1.bf16.msra.mxu0 %v5335
        %7231 = vmatprep.mubr.bf16.mxu0 %v1494
        %7232 = vmatmul.mubr.bf16.gmra.mrb[0].mxu0 %v1493
        %v7233 = vpop.f32.mrb[0].mxu0
        %v7234 = vadd.f32 %v7193, %v7233
        %v7235 = vpop.f32.mrb[0].mxu0
        %v7236 = vadd.f32 %v7195, %v7235
        %v7237 = vpop.f32.mrb[0].mxu0
        %v7238 = vpop.f32.mrb[0].mxu0
        %7239 = vdwg.mxu0
        %7240 = vmatprep.subr.bf16.mxu0 %v5352
        %7241 = vmatpush1.bf16.msra.mxu0 %v5351
        %7242 = vmatprep.subr.bf16.mxu0 %v5368
        %7243 = vmatpush1.bf16.msra.mxu0 %v5367
        %7244 = vmatprep.subr.bf16.mxu0 %v5384
        %7245 = vmatpush1.bf16.msra.mxu0 %v5383
        %7246 = vmatprep.subr.bf16.mxu0 %v5400
        %7247 = vmatpush1.bf16.msra.mxu0 %v5399
        %7248 = vmatprep.subr.bf16.mxu0 %v5416
        %7249 = vmatpush1.bf16.msra.mxu0 %v5415
        %7250 = vmatprep.subr.bf16.mxu0 %v5432
        %7251 = vmatpush1.bf16.msra.mxu0 %v5431
        %7252 = vmatprep.subr.bf16.mxu0 %v5448
        %7253 = vmatpush1.bf16.msra.mxu0 %v5447
        %7254 = vmatprep.subr.bf16.mxu0 %v5464
        %7255 = vmatpush1.bf16.msra.mxu0 %v5463
        %7256 = vmatprep.subr.bf16.mxu0 %v5480
        %7257 = vmatpush1.bf16.msra.mxu0 %v5479
        %7258 = vmatprep.subr.bf16.mxu0 %v5496
        %7259 = vmatpush1.bf16.msra.mxu0 %v5495
        %7260 = vmatprep.subr.bf16.mxu0 %v5512
        %7261 = vmatpush1.bf16.msra.mxu0 %v5511
        %7262 = vmatprep.subr.bf16.mxu0 %v5528
        %7263 = vmatpush1.bf16.msra.mxu0 %v5527
        %7264 = vmatprep.subr.bf16.mxu0 %v5544
        %7265 = vmatpush1.bf16.msra.mxu0 %v5543
        %7266 = vmatprep.subr.bf16.mxu0 %v5560
        %7267 = vmatpush1.bf16.msra.mxu0 %v5559
        %7268 = vmatprep.subr.bf16.mxu0 %v5576
        %7269 = vmatpush1.bf16.msra.mxu0 %v5575
        %7270 = vmatprep.subr.bf16.mxu0 %v5592
        %7271 = vmatpush1.bf16.msra.mxu0 %v5591
        %7272 = vmatprep.mubr.bf16.mxu0 %v1496
        %7273 = vmatmul.mubr.bf16.gmra.mrb[0].mxu0 %v1495
        %v7274 = vpop.f32.mrb[0].mxu0
        %v7275 = vadd.f32 %v7234, %v7274
        %v7276 = vpop.f32.mrb[0].mxu0
        %v7277 = vadd.f32 %v7236, %v7276
        %v7278 = vpop.f32.mrb[0].mxu0
        %v7279 = vpop.f32.mrb[0].mxu0
        %7280 = vdwg.mxu0
        %7281 = vmatprep.subr.bf16.mxu0 %v4586
        %7282 = vmatpush1.bf16.msra.mxu0 %v4585
        %7283 = vmatprep.subr.bf16.mxu0 %v4602
        %7284 = vmatpush1.bf16.msra.mxu0 %v4601
        %7285 = vmatprep.subr.bf16.mxu0 %v4618
        %7286 = vmatpush1.bf16.msra.mxu0 %v4617
        %7287 = vmatprep.subr.bf16.mxu0 %v4634
        %7288 = vmatpush1.bf16.msra.mxu0 %v4633
        %7289 = vmatprep.subr.bf16.mxu0 %v4650
        %7290 = vmatpush1.bf16.msra.mxu0 %v4649
        %7291 = vmatprep.subr.bf16.mxu0 %v4666
        %7292 = vmatpush1.bf16.msra.mxu0 %v4665
        %7293 = vmatprep.subr.bf16.mxu0 %v4682
        %7294 = vmatpush1.bf16.msra.mxu0 %v4681
        %7295 = vmatprep.subr.bf16.mxu0 %v4698
        %7296 = vmatpush1.bf16.msra.mxu0 %v4697
        %7297 = vmatprep.subr.bf16.mxu0 %v4714
        %7298 = vmatpush1.bf16.msra.mxu0 %v4713
        %7299 = vmatprep.subr.bf16.mxu0 %v4730
        %7300 = vmatpush1.bf16.msra.mxu0 %v4729
        %7301 = vmatprep.subr.bf16.mxu0 %v4746
        %7302 = vmatpush1.bf16.msra.mxu0 %v4745
        %7303 = vmatprep.subr.bf16.mxu0 %v4762
        %7304 = vmatpush1.bf16.msra.mxu0 %v4761
        %7305 = vmatprep.subr.bf16.mxu0 %v4778
        %7306 = vmatpush1.bf16.msra.mxu0 %v4777
        %7307 = vmatprep.subr.bf16.mxu0 %v4794
        %7308 = vmatpush1.bf16.msra.mxu0 %v4793
        %7309 = vmatprep.subr.bf16.mxu0 %v4810
        %7310 = vmatpush1.bf16.msra.mxu0 %v4809
        %7311 = vmatprep.subr.bf16.mxu0 %v4826
        %7312 = vmatpush1.bf16.msra.mxu0 %v4825
        %7313 = vmatprep.mubr.bf16.mxu0 %v1490
        %7314 = vmatmul.mubr.bf16.gmra.mrb[0].mxu0 %v1489
        %v7315 = vpop.f32.mrb[0].mxu0
        %v7316 = vadd.f32 0.0, %v7315
        %v7317 = vpop.f32.mrb[0].mxu0
        %v7318 = vadd.f32 0.0, %v7317
        %v7319 = vpop.f32.mrb[0].mxu0
        %v7320 = vpop.f32.mrb[0].mxu0
        %7321 = vdwg.mxu0
        %7322 = vmatprep.subr.bf16.mxu0 %v4842
        %7323 = vmatpush1.bf16.msra.mxu0 %v4841
        %7324 = vmatprep.subr.bf16.mxu0 %v4858
        %7325 = vmatpush1.bf16.msra.mxu0 %v4857
        %7326 = vmatprep.subr.bf16.mxu0 %v4874
        %7327 = vmatpush1.bf16.msra.mxu0 %v4873
        %7328 = vmatprep.subr.bf16.mxu0 %v4890
        %7329 = vmatpush1.bf16.msra.mxu0 %v4889
        %7330 = vmatprep.subr.bf16.mxu0 %v4906
        %7331 = vmatpush1.bf16.msra.mxu0 %v4905
        %7332 = vmatprep.subr.bf16.mxu0 %v4922
        %7333 = vmatpush1.bf16.msra.mxu0 %v4921
        %7334 = vmatprep.subr.bf16.mxu0 %v4938
        %7335 = vmatpush1.bf16.msra.mxu0 %v4937
        %7336 = vmatprep.subr.bf16.mxu0 %v4954
        %7337 = vmatpush1.bf16.msra.mxu0 %v4953
        %7338 = vmatprep.subr.bf16.mxu0 %v4970
        %7339 = vmatpush1.bf16.msra.mxu0 %v4969
        %7340 = vmatprep.subr.bf16.mxu0 %v4986
        %7341 = vmatpush1.bf16.msra.mxu0 %v4985
        %7342 = vmatprep.subr.bf16.mxu0 %v5002
        %7343 = vmatpush1.bf16.msra.mxu0 %v5001
        %7344 = vmatprep.subr.bf16.mxu0 %v5018
        %7345 = vmatpush1.bf16.msra.mxu0 %v5017
        %7346 = vmatprep.subr.bf16.mxu0 %v5034
        %7347 = vmatpush1.bf16.msra.mxu0 %v5033
        %7348 = vmatprep.subr.bf16.mxu0 %v5050
        %7349 = vmatpush1.bf16.msra.mxu0 %v5049
        %7350 = vmatprep.subr.bf16.mxu0 %v5066
        %7351 = vmatpush1.bf16.msra.mxu0 %v5065
        %7352 = vmatprep.subr.bf16.mxu0 %v5082
        %7353 = vmatpush1.bf16.msra.mxu0 %v5081
        %7354 = vmatprep.mubr.bf16.mxu0 %v1492
        %7355 = vmatmul.mubr.bf16.gmra.mrb[0].mxu0 %v1491
        %v7356 = vpop.f32.mrb[0].mxu0
        %v7357 = vadd.f32 %v7316, %v7356
        %v7358 = vpop.f32.mrb[0].mxu0
        %v7359 = vadd.f32 %v7318, %v7358
        %v7360 = vpop.f32.mrb[0].mxu0
        %v7361 = vpop.f32.mrb[0].mxu0
        %7362 = vdwg.mxu0
        %7363 = vmatprep.subr.bf16.mxu0 %v5098
        %7364 = vmatpush1.bf16.msra.mxu0 %v5097
        %7365 = vmatprep.subr.bf16.mxu0 %v5114
        %7366 = vmatpush1.bf16.msra.mxu0 %v5113
        %7367 = vmatprep.subr.bf16.mxu0 %v5130
        %7368 = vmatpush1.bf16.msra.mxu0 %v5129
        %7369 = vmatprep.subr.bf16.mxu0 %v5146
        %7370 = vmatpush1.bf16.msra.mxu0 %v5145
        %7371 = vmatprep.subr.bf16.mxu0 %v5162
        %7372 = vmatpush1.bf16.msra.mxu0 %v5161
        %7373 = vmatprep.subr.bf16.mxu0 %v5178
        %7374 = vmatpush1.bf16.msra.mxu0 %v5177
        %7375 = vmatprep.subr.bf16.mxu0 %v5194
        %7376 = vmatpush1.bf16.msra.mxu0 %v5193
        %7377 = vmatprep.subr.bf16.mxu0 %v5210
        %7378 = vmatpush1.bf16.msra.mxu0 %v5209
        %7379 = vmatprep.subr.bf16.mxu0 %v5226
        %7380 = vmatpush1.bf16.msra.mxu0 %v5225
        %7381 = vmatprep.subr.bf16.mxu0 %v5242
        %7382 = vmatpush1.bf16.msra.mxu0 %v5241
        %7383 = vmatprep.subr.bf16.mxu0 %v5258
        %7384 = vmatpush1.bf16.msra.mxu0 %v5257
        %7385 = vmatprep.subr.bf16.mxu0 %v5274
        %7386 = vmatpush1.bf16.msra.mxu0 %v5273
        %7387 = vmatprep.subr.bf16.mxu0 %v5290
        %7388 = vmatpush1.bf16.msra.mxu0 %v5289
        %7389 = vmatprep.subr.bf16.mxu0 %v5306
        %7390 = vmatpush1.bf16.msra.mxu0 %v5305
        %7391 = vmatprep.subr.bf16.mxu0 %v5322
        %7392 = vmatpush1.bf16.msra.mxu0 %v5321
        %7393 = vmatprep.subr.bf16.mxu0 %v5338
        %7394 = vmatpush1.bf16.msra.mxu0 %v5337
        %7395 = vmatprep.mubr.bf16.mxu0 %v1494
        %7396 = vmatmul.mubr.bf16.gmra.mrb[0].mxu0 %v1493
        %v7397 = vpop.f32.mrb[0].mxu0
        %v7398 = vadd.f32 %v7357, %v7397
        %v7399 = vpop.f32.mrb[0].mxu0
        %v7400 = vadd.f32 %v7359, %v7399
        %v7401 = vpop.f32.mrb[0].mxu0
        %v7402 = vpop.f32.mrb[0].mxu0
        %7403 = vdwg.mxu0
        %7404 = vmatprep.subr.bf16.mxu0 %v5354
        %7405 = vmatpush1.bf16.msra.mxu0 %v5353
        %7406 = vmatprep.subr.bf16.mxu0 %v5370
        %7407 = vmatpush1.bf16.msra.mxu0 %v5369
        %7408 = vmatprep.subr.bf16.mxu0 %v5386
        %7409 = vmatpush1.bf16.msra.mxu0 %v5385
        %7410 = vmatprep.subr.bf16.mxu0 %v5402
        %7411 = vmatpush1.bf16.msra.mxu0 %v5401
        %7412 = vmatprep.subr.bf16.mxu0 %v5418
        %7413 = vmatpush1.bf16.msra.mxu0 %v5417
        %7414 = vmatprep.subr.bf16.mxu0 %v5434
        %7415 = vmatpush1.bf16.msra.mxu0 %v5433
        %7416 = vmatprep.subr.bf16.mxu0 %v5450
        %7417 = vmatpush1.bf16.msra.mxu0 %v5449
        %7418 = vmatprep.subr.bf16.mxu0 %v5466
        %7419 = vmatpush1.bf16.msra.mxu0 %v5465
        %7420 = vmatprep.subr.bf16.mxu0 %v5482
        %7421 = vmatpush1.bf16.msra.mxu0 %v5481
        %7422 = vmatprep.subr.bf16.mxu0 %v5498
        %7423 = vmatpush1.bf16.msra.mxu0 %v5497
        %7424 = vmatprep.subr.bf16.mxu0 %v5514
        %7425 = vmatpush1.bf16.msra.mxu0 %v5513
        %7426 = vmatprep.subr.bf16.mxu0 %v5530
        %7427 = vmatpush1.bf16.msra.mxu0 %v5529
        %7428 = vmatprep.subr.bf16.mxu0 %v5546
        %7429 = vmatpush1.bf16.msra.mxu0 %v5545
        %7430 = vmatprep.subr.bf16.mxu0 %v5562
        %7431 = vmatpush1.bf16.msra.mxu0 %v5561
        %7432 = vmatprep.subr.bf16.mxu0 %v5578
        %7433 = vmatpush1.bf16.msra.mxu0 %v5577
        %7434 = vmatprep.subr.bf16.mxu0 %v5594
        %7435 = vmatpush1.bf16.msra.mxu0 %v5593
        %7436 = vmatprep.mubr.bf16.mxu0 %v1496
        %7437 = vmatmul.mubr.bf16.gmra.mrb[0].mxu0 %v1495
        %v7438 = vpop.f32.mrb[0].mxu0
        %v7439 = vadd.f32 %v7398, %v7438
        %v7440 = vpop.f32.mrb[0].mxu0
        %v7441 = vadd.f32 %v7400, %v7440
        %v7442 = vpop.f32.mrb[0].mxu0
        %v7443 = vpop.f32.mrb[0].mxu0
        %7444 = vdwg.mxu0
        %7445 = vmatprep.subr.bf16.mxu0 %v4588
        %7446 = vmatpush1.bf16.msra.mxu0 %v4587
        %7447 = vmatprep.subr.bf16.mxu0 %v4604
        %7448 = vmatpush1.bf16.msra.mxu0 %v4603
        %7449 = vmatprep.subr.bf16.mxu0 %v4620
        %7450 = vmatpush1.bf16.msra.mxu0 %v4619
        %7451 = vmatprep.subr.bf16.mxu0 %v4636
        %7452 = vmatpush1.bf16.msra.mxu0 %v4635
        %7453 = vmatprep.subr.bf16.mxu0 %v4652
        %7454 = vmatpush1.bf16.msra.mxu0 %v4651
        %7455 = vmatprep.subr.bf16.mxu0 %v4668
        %7456 = vmatpush1.bf16.msra.mxu0 %v4667
        %7457 = vmatprep.subr.bf16.mxu0 %v4684
        %7458 = vmatpush1.bf16.msra.mxu0 %v4683
        %7459 = vmatprep.subr.bf16.mxu0 %v4700
        %7460 = vmatpush1.bf16.msra.mxu0 %v4699
        %7461 = vmatprep.subr.bf16.mxu0 %v4716
        %7462 = vmatpush1.bf16.msra.mxu0 %v4715
        %7463 = vmatprep.subr.bf16.mxu0 %v4732
        %7464 = vmatpush1.bf16.msra.mxu0 %v4731
        %7465 = vmatprep.subr.bf16.mxu0 %v4748
        %7466 = vmatpush1.bf16.msra.mxu0 %v4747
        %7467 = vmatprep.subr.bf16.mxu0 %v4764
        %7468 = vmatpush1.bf16.msra.mxu0 %v4763
        %7469 = vmatprep.subr.bf16.mxu0 %v4780
        %7470 = vmatpush1.bf16.msra.mxu0 %v4779
        %7471 = vmatprep.subr.bf16.mxu0 %v4796
        %7472 = vmatpush1.bf16.msra.mxu0 %v4795
        %7473 = vmatprep.subr.bf16.mxu0 %v4812
        %7474 = vmatpush1.bf16.msra.mxu0 %v4811
        %7475 = vmatprep.subr.bf16.mxu0 %v4828
        %7476 = vmatpush1.bf16.msra.mxu0 %v4827
        %7477 = vmatprep.mubr.bf16.mxu0 %v1490
        %7478 = vmatmul.mubr.bf16.gmra.mrb[0].mxu0 %v1489
        %v7479 = vpop.f32.mrb[0].mxu0
        %v7480 = vadd.f32 0.0, %v7479
        %v7481 = vpop.f32.mrb[0].mxu0
        %v7482 = vadd.f32 0.0, %v7481
        %v7483 = vpop.f32.mrb[0].mxu0
        %v7484 = vpop.f32.mrb[0].mxu0
        %7485 = vdwg.mxu0
        %7486 = vmatprep.subr.bf16.mxu0 %v4844
        %7487 = vmatpush1.bf16.msra.mxu0 %v4843
        %7488 = vmatprep.subr.bf16.mxu0 %v4860
        %7489 = vmatpush1.bf16.msra.mxu0 %v4859
        %7490 = vmatprep.subr.bf16.mxu0 %v4876
        %7491 = vmatpush1.bf16.msra.mxu0 %v4875
        %7492 = vmatprep.subr.bf16.mxu0 %v4892
        %7493 = vmatpush1.bf16.msra.mxu0 %v4891
        %7494 = vmatprep.subr.bf16.mxu0 %v4908
        %7495 = vmatpush1.bf16.msra.mxu0 %v4907
        %7496 = vmatprep.subr.bf16.mxu0 %v4924
        %7497 = vmatpush1.bf16.msra.mxu0 %v4923
        %7498 = vmatprep.subr.bf16.mxu0 %v4940
        %7499 = vmatpush1.bf16.msra.mxu0 %v4939
        %7500 = vmatprep.subr.bf16.mxu0 %v4956
        %7501 = vmatpush1.bf16.msra.mxu0 %v4955
        %7502 = vmatprep.subr.bf16.mxu0 %v4972
        %7503 = vmatpush1.bf16.msra.mxu0 %v4971
        %7504 = vmatprep.subr.bf16.mxu0 %v4988
        %7505 = vmatpush1.bf16.msra.mxu0 %v4987
        %7506 = vmatprep.subr.bf16.mxu0 %v5004
        %7507 = vmatpush1.bf16.msra.mxu0 %v5003
        %7508 = vmatprep.subr.bf16.mxu0 %v5020
        %7509 = vmatpush1.bf16.msra.mxu0 %v5019
        %7510 = vmatprep.subr.bf16.mxu0 %v5036
        %7511 = vmatpush1.bf16.msra.mxu0 %v5035
        %7512 = vmatprep.subr.bf16.mxu0 %v5052
        %7513 = vmatpush1.bf16.msra.mxu0 %v5051
        %7514 = vmatprep.subr.bf16.mxu0 %v5068
        %7515 = vmatpush1.bf16.msra.mxu0 %v5067
        %7516 = vmatprep.subr.bf16.mxu0 %v5084
        %7517 = vmatpush1.bf16.msra.mxu0 %v5083
        %7518 = vmatprep.mubr.bf16.mxu0 %v1492
        %7519 = vmatmul.mubr.bf16.gmra.mrb[0].mxu0 %v1491
        %v7520 = vpop.f32.mrb[0].mxu0
        %v7521 = vadd.f32 %v7480, %v7520
        %v7522 = vpop.f32.mrb[0].mxu0
        %v7523 = vadd.f32 %v7482, %v7522
        %v7524 = vpop.f32.mrb[0].mxu0
        %v7525 = vpop.f32.mrb[0].mxu0
        %7526 = vdwg.mxu0
        %7527 = vmatprep.subr.bf16.mxu0 %v5100
        %7528 = vmatpush1.bf16.msra.mxu0 %v5099
        %7529 = vmatprep.subr.bf16.mxu0 %v5116
        %7530 = vmatpush1.bf16.msra.mxu0 %v5115
        %7531 = vmatprep.subr.bf16.mxu0 %v5132
        %7532 = vmatpush1.bf16.msra.mxu0 %v5131
        %7533 = vmatprep.subr.bf16.mxu0 %v5148
        %7534 = vmatpush1.bf16.msra.mxu0 %v5147
        %7535 = vmatprep.subr.bf16.mxu0 %v5164
        %7536 = vmatpush1.bf16.msra.mxu0 %v5163
        %7537 = vmatprep.subr.bf16.mxu0 %v5180
        %7538 = vmatpush1.bf16.msra.mxu0 %v5179
        %7539 = vmatprep.subr.bf16.mxu0 %v5196
        %7540 = vmatpush1.bf16.msra.mxu0 %v5195
        %7541 = vmatprep.subr.bf16.mxu0 %v5212
        %7542 = vmatpush1.bf16.msra.mxu0 %v5211
        %7543 = vmatprep.subr.bf16.mxu0 %v5228
        %7544 = vmatpush1.bf16.msra.mxu0 %v5227
        %7545 = vmatprep.subr.bf16.mxu0 %v5244
        %7546 = vmatpush1.bf16.msra.mxu0 %v5243
        %7547 = vmatprep.subr.bf16.mxu0 %v5260
        %7548 = vmatpush1.bf16.msra.mxu0 %v5259
        %7549 = vmatprep.subr.bf16.mxu0 %v5276
        %7550 = vmatpush1.bf16.msra.mxu0 %v5275
        %7551 = vmatprep.subr.bf16.mxu0 %v5292
        %7552 = vmatpush1.bf16.msra.mxu0 %v5291
        %7553 = vmatprep.subr.bf16.mxu0 %v5308
        %7554 = vmatpush1.bf16.msra.mxu0 %v5307
        %7555 = vmatprep.subr.bf16.mxu0 %v5324
        %7556 = vmatpush1.bf16.msra.mxu0 %v5323
        %7557 = vmatprep.subr.bf16.mxu0 %v5340
        %7558 = vmatpush1.bf16.msra.mxu0 %v5339
        %7559 = vmatprep.mubr.bf16.mxu0 %v1494
        %7560 = vmatmul.mubr.bf16.gmra.mrb[0].mxu0 %v1493
        %v7561 = vpop.f32.mrb[0].mxu0
        %v7562 = vadd.f32 %v7521, %v7561
        %v7563 = vpop.f32.mrb[0].mxu0
        %v7564 = vadd.f32 %v7523, %v7563
        %v7565 = vpop.f32.mrb[0].mxu0
        %v7566 = vpop.f32.mrb[0].mxu0
        %7567 = vdwg.mxu0
        %7568 = vmatprep.subr.bf16.mxu0 %v5356
        %7569 = vmatpush1.bf16.msra.mxu0 %v5355
        %7570 = vmatprep.subr.bf16.mxu0 %v5372
        %7571 = vmatpush1.bf16.msra.mxu0 %v5371
        %7572 = vmatprep.subr.bf16.mxu0 %v5388
        %7573 = vmatpush1.bf16.msra.mxu0 %v5387
        %7574 = vmatprep.subr.bf16.mxu0 %v5404
        %7575 = vmatpush1.bf16.msra.mxu0 %v5403
        %7576 = vmatprep.subr.bf16.mxu0 %v5420
        %7577 = vmatpush1.bf16.msra.mxu0 %v5419
        %7578 = vmatprep.subr.bf16.mxu0 %v5436
        %7579 = vmatpush1.bf16.msra.mxu0 %v5435
        %7580 = vmatprep.subr.bf16.mxu0 %v5452
        %7581 = vmatpush1.bf16.msra.mxu0 %v5451
        %7582 = vmatprep.subr.bf16.mxu0 %v5468
        %7583 = vmatpush1.bf16.msra.mxu0 %v5467
        %7584 = vmatprep.subr.bf16.mxu0 %v5484
        %7585 = vmatpush1.bf16.msra.mxu0 %v5483
        %7586 = vmatprep.subr.bf16.mxu0 %v5500
        %7587 = vmatpush1.bf16.msra.mxu0 %v5499
        %7588 = vmatprep.subr.bf16.mxu0 %v5516
        %7589 = vmatpush1.bf16.msra.mxu0 %v5515
        %7590 = vmatprep.subr.bf16.mxu0 %v5532
        %7591 = vmatpush1.bf16.msra.mxu0 %v5531
        %7592 = vmatprep.subr.bf16.mxu0 %v5548
        %7593 = vmatpush1.bf16.msra.mxu0 %v5547
        %7594 = vmatprep.subr.bf16.mxu0 %v5564
        %7595 = vmatpush1.bf16.msra.mxu0 %v5563
        %7596 = vmatprep.subr.bf16.mxu0 %v5580
        %7597 = vmatpush1.bf16.msra.mxu0 %v5579
        %7598 = vmatprep.subr.bf16.mxu0 %v5596
        %7599 = vmatpush1.bf16.msra.mxu0 %v5595
        %7600 = vmatprep.mubr.bf16.mxu0 %v1496
        %7601 = vmatmul.mubr.bf16.gmra.mrb[0].mxu0 %v1495
        %v7602 = vpop.f32.mrb[0].mxu0
        %v7603 = vadd.f32 %v7562, %v7602
        %v7604 = vpop.f32.mrb[0].mxu0
        %v7605 = vadd.f32 %v7564, %v7604
        %v7606 = vpop.f32.mrb[0].mxu0
        %v7607 = vpop.f32.mrb[0].mxu0
        %7608 = vdwg.mxu0
        %7609 = vmatprep.subr.bf16.mxu0 %v4590
        %7610 = vmatpush1.bf16.msra.mxu0 %v4589
        %7611 = vmatprep.subr.bf16.mxu0 %v4606
        %7612 = vmatpush1.bf16.msra.mxu0 %v4605
        %7613 = vmatprep.subr.bf16.mxu0 %v4622
        %7614 = vmatpush1.bf16.msra.mxu0 %v4621
        %7615 = vmatprep.subr.bf16.mxu0 %v4638
        %7616 = vmatpush1.bf16.msra.mxu0 %v4637
        %7617 = vmatprep.subr.bf16.mxu0 %v4654
        %7618 = vmatpush1.bf16.msra.mxu0 %v4653
        %7619 = vmatprep.subr.bf16.mxu0 %v4670
        %7620 = vmatpush1.bf16.msra.mxu0 %v4669
        %7621 = vmatprep.subr.bf16.mxu0 %v4686
        %7622 = vmatpush1.bf16.msra.mxu0 %v4685
        %7623 = vmatprep.subr.bf16.mxu0 %v4702
        %7624 = vmatpush1.bf16.msra.mxu0 %v4701
        %7625 = vmatprep.subr.bf16.mxu0 %v4718
        %7626 = vmatpush1.bf16.msra.mxu0 %v4717
        %7627 = vmatprep.subr.bf16.mxu0 %v4734
        %7628 = vmatpush1.bf16.msra.mxu0 %v4733
        %7629 = vmatprep.subr.bf16.mxu0 %v4750
        %7630 = vmatpush1.bf16.msra.mxu0 %v4749
        %7631 = vmatprep.subr.bf16.mxu0 %v4766
        %7632 = vmatpush1.bf16.msra.mxu0 %v4765
        %7633 = vmatprep.subr.bf16.mxu0 %v4782
        %7634 = vmatpush1.bf16.msra.mxu0 %v4781
        %7635 = vmatprep.subr.bf16.mxu0 %v4798
        %7636 = vmatpush1.bf16.msra.mxu0 %v4797
        %7637 = vmatprep.subr.bf16.mxu0 %v4814
        %7638 = vmatpush1.bf16.msra.mxu0 %v4813
        %7639 = vmatprep.subr.bf16.mxu0 %v4830
        %7640 = vmatpush1.bf16.msra.mxu0 %v4829
        %7641 = vmatprep.mubr.bf16.mxu0 %v1490
        %7642 = vmatmul.mubr.bf16.gmra.mrb[0].mxu0 %v1489
        %v7643 = vpop.f32.mrb[0].mxu0
        %v7644 = vadd.f32 0.0, %v7643
        %v7645 = vpop.f32.mrb[0].mxu0
        %v7646 = vadd.f32 0.0, %v7645
        %v7647 = vpop.f32.mrb[0].mxu0
        %v7648 = vpop.f32.mrb[0].mxu0
        %7649 = vdwg.mxu0
        %7650 = vmatprep.subr.bf16.mxu0 %v4846
        %7651 = vmatpush1.bf16.msra.mxu0 %v4845
        %7652 = vmatprep.subr.bf16.mxu0 %v4862
        %7653 = vmatpush1.bf16.msra.mxu0 %v4861
        %7654 = vmatprep.subr.bf16.mxu0 %v4878
        %7655 = vmatpush1.bf16.msra.mxu0 %v4877
        %7656 = vmatprep.subr.bf16.mxu0 %v4894
        %7657 = vmatpush1.bf16.msra.mxu0 %v4893
        %7658 = vmatprep.subr.bf16.mxu0 %v4910
        %7659 = vmatpush1.bf16.msra.mxu0 %v4909
        %7660 = vmatprep.subr.bf16.mxu0 %v4926
        %7661 = vmatpush1.bf16.msra.mxu0 %v4925
        %7662 = vmatprep.subr.bf16.mxu0 %v4942
        %7663 = vmatpush1.bf16.msra.mxu0 %v4941
        %7664 = vmatprep.subr.bf16.mxu0 %v4958
        %7665 = vmatpush1.bf16.msra.mxu0 %v4957
        %7666 = vmatprep.subr.bf16.mxu0 %v4974
        %7667 = vmatpush1.bf16.msra.mxu0 %v4973
        %7668 = vmatprep.subr.bf16.mxu0 %v4990
        %7669 = vmatpush1.bf16.msra.mxu0 %v4989
        %7670 = vmatprep.subr.bf16.mxu0 %v5006
        %7671 = vmatpush1.bf16.msra.mxu0 %v5005
        %7672 = vmatprep.subr.bf16.mxu0 %v5022
        %7673 = vmatpush1.bf16.msra.mxu0 %v5021
        %7674 = vmatprep.subr.bf16.mxu0 %v5038
        %7675 = vmatpush1.bf16.msra.mxu0 %v5037
        %7676 = vmatprep.subr.bf16.mxu0 %v5054
        %7677 = vmatpush1.bf16.msra.mxu0 %v5053
        %7678 = vmatprep.subr.bf16.mxu0 %v5070
        %7679 = vmatpush1.bf16.msra.mxu0 %v5069
        %7680 = vmatprep.subr.bf16.mxu0 %v5086
        %7681 = vmatpush1.bf16.msra.mxu0 %v5085
        %7682 = vmatprep.mubr.bf16.mxu0 %v1492
        %7683 = vmatmul.mubr.bf16.gmra.mrb[0].mxu0 %v1491
        %v7684 = vpop.f32.mrb[0].mxu0
        %v7685 = vadd.f32 %v7644, %v7684
        %v7686 = vpop.f32.mrb[0].mxu0
        %v7687 = vadd.f32 %v7646, %v7686
        %v7688 = vpop.f32.mrb[0].mxu0
        %v7689 = vpop.f32.mrb[0].mxu0
        %7690 = vdwg.mxu0
        %7691 = vmatprep.subr.bf16.mxu0 %v5102
        %7692 = vmatpush1.bf16.msra.mxu0 %v5101
        %7693 = vmatprep.subr.bf16.mxu0 %v5118
        %7694 = vmatpush1.bf16.msra.mxu0 %v5117
        %7695 = vmatprep.subr.bf16.mxu0 %v5134
        %7696 = vmatpush1.bf16.msra.mxu0 %v5133
        %7697 = vmatprep.subr.bf16.mxu0 %v5150
        %7698 = vmatpush1.bf16.msra.mxu0 %v5149
        %7699 = vmatprep.subr.bf16.mxu0 %v5166
        %7700 = vmatpush1.bf16.msra.mxu0 %v5165
        %7701 = vmatprep.subr.bf16.mxu0 %v5182
        %7702 = vmatpush1.bf16.msra.mxu0 %v5181
        %7703 = vmatprep.subr.bf16.mxu0 %v5198
        %7704 = vmatpush1.bf16.msra.mxu0 %v5197
        %7705 = vmatprep.subr.bf16.mxu0 %v5214
        %7706 = vmatpush1.bf16.msra.mxu0 %v5213
        %7707 = vmatprep.subr.bf16.mxu0 %v5230
        %7708 = vmatpush1.bf16.msra.mxu0 %v5229
        %7709 = vmatprep.subr.bf16.mxu0 %v5246
        %7710 = vmatpush1.bf16.msra.mxu0 %v5245
        %7711 = vmatprep.subr.bf16.mxu0 %v5262
        %7712 = vmatpush1.bf16.msra.mxu0 %v5261
        %7713 = vmatprep.subr.bf16.mxu0 %v5278
        %7714 = vmatpush1.bf16.msra.mxu0 %v5277
        %7715 = vmatprep.subr.bf16.mxu0 %v5294
        %7716 = vmatpush1.bf16.msra.mxu0 %v5293
        %7717 = vmatprep.subr.bf16.mxu0 %v5310
        %7718 = vmatpush1.bf16.msra.mxu0 %v5309
        %7719 = vmatprep.subr.bf16.mxu0 %v5326
        %7720 = vmatpush1.bf16.msra.mxu0 %v5325
        %7721 = vmatprep.subr.bf16.mxu0 %v5342
        %7722 = vmatpush1.bf16.msra.mxu0 %v5341
        %7723 = vmatprep.mubr.bf16.mxu0 %v1494
        %7724 = vmatmul.mubr.bf16.gmra.mrb[0].mxu0 %v1493
        %v7725 = vpop.f32.mrb[0].mxu0
        %v7726 = vadd.f32 %v7685, %v7725
        %v7727 = vpop.f32.mrb[0].mxu0
        %v7728 = vadd.f32 %v7687, %v7727
        %v7729 = vpop.f32.mrb[0].mxu0
        %v7730 = vpop.f32.mrb[0].mxu0
        %7731 = vdwg.mxu0
        %7732 = vmatprep.subr.bf16.mxu0 %v5358
        %7733 = vmatpush1.bf16.msra.mxu0 %v5357
        %7734 = vmatprep.subr.bf16.mxu0 %v5374
        %7735 = vmatpush1.bf16.msra.mxu0 %v5373
        %7736 = vmatprep.subr.bf16.mxu0 %v5390
        %7737 = vmatpush1.bf16.msra.mxu0 %v5389
        %7738 = vmatprep.subr.bf16.mxu0 %v5406
        %7739 = vmatpush1.bf16.msra.mxu0 %v5405
        %7740 = vmatprep.subr.bf16.mxu0 %v5422
        %7741 = vmatpush1.bf16.msra.mxu0 %v5421
        %7742 = vmatprep.subr.bf16.mxu0 %v5438
        %7743 = vmatpush1.bf16.msra.mxu0 %v5437
        %7744 = vmatprep.subr.bf16.mxu0 %v5454
        %7745 = vmatpush1.bf16.msra.mxu0 %v5453
        %7746 = vmatprep.subr.bf16.mxu0 %v5470
        %7747 = vmatpush1.bf16.msra.mxu0 %v5469
        %7748 = vmatprep.subr.bf16.mxu0 %v5486
        %7749 = vmatpush1.bf16.msra.mxu0 %v5485
        %7750 = vmatprep.subr.bf16.mxu0 %v5502
        %7751 = vmatpush1.bf16.msra.mxu0 %v5501
        %7752 = vmatprep.subr.bf16.mxu0 %v5518
        %7753 = vmatpush1.bf16.msra.mxu0 %v5517
        %7754 = vmatprep.subr.bf16.mxu0 %v5534
        %7755 = vmatpush1.bf16.msra.mxu0 %v5533
        %7756 = vmatprep.subr.bf16.mxu0 %v5550
        %7757 = vmatpush1.bf16.msra.mxu0 %v5549
        %7758 = vmatprep.subr.bf16.mxu0 %v5566
        %7759 = vmatpush1.bf16.msra.mxu0 %v5565
        %7760 = vmatprep.subr.bf16.mxu0 %v5582
        %7761 = vmatpush1.bf16.msra.mxu0 %v5581
        %7762 = vmatprep.subr.bf16.mxu0 %v5598
        %7763 = vmatpush1.bf16.msra.mxu0 %v5597
        %7764 = vmatprep.mubr.bf16.mxu0 %v1496
        %7765 = vmatmul.mubr.bf16.gmra.mrb[0].mxu0 %v1495
        %v7766 = vpop.f32.mrb[0].mxu0
        %v7767 = vadd.f32 %v7726, %v7766
        %v7768 = vpop.f32.mrb[0].mxu0
        %v7769 = vadd.f32 %v7728, %v7768
        %v7770 = vpop.f32.mrb[0].mxu0
        %v7771 = vpop.f32.mrb[0].mxu0
        %7772 = vdwg.mxu0
        %7773 = vmatprep.subr.bf16.mxu0 %v4592
        %7774 = vmatpush1.bf16.msra.mxu0 %v4591
        %7775 = vmatprep.subr.bf16.mxu0 %v4608
        %7776 = vmatpush1.bf16.msra.mxu0 %v4607
        %7777 = vmatprep.subr.bf16.mxu0 %v4624
        %7778 = vmatpush1.bf16.msra.mxu0 %v4623
        %7779 = vmatprep.subr.bf16.mxu0 %v4640
        %7780 = vmatpush1.bf16.msra.mxu0 %v4639
        %7781 = vmatprep.subr.bf16.mxu0 %v4656
        %7782 = vmatpush1.bf16.msra.mxu0 %v4655
        %7783 = vmatprep.subr.bf16.mxu0 %v4672
        %7784 = vmatpush1.bf16.msra.mxu0 %v4671
        %7785 = vmatprep.subr.bf16.mxu0 %v4688
        %7786 = vmatpush1.bf16.msra.mxu0 %v4687
        %7787 = vmatprep.subr.bf16.mxu0 %v4704
        %7788 = vmatpush1.bf16.msra.mxu0 %v4703
        %7789 = vmatprep.subr.bf16.mxu0 %v4720
        %7790 = vmatpush1.bf16.msra.mxu0 %v4719
        %7791 = vmatprep.subr.bf16.mxu0 %v4736
        %7792 = vmatpush1.bf16.msra.mxu0 %v4735
        %7793 = vmatprep.subr.bf16.mxu0 %v4752
        %7794 = vmatpush1.bf16.msra.mxu0 %v4751
        %7795 = vmatprep.subr.bf16.mxu0 %v4768
        %7796 = vmatpush1.bf16.msra.mxu0 %v4767
        %7797 = vmatprep.subr.bf16.mxu0 %v4784
        %7798 = vmatpush1.bf16.msra.mxu0 %v4783
        %7799 = vmatprep.subr.bf16.mxu0 %v4800
        %7800 = vmatpush1.bf16.msra.mxu0 %v4799
        %7801 = vmatprep.subr.bf16.mxu0 %v4816
        %7802 = vmatpush1.bf16.msra.mxu0 %v4815
        %7803 = vmatprep.subr.bf16.mxu0 %v4832
        %7804 = vmatpush1.bf16.msra.mxu0 %v4831
        %7805 = vmatprep.mubr.bf16.mxu0 %v1490
        %7806 = vmatmul.mubr.bf16.gmra.mrb[0].mxu0 %v1489
        %v7807 = vpop.f32.mrb[0].mxu0
        %v7808 = vadd.f32 0.0, %v7807
        %v7809 = vpop.f32.mrb[0].mxu0
        %v7810 = vadd.f32 0.0, %v7809
        %v7811 = vpop.f32.mrb[0].mxu0
        %v7812 = vpop.f32.mrb[0].mxu0
        %7813 = vdwg.mxu0
        %7814 = vmatprep.subr.bf16.mxu0 %v4848
        %7815 = vmatpush1.bf16.msra.mxu0 %v4847
        %7816 = vmatprep.subr.bf16.mxu0 %v4864
        %7817 = vmatpush1.bf16.msra.mxu0 %v4863
        %7818 = vmatprep.subr.bf16.mxu0 %v4880
        %7819 = vmatpush1.bf16.msra.mxu0 %v4879
        %7820 = vmatprep.subr.bf16.mxu0 %v4896
        %7821 = vmatpush1.bf16.msra.mxu0 %v4895
        %7822 = vmatprep.subr.bf16.mxu0 %v4912
        %7823 = vmatpush1.bf16.msra.mxu0 %v4911
        %7824 = vmatprep.subr.bf16.mxu0 %v4928
        %7825 = vmatpush1.bf16.msra.mxu0 %v4927
        %7826 = vmatprep.subr.bf16.mxu0 %v4944
        %7827 = vmatpush1.bf16.msra.mxu0 %v4943
        %7828 = vmatprep.subr.bf16.mxu0 %v4960
        %7829 = vmatpush1.bf16.msra.mxu0 %v4959
        %7830 = vmatprep.subr.bf16.mxu0 %v4976
        %7831 = vmatpush1.bf16.msra.mxu0 %v4975
        %7832 = vmatprep.subr.bf16.mxu0 %v4992
        %7833 = vmatpush1.bf16.msra.mxu0 %v4991
        %7834 = vmatprep.subr.bf16.mxu0 %v5008
        %7835 = vmatpush1.bf16.msra.mxu0 %v5007
        %7836 = vmatprep.subr.bf16.mxu0 %v5024
        %7837 = vmatpush1.bf16.msra.mxu0 %v5023
        %7838 = vmatprep.subr.bf16.mxu0 %v5040
        %7839 = vmatpush1.bf16.msra.mxu0 %v5039
        %7840 = vmatprep.subr.bf16.mxu0 %v5056
        %7841 = vmatpush1.bf16.msra.mxu0 %v5055
        %7842 = vmatprep.subr.bf16.mxu0 %v5072
        %7843 = vmatpush1.bf16.msra.mxu0 %v5071
        %7844 = vmatprep.subr.bf16.mxu0 %v5088
        %7845 = vmatpush1.bf16.msra.mxu0 %v5087
        %7846 = vmatprep.mubr.bf16.mxu0 %v1492
        %7847 = vmatmul.mubr.bf16.gmra.mrb[0].mxu0 %v1491
        %v7848 = vpop.f32.mrb[0].mxu0
        %v7849 = vadd.f32 %v7808, %v7848
        %v7850 = vpop.f32.mrb[0].mxu0
        %v7851 = vadd.f32 %v7810, %v7850
        %v7852 = vpop.f32.mrb[0].mxu0
        %v7853 = vpop.f32.mrb[0].mxu0
        %7854 = vdwg.mxu0
        %7855 = vmatprep.subr.bf16.mxu0 %v5104
        %7856 = vmatpush1.bf16.msra.mxu0 %v5103
        %7857 = vmatprep.subr.bf16.mxu0 %v5120
        %7858 = vmatpush1.bf16.msra.mxu0 %v5119
        %7859 = vmatprep.subr.bf16.mxu0 %v5136
        %7860 = vmatpush1.bf16.msra.mxu0 %v5135
        %7861 = vmatprep.subr.bf16.mxu0 %v5152
        %7862 = vmatpush1.bf16.msra.mxu0 %v5151
        %7863 = vmatprep.subr.bf16.mxu0 %v5168
        %7864 = vmatpush1.bf16.msra.mxu0 %v5167
        %7865 = vmatprep.subr.bf16.mxu0 %v5184
        %7866 = vmatpush1.bf16.msra.mxu0 %v5183
        %7867 = vmatprep.subr.bf16.mxu0 %v5200
        %7868 = vmatpush1.bf16.msra.mxu0 %v5199
        %7869 = vmatprep.subr.bf16.mxu0 %v5216
        %7870 = vmatpush1.bf16.msra.mxu0 %v5215
        %7871 = vmatprep.subr.bf16.mxu0 %v5232
        %7872 = vmatpush1.bf16.msra.mxu0 %v5231
        %7873 = vmatprep.subr.bf16.mxu0 %v5248
        %7874 = vmatpush1.bf16.msra.mxu0 %v5247
        %7875 = vmatprep.subr.bf16.mxu0 %v5264
        %7876 = vmatpush1.bf16.msra.mxu0 %v5263
        %7877 = vmatprep.subr.bf16.mxu0 %v5280
        %7878 = vmatpush1.bf16.msra.mxu0 %v5279
        %7879 = vmatprep.subr.bf16.mxu0 %v5296
        %7880 = vmatpush1.bf16.msra.mxu0 %v5295
        %7881 = vmatprep.subr.bf16.mxu0 %v5312
        %7882 = vmatpush1.bf16.msra.mxu0 %v5311
        %7883 = vmatprep.subr.bf16.mxu0 %v5328
        %7884 = vmatpush1.bf16.msra.mxu0 %v5327
        %7885 = vmatprep.subr.bf16.mxu0 %v5344
        %7886 = vmatpush1.bf16.msra.mxu0 %v5343
        %7887 = vmatprep.mubr.bf16.mxu0 %v1494
        %7888 = vmatmul.mubr.bf16.gmra.mrb[0].mxu0 %v1493
        %v7889 = vpop.f32.mrb[0].mxu0
        %v7890 = vadd.f32 %v7849, %v7889
        %v7891 = vpop.f32.mrb[0].mxu0
        %v7892 = vadd.f32 %v7851, %v7891
        %v7893 = vpop.f32.mrb[0].mxu0
        %v7894 = vpop.f32.mrb[0].mxu0
        %7895 = vdwg.mxu0
        %7896 = vmatprep.subr.bf16.mxu0 %v5360
        %7897 = vmatpush1.bf16.msra.mxu0 %v5359
        %7898 = vmatprep.subr.bf16.mxu0 %v5376
        %7899 = vmatpush1.bf16.msra.mxu0 %v5375
        %7900 = vmatprep.subr.bf16.mxu0 %v5392
        %7901 = vmatpush1.bf16.msra.mxu0 %v5391
        %7902 = vmatprep.subr.bf16.mxu0 %v5408
        %7903 = vmatpush1.bf16.msra.mxu0 %v5407
        %7904 = vmatprep.subr.bf16.mxu0 %v5424
        %7905 = vmatpush1.bf16.msra.mxu0 %v5423
        %7906 = vmatprep.subr.bf16.mxu0 %v5440
        %7907 = vmatpush1.bf16.msra.mxu0 %v5439
        %7908 = vmatprep.subr.bf16.mxu0 %v5456
        %7909 = vmatpush1.bf16.msra.mxu0 %v5455
        %7910 = vmatprep.subr.bf16.mxu0 %v5472
        %7911 = vmatpush1.bf16.msra.mxu0 %v5471
        %7912 = vmatprep.subr.bf16.mxu0 %v5488
        %7913 = vmatpush1.bf16.msra.mxu0 %v5487
        %7914 = vmatprep.subr.bf16.mxu0 %v5504
        %7915 = vmatpush1.bf16.msra.mxu0 %v5503
        %7916 = vmatprep.subr.bf16.mxu0 %v5520
        %7917 = vmatpush1.bf16.msra.mxu0 %v5519
        %7918 = vmatprep.subr.bf16.mxu0 %v5536
        %7919 = vmatpush1.bf16.msra.mxu0 %v5535
        %7920 = vmatprep.subr.bf16.mxu0 %v5552
        %7921 = vmatpush1.bf16.msra.mxu0 %v5551
        %7922 = vmatprep.subr.bf16.mxu0 %v5568
        %7923 = vmatpush1.bf16.msra.mxu0 %v5567
        %7924 = vmatprep.subr.bf16.mxu0 %v5584
        %7925 = vmatpush1.bf16.msra.mxu0 %v5583
        %7926 = vmatprep.subr.bf16.mxu0 %v5600
        %7927 = vmatpush1.bf16.msra.mxu0 %v5599
        %7928 = vmatprep.mubr.bf16.mxu0 %v1496
        %7929 = vmatmul.mubr.bf16.gmra.mrb[0].mxu0 %v1495
        %v7930 = vpop.f32.mrb[0].mxu0
        %v7931 = vadd.f32 %v7890, %v7930
        %v7932 = vpop.f32.mrb[0].mxu0
        %v7933 = vadd.f32 %v7892, %v7932
        %v7934 = vpop.f32.mrb[0].mxu0
        %v7935 = vpop.f32.mrb[0].mxu0
        %7936 = vdwg.mxu0
        %v7937 = vadd.f32 %v433, %v6783
        %v7938 = vadd.f32 %v434, %v6785
        %v7939 = vadd.f32 %v435, %v6947
        %v7940 = vadd.f32 %v436, %v6949
        %v7941 = vadd.f32 %v437, %v7111
        %v7942 = vadd.f32 %v438, %v7113
        %v7943 = vadd.f32 %v439, %v7275
        %v7944 = vadd.f32 %v440, %v7277
        %v7945 = vadd.f32 %v441, %v7439
        %v7946 = vadd.f32 %v442, %v7441
        %v7947 = vadd.f32 %v443, %v7603
        %v7948 = vadd.f32 %v444, %v7605
        %v7949 = vadd.f32 %v445, %v7767
        %v7950 = vadd.f32 %v446, %v7769
        %v7951 = vadd.f32 %v447, %v7931
        %v7952 = vadd.f32 %v448, %v7933
        %7953 = vst [vmem:[#allocation2] sm:$0xff] %v7937
        %7954 = vst [vmem:[#allocation2 + $0x8] sm:$0xff] %v7938
        %7955 = vst [vmem:[#allocation2 + $0x10] sm:$0xff] %v7939
        %7956 = vst [vmem:[#allocation2 + $0x18] sm:$0xff] %v7940
        %7957 = vst [vmem:[#allocation2 + $0x20] sm:$0xff] %v7941
        %7958 = vst [vmem:[#allocation2 + $0x28] sm:$0xff] %v7942
        %7959 = vst [vmem:[#allocation2 + $0x30] sm:$0xff] %v7943
        %7960 = vst [vmem:[#allocation2 + $0x38] sm:$0xff] %v7944
        %7961 = vst [vmem:[#allocation2 + $0x40] sm:$0xff] %v7945
        %7962 = vst [vmem:[#allocation2 + $0x48] sm:$0xff] %v7946
        %7963 = vst [vmem:[#allocation2 + $0x50] sm:$0xff] %v7947
        %7964 = vst [vmem:[#allocation2 + $0x58] sm:$0xff] %v7948
        %7965 = vst [vmem:[#allocation2 + $0x60] sm:$0xff] %v7949
        %7966 = vst [vmem:[#allocation2 + $0x68] sm:$0xff] %v7950
        %7967 = vst [vmem:[#allocation2 + $0x70] sm:$0xff] %v7951
        %7968 = vst [vmem:[#allocation2 + $0x78] sm:$0xff] %v7952
        %p7969 = scmp.eq.s32.totalorder %s26, 2
        // Predicated region
        $region85: #{hybrid_vit_forward.1} parent=51 // pred_check
          %p7970 = pneg %p7969
        $region86: #{hybrid_vit_forward.1} parent=51 // pred_check_branch
          %7972 = sbr.rel (%p7970) target = $region88
        $region87: #{hybrid_vit_forward.1} parent=51 // pred_region
          %v7973 = vld [vmem:[#allocation2] sm:$0xff]
          %v7974 = vld [vmem:[#allocation2 + $0x8] sm:$0xff]
          %v7975 = vld [vmem:[#allocation2 + $0x10] sm:$0xff]
          %v7976 = vld [vmem:[#allocation2 + $0x18] sm:$0xff]
          %v7977 = vld [vmem:[#allocation2 + $0x20] sm:$0xff]
          %v7978 = vld [vmem:[#allocation2 + $0x28] sm:$0xff]
          %v7979 = vld [vmem:[#allocation2 + $0x30] sm:$0xff]
          %v7980 = vld [vmem:[#allocation2 + $0x38] sm:$0xff]
          %v7981 = vld [vmem:[#allocation2 + $0x40] sm:$0xff]
          %v7982 = vld [vmem:[#allocation2 + $0x48] sm:$0xff]
          %v7983 = vld [vmem:[#allocation2 + $0x50] sm:$0xff]
          %v7984 = vld [vmem:[#allocation2 + $0x58] sm:$0xff]
          %v7985 = vld [vmem:[#allocation2 + $0x60] sm:$0xff]
          %v7986 = vld [vmem:[#allocation2 + $0x68] sm:$0xff]
          %v7987 = vld [vmem:[#allocation2 + $0x70] sm:$0xff]
          %v7988 = vld [vmem:[#allocation2 + $0x78] sm:$0xff]
          %v7989 = vld [vmem:[#allocation6] sm:$0xff]
          %v7990 = vld [vmem:[#allocation6 + $0x8] sm:$0xff]
          %v7993 = vlaneseq
          %v7994 = vshrl.u32 %v7993, 7
          %v7995 = vsub.s32 0, %v7994
          %v7996 = vrot.slane %v7989, %v7995
          %v7997 = vlaneseq
          %v7998 = vshrl.u32 %v7997, 7
          %v7999 = vsub.s32 1, %v7998
          %v8000 = vrot.slane %v7989, %v7999
          %v8001 = vlaneseq
          %v8002 = vshrl.u32 %v8001, 7
          %v8003 = vsub.s32 2, %v8002
          %v8004 = vrot.slane %v7989, %v8003
          %v8005 = vlaneseq
          %v8006 = vshrl.u32 %v8005, 7
          %v8007 = vsub.s32 3, %v8006
          %v8008 = vrot.slane %v7989, %v8007
          %v8009 = vlaneseq
          %v8010 = vshrl.u32 %v8009, 7
          %v8011 = vsub.s32 4, %v8010
          %v8012 = vrot.slane %v7989, %v8011
          %v8013 = vlaneseq
          %v8014 = vshrl.u32 %v8013, 7
          %v8015 = vsub.s32 5, %v8014
          %v8016 = vrot.slane %v7989, %v8015
          %v8017 = vlaneseq
          %v8018 = vshrl.u32 %v8017, 7
          %v8019 = vsub.s32 6, %v8018
          %v8020 = vrot.slane %v7989, %v8019
          %v8021 = vlaneseq
          %v8022 = vshrl.u32 %v8021, 7
          %v8023 = vsub.s32 7, %v8022
          %v8024 = vrot.slane %v7989, %v8023
          %v8025 = vlaneseq
          %v8026 = vshrl.u32 %v8025, 7
          %v8027 = vsub.s32 0, %v8026
          %v8028 = vrot.slane %v7990, %v8027
          %v8029 = vlaneseq
          %v8030 = vshrl.u32 %v8029, 7
          %v8031 = vsub.s32 1, %v8030
          %v8032 = vrot.slane %v7990, %v8031
          %v8033 = vlaneseq
          %v8034 = vshrl.u32 %v8033, 7
          %v8035 = vsub.s32 2, %v8034
          %v8036 = vrot.slane %v7990, %v8035
          %v8037 = vlaneseq
          %v8038 = vshrl.u32 %v8037, 7
          %v8039 = vsub.s32 3, %v8038
          %v8040 = vrot.slane %v7990, %v8039
          %v8041 = vlaneseq
          %v8042 = vshrl.u32 %v8041, 7
          %v8043 = vsub.s32 4, %v8042
          %v8044 = vrot.slane %v7990, %v8043
          %v8045 = vlaneseq
          %v8046 = vshrl.u32 %v8045, 7
          %v8047 = vsub.s32 5, %v8046
          %v8048 = vrot.slane %v7990, %v8047
          %v8049 = vlaneseq
          %v8050 = vshrl.u32 %v8049, 7
          %v8051 = vsub.s32 6, %v8050
          %v8052 = vrot.slane %v7990, %v8051
          %v8053 = vlaneseq
          %v8054 = vshrl.u32 %v8053, 7
          %v8055 = vsub.s32 7, %v8054
          %v8056 = vrot.slane %v7990, %v8055
          %v8073 = vadd.f32 %v7973, %v7996
          %v8074 = vadd.f32 %v7974, %v8000
          %v8075 = vadd.f32 %v7975, %v8004
          %v8076 = vadd.f32 %v7976, %v8008
          %v8077 = vadd.f32 %v7977, %v8012
          %v8078 = vadd.f32 %v7978, %v8016
          %v8079 = vadd.f32 %v7979, %v8020
          %v8080 = vadd.f32 %v7980, %v8024
          %v8081 = vadd.f32 %v7981, %v8028
          %v8082 = vadd.f32 %v7982, %v8032
          %v8083 = vadd.f32 %v7983, %v8036
          %v8084 = vadd.f32 %v7984, %v8040
          %v8085 = vadd.f32 %v7985, %v8044
          %v8086 = vadd.f32 %v7986, %v8048
          %v8087 = vadd.f32 %v7987, %v8052
          %v8088 = vadd.f32 %v7988, %v8056
          %v8089 = vmax.f32 %v8073, 0.0
          %v8090 = vmax.f32 %v8074, 0.0
          %v8091 = vmax.f32 %v8075, 0.0
          %v8092 = vmax.f32 %v8076, 0.0
          %v8093 = vmax.f32 %v8077, 0.0
          %v8094 = vmax.f32 %v8078, 0.0
          %v8095 = vmax.f32 %v8079, 0.0
          %v8096 = vmax.f32 %v8080, 0.0
          %v8097 = vmax.f32 %v8081, 0.0
          %v8098 = vmax.f32 %v8082, 0.0
          %v8099 = vmax.f32 %v8083, 0.0
          %v8100 = vmax.f32 %v8084, 0.0
          %v8101 = vmax.f32 %v8085, 0.0
          %v8102 = vmax.f32 %v8086, 0.0
          %v8103 = vmax.f32 %v8087, 0.0
          %v8104 = vmax.f32 %v8088, 0.0
          %v8105 = vadd.f32 %v8089, %v8090
          %v8106 = vadd.f32 %v8105, %v8091
          %v8107 = vadd.f32 %v8106, %v8092
          %v8108 = vadd.f32 %v8107, %v8093
          %v8109 = vadd.f32 %v8108, %v8094
          %v8110 = vadd.f32 %v8109, %v8095
          %v8111 = vadd.f32 %v8110, %v8096
          %v8112 = vadd.f32 %v8111, %v8097
          %v8113 = vadd.f32 %v8112, %v8098
          %v8114 = vadd.f32 %v8113, %v8099
          %v8115 = vadd.f32 %v8114, %v8100
          %v8116 = vadd.f32 %v8115, %v8101
          %v8117 = vadd.f32 %v8116, %v8102
          %v8118 = vadd.f32 %v8117, %v8103
          %v8119 = vadd.f32 %v8118, %v8104
          %8120 = vadd.xlane.f32.xlu0 %v8119
          %v8121 = vpop.xlane.xlu0 %8120
          %v8122 = vrcp.pop 2048.0
          %v8123 = vmul.f32 %v8121, %v8122
          %v8124 = vmax.f32 %v8089, %v8093
          %v8125 = vmax.f32 %v8090, %v8094
          %v8126 = vmax.f32 %v8091, %v8095
          %v8127 = vmax.f32 %v8092, %v8096
          %v8128 = vmax.f32 %v8124, %v8097
          %v8129 = vmax.f32 %v8125, %v8098
          %v8130 = vmax.f32 %v8126, %v8099
          %v8131 = vmax.f32 %v8127, %v8100
          %v8132 = vmax.f32 %v8128, %v8101
          %v8133 = vmax.f32 %v8129, %v8102
          %v8134 = vmax.f32 %v8130, %v8103
          %v8135 = vmax.f32 %v8131, %v8104
          %v8136 = vmax.f32 %v8132, %v8133
          %v8137 = vmax.f32 %v8134, %v8135
          %v8138 = vmax.f32 %v8136, %v8137
          %8139 = vmax.xlane.f32.xlu0 %v8138
          %v8140 = vpop.xlane.xlu0 %8139
          %v8141 = vld [vmem:[#allocation8] sm:$0xff]
          %v8142 = vmul.f32 %v8141, %v8123
          %v8143 = vld [vmem:[#allocation9] sm:$0xff]
          %v8144 = vmul.f32 %v8143, %v8140
          %v8145 = vadd.f32 %v8142, %v8144
          %vm8146 = vcmask 64512
          %v8147 = vsel %vm8146, %v8145, 0.0
          %v8148 = vrot.slane %v8147, 4
          %v8149 = vadd.f32 %v8147, %v8148
          %v8150 = vrot.slane %v8149, 2
          %v8151 = vadd.f32 %v8149, %v8150
          %v8152 = vrot.slane %v8151, 1
          %v8153 = vadd.f32 %v8151, %v8152
          %v8154 = vsub.f32 0.0, %v8153
          %v8155 = vmul.f32 %v8154, 1.442695
          %v8156 = vpow.pop %v8155
          %v8157 = vadd.f32 %v8156, 1.0
          %v8158 = vrcp.pop %v8157
          %v8159 = vld [vmem:[#allocation11] sm:$0x3]
          %v8160 = vmul.f32 %v8159, %v8158
          %v8162 = vsel %vm8146, %v8160, 0
          %8164 = vmatprep.subr.mxu0 %v8090
          %8165 = vmatpush1.msra.mxu0 %v8089
          %8166 = vmatprep.subr.mxu0 0.0
          %8167 = vmatpush1.msra.mxu0 0.0
          %8168 = vmatprep.subr.mxu0 0.0
          %8169 = vmatpush1.msra.mxu0 0.0
          %8170 = vmatprep.subr.mxu0 0.0
          %8171 = vmatpush1.msra.mxu0 0.0
          %8172 = vmatprep.subr.mxu0 0.0
          %8173 = vmatpush1.msra.mxu0 0.0
          %8174 = vmatprep.subr.mxu0 0.0
          %8175 = vmatpush1.msra.mxu0 0.0
          %8176 = vmatprep.subr.mxu0 0.0
          %8177 = vmatpush1.msra.mxu0 0.0
          %8178 = vmatprep.subr.mxu0 0.0
          %8179 = vmatpush1.msra.mxu0 0.0
          %8180 = vmatprep.subr.mxu0 0.0
          %8181 = vmatpush1.msra.mxu0 0.0
          %8182 = vmatprep.subr.mxu0 0.0
          %8183 = vmatpush1.msra.mxu0 0.0
          %8184 = vmatprep.subr.mxu0 0.0
          %8185 = vmatpush1.msra.mxu0 0.0
          %8186 = vmatprep.subr.mxu0 0.0
          %8187 = vmatpush1.msra.mxu0 0.0
          %8188 = vmatprep.subr.mxu0 0.0
          %8189 = vmatpush1.msra.mxu0 0.0
          %8190 = vmatprep.subr.mxu0 0.0
          %8191 = vmatpush1.msra.mxu0 0.0
          %8192 = vmatprep.subr.mxu0 0.0
          %8193 = vmatpush1.msra.mxu0 0.0
          %8194 = vmatprep.subr.mxu0 0.0
          %8195 = vmatpush1.msra.mxu0 0.0
          %8196 = vmatprep.subr.mxu0 0.0
          %8197 = vmatpush1.msra.mxu0 0.0
          %8198 = vmatprep.subr.mxu0 0.0
          %8199 = vmatpush1.msra.mxu0 0.0
          %8200 = vmatprep.subr.mxu0 0.0
          %8201 = vmatpush1.msra.mxu0 0.0
          %8202 = vmatprep.subr.mxu0 0.0
          %8203 = vmatpush1.msra.mxu0 0.0
          %8204 = vmatprep.subr.mxu0 0.0
          %8205 = vmatpush1.msra.mxu0 0.0
          %8206 = vmatprep.subr.mxu0 0.0
          %8207 = vmatpush1.msra.mxu0 0.0
          %8208 = vmatprep.subr.mxu0 0.0
          %8209 = vmatpush1.msra.mxu0 0.0
          %8210 = vmatprep.subr.mxu0 0.0
          %8211 = vmatpush1.msra.mxu0 0.0
          %8212 = vmatprep.subr.mxu0 0.0
          %8213 = vmatpush1.msra.mxu0 0.0
          %8214 = vmatprep.subr.mxu0 0.0
          %8215 = vmatpush1.msra.mxu0 0.0
          %8216 = vmatprep.subr.mxu0 0.0
          %8217 = vmatpush1.msra.mxu0 0.0
          %8218 = vmatprep.subr.mxu0 0.0
          %8219 = vmatpush1.msra.mxu0 0.0
          %8220 = vmatprep.subr.mxu0 0.0
          %8221 = vmatpush1.msra.mxu0 0.0
          %8222 = vmatprep.subr.mxu0 0.0
          %8223 = vmatpush1.msra.mxu0 0.0
          %8224 = vmatprep.subr.mxu0 0.0
          %8225 = vmatpush1.msra.mxu0 0.0
          %8226 = vmatprep.subr.mxu0 0.0
          %8227 = vmatpush1.msra.mxu0 0.0
          %8228 = vmatprep.mubr.f32.mxu0 0.0
          %8229 = vmatmul.mubr.f32.gmra.mrb[0].mxu0 %v8162
          %v8230 = vpop.f32.mrb[0].mxu0
          %v8231 = vadd.f32 0.0, %v8230
          %v8232 = vpop.f32.mrb[0].mxu0
          %v8233 = vadd.f32 0.0, %v8232
          %8234 = vdwg.mxu0
          %8235 = vmatprep.subr.mxu0 %v8092
          %8236 = vmatpush1.msra.mxu0 %v8091
          %8237 = vmatprep.subr.mxu0 0.0
          %8238 = vmatpush1.msra.mxu0 0.0
          %8239 = vmatprep.subr.mxu0 0.0
          %8240 = vmatpush1.msra.mxu0 0.0
          %8241 = vmatprep.subr.mxu0 0.0
          %8242 = vmatpush1.msra.mxu0 0.0
          %8243 = vmatprep.subr.mxu0 0.0
          %8244 = vmatpush1.msra.mxu0 0.0
          %8245 = vmatprep.subr.mxu0 0.0
          %8246 = vmatpush1.msra.mxu0 0.0
          %8247 = vmatprep.subr.mxu0 0.0
          %8248 = vmatpush1.msra.mxu0 0.0
          %8249 = vmatprep.subr.mxu0 0.0
          %8250 = vmatpush1.msra.mxu0 0.0
          %8251 = vmatprep.subr.mxu0 0.0
          %8252 = vmatpush1.msra.mxu0 0.0
          %8253 = vmatprep.subr.mxu0 0.0
          %8254 = vmatpush1.msra.mxu0 0.0
          %8255 = vmatprep.subr.mxu0 0.0
          %8256 = vmatpush1.msra.mxu0 0.0
          %8257 = vmatprep.subr.mxu0 0.0
          %8258 = vmatpush1.msra.mxu0 0.0
          %8259 = vmatprep.subr.mxu0 0.0
          %8260 = vmatpush1.msra.mxu0 0.0
          %8261 = vmatprep.subr.mxu0 0.0
          %8262 = vmatpush1.msra.mxu0 0.0
          %8263 = vmatprep.subr.mxu0 0.0
          %8264 = vmatpush1.msra.mxu0 0.0
          %8265 = vmatprep.subr.mxu0 0.0
          %8266 = vmatpush1.msra.mxu0 0.0
          %8267 = vmatprep.subr.mxu0 0.0
          %8268 = vmatpush1.msra.mxu0 0.0
          %8269 = vmatprep.subr.mxu0 0.0
          %8270 = vmatpush1.msra.mxu0 0.0
          %8271 = vmatprep.subr.mxu0 0.0
          %8272 = vmatpush1.msra.mxu0 0.0
          %8273 = vmatprep.subr.mxu0 0.0
          %8274 = vmatpush1.msra.mxu0 0.0
          %8275 = vmatprep.subr.mxu0 0.0
          %8276 = vmatpush1.msra.mxu0 0.0
          %8277 = vmatprep.subr.mxu0 0.0
          %8278 = vmatpush1.msra.mxu0 0.0
          %8279 = vmatprep.subr.mxu0 0.0
          %8280 = vmatpush1.msra.mxu0 0.0
          %8281 = vmatprep.subr.mxu0 0.0
          %8282 = vmatpush1.msra.mxu0 0.0
          %8283 = vmatprep.subr.mxu0 0.0
          %8284 = vmatpush1.msra.mxu0 0.0
          %8285 = vmatprep.subr.mxu0 0.0
          %8286 = vmatpush1.msra.mxu0 0.0
          %8287 = vmatprep.subr.mxu0 0.0
          %8288 = vmatpush1.msra.mxu0 0.0
          %8289 = vmatprep.subr.mxu0 0.0
          %8290 = vmatpush1.msra.mxu0 0.0
          %8291 = vmatprep.subr.mxu0 0.0
          %8292 = vmatpush1.msra.mxu0 0.0
          %8293 = vmatprep.subr.mxu0 0.0
          %8294 = vmatpush1.msra.mxu0 0.0
          %8295 = vmatprep.subr.mxu0 0.0
          %8296 = vmatpush1.msra.mxu0 0.0
          %8297 = vmatprep.subr.mxu0 0.0
          %8298 = vmatpush1.msra.mxu0 0.0
          %8299 = vmatprep.mubr.f32.mxu0 0.0
          %8300 = vmatmul.mubr.f32.gmra.mrb[0].mxu0 %v8162
          %v8301 = vpop.f32.mrb[0].mxu0
          %v8302 = vadd.f32 0.0, %v8301
          %v8303 = vpop.f32.mrb[0].mxu0
          %v8304 = vadd.f32 0.0, %v8303
          %8305 = vdwg.mxu0
          %8306 = vmatprep.subr.mxu0 %v8094
          %8307 = vmatpush1.msra.mxu0 %v8093
          %8308 = vmatprep.subr.mxu0 0.0
          %8309 = vmatpush1.msra.mxu0 0.0
          %8310 = vmatprep.subr.mxu0 0.0
          %8311 = vmatpush1.msra.mxu0 0.0
          %8312 = vmatprep.subr.mxu0 0.0
          %8313 = vmatpush1.msra.mxu0 0.0
          %8314 = vmatprep.subr.mxu0 0.0
          %8315 = vmatpush1.msra.mxu0 0.0
          %8316 = vmatprep.subr.mxu0 0.0
          %8317 = vmatpush1.msra.mxu0 0.0
          %8318 = vmatprep.subr.mxu0 0.0
          %8319 = vmatpush1.msra.mxu0 0.0
          %8320 = vmatprep.subr.mxu0 0.0
          %8321 = vmatpush1.msra.mxu0 0.0
          %8322 = vmatprep.subr.mxu0 0.0
          %8323 = vmatpush1.msra.mxu0 0.0
          %8324 = vmatprep.subr.mxu0 0.0
          %8325 = vmatpush1.msra.mxu0 0.0
          %8326 = vmatprep.subr.mxu0 0.0
          %8327 = vmatpush1.msra.mxu0 0.0
          %8328 = vmatprep.subr.mxu0 0.0
          %8329 = vmatpush1.msra.mxu0 0.0
          %8330 = vmatprep.subr.mxu0 0.0
          %8331 = vmatpush1.msra.mxu0 0.0
          %8332 = vmatprep.subr.mxu0 0.0
          %8333 = vmatpush1.msra.mxu0 0.0
          %8334 = vmatprep.subr.mxu0 0.0
          %8335 = vmatpush1.msra.mxu0 0.0
          %8336 = vmatprep.subr.mxu0 0.0
          %8337 = vmatpush1.msra.mxu0 0.0
          %8338 = vmatprep.subr.mxu0 0.0
          %8339 = vmatpush1.msra.mxu0 0.0
          %8340 = vmatprep.subr.mxu0 0.0
          %8341 = vmatpush1.msra.mxu0 0.0
          %8342 = vmatprep.subr.mxu0 0.0
          %8343 = vmatpush1.msra.mxu0 0.0
          %8344 = vmatprep.subr.mxu0 0.0
          %8345 = vmatpush1.msra.mxu0 0.0
          %8346 = vmatprep.subr.mxu0 0.0
          %8347 = vmatpush1.msra.mxu0 0.0
          %8348 = vmatprep.subr.mxu0 0.0
          %8349 = vmatpush1.msra.mxu0 0.0
          %8350 = vmatprep.subr.mxu0 0.0
          %8351 = vmatpush1.msra.mxu0 0.0
          %8352 = vmatprep.subr.mxu0 0.0
          %8353 = vmatpush1.msra.mxu0 0.0
          %8354 = vmatprep.subr.mxu0 0.0
          %8355 = vmatpush1.msra.mxu0 0.0
          %8356 = vmatprep.subr.mxu0 0.0
          %8357 = vmatpush1.msra.mxu0 0.0
          %8358 = vmatprep.subr.mxu0 0.0
          %8359 = vmatpush1.msra.mxu0 0.0
          %8360 = vmatprep.subr.mxu0 0.0
          %8361 = vmatpush1.msra.mxu0 0.0
          %8362 = vmatprep.subr.mxu0 0.0
          %8363 = vmatpush1.msra.mxu0 0.0
          %8364 = vmatprep.subr.mxu0 0.0
          %8365 = vmatpush1.msra.mxu0 0.0
          %8366 = vmatprep.subr.mxu0 0.0
          %8367 = vmatpush1.msra.mxu0 0.0
          %8368 = vmatprep.subr.mxu0 0.0
          %8369 = vmatpush1.msra.mxu0 0.0
          %8370 = vmatprep.mubr.f32.mxu0 0.0
          %8371 = vmatmul.mubr.f32.gmra.mrb[0].mxu0 %v8162
          %v8372 = vpop.f32.mrb[0].mxu0
          %v8373 = vadd.f32 0.0, %v8372
          %v8374 = vpop.f32.mrb[0].mxu0
          %v8375 = vadd.f32 0.0, %v8374
          %8376 = vdwg.mxu0
          %8377 = vmatprep.subr.mxu0 %v8096
          %8378 = vmatpush1.msra.mxu0 %v8095
          %8379 = vmatprep.subr.mxu0 0.0
          %8380 = vmatpush1.msra.mxu0 0.0
          %8381 = vmatprep.subr.mxu0 0.0
          %8382 = vmatpush1.msra.mxu0 0.0
          %8383 = vmatprep.subr.mxu0 0.0
          %8384 = vmatpush1.msra.mxu0 0.0
          %8385 = vmatprep.subr.mxu0 0.0
          %8386 = vmatpush1.msra.mxu0 0.0
          %8387 = vmatprep.subr.mxu0 0.0
          %8388 = vmatpush1.msra.mxu0 0.0
          %8389 = vmatprep.subr.mxu0 0.0
          %8390 = vmatpush1.msra.mxu0 0.0
          %8391 = vmatprep.subr.mxu0 0.0
          %8392 = vmatpush1.msra.mxu0 0.0
          %8393 = vmatprep.subr.mxu0 0.0
          %8394 = vmatpush1.msra.mxu0 0.0
          %8395 = vmatprep.subr.mxu0 0.0
          %8396 = vmatpush1.msra.mxu0 0.0
          %8397 = vmatprep.subr.mxu0 0.0
          %8398 = vmatpush1.msra.mxu0 0.0
          %8399 = vmatprep.subr.mxu0 0.0
          %8400 = vmatpush1.msra.mxu0 0.0
          %8401 = vmatprep.subr.mxu0 0.0
          %8402 = vmatpush1.msra.mxu0 0.0
          %8403 = vmatprep.subr.mxu0 0.0
          %8404 = vmatpush1.msra.mxu0 0.0
          %8405 = vmatprep.subr.mxu0 0.0
          %8406 = vmatpush1.msra.mxu0 0.0
          %8407 = vmatprep.subr.mxu0 0.0
          %8408 = vmatpush1.msra.mxu0 0.0
          %8409 = vmatprep.subr.mxu0 0.0
          %8410 = vmatpush1.msra.mxu0 0.0
          %8411 = vmatprep.subr.mxu0 0.0
          %8412 = vmatpush1.msra.mxu0 0.0
          %8413 = vmatprep.subr.mxu0 0.0
          %8414 = vmatpush1.msra.mxu0 0.0
          %8415 = vmatprep.subr.mxu0 0.0
          %8416 = vmatpush1.msra.mxu0 0.0
          %8417 = vmatprep.subr.mxu0 0.0
          %8418 = vmatpush1.msra.mxu0 0.0
          %8419 = vmatprep.subr.mxu0 0.0
          %8420 = vmatpush1.msra.mxu0 0.0
          %8421 = vmatprep.subr.mxu0 0.0
          %8422 = vmatpush1.msra.mxu0 0.0
          %8423 = vmatprep.subr.mxu0 0.0
          %8424 = vmatpush1.msra.mxu0 0.0
          %8425 = vmatprep.subr.mxu0 0.0
          %8426 = vmatpush1.msra.mxu0 0.0
          %8427 = vmatprep.subr.mxu0 0.0
          %8428 = vmatpush1.msra.mxu0 0.0
          %8429 = vmatprep.subr.mxu0 0.0
          %8430 = vmatpush1.msra.mxu0 0.0
          %8431 = vmatprep.subr.mxu0 0.0
          %8432 = vmatpush1.msra.mxu0 0.0
          %8433 = vmatprep.subr.mxu0 0.0
          %8434 = vmatpush1.msra.mxu0 0.0
          %8435 = vmatprep.subr.mxu0 0.0
          %8436 = vmatpush1.msra.mxu0 0.0
          %8437 = vmatprep.subr.mxu0 0.0
          %8438 = vmatpush1.msra.mxu0 0.0
          %8439 = vmatprep.subr.mxu0 0.0
          %8440 = vmatpush1.msra.mxu0 0.0
          %8441 = vmatprep.mubr.f32.mxu0 0.0
          %8442 = vmatmul.mubr.f32.gmra.mrb[0].mxu0 %v8162
          %v8443 = vpop.f32.mrb[0].mxu0
          %v8444 = vadd.f32 0.0, %v8443
          %v8445 = vpop.f32.mrb[0].mxu0
          %v8446 = vadd.f32 0.0, %v8445
          %8447 = vdwg.mxu0
          %8448 = vmatprep.subr.mxu0 %v8098
          %8449 = vmatpush1.msra.mxu0 %v8097
          %8450 = vmatprep.subr.mxu0 0.0
          %8451 = vmatpush1.msra.mxu0 0.0
          %8452 = vmatprep.subr.mxu0 0.0
          %8453 = vmatpush1.msra.mxu0 0.0
          %8454 = vmatprep.subr.mxu0 0.0
          %8455 = vmatpush1.msra.mxu0 0.0
          %8456 = vmatprep.subr.mxu0 0.0
          %8457 = vmatpush1.msra.mxu0 0.0
          %8458 = vmatprep.subr.mxu0 0.0
          %8459 = vmatpush1.msra.mxu0 0.0
          %8460 = vmatprep.subr.mxu0 0.0
          %8461 = vmatpush1.msra.mxu0 0.0
          %8462 = vmatprep.subr.mxu0 0.0
          %8463 = vmatpush1.msra.mxu0 0.0
          %8464 = vmatprep.subr.mxu0 0.0
          %8465 = vmatpush1.msra.mxu0 0.0
          %8466 = vmatprep.subr.mxu0 0.0
          %8467 = vmatpush1.msra.mxu0 0.0
          %8468 = vmatprep.subr.mxu0 0.0
          %8469 = vmatpush1.msra.mxu0 0.0
          %8470 = vmatprep.subr.mxu0 0.0
          %8471 = vmatpush1.msra.mxu0 0.0
          %8472 = vmatprep.subr.mxu0 0.0
          %8473 = vmatpush1.msra.mxu0 0.0
          %8474 = vmatprep.subr.mxu0 0.0
          %8475 = vmatpush1.msra.mxu0 0.0
          %8476 = vmatprep.subr.mxu0 0.0
          %8477 = vmatpush1.msra.mxu0 0.0
          %8478 = vmatprep.subr.mxu0 0.0
          %8479 = vmatpush1.msra.mxu0 0.0
          %8480 = vmatprep.subr.mxu0 0.0
          %8481 = vmatpush1.msra.mxu0 0.0
          %8482 = vmatprep.subr.mxu0 0.0
          %8483 = vmatpush1.msra.mxu0 0.0
          %8484 = vmatprep.subr.mxu0 0.0
          %8485 = vmatpush1.msra.mxu0 0.0
          %8486 = vmatprep.subr.mxu0 0.0
          %8487 = vmatpush1.msra.mxu0 0.0
          %8488 = vmatprep.subr.mxu0 0.0
          %8489 = vmatpush1.msra.mxu0 0.0
          %8490 = vmatprep.subr.mxu0 0.0
          %8491 = vmatpush1.msra.mxu0 0.0
          %8492 = vmatprep.subr.mxu0 0.0
          %8493 = vmatpush1.msra.mxu0 0.0
          %8494 = vmatprep.subr.mxu0 0.0
          %8495 = vmatpush1.msra.mxu0 0.0
          %8496 = vmatprep.subr.mxu0 0.0
          %8497 = vmatpush1.msra.mxu0 0.0
          %8498 = vmatprep.subr.mxu0 0.0
          %8499 = vmatpush1.msra.mxu0 0.0
          %8500 = vmatprep.subr.mxu0 0.0
          %8501 = vmatpush1.msra.mxu0 0.0
          %8502 = vmatprep.subr.mxu0 0.0
          %8503 = vmatpush1.msra.mxu0 0.0
          %8504 = vmatprep.subr.mxu0 0.0
          %8505 = vmatpush1.msra.mxu0 0.0
          %8506 = vmatprep.subr.mxu0 0.0
          %8507 = vmatpush1.msra.mxu0 0.0
          %8508 = vmatprep.subr.mxu0 0.0
          %8509 = vmatpush1.msra.mxu0 0.0
          %8510 = vmatprep.subr.mxu0 0.0
          %8511 = vmatpush1.msra.mxu0 0.0
          %8512 = vmatprep.mubr.f32.mxu0 0.0
          %8513 = vmatmul.mubr.f32.gmra.mrb[0].mxu0 %v8162
          %v8514 = vpop.f32.mrb[0].mxu0
          %v8515 = vadd.f32 0.0, %v8514
          %v8516 = vpop.f32.mrb[0].mxu0
          %v8517 = vadd.f32 0.0, %v8516
          %8518 = vdwg.mxu0
          %8519 = vmatprep.subr.mxu0 %v8100
          %8520 = vmatpush1.msra.mxu0 %v8099
          %8521 = vmatprep.subr.mxu0 0.0
          %8522 = vmatpush1.msra.mxu0 0.0
          %8523 = vmatprep.subr.mxu0 0.0
          %8524 = vmatpush1.msra.mxu0 0.0
          %8525 = vmatprep.subr.mxu0 0.0
          %8526 = vmatpush1.msra.mxu0 0.0
          %8527 = vmatprep.subr.mxu0 0.0
          %8528 = vmatpush1.msra.mxu0 0.0
          %8529 = vmatprep.subr.mxu0 0.0
          %8530 = vmatpush1.msra.mxu0 0.0
          %8531 = vmatprep.subr.mxu0 0.0
          %8532 = vmatpush1.msra.mxu0 0.0
          %8533 = vmatprep.subr.mxu0 0.0
          %8534 = vmatpush1.msra.mxu0 0.0
          %8535 = vmatprep.subr.mxu0 0.0
          %8536 = vmatpush1.msra.mxu0 0.0
          %8537 = vmatprep.subr.mxu0 0.0
          %8538 = vmatpush1.msra.mxu0 0.0
          %8539 = vmatprep.subr.mxu0 0.0
          %8540 = vmatpush1.msra.mxu0 0.0
          %8541 = vmatprep.subr.mxu0 0.0
          %8542 = vmatpush1.msra.mxu0 0.0
          %8543 = vmatprep.subr.mxu0 0.0
          %8544 = vmatpush1.msra.mxu0 0.0
          %8545 = vmatprep.subr.mxu0 0.0
          %8546 = vmatpush1.msra.mxu0 0.0
          %8547 = vmatprep.subr.mxu0 0.0
          %8548 = vmatpush1.msra.mxu0 0.0
          %8549 = vmatprep.subr.mxu0 0.0
          %8550 = vmatpush1.msra.mxu0 0.0
          %8551 = vmatprep.subr.mxu0 0.0
          %8552 = vmatpush1.msra.mxu0 0.0
          %8553 = vmatprep.subr.mxu0 0.0
          %8554 = vmatpush1.msra.mxu0 0.0
          %8555 = vmatprep.subr.mxu0 0.0
          %8556 = vmatpush1.msra.mxu0 0.0
          %8557 = vmatprep.subr.mxu0 0.0
          %8558 = vmatpush1.msra.mxu0 0.0
          %8559 = vmatprep.subr.mxu0 0.0
          %8560 = vmatpush1.msra.mxu0 0.0
          %8561 = vmatprep.subr.mxu0 0.0
          %8562 = vmatpush1.msra.mxu0 0.0
          %8563 = vmatprep.subr.mxu0 0.0
          %8564 = vmatpush1.msra.mxu0 0.0
          %8565 = vmatprep.subr.mxu0 0.0
          %8566 = vmatpush1.msra.mxu0 0.0
          %8567 = vmatprep.subr.mxu0 0.0
          %8568 = vmatpush1.msra.mxu0 0.0
          %8569 = vmatprep.subr.mxu0 0.0
          %8570 = vmatpush1.msra.mxu0 0.0
          %8571 = vmatprep.subr.mxu0 0.0
          %8572 = vmatpush1.msra.mxu0 0.0
          %8573 = vmatprep.subr.mxu0 0.0
          %8574 = vmatpush1.msra.mxu0 0.0
          %8575 = vmatprep.subr.mxu0 0.0
          %8576 = vmatpush1.msra.mxu0 0.0
          %8577 = vmatprep.subr.mxu0 0.0
          %8578 = vmatpush1.msra.mxu0 0.0
          %8579 = vmatprep.subr.mxu0 0.0
          %8580 = vmatpush1.msra.mxu0 0.0
          %8581 = vmatprep.subr.mxu0 0.0
          %8582 = vmatpush1.msra.mxu0 0.0
          %8583 = vmatprep.mubr.f32.mxu0 0.0
          %8584 = vmatmul.mubr.f32.gmra.mrb[0].mxu0 %v8162
          %v8585 = vpop.f32.mrb[0].mxu0
          %v8586 = vadd.f32 0.0, %v8585
          %v8587 = vpop.f32.mrb[0].mxu0
          %v8588 = vadd.f32 0.0, %v8587
          %8589 = vdwg.mxu0
          %8590 = vmatprep.subr.mxu0 %v8102
          %8591 = vmatpush1.msra.mxu0 %v8101
          %8592 = vmatprep.subr.mxu0 0.0
          %8593 = vmatpush1.msra.mxu0 0.0
          %8594 = vmatprep.subr.mxu0 0.0
          %8595 = vmatpush1.msra.mxu0 0.0
          %8596 = vmatprep.subr.mxu0 0.0
          %8597 = vmatpush1.msra.mxu0 0.0
          %8598 = vmatprep.subr.mxu0 0.0
          %8599 = vmatpush1.msra.mxu0 0.0
          %8600 = vmatprep.subr.mxu0 0.0
          %8601 = vmatpush1.msra.mxu0 0.0
          %8602 = vmatprep.subr.mxu0 0.0
          %8603 = vmatpush1.msra.mxu0 0.0
          %8604 = vmatprep.subr.mxu0 0.0
          %8605 = vmatpush1.msra.mxu0 0.0
          %8606 = vmatprep.subr.mxu0 0.0
          %8607 = vmatpush1.msra.mxu0 0.0
          %8608 = vmatprep.subr.mxu0 0.0
          %8609 = vmatpush1.msra.mxu0 0.0
          %8610 = vmatprep.subr.mxu0 0.0
          %8611 = vmatpush1.msra.mxu0 0.0
          %8612 = vmatprep.subr.mxu0 0.0
          %8613 = vmatpush1.msra.mxu0 0.0
          %8614 = vmatprep.subr.mxu0 0.0
          %8615 = vmatpush1.msra.mxu0 0.0
          %8616 = vmatprep.subr.mxu0 0.0
          %8617 = vmatpush1.msra.mxu0 0.0
          %8618 = vmatprep.subr.mxu0 0.0
          %8619 = vmatpush1.msra.mxu0 0.0
          %8620 = vmatprep.subr.mxu0 0.0
          %8621 = vmatpush1.msra.mxu0 0.0
          %8622 = vmatprep.subr.mxu0 0.0
          %8623 = vmatpush1.msra.mxu0 0.0
          %8624 = vmatprep.subr.mxu0 0.0
          %8625 = vmatpush1.msra.mxu0 0.0
          %8626 = vmatprep.subr.mxu0 0.0
          %8627 = vmatpush1.msra.mxu0 0.0
          %8628 = vmatprep.subr.mxu0 0.0
          %8629 = vmatpush1.msra.mxu0 0.0
          %8630 = vmatprep.subr.mxu0 0.0
          %8631 = vmatpush1.msra.mxu0 0.0
          %8632 = vmatprep.subr.mxu0 0.0
          %8633 = vmatpush1.msra.mxu0 0.0
          %8634 = vmatprep.subr.mxu0 0.0
          %8635 = vmatpush1.msra.mxu0 0.0
          %8636 = vmatprep.subr.mxu0 0.0
          %8637 = vmatpush1.msra.mxu0 0.0
          %8638 = vmatprep.subr.mxu0 0.0
          %8639 = vmatpush1.msra.mxu0 0.0
          %8640 = vmatprep.subr.mxu0 0.0
          %8641 = vmatpush1.msra.mxu0 0.0
          %8642 = vmatprep.subr.mxu0 0.0
          %8643 = vmatpush1.msra.mxu0 0.0
          %8644 = vmatprep.subr.mxu0 0.0
          %8645 = vmatpush1.msra.mxu0 0.0
          %8646 = vmatprep.subr.mxu0 0.0
          %8647 = vmatpush1.msra.mxu0 0.0
          %8648 = vmatprep.subr.mxu0 0.0
          %8649 = vmatpush1.msra.mxu0 0.0
          %8650 = vmatprep.subr.mxu0 0.0
          %8651 = vmatpush1.msra.mxu0 0.0
          %8652 = vmatprep.subr.mxu0 0.0
          %8653 = vmatpush1.msra.mxu0 0.0
          %8654 = vmatprep.mubr.f32.mxu0 0.0
          %8655 = vmatmul.mubr.f32.gmra.mrb[0].mxu0 %v8162
          %v8656 = vpop.f32.mrb[0].mxu0
          %v8657 = vadd.f32 0.0, %v8656
          %v8658 = vpop.f32.mrb[0].mxu0
          %v8659 = vadd.f32 0.0, %v8658
          %8660 = vdwg.mxu0
          %8661 = vmatprep.subr.mxu0 %v8104
          %8662 = vmatpush1.msra.mxu0 %v8103
          %8663 = vmatprep.subr.mxu0 0.0
          %8664 = vmatpush1.msra.mxu0 0.0
          %8665 = vmatprep.subr.mxu0 0.0
          %8666 = vmatpush1.msra.mxu0 0.0
          %8667 = vmatprep.subr.mxu0 0.0
          %8668 = vmatpush1.msra.mxu0 0.0
          %8669 = vmatprep.subr.mxu0 0.0
          %8670 = vmatpush1.msra.mxu0 0.0
          %8671 = vmatprep.subr.mxu0 0.0
          %8672 = vmatpush1.msra.mxu0 0.0
          %8673 = vmatprep.subr.mxu0 0.0
          %8674 = vmatpush1.msra.mxu0 0.0
          %8675 = vmatprep.subr.mxu0 0.0
          %8676 = vmatpush1.msra.mxu0 0.0
          %8677 = vmatprep.subr.mxu0 0.0
          %8678 = vmatpush1.msra.mxu0 0.0
          %8679 = vmatprep.subr.mxu0 0.0
          %8680 = vmatpush1.msra.mxu0 0.0
          %8681 = vmatprep.subr.mxu0 0.0
          %8682 = vmatpush1.msra.mxu0 0.0
          %8683 = vmatprep.subr.mxu0 0.0
          %8684 = vmatpush1.msra.mxu0 0.0
          %8685 = vmatprep.subr.mxu0 0.0
          %8686 = vmatpush1.msra.mxu0 0.0
          %8687 = vmatprep.subr.mxu0 0.0
          %8688 = vmatpush1.msra.mxu0 0.0
          %8689 = vmatprep.subr.mxu0 0.0
          %8690 = vmatpush1.msra.mxu0 0.0
          %8691 = vmatprep.subr.mxu0 0.0
          %8692 = vmatpush1.msra.mxu0 0.0
          %8693 = vmatprep.subr.mxu0 0.0
          %8694 = vmatpush1.msra.mxu0 0.0
          %8695 = vmatprep.subr.mxu0 0.0
          %8696 = vmatpush1.msra.mxu0 0.0
          %8697 = vmatprep.subr.mxu0 0.0
          %8698 = vmatpush1.msra.mxu0 0.0
          %8699 = vmatprep.subr.mxu0 0.0
          %8700 = vmatpush1.msra.mxu0 0.0
          %8701 = vmatprep.subr.mxu0 0.0
          %8702 = vmatpush1.msra.mxu0 0.0
          %8703 = vmatprep.subr.mxu0 0.0
          %8704 = vmatpush1.msra.mxu0 0.0
          %8705 = vmatprep.subr.mxu0 0.0
          %8706 = vmatpush1.msra.mxu0 0.0
          %8707 = vmatprep.subr.mxu0 0.0
          %8708 = vmatpush1.msra.mxu0 0.0
          %8709 = vmatprep.subr.mxu0 0.0
          %8710 = vmatpush1.msra.mxu0 0.0
          %8711 = vmatprep.subr.mxu0 0.0
          %8712 = vmatpush1.msra.mxu0 0.0
          %8713 = vmatprep.subr.mxu0 0.0
          %8714 = vmatpush1.msra.mxu0 0.0
          %8715 = vmatprep.subr.mxu0 0.0
          %8716 = vmatpush1.msra.mxu0 0.0
          %8717 = vmatprep.subr.mxu0 0.0
          %8718 = vmatpush1.msra.mxu0 0.0
          %8719 = vmatprep.subr.mxu0 0.0
          %8720 = vmatpush1.msra.mxu0 0.0
          %8721 = vmatprep.subr.mxu0 0.0
          %8722 = vmatpush1.msra.mxu0 0.0
          %8723 = vmatprep.subr.mxu0 0.0
          %8724 = vmatpush1.msra.mxu0 0.0
          %8725 = vmatprep.mubr.f32.mxu0 0.0
          %8726 = vmatmul.mubr.f32.gmra.mrb[0].mxu0 %v8162
          %v8727 = vpop.f32.mrb[0].mxu0
          %v8728 = vadd.f32 0.0, %v8727
          %v8729 = vpop.f32.mrb[0].mxu0
          %v8730 = vadd.f32 0.0, %v8729
          %8731 = vdwg.mxu0
          %v8732 = vmul.f32 %v8231, 0.25
          %v8733 = vmul.f32 %v8233, 0.25
          %v8734 = vmul.f32 %v8302, 0.25
          %v8735 = vmul.f32 %v8304, 0.25
          %v8736 = vmul.f32 %v8373, 0.25
          %v8737 = vmul.f32 %v8375, 0.25
          %v8738 = vmul.f32 %v8444, 0.25
          %v8739 = vmul.f32 %v8446, 0.25
          %v8740 = vmul.f32 %v8515, 0.25
          %v8741 = vmul.f32 %v8517, 0.25
          %v8742 = vmul.f32 %v8586, 0.25
          %v8743 = vmul.f32 %v8588, 0.25
          %v8744 = vmul.f32 %v8657, 0.25
          %v8745 = vmul.f32 %v8659, 0.25
          %v8746 = vmul.f32 %v8728, 0.25
          %v8747 = vmul.f32 %v8730, 0.25
          %v8748 = vld [vmem:[#allocation12] sm:$0xff]
          %v8749 = vld [vmem:[#allocation12 + $0x8] sm:$0xff]
          %v8750 = vld [vmem:[#allocation12 + $0x10] sm:$0xff]
          %v8751 = vld [vmem:[#allocation12 + $0x18] sm:$0xff]
          %v8752 = vld [vmem:[#allocation12 + $0x20] sm:$0xff]
          %v8753 = vld [vmem:[#allocation12 + $0x28] sm:$0xff]
          %v8754 = vld [vmem:[#allocation12 + $0x30] sm:$0xff]
          %v8755 = vld [vmem:[#allocation12 + $0x38] sm:$0xff]
          %v8756 = vld [vmem:[#allocation12 + $0x40] sm:$0xff]
          %v8757 = vld [vmem:[#allocation12 + $0x48] sm:$0xff]
          %v8758 = vld [vmem:[#allocation12 + $0x50] sm:$0xff]
          %v8759 = vld [vmem:[#allocation12 + $0x58] sm:$0xff]
          %v8760 = vld [vmem:[#allocation12 + $0x60] sm:$0xff]
          %v8761 = vld [vmem:[#allocation12 + $0x68] sm:$0xff]
          %v8762 = vld [vmem:[#allocation12 + $0x70] sm:$0xff]
          %v8763 = vld [vmem:[#allocation12 + $0x78] sm:$0xff]
          %v8764 = vld [vmem:[#allocation12 + $0x80] sm:$0xff]
          %v8765 = vld [vmem:[#allocation12 + $0x88] sm:$0xff]
          %v8766 = vld [vmem:[#allocation12 + $0x90] sm:$0xff]
          %v8767 = vld [vmem:[#allocation12 + $0x98] sm:$0xff]
          %v8768 = vld [vmem:[#allocation12 + $0xa0] sm:$0xff]
          %v8769 = vld [vmem:[#allocation12 + $0xa8] sm:$0xff]
          %v8770 = vld [vmem:[#allocation12 + $0xb0] sm:$0xff]
          %v8771 = vld [vmem:[#allocation12 + $0xb8] sm:$0xff]
          %v8772 = vld [vmem:[#allocation12 + $0xc0] sm:$0xff]
          %v8773 = vld [vmem:[#allocation12 + $0xc8] sm:$0xff]
          %v8774 = vld [vmem:[#allocation12 + $0xd0] sm:$0xff]
          %v8775 = vld [vmem:[#allocation12 + $0xd8] sm:$0xff]
          %v8776 = vld [vmem:[#allocation12 + $0xe0] sm:$0xff]
          %v8777 = vld [vmem:[#allocation12 + $0xe8] sm:$0xff]
          %v8778 = vld [vmem:[#allocation12 + $0xf0] sm:$0xff]
          %v8779 = vld [vmem:[#allocation12 + $0xf8] sm:$0xff]
          %v8780 = vld [vmem:[#allocation12 + $0x100] sm:$0xff]
          %v8781 = vld [vmem:[#allocation12 + $0x108] sm:$0xff]
          %v8782 = vld [vmem:[#allocation12 + $0x110] sm:$0xff]
          %v8783 = vld [vmem:[#allocation12 + $0x118] sm:$0xff]
          %v8784 = vld [vmem:[#allocation12 + $0x120] sm:$0xff]
          %v8785 = vld [vmem:[#allocation12 + $0x128] sm:$0xff]
          %v8786 = vld [vmem:[#allocation12 + $0x130] sm:$0xff]
          %v8787 = vld [vmem:[#allocation12 + $0x138] sm:$0xff]
          %v8788 = vld [vmem:[#allocation12 + $0x140] sm:$0xff]
          %v8789 = vld [vmem:[#allocation12 + $0x148] sm:$0xff]
          %v8790 = vld [vmem:[#allocation12 + $0x150] sm:$0xff]
          %v8791 = vld [vmem:[#allocation12 + $0x158] sm:$0xff]
          %v8792 = vld [vmem:[#allocation12 + $0x160] sm:$0xff]
          %v8793 = vld [vmem:[#allocation12 + $0x168] sm:$0xff]
          %v8794 = vld [vmem:[#allocation12 + $0x170] sm:$0xff]
          %v8795 = vld [vmem:[#allocation12 + $0x178] sm:$0xff]
          %v8796 = vld [vmem:[#allocation12 + $0x180] sm:$0xff]
          %v8797 = vld [vmem:[#allocation12 + $0x188] sm:$0xff]
          %v8798 = vld [vmem:[#allocation12 + $0x190] sm:$0xff]
          %v8799 = vld [vmem:[#allocation12 + $0x198] sm:$0xff]
          %v8800 = vld [vmem:[#allocation12 + $0x1a0] sm:$0xff]
          %v8801 = vld [vmem:[#allocation12 + $0x1a8] sm:$0xff]
          %v8802 = vld [vmem:[#allocation12 + $0x1b0] sm:$0xff]
          %v8803 = vld [vmem:[#allocation12 + $0x1b8] sm:$0xff]
          %v8804 = vld [vmem:[#allocation12 + $0x1c0] sm:$0xff]
          %v8805 = vld [vmem:[#allocation12 + $0x1c8] sm:$0xff]
          %v8806 = vld [vmem:[#allocation12 + $0x1d0] sm:$0xff]
          %v8807 = vld [vmem:[#allocation12 + $0x1d8] sm:$0xff]
          %v8808 = vld [vmem:[#allocation12 + $0x1e0] sm:$0xff]
          %v8809 = vld [vmem:[#allocation12 + $0x1e8] sm:$0xff]
          %v8810 = vld [vmem:[#allocation12 + $0x1f0] sm:$0xff]
          %v8811 = vld [vmem:[#allocation12 + $0x1f8] sm:$0xff]
          %v8812 = vld [vmem:[#allocation12 + $0x200] sm:$0xff]
          %v8813 = vld [vmem:[#allocation12 + $0x208] sm:$0xff]
          %v8814 = vld [vmem:[#allocation12 + $0x210] sm:$0xff]
          %v8815 = vld [vmem:[#allocation12 + $0x218] sm:$0xff]
          %v8816 = vld [vmem:[#allocation12 + $0x220] sm:$0xff]
          %v8817 = vld [vmem:[#allocation12 + $0x228] sm:$0xff]
          %v8818 = vld [vmem:[#allocation12 + $0x230] sm:$0xff]
          %v8819 = vld [vmem:[#allocation12 + $0x238] sm:$0xff]
          %v8820 = vld [vmem:[#allocation12 + $0x240] sm:$0xff]
          %v8821 = vld [vmem:[#allocation12 + $0x248] sm:$0xff]
          %v8822 = vld [vmem:[#allocation12 + $0x250] sm:$0xff]
          %v8823 = vld [vmem:[#allocation12 + $0x258] sm:$0xff]
          %v8824 = vld [vmem:[#allocation12 + $0x260] sm:$0xff]
          %v8825 = vld [vmem:[#allocation12 + $0x268] sm:$0xff]
          %v8826 = vld [vmem:[#allocation12 + $0x270] sm:$0xff]
          %v8827 = vld [vmem:[#allocation12 + $0x278] sm:$0xff]
          %v8828 = vld [vmem:[#allocation12 + $0x280] sm:$0xff]
          %v8829 = vld [vmem:[#allocation12 + $0x288] sm:$0xff]
          %v8830 = vld [vmem:[#allocation12 + $0x290] sm:$0xff]
          %v8831 = vld [vmem:[#allocation12 + $0x298] sm:$0xff]
          %v8832 = vld [vmem:[#allocation12 + $0x2a0] sm:$0xff]
          %v8833 = vld [vmem:[#allocation12 + $0x2a8] sm:$0xff]
          %v8834 = vld [vmem:[#allocation12 + $0x2b0] sm:$0xff]
          %v8835 = vld [vmem:[#allocation12 + $0x2b8] sm:$0xff]
          %v8836 = vld [vmem:[#allocation12 + $0x2c0] sm:$0xff]
          %v8837 = vld [vmem:[#allocation12 + $0x2c8] sm:$0xff]
          %v8838 = vld [vmem:[#allocation12 + $0x2d0] sm:$0xff]
          %v8839 = vld [vmem:[#allocation12 + $0x2d8] sm:$0xff]
          %v8840 = vld [vmem:[#allocation12 + $0x2e0] sm:$0xff]
          %v8841 = vld [vmem:[#allocation12 + $0x2e8] sm:$0xff]
          %v8842 = vld [vmem:[#allocation12 + $0x2f0] sm:$0xff]
          %v8843 = vld [vmem:[#allocation12 + $0x2f8] sm:$0xff]
          %v8844 = vld [vmem:[#allocation12 + $0x300] sm:$0xff]
          %v8845 = vld [vmem:[#allocation12 + $0x308] sm:$0xff]
          %v8846 = vld [vmem:[#allocation12 + $0x310] sm:$0xff]
          %v8847 = vld [vmem:[#allocation12 + $0x318] sm:$0xff]
          %v8848 = vld [vmem:[#allocation12 + $0x320] sm:$0xff]
          %v8849 = vld [vmem:[#allocation12 + $0x328] sm:$0xff]
          %v8850 = vld [vmem:[#allocation12 + $0x330] sm:$0xff]
          %v8851 = vld [vmem:[#allocation12 + $0x338] sm:$0xff]
          %v8852 = vld [vmem:[#allocation12 + $0x340] sm:$0xff]
          %v8853 = vld [vmem:[#allocation12 + $0x348] sm:$0xff]
          %v8854 = vld [vmem:[#allocation12 + $0x350] sm:$0xff]
          %v8855 = vld [vmem:[#allocation12 + $0x358] sm:$0xff]
          %v8856 = vld [vmem:[#allocation12 + $0x360] sm:$0xff]
          %v8857 = vld [vmem:[#allocation12 + $0x368] sm:$0xff]
          %v8858 = vld [vmem:[#allocation12 + $0x370] sm:$0xff]
          %v8859 = vld [vmem:[#allocation12 + $0x378] sm:$0xff]
          %v8860 = vld [vmem:[#allocation12 + $0x380] sm:$0xff]
          %v8861 = vld [vmem:[#allocation12 + $0x388] sm:$0xff]
          %v8862 = vld [vmem:[#allocation12 + $0x390] sm:$0xff]
          %v8863 = vld [vmem:[#allocation12 + $0x398] sm:$0xff]
          %v8864 = vld [vmem:[#allocation12 + $0x3a0] sm:$0xff]
          %v8865 = vld [vmem:[#allocation12 + $0x3a8] sm:$0xff]
          %v8866 = vld [vmem:[#allocation12 + $0x3b0] sm:$0xff]
          %v8867 = vld [vmem:[#allocation12 + $0x3b8] sm:$0xff]
          %v8868 = vld [vmem:[#allocation12 + $0x3c0] sm:$0xff]
          %v8869 = vld [vmem:[#allocation12 + $0x3c8] sm:$0xff]
          %v8870 = vld [vmem:[#allocation12 + $0x3d0] sm:$0xff]
          %v8871 = vld [vmem:[#allocation12 + $0x3d8] sm:$0xff]
          %v8872 = vld [vmem:[#allocation12 + $0x3e0] sm:$0xff]
          %v8873 = vld [vmem:[#allocation12 + $0x3e8] sm:$0xff]
          %v8874 = vld [vmem:[#allocation12 + $0x3f0] sm:$0xff]
          %v8875 = vld [vmem:[#allocation12 + $0x3f8] sm:$0xff]
          %v8876 = vld [vmem:[#allocation12 + $0x400] sm:$0xff]
          %v8877 = vld [vmem:[#allocation12 + $0x408] sm:$0xff]
          %v8878 = vld [vmem:[#allocation12 + $0x410] sm:$0xff]
          %v8879 = vld [vmem:[#allocation12 + $0x418] sm:$0xff]
          %v8880 = vld [vmem:[#allocation12 + $0x420] sm:$0xff]
          %v8881 = vld [vmem:[#allocation12 + $0x428] sm:$0xff]
          %v8882 = vld [vmem:[#allocation12 + $0x430] sm:$0xff]
          %v8883 = vld [vmem:[#allocation12 + $0x438] sm:$0xff]
          %v8884 = vld [vmem:[#allocation12 + $0x440] sm:$0xff]
          %v8885 = vld [vmem:[#allocation12 + $0x448] sm:$0xff]
          %v8886 = vld [vmem:[#allocation12 + $0x450] sm:$0xff]
          %v8887 = vld [vmem:[#allocation12 + $0x458] sm:$0xff]
          %v8888 = vld [vmem:[#allocation12 + $0x460] sm:$0xff]
          %v8889 = vld [vmem:[#allocation12 + $0x468] sm:$0xff]
          %v8890 = vld [vmem:[#allocation12 + $0x470] sm:$0xff]
          %v8891 = vld [vmem:[#allocation12 + $0x478] sm:$0xff]
          %v8892 = vld [vmem:[#allocation12 + $0x480] sm:$0xff]
          %v8893 = vld [vmem:[#allocation12 + $0x488] sm:$0xff]
          %v8894 = vld [vmem:[#allocation12 + $0x490] sm:$0xff]
          %v8895 = vld [vmem:[#allocation12 + $0x498] sm:$0xff]
          %v8896 = vld [vmem:[#allocation12 + $0x4a0] sm:$0xff]
          %v8897 = vld [vmem:[#allocation12 + $0x4a8] sm:$0xff]
          %v8898 = vld [vmem:[#allocation12 + $0x4b0] sm:$0xff]
          %v8899 = vld [vmem:[#allocation12 + $0x4b8] sm:$0xff]
          %v8900 = vld [vmem:[#allocation12 + $0x4c0] sm:$0xff]
          %v8901 = vld [vmem:[#allocation12 + $0x4c8] sm:$0xff]
          %v8902 = vld [vmem:[#allocation12 + $0x4d0] sm:$0xff]
          %v8903 = vld [vmem:[#allocation12 + $0x4d8] sm:$0xff]
          %v8904 = vld [vmem:[#allocation12 + $0x4e0] sm:$0xff]
          %v8905 = vld [vmem:[#allocation12 + $0x4e8] sm:$0xff]
          %v8906 = vld [vmem:[#allocation12 + $0x4f0] sm:$0xff]
          %v8907 = vld [vmem:[#allocation12 + $0x4f8] sm:$0xff]
          %v8908 = vld [vmem:[#allocation12 + $0x500] sm:$0xff]
          %v8909 = vld [vmem:[#allocation12 + $0x508] sm:$0xff]
          %v8910 = vld [vmem:[#allocation12 + $0x510] sm:$0xff]
          %v8911 = vld [vmem:[#allocation12 + $0x518] sm:$0xff]
          %v8912 = vld [vmem:[#allocation12 + $0x520] sm:$0xff]
          %v8913 = vld [vmem:[#allocation12 + $0x528] sm:$0xff]
          %v8914 = vld [vmem:[#allocation12 + $0x530] sm:$0xff]
          %v8915 = vld [vmem:[#allocation12 + $0x538] sm:$0xff]
          %v8916 = vld [vmem:[#allocation12 + $0x540] sm:$0xff]
          %v8917 = vld [vmem:[#allocation12 + $0x548] sm:$0xff]
          %v8918 = vld [vmem:[#allocation12 + $0x550] sm:$0xff]
          %v8919 = vld [vmem:[#allocation12 + $0x558] sm:$0xff]
          %v8920 = vld [vmem:[#allocation12 + $0x560] sm:$0xff]
          %v8921 = vld [vmem:[#allocation12 + $0x568] sm:$0xff]
          %v8922 = vld [vmem:[#allocation12 + $0x570] sm:$0xff]
          %v8923 = vld [vmem:[#allocation12 + $0x578] sm:$0xff]
          %v8924 = vld [vmem:[#allocation12 + $0x580] sm:$0xff]
          %v8925 = vld [vmem:[#allocation12 + $0x588] sm:$0xff]
          %v8926 = vld [vmem:[#allocation12 + $0x590] sm:$0xff]
          %v8927 = vld [vmem:[#allocation12 + $0x598] sm:$0xff]
          %v8928 = vld [vmem:[#allocation12 + $0x5a0] sm:$0xff]
          %v8929 = vld [vmem:[#allocation12 + $0x5a8] sm:$0xff]
          %v8930 = vld [vmem:[#allocation12 + $0x5b0] sm:$0xff]
          %v8931 = vld [vmem:[#allocation12 + $0x5b8] sm:$0xff]
          %v8932 = vld [vmem:[#allocation12 + $0x5c0] sm:$0xff]
          %v8933 = vld [vmem:[#allocation12 + $0x5c8] sm:$0xff]
          %v8934 = vld [vmem:[#allocation12 + $0x5d0] sm:$0xff]
          %v8935 = vld [vmem:[#allocation12 + $0x5d8] sm:$0xff]
          %v8936 = vld [vmem:[#allocation12 + $0x5e0] sm:$0xff]
          %v8937 = vld [vmem:[#allocation12 + $0x5e8] sm:$0xff]
          %v8938 = vld [vmem:[#allocation12 + $0x5f0] sm:$0xff]
          %v8939 = vld [vmem:[#allocation12 + $0x5f8] sm:$0xff]
          %v8940 = vld [vmem:[#allocation12 + $0x600] sm:$0xff]
          %v8941 = vld [vmem:[#allocation12 + $0x608] sm:$0xff]
          %v8942 = vld [vmem:[#allocation12 + $0x610] sm:$0xff]
          %v8943 = vld [vmem:[#allocation12 + $0x618] sm:$0xff]
          %v8944 = vld [vmem:[#allocation12 + $0x620] sm:$0xff]
          %v8945 = vld [vmem:[#allocation12 + $0x628] sm:$0xff]
          %v8946 = vld [vmem:[#allocation12 + $0x630] sm:$0xff]
          %v8947 = vld [vmem:[#allocation12 + $0x638] sm:$0xff]
          %v8948 = vld [vmem:[#allocation12 + $0x640] sm:$0xff]
          %v8949 = vld [vmem:[#allocation12 + $0x648] sm:$0xff]
          %v8950 = vld [vmem:[#allocation12 + $0x650] sm:$0xff]
          %v8951 = vld [vmem:[#allocation12 + $0x658] sm:$0xff]
          %v8952 = vld [vmem:[#allocation12 + $0x660] sm:$0xff]
          %v8953 = vld [vmem:[#allocation12 + $0x668] sm:$0xff]
          %v8954 = vld [vmem:[#allocation12 + $0x670] sm:$0xff]
          %v8955 = vld [vmem:[#allocation12 + $0x678] sm:$0xff]
          %v8956 = vld [vmem:[#allocation12 + $0x680] sm:$0xff]
          %v8957 = vld [vmem:[#allocation12 + $0x688] sm:$0xff]
          %v8958 = vld [vmem:[#allocation12 + $0x690] sm:$0xff]
          %v8959 = vld [vmem:[#allocation12 + $0x698] sm:$0xff]
          %v8960 = vld [vmem:[#allocation12 + $0x6a0] sm:$0xff]
          %v8961 = vld [vmem:[#allocation12 + $0x6a8] sm:$0xff]
          %v8962 = vld [vmem:[#allocation12 + $0x6b0] sm:$0xff]
          %v8963 = vld [vmem:[#allocation12 + $0x6b8] sm:$0xff]
          %v8964 = vld [vmem:[#allocation12 + $0x6c0] sm:$0xff]
          %v8965 = vld [vmem:[#allocation12 + $0x6c8] sm:$0xff]
          %v8966 = vld [vmem:[#allocation12 + $0x6d0] sm:$0xff]
          %v8967 = vld [vmem:[#allocation12 + $0x6d8] sm:$0xff]
          %v8968 = vld [vmem:[#allocation12 + $0x6e0] sm:$0xff]
          %v8969 = vld [vmem:[#allocation12 + $0x6e8] sm:$0xff]
          %v8970 = vld [vmem:[#allocation12 + $0x6f0] sm:$0xff]
          %v8971 = vld [vmem:[#allocation12 + $0x6f8] sm:$0xff]
          %v8972 = vld [vmem:[#allocation12 + $0x700] sm:$0xff]
          %v8973 = vld [vmem:[#allocation12 + $0x708] sm:$0xff]
          %v8974 = vld [vmem:[#allocation12 + $0x710] sm:$0xff]
          %v8975 = vld [vmem:[#allocation12 + $0x718] sm:$0xff]
          %v8976 = vld [vmem:[#allocation12 + $0x720] sm:$0xff]
          %v8977 = vld [vmem:[#allocation12 + $0x728] sm:$0xff]
          %v8978 = vld [vmem:[#allocation12 + $0x730] sm:$0xff]
          %v8979 = vld [vmem:[#allocation12 + $0x738] sm:$0xff]
          %v8980 = vld [vmem:[#allocation12 + $0x740] sm:$0xff]
          %v8981 = vld [vmem:[#allocation12 + $0x748] sm:$0xff]
          %v8982 = vld [vmem:[#allocation12 + $0x750] sm:$0xff]
          %v8983 = vld [vmem:[#allocation12 + $0x758] sm:$0xff]
          %v8984 = vld [vmem:[#allocation12 + $0x760] sm:$0xff]
          %v8985 = vld [vmem:[#allocation12 + $0x768] sm:$0xff]
          %v8986 = vld [vmem:[#allocation12 + $0x770] sm:$0xff]
          %v8987 = vld [vmem:[#allocation12 + $0x778] sm:$0xff]
          %v8988 = vld [vmem:[#allocation12 + $0x780] sm:$0xff]
          %v8989 = vld [vmem:[#allocation12 + $0x788] sm:$0xff]
          %v8990 = vld [vmem:[#allocation12 + $0x790] sm:$0xff]
          %v8991 = vld [vmem:[#allocation12 + $0x798] sm:$0xff]
          %v8992 = vld [vmem:[#allocation12 + $0x7a0] sm:$0xff]
          %v8993 = vld [vmem:[#allocation12 + $0x7a8] sm:$0xff]
          %v8994 = vld [vmem:[#allocation12 + $0x7b0] sm:$0xff]
          %v8995 = vld [vmem:[#allocation12 + $0x7b8] sm:$0xff]
          %v8996 = vld [vmem:[#allocation12 + $0x7c0] sm:$0xff]
          %v8997 = vld [vmem:[#allocation12 + $0x7c8] sm:$0xff]
          %v8998 = vld [vmem:[#allocation12 + $0x7d0] sm:$0xff]
          %v8999 = vld [vmem:[#allocation12 + $0x7d8] sm:$0xff]
          %v9000 = vld [vmem:[#allocation12 + $0x7e0] sm:$0xff]
          %v9001 = vld [vmem:[#allocation12 + $0x7e8] sm:$0xff]
          %v9002 = vld [vmem:[#allocation12 + $0x7f0] sm:$0xff]
          %v9003 = vld [vmem:[#allocation12 + $0x7f8] sm:$0xff]
          %v9004 = vld [vmem:[#allocation14] sm:$0x1]
          %v9006 = vlaneseq
          %v9007 = vshrl.u32 %v9006, 7
          %v9008 = vsub.s32 0, %v9007
          %v9009 = vrot.slane %v9004, %v9008
          %9011 = vmatprep.subr.mxu0 0.0
          %9012 = vmatpush1.msra.mxu0 %v8748
          %9013 = vmatprep.subr.mxu0 0.0
          %9014 = vmatpush1.msra.mxu0 %v8749
          %9015 = vmatprep.subr.mxu0 0.0
          %9016 = vmatpush1.msra.mxu0 %v8750
          %9017 = vmatprep.subr.mxu0 0.0
          %9018 = vmatpush1.msra.mxu0 %v8751
          %9019 = vmatprep.subr.mxu0 0.0
          %9020 = vmatpush1.msra.mxu0 %v8752
          %9021 = vmatprep.subr.mxu0 0.0
          %9022 = vmatpush1.msra.mxu0 %v8753
          %9023 = vmatprep.subr.mxu0 0.0
          %9024 = vmatpush1.msra.mxu0 %v8754
          %9025 = vmatprep.subr.mxu0 0.0
          %9026 = vmatpush1.msra.mxu0 %v8755
          %9027 = vmatprep.subr.mxu0 0.0
          %9028 = vmatpush1.msra.mxu0 %v8756
          %9029 = vmatprep.subr.mxu0 0.0
          %9030 = vmatpush1.msra.mxu0 %v8757
          %9031 = vmatprep.subr.mxu0 0.0
          %9032 = vmatpush1.msra.mxu0 %v8758
          %9033 = vmatprep.subr.mxu0 0.0
          %9034 = vmatpush1.msra.mxu0 %v8759
          %9035 = vmatprep.subr.mxu0 0.0
          %9036 = vmatpush1.msra.mxu0 %v8760
          %9037 = vmatprep.subr.mxu0 0.0
          %9038 = vmatpush1.msra.mxu0 %v8761
          %9039 = vmatprep.subr.mxu0 0.0
          %9040 = vmatpush1.msra.mxu0 %v8762
          %9041 = vmatprep.subr.mxu0 0.0
          %9042 = vmatpush1.msra.mxu0 %v8763
          %9043 = vmatprep.subr.mxu0 0.0
          %9044 = vmatpush1.msra.mxu0 %v8764
          %9045 = vmatprep.subr.mxu0 0.0
          %9046 = vmatpush1.msra.mxu0 %v8765
          %9047 = vmatprep.subr.mxu0 0.0
          %9048 = vmatpush1.msra.mxu0 %v8766
          %9049 = vmatprep.subr.mxu0 0.0
          %9050 = vmatpush1.msra.mxu0 %v8767
          %9051 = vmatprep.subr.mxu0 0.0
          %9052 = vmatpush1.msra.mxu0 %v8768
          %9053 = vmatprep.subr.mxu0 0.0
          %9054 = vmatpush1.msra.mxu0 %v8769
          %9055 = vmatprep.subr.mxu0 0.0
          %9056 = vmatpush1.msra.mxu0 %v8770
          %9057 = vmatprep.subr.mxu0 0.0
          %9058 = vmatpush1.msra.mxu0 %v8771
          %9059 = vmatprep.subr.mxu0 0.0
          %9060 = vmatpush1.msra.mxu0 %v8772
          %9061 = vmatprep.subr.mxu0 0.0
          %9062 = vmatpush1.msra.mxu0 %v8773
          %9063 = vmatprep.subr.mxu0 0.0
          %9064 = vmatpush1.msra.mxu0 %v8774
          %9065 = vmatprep.subr.mxu0 0.0
          %9066 = vmatpush1.msra.mxu0 %v8775
          %9067 = vmatprep.subr.mxu0 0.0
          %9068 = vmatpush1.msra.mxu0 %v8776
          %9069 = vmatprep.subr.mxu0 0.0
          %9070 = vmatpush1.msra.mxu0 %v8777
          %9071 = vmatprep.subr.mxu0 0.0
          %9072 = vmatpush1.msra.mxu0 %v8778
          %9073 = vmatprep.subr.mxu0 0.0
          %9074 = vmatpush1.msra.mxu0 %v8779
          %9075 = vmatprep.mubr.f32.mxu0 %v8733
          %9076 = vmatmul.mubr.f32.gmra.mrb[0].mxu0 %v8732
          %v9077 = vpop.f32.mrb[0].mxu0
          %v9078 = vadd.f32 %v9009, %v9077
          %v9079 = vpop.f32.mrb[0].mxu0
          %9080 = vdwg.mxu0
          %9081 = vmatprep.subr.mxu0 0.0
          %9082 = vmatpush1.msra.mxu0 %v8780
          %9083 = vmatprep.subr.mxu0 0.0
          %9084 = vmatpush1.msra.mxu0 %v8781
          %9085 = vmatprep.subr.mxu0 0.0
          %9086 = vmatpush1.msra.mxu0 %v8782
          %9087 = vmatprep.subr.mxu0 0.0
          %9088 = vmatpush1.msra.mxu0 %v8783
          %9089 = vmatprep.subr.mxu0 0.0
          %9090 = vmatpush1.msra.mxu0 %v8784
          %9091 = vmatprep.subr.mxu0 0.0
          %9092 = vmatpush1.msra.mxu0 %v8785
          %9093 = vmatprep.subr.mxu0 0.0
          %9094 = vmatpush1.msra.mxu0 %v8786
          %9095 = vmatprep.subr.mxu0 0.0
          %9096 = vmatpush1.msra.mxu0 %v8787
          %9097 = vmatprep.subr.mxu0 0.0
          %9098 = vmatpush1.msra.mxu0 %v8788
          %9099 = vmatprep.subr.mxu0 0.0
          %9100 = vmatpush1.msra.mxu0 %v8789
          %9101 = vmatprep.subr.mxu0 0.0
          %9102 = vmatpush1.msra.mxu0 %v8790
          %9103 = vmatprep.subr.mxu0 0.0
          %9104 = vmatpush1.msra.mxu0 %v8791
          %9105 = vmatprep.subr.mxu0 0.0
          %9106 = vmatpush1.msra.mxu0 %v8792
          %9107 = vmatprep.subr.mxu0 0.0
          %9108 = vmatpush1.msra.mxu0 %v8793
          %9109 = vmatprep.subr.mxu0 0.0
          %9110 = vmatpush1.msra.mxu0 %v8794
          %9111 = vmatprep.subr.mxu0 0.0
          %9112 = vmatpush1.msra.mxu0 %v8795
          %9113 = vmatprep.subr.mxu0 0.0
          %9114 = vmatpush1.msra.mxu0 %v8796
          %9115 = vmatprep.subr.mxu0 0.0
          %9116 = vmatpush1.msra.mxu0 %v8797
          %9117 = vmatprep.subr.mxu0 0.0
          %9118 = vmatpush1.msra.mxu0 %v8798
          %9119 = vmatprep.subr.mxu0 0.0
          %9120 = vmatpush1.msra.mxu0 %v8799
          %9121 = vmatprep.subr.mxu0 0.0
          %9122 = vmatpush1.msra.mxu0 %v8800
          %9123 = vmatprep.subr.mxu0 0.0
          %9124 = vmatpush1.msra.mxu0 %v8801
          %9125 = vmatprep.subr.mxu0 0.0
          %9126 = vmatpush1.msra.mxu0 %v8802
          %9127 = vmatprep.subr.mxu0 0.0
          %9128 = vmatpush1.msra.mxu0 %v8803
          %9129 = vmatprep.subr.mxu0 0.0
          %9130 = vmatpush1.msra.mxu0 %v8804
          %9131 = vmatprep.subr.mxu0 0.0
          %9132 = vmatpush1.msra.mxu0 %v8805
          %9133 = vmatprep.subr.mxu0 0.0
          %9134 = vmatpush1.msra.mxu0 %v8806
          %9135 = vmatprep.subr.mxu0 0.0
          %9136 = vmatpush1.msra.mxu0 %v8807
          %9137 = vmatprep.subr.mxu0 0.0
          %9138 = vmatpush1.msra.mxu0 %v8808
          %9139 = vmatprep.subr.mxu0 0.0
          %9140 = vmatpush1.msra.mxu0 %v8809
          %9141 = vmatprep.subr.mxu0 0.0
          %9142 = vmatpush1.msra.mxu0 %v8810
          %9143 = vmatprep.subr.mxu0 0.0
          %9144 = vmatpush1.msra.mxu0 %v8811
          %9145 = vmatprep.mubr.f32.mxu0 %v8735
          %9146 = vmatmul.mubr.f32.gmra.mrb[0].mxu0 %v8734
          %v9147 = vpop.f32.mrb[0].mxu0
          %v9148 = vadd.f32 %v9078, %v9147
          %v9149 = vpop.f32.mrb[0].mxu0
          %9150 = vdwg.mxu0
          %9151 = vmatprep.subr.mxu0 0.0
          %9152 = vmatpush1.msra.mxu0 %v8812
          %9153 = vmatprep.subr.mxu0 0.0
          %9154 = vmatpush1.msra.mxu0 %v8813
          %9155 = vmatprep.subr.mxu0 0.0
          %9156 = vmatpush1.msra.mxu0 %v8814
          %9157 = vmatprep.subr.mxu0 0.0
          %9158 = vmatpush1.msra.mxu0 %v8815
          %9159 = vmatprep.subr.mxu0 0.0
          %9160 = vmatpush1.msra.mxu0 %v8816
          %9161 = vmatprep.subr.mxu0 0.0
          %9162 = vmatpush1.msra.mxu0 %v8817
          %9163 = vmatprep.subr.mxu0 0.0
          %9164 = vmatpush1.msra.mxu0 %v8818
          %9165 = vmatprep.subr.mxu0 0.0
          %9166 = vmatpush1.msra.mxu0 %v8819
          %9167 = vmatprep.subr.mxu0 0.0
          %9168 = vmatpush1.msra.mxu0 %v8820
          %9169 = vmatprep.subr.mxu0 0.0
          %9170 = vmatpush1.msra.mxu0 %v8821
          %9171 = vmatprep.subr.mxu0 0.0
          %9172 = vmatpush1.msra.mxu0 %v8822
          %9173 = vmatprep.subr.mxu0 0.0
          %9174 = vmatpush1.msra.mxu0 %v8823
          %9175 = vmatprep.subr.mxu0 0.0
          %9176 = vmatpush1.msra.mxu0 %v8824
          %9177 = vmatprep.subr.mxu0 0.0
          %9178 = vmatpush1.msra.mxu0 %v8825
          %9179 = vmatprep.subr.mxu0 0.0
          %9180 = vmatpush1.msra.mxu0 %v8826
          %9181 = vmatprep.subr.mxu0 0.0
          %9182 = vmatpush1.msra.mxu0 %v8827
          %9183 = vmatprep.subr.mxu0 0.0
          %9184 = vmatpush1.msra.mxu0 %v8828
          %9185 = vmatprep.subr.mxu0 0.0
          %9186 = vmatpush1.msra.mxu0 %v8829
          %9187 = vmatprep.subr.mxu0 0.0
          %9188 = vmatpush1.msra.mxu0 %v8830
          %9189 = vmatprep.subr.mxu0 0.0
          %9190 = vmatpush1.msra.mxu0 %v8831
          %9191 = vmatprep.subr.mxu0 0.0
          %9192 = vmatpush1.msra.mxu0 %v8832
          %9193 = vmatprep.subr.mxu0 0.0
          %9194 = vmatpush1.msra.mxu0 %v8833
          %9195 = vmatprep.subr.mxu0 0.0
          %9196 = vmatpush1.msra.mxu0 %v8834
          %9197 = vmatprep.subr.mxu0 0.0
          %9198 = vmatpush1.msra.mxu0 %v8835
          %9199 = vmatprep.subr.mxu0 0.0
          %9200 = vmatpush1.msra.mxu0 %v8836
          %9201 = vmatprep.subr.mxu0 0.0
          %9202 = vmatpush1.msra.mxu0 %v8837
          %9203 = vmatprep.subr.mxu0 0.0
          %9204 = vmatpush1.msra.mxu0 %v8838
          %9205 = vmatprep.subr.mxu0 0.0
          %9206 = vmatpush1.msra.mxu0 %v8839
          %9207 = vmatprep.subr.mxu0 0.0
          %9208 = vmatpush1.msra.mxu0 %v8840
          %9209 = vmatprep.subr.mxu0 0.0
          %9210 = vmatpush1.msra.mxu0 %v8841
          %9211 = vmatprep.subr.mxu0 0.0
          %9212 = vmatpush1.msra.mxu0 %v8842
          %9213 = vmatprep.subr.mxu0 0.0
          %9214 = vmatpush1.msra.mxu0 %v8843
          %9215 = vmatprep.mubr.f32.mxu0 %v8737
          %9216 = vmatmul.mubr.f32.gmra.mrb[0].mxu0 %v8736
          %v9217 = vpop.f32.mrb[0].mxu0
          %v9218 = vadd.f32 %v9148, %v9217
          %v9219 = vpop.f32.mrb[0].mxu0
          %9220 = vdwg.mxu0
          %9221 = vmatprep.subr.mxu0 0.0
          %9222 = vmatpush1.msra.mxu0 %v8844
          %9223 = vmatprep.subr.mxu0 0.0
          %9224 = vmatpush1.msra.mxu0 %v8845
          %9225 = vmatprep.subr.mxu0 0.0
          %9226 = vmatpush1.msra.mxu0 %v8846
          %9227 = vmatprep.subr.mxu0 0.0
          %9228 = vmatpush1.msra.mxu0 %v8847
          %9229 = vmatprep.subr.mxu0 0.0
          %9230 = vmatpush1.msra.mxu0 %v8848
          %9231 = vmatprep.subr.mxu0 0.0
          %9232 = vmatpush1.msra.mxu0 %v8849
          %9233 = vmatprep.subr.mxu0 0.0
          %9234 = vmatpush1.msra.mxu0 %v8850
          %9235 = vmatprep.subr.mxu0 0.0
          %9236 = vmatpush1.msra.mxu0 %v8851
          %9237 = vmatprep.subr.mxu0 0.0
          %9238 = vmatpush1.msra.mxu0 %v8852
          %9239 = vmatprep.subr.mxu0 0.0
          %9240 = vmatpush1.msra.mxu0 %v8853
          %9241 = vmatprep.subr.mxu0 0.0
          %9242 = vmatpush1.msra.mxu0 %v8854
          %9243 = vmatprep.subr.mxu0 0.0
          %9244 = vmatpush1.msra.mxu0 %v8855
          %9245 = vmatprep.subr.mxu0 0.0
          %9246 = vmatpush1.msra.mxu0 %v8856
          %9247 = vmatprep.subr.mxu0 0.0
          %9248 = vmatpush1.msra.mxu0 %v8857
          %9249 = vmatprep.subr.mxu0 0.0
          %9250 = vmatpush1.msra.mxu0 %v8858
          %9251 = vmatprep.subr.mxu0 0.0
          %9252 = vmatpush1.msra.mxu0 %v8859
          %9253 = vmatprep.subr.mxu0 0.0
          %9254 = vmatpush1.msra.mxu0 %v8860
          %9255 = vmatprep.subr.mxu0 0.0
          %9256 = vmatpush1.msra.mxu0 %v8861
          %9257 = vmatprep.subr.mxu0 0.0
          %9258 = vmatpush1.msra.mxu0 %v8862
          %9259 = vmatprep.subr.mxu0 0.0
          %9260 = vmatpush1.msra.mxu0 %v8863
          %9261 = vmatprep.subr.mxu0 0.0
          %9262 = vmatpush1.msra.mxu0 %v8864
          %9263 = vmatprep.subr.mxu0 0.0
          %9264 = vmatpush1.msra.mxu0 %v8865
          %9265 = vmatprep.subr.mxu0 0.0
          %9266 = vmatpush1.msra.mxu0 %v8866
          %9267 = vmatprep.subr.mxu0 0.0
          %9268 = vmatpush1.msra.mxu0 %v8867
          %9269 = vmatprep.subr.mxu0 0.0
          %9270 = vmatpush1.msra.mxu0 %v8868
          %9271 = vmatprep.subr.mxu0 0.0
          %9272 = vmatpush1.msra.mxu0 %v8869
          %9273 = vmatprep.subr.mxu0 0.0
          %9274 = vmatpush1.msra.mxu0 %v8870
          %9275 = vmatprep.subr.mxu0 0.0
          %9276 = vmatpush1.msra.mxu0 %v8871
          %9277 = vmatprep.subr.mxu0 0.0
          %9278 = vmatpush1.msra.mxu0 %v8872
          %9279 = vmatprep.subr.mxu0 0.0
          %9280 = vmatpush1.msra.mxu0 %v8873
          %9281 = vmatprep.subr.mxu0 0.0
          %9282 = vmatpush1.msra.mxu0 %v8874
          %9283 = vmatprep.subr.mxu0 0.0
          %9284 = vmatpush1.msra.mxu0 %v8875
          %9285 = vmatprep.mubr.f32.mxu0 %v8739
          %9286 = vmatmul.mubr.f32.gmra.mrb[0].mxu0 %v8738
          %v9287 = vpop.f32.mrb[0].mxu0
          %v9288 = vadd.f32 %v9218, %v9287
          %v9289 = vpop.f32.mrb[0].mxu0
          %9290 = vdwg.mxu0
          %9291 = vmatprep.subr.mxu0 0.0
          %9292 = vmatpush1.msra.mxu0 %v8876
          %9293 = vmatprep.subr.mxu0 0.0
          %9294 = vmatpush1.msra.mxu0 %v8877
          %9295 = vmatprep.subr.mxu0 0.0
          %9296 = vmatpush1.msra.mxu0 %v8878
          %9297 = vmatprep.subr.mxu0 0.0
          %9298 = vmatpush1.msra.mxu0 %v8879
          %9299 = vmatprep.subr.mxu0 0.0
          %9300 = vmatpush1.msra.mxu0 %v8880
          %9301 = vmatprep.subr.mxu0 0.0
          %9302 = vmatpush1.msra.mxu0 %v8881
          %9303 = vmatprep.subr.mxu0 0.0
          %9304 = vmatpush1.msra.mxu0 %v8882
          %9305 = vmatprep.subr.mxu0 0.0
          %9306 = vmatpush1.msra.mxu0 %v8883
          %9307 = vmatprep.subr.mxu0 0.0
          %9308 = vmatpush1.msra.mxu0 %v8884
          %9309 = vmatprep.subr.mxu0 0.0
          %9310 = vmatpush1.msra.mxu0 %v8885
          %9311 = vmatprep.subr.mxu0 0.0
          %9312 = vmatpush1.msra.mxu0 %v8886
          %9313 = vmatprep.subr.mxu0 0.0
          %9314 = vmatpush1.msra.mxu0 %v8887
          %9315 = vmatprep.subr.mxu0 0.0
          %9316 = vmatpush1.msra.mxu0 %v8888
          %9317 = vmatprep.subr.mxu0 0.0
          %9318 = vmatpush1.msra.mxu0 %v8889
          %9319 = vmatprep.subr.mxu0 0.0
          %9320 = vmatpush1.msra.mxu0 %v8890
          %9321 = vmatprep.subr.mxu0 0.0
          %9322 = vmatpush1.msra.mxu0 %v8891
          %9323 = vmatprep.subr.mxu0 0.0
          %9324 = vmatpush1.msra.mxu0 %v8892
          %9325 = vmatprep.subr.mxu0 0.0
          %9326 = vmatpush1.msra.mxu0 %v8893
          %9327 = vmatprep.subr.mxu0 0.0
          %9328 = vmatpush1.msra.mxu0 %v8894
          %9329 = vmatprep.subr.mxu0 0.0
          %9330 = vmatpush1.msra.mxu0 %v8895
          %9331 = vmatprep.subr.mxu0 0.0
          %9332 = vmatpush1.msra.mxu0 %v8896
          %9333 = vmatprep.subr.mxu0 0.0
          %9334 = vmatpush1.msra.mxu0 %v8897
          %9335 = vmatprep.subr.mxu0 0.0
          %9336 = vmatpush1.msra.mxu0 %v8898
          %9337 = vmatprep.subr.mxu0 0.0
          %9338 = vmatpush1.msra.mxu0 %v8899
          %9339 = vmatprep.subr.mxu0 0.0
          %9340 = vmatpush1.msra.mxu0 %v8900
          %9341 = vmatprep.subr.mxu0 0.0
          %9342 = vmatpush1.msra.mxu0 %v8901
          %9343 = vmatprep.subr.mxu0 0.0
          %9344 = vmatpush1.msra.mxu0 %v8902
          %9345 = vmatprep.subr.mxu0 0.0
          %9346 = vmatpush1.msra.mxu0 %v8903
          %9347 = vmatprep.subr.mxu0 0.0
          %9348 = vmatpush1.msra.mxu0 %v8904
          %9349 = vmatprep.subr.mxu0 0.0
          %9350 = vmatpush1.msra.mxu0 %v8905
          %9351 = vmatprep.subr.mxu0 0.0
          %9352 = vmatpush1.msra.mxu0 %v8906
          %9353 = vmatprep.subr.mxu0 0.0
          %9354 = vmatpush1.msra.mxu0 %v8907
          %9355 = vmatprep.mubr.f32.mxu0 %v8741
          %9356 = vmatmul.mubr.f32.gmra.mrb[0].mxu0 %v8740
          %v9357 = vpop.f32.mrb[0].mxu0
          %v9358 = vadd.f32 %v9288, %v9357
          %v9359 = vpop.f32.mrb[0].mxu0
          %9360 = vdwg.mxu0
          %9361 = vmatprep.subr.mxu0 0.0
          %9362 = vmatpush1.msra.mxu0 %v8908
          %9363 = vmatprep.subr.mxu0 0.0
          %9364 = vmatpush1.msra.mxu0 %v8909
          %9365 = vmatprep.subr.mxu0 0.0
          %9366 = vmatpush1.msra.mxu0 %v8910
          %9367 = vmatprep.subr.mxu0 0.0
          %9368 = vmatpush1.msra.mxu0 %v8911
          %9369 = vmatprep.subr.mxu0 0.0
          %9370 = vmatpush1.msra.mxu0 %v8912
          %9371 = vmatprep.subr.mxu0 0.0
          %9372 = vmatpush1.msra.mxu0 %v8913
          %9373 = vmatprep.subr.mxu0 0.0
          %9374 = vmatpush1.msra.mxu0 %v8914
          %9375 = vmatprep.subr.mxu0 0.0
          %9376 = vmatpush1.msra.mxu0 %v8915
          %9377 = vmatprep.subr.mxu0 0.0
          %9378 = vmatpush1.msra.mxu0 %v8916
          %9379 = vmatprep.subr.mxu0 0.0
          %9380 = vmatpush1.msra.mxu0 %v8917
          %9381 = vmatprep.subr.mxu0 0.0
          %9382 = vmatpush1.msra.mxu0 %v8918
          %9383 = vmatprep.subr.mxu0 0.0
          %9384 = vmatpush1.msra.mxu0 %v8919
          %9385 = vmatprep.subr.mxu0 0.0
          %9386 = vmatpush1.msra.mxu0 %v8920
          %9387 = vmatprep.subr.mxu0 0.0
          %9388 = vmatpush1.msra.mxu0 %v8921
          %9389 = vmatprep.subr.mxu0 0.0
          %9390 = vmatpush1.msra.mxu0 %v8922
          %9391 = vmatprep.subr.mxu0 0.0
          %9392 = vmatpush1.msra.mxu0 %v8923
          %9393 = vmatprep.subr.mxu0 0.0
          %9394 = vmatpush1.msra.mxu0 %v8924
          %9395 = vmatprep.subr.mxu0 0.0
          %9396 = vmatpush1.msra.mxu0 %v8925
          %9397 = vmatprep.subr.mxu0 0.0
          %9398 = vmatpush1.msra.mxu0 %v8926
          %9399 = vmatprep.subr.mxu0 0.0
          %9400 = vmatpush1.msra.mxu0 %v8927
          %9401 = vmatprep.subr.mxu0 0.0
          %9402 = vmatpush1.msra.mxu0 %v8928
          %9403 = vmatprep.subr.mxu0 0.0
          %9404 = vmatpush1.msra.mxu0 %v8929
          %9405 = vmatprep.subr.mxu0 0.0
          %9406 = vmatpush1.msra.mxu0 %v8930
          %9407 = vmatprep.subr.mxu0 0.0
          %9408 = vmatpush1.msra.mxu0 %v8931
          %9409 = vmatprep.subr.mxu0 0.0
          %9410 = vmatpush1.msra.mxu0 %v8932
          %9411 = vmatprep.subr.mxu0 0.0
          %9412 = vmatpush1.msra.mxu0 %v8933
          %9413 = vmatprep.subr.mxu0 0.0
          %9414 = vmatpush1.msra.mxu0 %v8934
          %9415 = vmatprep.subr.mxu0 0.0
          %9416 = vmatpush1.msra.mxu0 %v8935
          %9417 = vmatprep.subr.mxu0 0.0
          %9418 = vmatpush1.msra.mxu0 %v8936
          %9419 = vmatprep.subr.mxu0 0.0
          %9420 = vmatpush1.msra.mxu0 %v8937
          %9421 = vmatprep.subr.mxu0 0.0
          %9422 = vmatpush1.msra.mxu0 %v8938
          %9423 = vmatprep.subr.mxu0 0.0
          %9424 = vmatpush1.msra.mxu0 %v8939
          %9425 = vmatprep.mubr.f32.mxu0 %v8743
          %9426 = vmatmul.mubr.f32.gmra.mrb[0].mxu0 %v8742
          %v9427 = vpop.f32.mrb[0].mxu0
          %v9428 = vadd.f32 %v9358, %v9427
          %v9429 = vpop.f32.mrb[0].mxu0
          %9430 = vdwg.mxu0
          %9431 = vmatprep.subr.mxu0 0.0
          %9432 = vmatpush1.msra.mxu0 %v8940
          %9433 = vmatprep.subr.mxu0 0.0
          %9434 = vmatpush1.msra.mxu0 %v8941
          %9435 = vmatprep.subr.mxu0 0.0
          %9436 = vmatpush1.msra.mxu0 %v8942
          %9437 = vmatprep.subr.mxu0 0.0
          %9438 = vmatpush1.msra.mxu0 %v8943
          %9439 = vmatprep.subr.mxu0 0.0
          %9440 = vmatpush1.msra.mxu0 %v8944
          %9441 = vmatprep.subr.mxu0 0.0
          %9442 = vmatpush1.msra.mxu0 %v8945
          %9443 = vmatprep.subr.mxu0 0.0
          %9444 = vmatpush1.msra.mxu0 %v8946
          %9445 = vmatprep.subr.mxu0 0.0
          %9446 = vmatpush1.msra.mxu0 %v8947
          %9447 = vmatprep.subr.mxu0 0.0
          %9448 = vmatpush1.msra.mxu0 %v8948
          %9449 = vmatprep.subr.mxu0 0.0
          %9450 = vmatpush1.msra.mxu0 %v8949
          %9451 = vmatprep.subr.mxu0 0.0
          %9452 = vmatpush1.msra.mxu0 %v8950
          %9453 = vmatprep.subr.mxu0 0.0
          %9454 = vmatpush1.msra.mxu0 %v8951
          %9455 = vmatprep.subr.mxu0 0.0
          %9456 = vmatpush1.msra.mxu0 %v8952
          %9457 = vmatprep.subr.mxu0 0.0
          %9458 = vmatpush1.msra.mxu0 %v8953
          %9459 = vmatprep.subr.mxu0 0.0
          %9460 = vmatpush1.msra.mxu0 %v8954
          %9461 = vmatprep.subr.mxu0 0.0
          %9462 = vmatpush1.msra.mxu0 %v8955
          %9463 = vmatprep.subr.mxu0 0.0
          %9464 = vmatpush1.msra.mxu0 %v8956
          %9465 = vmatprep.subr.mxu0 0.0
          %9466 = vmatpush1.msra.mxu0 %v8957
          %9467 = vmatprep.subr.mxu0 0.0
          %9468 = vmatpush1.msra.mxu0 %v8958
          %9469 = vmatprep.subr.mxu0 0.0
          %9470 = vmatpush1.msra.mxu0 %v8959
          %9471 = vmatprep.subr.mxu0 0.0
          %9472 = vmatpush1.msra.mxu0 %v8960
          %9473 = vmatprep.subr.mxu0 0.0
          %9474 = vmatpush1.msra.mxu0 %v8961
          %9475 = vmatprep.subr.mxu0 0.0
          %9476 = vmatpush1.msra.mxu0 %v8962
          %9477 = vmatprep.subr.mxu0 0.0
          %9478 = vmatpush1.msra.mxu0 %v8963
          %9479 = vmatprep.subr.mxu0 0.0
          %9480 = vmatpush1.msra.mxu0 %v8964
          %9481 = vmatprep.subr.mxu0 0.0
          %9482 = vmatpush1.msra.mxu0 %v8965
          %9483 = vmatprep.subr.mxu0 0.0
          %9484 = vmatpush1.msra.mxu0 %v8966
          %9485 = vmatprep.subr.mxu0 0.0
          %9486 = vmatpush1.msra.mxu0 %v8967
          %9487 = vmatprep.subr.mxu0 0.0
          %9488 = vmatpush1.msra.mxu0 %v8968
          %9489 = vmatprep.subr.mxu0 0.0
          %9490 = vmatpush1.msra.mxu0 %v8969
          %9491 = vmatprep.subr.mxu0 0.0
          %9492 = vmatpush1.msra.mxu0 %v8970
          %9493 = vmatprep.subr.mxu0 0.0
          %9494 = vmatpush1.msra.mxu0 %v8971
          %9495 = vmatprep.mubr.f32.mxu0 %v8745
          %9496 = vmatmul.mubr.f32.gmra.mrb[0].mxu0 %v8744
          %v9497 = vpop.f32.mrb[0].mxu0
          %v9498 = vadd.f32 %v9428, %v9497
          %v9499 = vpop.f32.mrb[0].mxu0
          %9500 = vdwg.mxu0
          %9501 = vmatprep.subr.mxu0 0.0
          %9502 = vmatpush1.msra.mxu0 %v8972
          %9503 = vmatprep.subr.mxu0 0.0
          %9504 = vmatpush1.msra.mxu0 %v8973
          %9505 = vmatprep.subr.mxu0 0.0
          %9506 = vmatpush1.msra.mxu0 %v8974
          %9507 = vmatprep.subr.mxu0 0.0
          %9508 = vmatpush1.msra.mxu0 %v8975
          %9509 = vmatprep.subr.mxu0 0.0
          %9510 = vmatpush1.msra.mxu0 %v8976
          %9511 = vmatprep.subr.mxu0 0.0
          %9512 = vmatpush1.msra.mxu0 %v8977
          %9513 = vmatprep.subr.mxu0 0.0
          %9514 = vmatpush1.msra.mxu0 %v8978
          %9515 = vmatprep.subr.mxu0 0.0
          %9516 = vmatpush1.msra.mxu0 %v8979
          %9517 = vmatprep.subr.mxu0 0.0
          %9518 = vmatpush1.msra.mxu0 %v8980
          %9519 = vmatprep.subr.mxu0 0.0
          %9520 = vmatpush1.msra.mxu0 %v8981
          %9521 = vmatprep.subr.mxu0 0.0
          %9522 = vmatpush1.msra.mxu0 %v8982
          %9523 = vmatprep.subr.mxu0 0.0
          %9524 = vmatpush1.msra.mxu0 %v8983
          %9525 = vmatprep.subr.mxu0 0.0
          %9526 = vmatpush1.msra.mxu0 %v8984
          %9527 = vmatprep.subr.mxu0 0.0
          %9528 = vmatpush1.msra.mxu0 %v8985
          %9529 = vmatprep.subr.mxu0 0.0
          %9530 = vmatpush1.msra.mxu0 %v8986
          %9531 = vmatprep.subr.mxu0 0.0
          %9532 = vmatpush1.msra.mxu0 %v8987
          %9533 = vmatprep.subr.mxu0 0.0
          %9534 = vmatpush1.msra.mxu0 %v8988
          %9535 = vmatprep.subr.mxu0 0.0
          %9536 = vmatpush1.msra.mxu0 %v8989
          %9537 = vmatprep.subr.mxu0 0.0
          %9538 = vmatpush1.msra.mxu0 %v8990
          %9539 = vmatprep.subr.mxu0 0.0
          %9540 = vmatpush1.msra.mxu0 %v8991
          %9541 = vmatprep.subr.mxu0 0.0
          %9542 = vmatpush1.msra.mxu0 %v8992
          %9543 = vmatprep.subr.mxu0 0.0
          %9544 = vmatpush1.msra.mxu0 %v8993
          %9545 = vmatprep.subr.mxu0 0.0
          %9546 = vmatpush1.msra.mxu0 %v8994
          %9547 = vmatprep.subr.mxu0 0.0
          %9548 = vmatpush1.msra.mxu0 %v8995
          %9549 = vmatprep.subr.mxu0 0.0
          %9550 = vmatpush1.msra.mxu0 %v8996
          %9551 = vmatprep.subr.mxu0 0.0
          %9552 = vmatpush1.msra.mxu0 %v8997
          %9553 = vmatprep.subr.mxu0 0.0
          %9554 = vmatpush1.msra.mxu0 %v8998
          %9555 = vmatprep.subr.mxu0 0.0
          %9556 = vmatpush1.msra.mxu0 %v8999
          %9557 = vmatprep.subr.mxu0 0.0
          %9558 = vmatpush1.msra.mxu0 %v9000
          %9559 = vmatprep.subr.mxu0 0.0
          %9560 = vmatpush1.msra.mxu0 %v9001
          %9561 = vmatprep.subr.mxu0 0.0
          %9562 = vmatpush1.msra.mxu0 %v9002
          %9563 = vmatprep.subr.mxu0 0.0
          %9564 = vmatpush1.msra.mxu0 %v9003
          %9565 = vmatprep.mubr.f32.mxu0 %v8747
          %9566 = vmatmul.mubr.f32.gmra.mrb[0].mxu0 %v8746
          %v9567 = vpop.f32.mrb[0].mxu0
          %v9568 = vadd.f32 %v9498, %v9567
          %v9569 = vpop.f32.mrb[0].mxu0
          %9570 = vdwg.mxu0
          %9571 = vst [vmem:[#allocation15] sm:$0x3] %v9568
        $region88: #{hybrid_vit_forward.1} parent=51 // pred_fallthru
          _
        // Predicated region
        $region89: #{hybrid_vit_forward.1} parent=51 // pred_check
          %p9572 = pneg %p217
        $region90: #{hybrid_vit_forward.1} parent=51 // pred_check_branch
          %9574 = sbr.rel (%p9572) target = $region92
        $region91: #{hybrid_vit_forward.1} parent=51 // pred_region
          %s9576 = ssub.s32 32, 32
          %9577 = vsyncadd [#allocation5], %s9576
          %s9579 = sshll.u32 [#allocation15], 4
          %s9580 = int_to_ptr.vmem [resolvable:$true] %s9579
          %9582 = dma.vmem_to_hbm [thread:$0]  %s9580, 32, %s8, [#allocation5]
        $region92: #{hybrid_vit_forward.1} parent=51 // pred_fallthru
          _
        // Predicated region
        $region93: #{hybrid_vit_forward.1} parent=51 // pred_check
          %p9583 = pneg %p217
        $region94: #{hybrid_vit_forward.1} parent=51 // pred_check_branch
          %9585 = sbr.rel (%p9583) target = $region96
        $region95: #{hybrid_vit_forward.1} parent=51 // pred_region
          %9586 = dma.done [#allocation5], 32
        $region96: #{hybrid_vit_forward.1} parent=51 // pred_fallthru
          _
      $region52: #{hybrid_vit_forward.1} parent=5 // pred_fallthru
        _
      %p9587 = scmp.le.s32.totalorder 2, %s21
      // Predicated region
      $region97: #{hybrid_vit_forward.1} parent=5 // pred_check
        %p9588 = pneg %p9587
      $region98: #{hybrid_vit_forward.1} parent=5 // pred_check_branch
        %9590 = sbr.rel (%p9588) target = $region100
      $region99: #{hybrid_vit_forward.1} parent=5 // pred_region
        %s9591 = ssub.s32 %s21, 2
      $region100: #{hybrid_vit_forward.1} parent=5 // pred_fallthru
        _
    $region6: #{hybrid_vit_forward.1} parent=1 // loop_footer
      %s25 = sadd.s32 1, %s21
    $region7: #{hybrid_vit_forward.1} parent=1 // loop_footer_branch
      %20 = sbr.rel target = $region3
    $region8: #{hybrid_vit_forward.1} parent=1 // loop_exit
      _
    %9592 = vsyncpa [#allocation4], 1
    %s9593 = scalar_lea.sflag [#allocation4], 1
    %9594 = vsyncpa %s9593, 1
    %9595 = vsyncpa [#allocation7], 1
    %9596 = vsyncpa [#allocation10], 1
    %9597 = vsyncpa [#allocation13], 1
    %9598 = vsyncpa [#allocation5], 1
    %s9599 = scalar_lea.sflag [#allocation5], 1
    %9600 = vsyncpa %s9599, 1

</llo_original>
